<compile_context>
chip_gen: v7x
topology: tpu7x:2x2x1
jax: 0.10.0
libtpu: 0.0.40
codegen_flags: <defaults>
</compile_context>

<pallas_src>
import functools
import math

import jax
import jax.numpy as jnp
from jax import lax
from jax.experimental import pallas as pl
from jax.experimental.pallas import tpu as pltpu  # noqa: F401  (TPU backend)


# ------------------------------ Pallas kernel -------------------------------

def _layer_norm(x, w, b, eps):
    mu = jnp.mean(x, axis=-1, keepdims=True)
    xc = x - mu
    var = jnp.mean(xc * xc, axis=-1, keepdims=True)
    return xc * lax.rsqrt(var + eps) * w + b


def _transformer_kernel(
    x_ref, pe_ref,
    enc_w1_ref, enc_b1_ref, enc_w2_ref, enc_b2_ref,
    wqkv_ref, bqkv_ref, wo_ref, bo_ref, ln1w_ref, ln1b_ref,
    ff1w_ref, ff1b_ref, ff2w_ref, ff2b_ref, ln2w_ref, ln2b_ref,
    hw1_ref, hb1_ref, hw2_ref, hb2_ref,
    l2w1_ref, l2b1_ref, l2w2_ref, l2b2_ref,
    o_ref,
    *, B, S, D, H, L, eps):
    hd = D // H
    scale = 1.0 / math.sqrt(hd)

    # ---- input embedding: Linear(1, D/2) -> ReLU -> Linear(D/2, D) ----------
    x = x_ref[...]                                                  # (B*S, 1)
    t = jnp.maximum(x * enc_w1_ref[...] + enc_b1_ref[...], 0.0)     # (B*S, D/2)
    h = jnp.dot(t, enc_w2_ref[...],
                preferred_element_type=jnp.float32) + enc_b2_ref[...]   # (B*S, D)

    # ---- positional encoding (pe row = batch index, as in the original) -----
    pe_b = pe_ref[:B, :]                                            # (B, D)
    h = (h.reshape(B, S, D) + pe_b[:, None, :]).reshape(B * S, D)

    # ---- causal additive mask (strictly-upper-triangular -> -inf) -----------
    row = lax.broadcasted_iota(jnp.int32, (S, S), 0)
    col = lax.broadcasted_iota(jnp.int32, (S, S), 1)
    mask = jnp.where(row >= col, 0.0, -1e30).astype(jnp.float32)    # (S, S)

    # ---- L post-norm transformer encoder layers ------------------------------
    for l in range(L):
        qkv = jnp.dot(h, wqkv_ref[l],
                      preferred_element_type=jnp.float32) + bqkv_ref[l]  # (B*S, 3D)
        q = qkv[:, 0 * D:1 * D].reshape(B, S, D)
        k = qkv[:, 1 * D:2 * D].reshape(B, S, D)
        v = qkv[:, 2 * D:3 * D].reshape(B, S, D)

        heads = []
        for hh in range(H):                      # H is small & static: unrolled
            lo = hh * hd
            qh = q[:, :, lo:lo + hd]
            kh = k[:, :, lo:lo + hd]
            vh = v[:, :, lo:lo + hd]
            logits = jnp.einsum('bqd,bkd->bqk', qh, kh,
                                preferred_element_type=jnp.float32) * scale
            logits = logits + mask[None]
            m = jnp.max(logits, axis=-1, keepdims=True)
            p = jnp.exp(logits - m)
            p = p / jnp.sum(p, axis=-1, keepdims=True)
            heads.append(jnp.einsum('bqk,bkd->bqd', p, vh,
                                    preferred_element_type=jnp.float32))
        ctx = jnp.concatenate(heads, axis=-1).reshape(B * S, D)

        attn = jnp.dot(ctx, wo_ref[l],
                       preferred_element_type=jnp.float32) + bo_ref[l]
        h = _layer_norm(h + attn, ln1w_ref[l], ln1b_ref[l], eps)

        ff = jnp.maximum(jnp.dot(h, ff1w_ref[l],
                                 preferred_element_type=jnp.float32) + ff1b_ref[l], 0.0)
        ff = jnp.dot(ff, ff2w_ref[l],
                     preferred_element_type=jnp.float32) + ff2b_ref[l]
        h = _layer_norm(h + ff, ln2w_ref[l], ln2b_ref[l], eps)

    # ---- per-token head: Linear(D, D/2) -> ReLU -> Linear(D/2, 1) -----------
    t = jnp.maximum(jnp.dot(h, hw1_ref[...],
                            preferred_element_type=jnp.float32) + hb1_ref[...], 0.0)
    t3 = t.reshape(B, S, t.shape[1])                                 # (B, S, D/2)
    y = jnp.sum(t3 * hw2_ref[...][None, :, :], axis=-1) + hb2_ref[...]   # (B, S)

    # ---- sequence head: Linear(S, (S+ow)//2) -> ReLU -> Linear(., ow) --------
    z = jnp.maximum(jnp.dot(y, l2w1_ref[...],
                            preferred_element_type=jnp.float32) + l2b1_ref[...], 0.0)
    out = jnp.dot(z, l2w2_ref[...],
                  preferred_element_type=jnp.float32) + l2b2_ref[...]    # (B, ow)
    o_ref[...] = out.astype(o_ref.dtype)


def _full_spec(arr):
    zeros = (0,) * arr.ndim
    return pl.BlockSpec(arr.shape, lambda *_: zeros)


@functools.partial(jax.jit, static_argnames=("num_heads",))
def transformer_forward(params, x, *, num_heads):
    """x: (B, S, 1) -> (B, ow). Entire forward pass in one pallas_call."""
    B, S, _ = x.shape
    D = params["enc_w2"].shape[1]
    L = params["wqkv"].shape[0]
    OW = params["l2w2"].shape[1]
    assert D % num_heads == 0

    x_flat = x.reshape(B * S, 1)       # metadata-only bitcast, no extra launch

    args = [
        x_flat, params["pe"],
        params["enc_w1"], params["enc_b1"], params["enc_w2"], params["enc_b2"],
        params["wqkv"], params["bqkv"], params["wo"], params["bo"],
        params["ln1_w"], params["ln1_b"],
        params["ff1_w"], params["ff1_b"], params["ff2_w"], params["ff2_b"],
        params["ln2_w"], params["ln2_b"],
        params["hw1"], params["hb1"], params["hw2"], params["hb2"],
        params["l2w1"], params["l2b1"], params["l2w2"], params["l2b2"],
    ]

    kernel = functools.partial(
        _transformer_kernel, B=B, S=S, D=D, H=num_heads, L=L, eps=1e-5)

    return pl.pallas_call(
        kernel,
        out_shape=jax.ShapeDtypeStruct((B, OW), jnp.float32),
        in_specs=[_full_spec(a) for a in args],
        out_specs=pl.BlockSpec((B, OW), lambda *_: (0, 0)),
    )(*args)


# ------------------------------- parameters ---------------------------------

def init_params(key, *, d_model=128, num_heads=4, num_layers=2, dim_ff=256,
                iw=16, ow=1, max_len=64):
    D, D2, F, L = d_model, d_model // 2, dim_ff, num_layers
    M2 = (iw + ow) // 2
    assert D % num_heads == 0

    def rand(k, shape, s=0.05):
        return s * jax.random.normal(k, shape, jnp.float32)

    ki = iter(jax.random.split(key, 24))
    p = {}
    # encoder: Linear(1, D/2) -> ReLU -> Linear(D/2, D)
    p["enc_w1"] = rand(next(ki), (1, D2))
    p["enc_b1"] = rand(next(ki), (1, D2))
    p["enc_w2"] = rand(next(ki), (D2, D))
    p["enc_b2"] = rand(next(ki), (1, D))
    # L encoder layers (weights stacked on a leading layer axis)
    p["wqkv"] = rand(next(ki), (L, D, 3 * D))
    p["bqkv"] = rand(next(ki), (L, 1, 3 * D))
    p["wo"] = rand(next(ki), (L, D, D))
    p["bo"] = rand(next(ki), (L, 1, D))
    p["ln1_w"] = jnp.ones((L, 1, D), jnp.float32)
    p["ln1_b"] = jnp.zeros((L, 1, D), jnp.float32)
    p["ff1_w"] = rand(next(ki), (L, D, F))
    p["ff1_b"] = rand(next(ki), (L, 1, F))
    p["ff2_w"] = rand(next(ki), (L, F, D))
    p["ff2_b"] = rand(next(ki), (L, 1, D))
    p["ln2_w"] = jnp.ones((L, 1, D), jnp.float32)
    p["ln2_b"] = jnp.zeros((L, 1, D), jnp.float32)
    # head: Linear(D, D/2) -> ReLU -> Linear(D/2, 1)
    p["hw1"] = rand(next(ki), (D, D2))
    p["hb1"] = rand(next(ki), (1, D2))
    p["hw2"] = rand(next(ki), (1, D2))          # Linear(D/2, 1) as row vector
    p["hb2"] = rand(next(ki), (1, 1))
    # linear2: Linear(iw, (iw+ow)//2) -> ReLU -> Linear(., ow)
    p["l2w1"] = rand(next(ki), (iw, M2))
    p["l2b1"] = rand(next(ki), (1, M2))
    p["l2w2"] = rand(next(ki), (M2, ow))
    p["l2b2"] = rand(next(ki), (1, ow))
    # sin/cos positional-encoding table (PyTorch layout pe[pos, d])
    pos = jnp.arange(max_len, dtype=jnp.float32)[:, None]
    div = jnp.exp(jnp.arange(0, D, 2, dtype=jnp.float32)
                  * (-math.log(10000.0) / D))
    pe = jnp.zeros((max_len, D), jnp.float32)
    pe = pe.at[:, 0::2].set(jnp.sin(pos * div))
    pe = pe.at[:, 1::2].set(jnp.cos(pos * div))
    p["pe"] = pe
    return p


# ---------------------------- pure-JAX reference ----------------------------

_HI = jax.lax.Precision.HIGHEST


def _ln_ref(x, w, b, eps=1e-5):
    mu = jnp.mean(x, axis=-1, keepdims=True)
    var = jnp.mean((x - mu) ** 2, axis=-1, keepdims=True)
    return (x - mu) / jnp.sqrt(var + eps) * w + b


def transformer_forward_ref(params, x, *, num_heads):
    B, S, _ = x.shape
    D = params["enc_w2"].shape[1]
    L = params["wqkv"].shape[0]
    H = num_heads
    hd = D // H

    h = jnp.maximum(jnp.matmul(x, params["enc_w1"], precision=_HI)
                    + params["enc_b1"], 0.0)
    h = jnp.matmul(h, params["enc_w2"], precision=_HI) + params["enc_b2"]
    h = h + params["pe"][:B][:, None, :]                 # pe row = batch index

    row = jnp.arange(S)[:, None]
    col = jnp.arange(S)[None, :]
    mask = jnp.where(row >= col, 0.0, -1e30)

    for l in range(L):
        qkv = jnp.matmul(h, params["wqkv"][l], precision=_HI) + params["bqkv"][l]
        q, k, v = jnp.split(qkv, 3, axis=-1)
        q = q.reshape(B, S, H, hd)
        k = k.reshape(B, S, H, hd)
        v = v.reshape(B, S, H, hd)
        s = jnp.einsum('bqhd,bkhd->bhqk', q, k, precision=_HI) / math.sqrt(hd)
        s = s + mask
        p = jax.nn.softmax(s, axis=-1)
        ctx = jnp.einsum('bhqk,bkhd->bqhd', p, v, precision=_HI).reshape(B, S, D)
        attn = jnp.matmul(ctx, params["wo"][l], precision=_HI) + params["bo"][l]
        h = _ln_ref(h + attn, params["ln1_w"][l], params["ln1_b"][l])
        ff = jnp.maximum(jnp.matmul(h, params["ff1_w"][l], precision=_HI)
                         + params["ff1_b"][l], 0.0)
        ff = jnp.matmul(ff, params["ff2_w"][l], precision=_HI) + params["ff2_b"][l]
        h = _ln_ref(h + ff, params["ln2_w"][l], params["ln2_b"][l])

    t = jnp.maximum(jnp.matmul(h, params["hw1"], precision=_HI)
                    + params["hb1"], 0.0)
    y = jnp.sum(t * params["hw2"][0], axis=-1) + params["hb2"][0, 0]     # (B, S)
    z = jnp.maximum(jnp.matmul(y, params["l2w1"], precision=_HI)
                    + params["l2b1"], 0.0)
    return jnp.matmul(z, params["l2w2"], precision=_HI) + params["l2b2"]


# ----------------------------------- main ------------------------------------

if __name__ == "__main__":
    key = jax.random.PRNGKey(0)
    k_p, k_x = jax.random.split(key)

    # Small shapes consistent with the module (iw=seq, input_size=1, ow=1).
    B, IW, OW = 2, 16, 1
    D_MODEL, N_HEADS, N_LAYERS, D_FF = 128, 4, 2, 256

    params = init_params(k_p, d_model=D_MODEL, num_heads=N_HEADS,
                         num_layers=N_LAYERS, dim_ff=D_FF, iw=IW, ow=OW)
    x = jax.random.normal(k_x, (B, IW, 1), jnp.float32)

    # NOTE: dropout layers are inference no-ops and are omitted.
    out = jax.block_until_ready(transformer_forward(params, x, num_heads=N_HEADS))
    assert out.shape == (B, OW), out.shape

    ref = jax.block_until_ready(
        transformer_forward_ref(params, x, num_heads=N_HEADS))
    assert jnp.allclose(out, ref, atol=2e-3, rtol=2e-3), (out, ref)

    print("KERNEL_OK")
</pallas_src>

<mosaic_0001>
module attributes {stable_mosaic.version = 11 : i64} {
  func.func @_transformer_kernel(%arg0: memref<32x1xf32, #tpu.memory_space<vmem>>, %arg1: memref<64x128xf32, #tpu.memory_space<vmem>>, %arg2: memref<1x64xf32, #tpu.memory_space<vmem>>, %arg3: memref<1x64xf32, #tpu.memory_space<vmem>>, %arg4: memref<64x128xf32, #tpu.memory_space<vmem>>, %arg5: memref<1x128xf32, #tpu.memory_space<vmem>>, %arg6: memref<2x128x384xf32, #tpu.memory_space<vmem>>, %arg7: memref<2x1x384xf32, #tpu.memory_space<vmem>>, %arg8: memref<2x128x128xf32, #tpu.memory_space<vmem>>, %arg9: memref<2x1x128xf32, #tpu.memory_space<vmem>>, %arg10: memref<2x1x128xf32, #tpu.memory_space<vmem>>, %arg11: memref<2x1x128xf32, #tpu.memory_space<vmem>>, %arg12: memref<2x128x256xf32, #tpu.memory_space<vmem>>, %arg13: memref<2x1x256xf32, #tpu.memory_space<vmem>>, %arg14: memref<2x256x128xf32, #tpu.memory_space<vmem>>, %arg15: memref<2x1x128xf32, #tpu.memory_space<vmem>>, %arg16: memref<2x1x128xf32, #tpu.memory_space<vmem>>, %arg17: memref<2x1x128xf32, #tpu.memory_space<vmem>>, %arg18: memref<128x64xf32, #tpu.memory_space<vmem>>, %arg19: memref<1x64xf32, #tpu.memory_space<vmem>>, %arg20: memref<1x64xf32, #tpu.memory_space<vmem>>, %arg21: memref<1x1xf32, #tpu.memory_space<vmem>>, %arg22: memref<16x8xf32, #tpu.memory_space<vmem>>, %arg23: memref<1x8xf32, #tpu.memory_space<vmem>>, %arg24: memref<8x1xf32, #tpu.memory_space<vmem>>, %arg25: memref<1x1xf32, #tpu.memory_space<vmem>>, %arg26: memref<2x1xf32, #tpu.memory_space<vmem>>) attributes {dimension_semantics = [], scalar_prefetch = 0 : i64, scratch_operands = 0 : i64, tpu.core_type = #tpu.core_type<tc>} {
    %c0 = arith.constant 0 : index
    %c0_0 = arith.constant 0 : index
    %0 = vector.load %arg0[%c0, %c0_0] : memref<32x1xf32, #tpu.memory_space<vmem>>, vector<32x1xf32>
    %c0_1 = arith.constant 0 : index
    %c0_2 = arith.constant 0 : index
    %1 = vector.load %arg2[%c0_1, %c0_2] : memref<1x64xf32, #tpu.memory_space<vmem>>, vector<1x64xf32>
    %2 = vector.broadcast %0 : vector<32x1xf32> to vector<32x64xf32>
    %3 = vector.broadcast %1 : vector<1x64xf32> to vector<32x64xf32>
    %4 = arith.mulf %2, %3 : vector<32x64xf32>
    %c0_3 = arith.constant 0 : index
    %c0_4 = arith.constant 0 : index
    %5 = vector.load %arg3[%c0_3, %c0_4] : memref<1x64xf32, #tpu.memory_space<vmem>>, vector<1x64xf32>
    %6 = vector.broadcast %5 : vector<1x64xf32> to vector<32x64xf32>
    %7 = arith.addf %4, %6 : vector<32x64xf32>
    %cst = arith.constant 0.000000e+00 : f32
    %8 = vector.broadcast %cst : f32 to vector<32x64xf32>
    %9 = arith.maximumf %7, %8 : vector<32x64xf32>
    %c0_5 = arith.constant 0 : index
    %c0_6 = arith.constant 0 : index
    %10 = vector.load %arg4[%c0_5, %c0_6] : memref<64x128xf32, #tpu.memory_space<vmem>>, vector<64x128xf32>
    %cst_7 = arith.constant dense<0.000000e+00> : vector<32x128xf32>
    %11 = tpu.matmul %9, %10, %cst_7 {dimension_numbers = #tpu.dot_dimension_numbers<[1], [0], [0], [1], [0, 0, 1, 1], [], []>} : vector<32x64xf32>, vector<64x128xf32>, vector<32x128xf32> -> vector<32x128xf32>
    %c0_8 = arith.constant 0 : index
    %c0_9 = arith.constant 0 : index
    %12 = vector.load %arg5[%c0_8, %c0_9] : memref<1x128xf32, #tpu.memory_space<vmem>>, vector<1x128xf32>
    %13 = vector.broadcast %12 : vector<1x128xf32> to vector<32x128xf32>
    %14 = arith.addf %11, %13 : vector<32x128xf32>
    %c0_10 = arith.constant 0 : index
    %c0_11 = arith.constant 0 : index
    %15 = vector.load %arg1[%c0_10, %c0_11] : memref<64x128xf32, #tpu.memory_space<vmem>>, vector<2x128xf32>
    %16 = vector.shape_cast %14 : vector<32x128xf32> to vector<2x16x128xf32>
    %17 = vector.shape_cast %15 : vector<2x128xf32> to vector<2x1x128xf32>
    %18 = vector.broadcast %17 : vector<2x1x128xf32> to vector<2x16x128xf32>
    %19 = arith.addf %16, %18 : vector<2x16x128xf32>
    %20 = vector.shape_cast %19 : vector<2x16x128xf32> to vector<32x128xf32>
    %21 = tpu.iota {dimensions = array<i32: 0>} : vector<16x16xi32>
    %22 = tpu.iota {dimensions = array<i32: 1>} : vector<16x16xi32>
    %23 = arith.cmpi sge, %21, %22 : vector<16x16xi32>
    %cst_12 = arith.constant 0.000000e+00 : f32
    %cst_13 = arith.constant -1.000000e+30 : f32
    %24 = vector.broadcast %cst_12 : f32 to vector<16x16xf32>
    %25 = vector.broadcast %cst_13 : f32 to vector<16x16xf32>
    %26 = arith.select %23, %24, %25 : vector<16x16xi1>, vector<16x16xf32>
    %c0_14 = arith.constant 0 : index
    %c0_15 = arith.constant 0 : index
    %c0_16 = arith.constant 0 : index
    %27 = vector.load %arg6[%c0_14, %c0_15, %c0_16] : memref<2x128x384xf32, #tpu.memory_space<vmem>>, vector<1x128x384xf32>
    %28 = vector.shape_cast %27 : vector<1x128x384xf32> to vector<128x384xf32>
    %cst_17 = arith.constant dense<0.000000e+00> : vector<32x384xf32>
    %29 = tpu.matmul %20, %28, %cst_17 {dimension_numbers = #tpu.dot_dimension_numbers<[1], [0], [0], [1], [0, 0, 1, 1], [], []>} : vector<32x128xf32>, vector<128x384xf32>, vector<32x384xf32> -> vector<32x384xf32>
    %c0_18 = arith.constant 0 : index
    %c0_19 = arith.constant 0 : index
    %c0_20 = arith.constant 0 : index
    %30 = vector.load %arg7[%c0_18, %c0_19, %c0_20] : memref<2x1x384xf32, #tpu.memory_space<vmem>>, vector<1x1x384xf32>
    %31 = vector.shape_cast %30 : vector<1x1x384xf32> to vector<1x384xf32>
    %32 = vector.broadcast %31 : vector<1x384xf32> to vector<32x384xf32>
    %33 = arith.addf %29, %32 : vector<32x384xf32>
    %34 = vector.extract_strided_slice %33 {offsets = [0, 0], sizes = [32, 128], strides = [1, 1]} : vector<32x384xf32> to vector<32x128xf32>
    %35 = vector.shape_cast %34 : vector<32x128xf32> to vector<2x16x128xf32>
    %36 = vector.extract_strided_slice %33 {offsets = [0, 128], sizes = [32, 128], strides = [1, 1]} : vector<32x384xf32> to vector<32x128xf32>
    %37 = vector.shape_cast %36 : vector<32x128xf32> to vector<2x16x128xf32>
    %38 = vector.extract_strided_slice %33 {offsets = [0, 256], sizes = [32, 128], strides = [1, 1]} : vector<32x384xf32> to vector<32x128xf32>
    %39 = vector.shape_cast %38 : vector<32x128xf32> to vector<2x16x128xf32>
    %40 = vector.extract_strided_slice %35 {offsets = [0, 0, 0], sizes = [2, 16, 32], strides = [1, 1, 1]} : vector<2x16x128xf32> to vector<2x16x32xf32>
    %41 = vector.extract_strided_slice %37 {offsets = [0, 0, 0], sizes = [2, 16, 32], strides = [1, 1, 1]} : vector<2x16x128xf32> to vector<2x16x32xf32>
    %42 = vector.extract_strided_slice %39 {offsets = [0, 0, 0], sizes = [2, 16, 32], strides = [1, 1, 1]} : vector<2x16x128xf32> to vector<2x16x32xf32>
    "tpu.trace_start"() <{level = 10 : i32, message = "bqd,bkd->bqk"}> : () -> ()
    %cst_21 = arith.constant dense<0.000000e+00> : vector<2x16x16xf32>
    %43 = tpu.matmul %40, %41, %cst_21 {dimension_numbers = #tpu.dot_dimension_numbers<[2], [2], [1], [1], [0, 0, 0, 1, 1, 1], [0], [0]>} : vector<2x16x32xf32>, vector<2x16x32xf32>, vector<2x16x16xf32> -> vector<2x16x16xf32>
    "tpu.trace_stop"() : () -> ()
    %cst_22 = arith.constant 0.176776692 : f32
    %44 = vector.broadcast %cst_22 : f32 to vector<2x16x16xf32>
    %45 = arith.mulf %43, %44 : vector<2x16x16xf32>
    %46 = vector.shape_cast %26 : vector<16x16xf32> to vector<1x16x16xf32>
    %47 = vector.broadcast %46 : vector<1x16x16xf32> to vector<2x16x16xf32>
    %48 = arith.addf %45, %47 : vector<2x16x16xf32>
    %cst_23 = arith.constant dense<0xFF800000> : vector<2x16xf32>
    %49 = vector.multi_reduction <maximumf>, %48, %cst_23 [2] : vector<2x16x16xf32> to vector<2x16xf32>
    %50 = vector.shape_cast %49 : vector<2x16xf32> to vector<2x16x1xf32>
    %51 = vector.broadcast %50 : vector<2x16x1xf32> to vector<2x16x16xf32>
    %52 = arith.subf %48, %51 : vector<2x16x16xf32>
    %53 = math.exp %52 : vector<2x16x16xf32>
    %cst_24 = arith.constant dense<0.000000e+00> : vector<2x16xf32>
    %54 = vector.multi_reduction <add>, %53, %cst_24 [2] : vector<2x16x16xf32> to vector<2x16xf32>
    %55 = vector.shape_cast %54 : vector<2x16xf32> to vector<2x16x1xf32>
    %56 = vector.broadcast %55 : vector<2x16x1xf32> to vector<2x16x16xf32>
    %57 = arith.divf %53, %56 : vector<2x16x16xf32>
    "tpu.trace_start"() <{level = 10 : i32, message = "bqk,bkd->bqd"}> : () -> ()
    %cst_25 = arith.constant dense<0.000000e+00> : vector<2x16x32xf32>
    %58 = tpu.matmul %57, %42, %cst_25 {dimension_numbers = #tpu.dot_dimension_numbers<[2], [1], [1], [2], [0, 0, 0, 1, 1, 2], [0], [0]>} : vector<2x16x16xf32>, vector<2x16x32xf32>, vector<2x16x32xf32> -> vector<2x16x32xf32>
    "tpu.trace_stop"() : () -> ()
    %59 = vector.extract_strided_slice %35 {offsets = [0, 0, 32], sizes = [2, 16, 32], strides = [1, 1, 1]} : vector<2x16x128xf32> to vector<2x16x32xf32>
    %60 = vector.extract_strided_slice %37 {offsets = [0, 0, 32], sizes = [2, 16, 32], strides = [1, 1, 1]} : vector<2x16x128xf32> to vector<2x16x32xf32>
    %61 = vector.extract_strided_slice %39 {offsets = [0, 0, 32], sizes = [2, 16, 32], strides = [1, 1, 1]} : vector<2x16x128xf32> to vector<2x16x32xf32>
    "tpu.trace_start"() <{level = 10 : i32, message = "bqd,bkd->bqk"}> : () -> ()
    %cst_26 = arith.constant dense<0.000000e+00> : vector<2x16x16xf32>
    %62 = tpu.matmul %59, %60, %cst_26 {dimension_numbers = #tpu.dot_dimension_numbers<[2], [2], [1], [1], [0, 0, 0, 1, 1, 1], [0], [0]>} : vector<2x16x32xf32>, vector<2x16x32xf32>, vector<2x16x16xf32> -> vector<2x16x16xf32>
    "tpu.trace_stop"() : () -> ()
    %cst_27 = arith.constant 0.176776692 : f32
    %63 = vector.broadcast %cst_27 : f32 to vector<2x16x16xf32>
    %64 = arith.mulf %62, %63 : vector<2x16x16xf32>
    %65 = vector.shape_cast %26 : vector<16x16xf32> to vector<1x16x16xf32>
    %66 = vector.broadcast %65 : vector<1x16x16xf32> to vector<2x16x16xf32>
    %67 = arith.addf %64, %66 : vector<2x16x16xf32>
    %cst_28 = arith.constant dense<0xFF800000> : vector<2x16xf32>
    %68 = vector.multi_reduction <maximumf>, %67, %cst_28 [2] : vector<2x16x16xf32> to vector<2x16xf32>
    %69 = vector.shape_cast %68 : vector<2x16xf32> to vector<2x16x1xf32>
    %70 = vector.broadcast %69 : vector<2x16x1xf32> to vector<2x16x16xf32>
    %71 = arith.subf %67, %70 : vector<2x16x16xf32>
    %72 = math.exp %71 : vector<2x16x16xf32>
    %cst_29 = arith.constant dense<0.000000e+00> : vector<2x16xf32>
    %73 = vector.multi_reduction <add>, %72, %cst_29 [2] : vector<2x16x16xf32> to vector<2x16xf32>
    %74 = vector.shape_cast %73 : vector<2x16xf32> to vector<2x16x1xf32>
    %75 = vector.broadcast %74 : vector<2x16x1xf32> to vector<2x16x16xf32>
    %76 = arith.divf %72, %75 : vector<2x16x16xf32>
    "tpu.trace_start"() <{level = 10 : i32, message = "bqk,bkd->bqd"}> : () -> ()
    %cst_30 = arith.constant dense<0.000000e+00> : vector<2x16x32xf32>
    %77 = tpu.matmul %76, %61, %cst_30 {dimension_numbers = #tpu.dot_dimension_numbers<[2], [1], [1], [2], [0, 0, 0, 1, 1, 2], [0], [0]>} : vector<2x16x16xf32>, vector<2x16x32xf32>, vector<2x16x32xf32> -> vector<2x16x32xf32>
    "tpu.trace_stop"() : () -> ()
    %78 = vector.extract_strided_slice %35 {offsets = [0, 0, 64], sizes = [2, 16, 32], strides = [1, 1, 1]} : vector<2x16x128xf32> to vector<2x16x32xf32>
    %79 = vector.extract_strided_slice %37 {offsets = [0, 0, 64], sizes = [2, 16, 32], strides = [1, 1, 1]} : vector<2x16x128xf32> to vector<2x16x32xf32>
    %80 = vector.extract_strided_slice %39 {offsets = [0, 0, 64], sizes = [2, 16, 32], strides = [1, 1, 1]} : vector<2x16x128xf32> to vector<2x16x32xf32>
    "tpu.trace_start"() <{level = 10 : i32, message = "bqd,bkd->bqk"}> : () -> ()
    %cst_31 = arith.constant dense<0.000000e+00> : vector<2x16x16xf32>
    %81 = tpu.matmul %78, %79, %cst_31 {dimension_numbers = #tpu.dot_dimension_numbers<[2], [2], [1], [1], [0, 0, 0, 1, 1, 1], [0], [0]>} : vector<2x16x32xf32>, vector<2x16x32xf32>, vector<2x16x16xf32> -> vector<2x16x16xf32>
    "tpu.trace_stop"() : () -> ()
    %cst_32 = arith.constant 0.176776692 : f32
    %82 = vector.broadcast %cst_32 : f32 to vector<2x16x16xf32>
    %83 = arith.mulf %81, %82 : vector<2x16x16xf32>
    %84 = vector.shape_cast %26 : vector<16x16xf32> to vector<1x16x16xf32>
    %85 = vector.broadcast %84 : vector<1x16x16xf32> to vector<2x16x16xf32>
    %86 = arith.addf %83, %85 : vector<2x16x16xf32>
    %cst_33 = arith.constant dense<0xFF800000> : vector<2x16xf32>
    %87 = vector.multi_reduction <maximumf>, %86, %cst_33 [2] : vector<2x16x16xf32> to vector<2x16xf32>
    %88 = vector.shape_cast %87 : vector<2x16xf32> to vector<2x16x1xf32>
    %89 = vector.broadcast %88 : vector<2x16x1xf32> to vector<2x16x16xf32>
    %90 = arith.subf %86, %89 : vector<2x16x16xf32>
    %91 = math.exp %90 : vector<2x16x16xf32>
    %cst_34 = arith.constant dense<0.000000e+00> : vector<2x16xf32>
    %92 = vector.multi_reduction <add>, %91, %cst_34 [2] : vector<2x16x16xf32> to vector<2x16xf32>
    %93 = vector.shape_cast %92 : vector<2x16xf32> to vector<2x16x1xf32>
    %94 = vector.broadcast %93 : vector<2x16x1xf32> to vector<2x16x16xf32>
    %95 = arith.divf %91, %94 : vector<2x16x16xf32>
    "tpu.trace_start"() <{level = 10 : i32, message = "bqk,bkd->bqd"}> : () -> ()
    %cst_35 = arith.constant dense<0.000000e+00> : vector<2x16x32xf32>
    %96 = tpu.matmul %95, %80, %cst_35 {dimension_numbers = #tpu.dot_dimension_numbers<[2], [1], [1], [2], [0, 0, 0, 1, 1, 2], [0], [0]>} : vector<2x16x16xf32>, vector<2x16x32xf32>, vector<2x16x32xf32> -> vector<2x16x32xf32>
    "tpu.trace_stop"() : () -> ()
    %97 = vector.extract_strided_slice %35 {offsets = [0, 0, 96], sizes = [2, 16, 32], strides = [1, 1, 1]} : vector<2x16x128xf32> to vector<2x16x32xf32>
    %98 = vector.extract_strided_slice %37 {offsets = [0, 0, 96], sizes = [2, 16, 32], strides = [1, 1, 1]} : vector<2x16x128xf32> to vector<2x16x32xf32>
    %99 = vector.extract_strided_slice %39 {offsets = [0, 0, 96], sizes = [2, 16, 32], strides = [1, 1, 1]} : vector<2x16x128xf32> to vector<2x16x32xf32>
    "tpu.trace_start"() <{level = 10 : i32, message = "bqd,bkd->bqk"}> : () -> ()
    %cst_36 = arith.constant dense<0.000000e+00> : vector<2x16x16xf32>
    %100 = tpu.matmul %97, %98, %cst_36 {dimension_numbers = #tpu.dot_dimension_numbers<[2], [2], [1], [1], [0, 0, 0, 1, 1, 1], [0], [0]>} : vector<2x16x32xf32>, vector<2x16x32xf32>, vector<2x16x16xf32> -> vector<2x16x16xf32>
    "tpu.trace_stop"() : () -> ()
    %cst_37 = arith.constant 0.176776692 : f32
    %101 = vector.broadcast %cst_37 : f32 to vector<2x16x16xf32>
    %102 = arith.mulf %100, %101 : vector<2x16x16xf32>
    %103 = vector.shape_cast %26 : vector<16x16xf32> to vector<1x16x16xf32>
    %104 = vector.broadcast %103 : vector<1x16x16xf32> to vector<2x16x16xf32>
    %105 = arith.addf %102, %104 : vector<2x16x16xf32>
    %cst_38 = arith.constant dense<0xFF800000> : vector<2x16xf32>
    %106 = vector.multi_reduction <maximumf>, %105, %cst_38 [2] : vector<2x16x16xf32> to vector<2x16xf32>
    %107 = vector.shape_cast %106 : vector<2x16xf32> to vector<2x16x1xf32>
    %108 = vector.broadcast %107 : vector<2x16x1xf32> to vector<2x16x16xf32>
    %109 = arith.subf %105, %108 : vector<2x16x16xf32>
    %110 = math.exp %109 : vector<2x16x16xf32>
    %cst_39 = arith.constant dense<0.000000e+00> : vector<2x16xf32>
    %111 = vector.multi_reduction <add>, %110, %cst_39 [2] : vector<2x16x16xf32> to vector<2x16xf32>
    %112 = vector.shape_cast %111 : vector<2x16xf32> to vector<2x16x1xf32>
    %113 = vector.broadcast %112 : vector<2x16x1xf32> to vector<2x16x16xf32>
    %114 = arith.divf %110, %113 : vector<2x16x16xf32>
    "tpu.trace_start"() <{level = 10 : i32, message = "bqk,bkd->bqd"}> : () -> ()
    %cst_40 = arith.constant dense<0.000000e+00> : vector<2x16x32xf32>
    %115 = tpu.matmul %114, %99, %cst_40 {dimension_numbers = #tpu.dot_dimension_numbers<[2], [1], [1], [2], [0, 0, 0, 1, 1, 2], [0], [0]>} : vector<2x16x16xf32>, vector<2x16x32xf32>, vector<2x16x32xf32> -> vector<2x16x32xf32>
    "tpu.trace_stop"() : () -> ()
    %116 = tpu.concatenate %58, %77, %96, %115 in 2 : vector<2x16x32xf32>, vector<2x16x32xf32>, vector<2x16x32xf32>, vector<2x16x32xf32> -> vector<2x16x128xf32>
    %117 = vector.shape_cast %116 : vector<2x16x128xf32> to vector<32x128xf32>
    %c0_41 = arith.constant 0 : index
    %c0_42 = arith.constant 0 : index
    %c0_43 = arith.constant 0 : index
    %118 = vector.load %arg8[%c0_41, %c0_42, %c0_43] : memref<2x128x128xf32, #tpu.memory_space<vmem>>, vector<1x128x128xf32>
    %119 = vector.shape_cast %118 : vector<1x128x128xf32> to vector<128x128xf32>
    %cst_44 = arith.constant dense<0.000000e+00> : vector<32x128xf32>
    %120 = tpu.matmul %117, %119, %cst_44 {dimension_numbers = #tpu.dot_dimension_numbers<[1], [0], [0], [1], [0, 0, 1, 1], [], []>} : vector<32x128xf32>, vector<128x128xf32>, vector<32x128xf32> -> vector<32x128xf32>
    %c0_45 = arith.constant 0 : index
    %c0_46 = arith.constant 0 : index
    %c0_47 = arith.constant 0 : index
    %121 = vector.load %arg9[%c0_45, %c0_46, %c0_47] : memref<2x1x128xf32, #tpu.memory_space<vmem>>, vector<1x1x128xf32>
    %122 = vector.shape_cast %121 : vector<1x1x128xf32> to vector<1x128xf32>
    %123 = vector.broadcast %122 : vector<1x128xf32> to vector<32x128xf32>
    %124 = arith.addf %120, %123 : vector<32x128xf32>
    %125 = arith.addf %20, %124 : vector<32x128xf32>
    %c0_48 = arith.constant 0 : index
    %c0_49 = arith.constant 0 : index
    %c0_50 = arith.constant 0 : index
    %126 = vector.load %arg10[%c0_48, %c0_49, %c0_50] : memref<2x1x128xf32, #tpu.memory_space<vmem>>, vector<1x1x128xf32>
    %127 = vector.shape_cast %126 : vector<1x1x128xf32> to vector<1x128xf32>
    %c0_51 = arith.constant 0 : index
    %c0_52 = arith.constant 0 : index
    %c0_53 = arith.constant 0 : index
    %128 = vector.load %arg11[%c0_51, %c0_52, %c0_53] : memref<2x1x128xf32, #tpu.memory_space<vmem>>, vector<1x1x128xf32>
    %129 = vector.shape_cast %128 : vector<1x1x128xf32> to vector<1x128xf32>
    %cst_54 = arith.constant dense<0.000000e+00> : vector<32xf32>
    %130 = vector.multi_reduction <add>, %125, %cst_54 [1] : vector<32x128xf32> to vector<32xf32>
    %131 = vector.shape_cast %130 : vector<32xf32> to vector<32x1xf32>
    %cst_55 = arith.constant 1.280000e+02 : f32
    %132 = vector.broadcast %cst_55 : f32 to vector<32x1xf32>
    %133 = arith.divf %131, %132 : vector<32x1xf32>
    %134 = vector.broadcast %133 : vector<32x1xf32> to vector<32x128xf32>
    %135 = arith.subf %125, %134 : vector<32x128xf32>
    %136 = arith.mulf %135, %135 : vector<32x128xf32>
    %cst_56 = arith.constant dense<0.000000e+00> : vector<32xf32>
    %137 = vector.multi_reduction <add>, %136, %cst_56 [1] : vector<32x128xf32> to vector<32xf32>
    %138 = vector.shape_cast %137 : vector<32xf32> to vector<32x1xf32>
    %cst_57 = arith.constant 1.280000e+02 : f32
    %139 = vector.broadcast %cst_57 : f32 to vector<32x1xf32>
    %140 = arith.divf %138, %139 : vector<32x1xf32>
    %cst_58 = arith.constant 9.99999974E-6 : f32
    %141 = vector.broadcast %cst_58 : f32 to vector<32x1xf32>
    %142 = arith.addf %140, %141 : vector<32x1xf32>
    %143 = math.rsqrt %142 : vector<32x1xf32>
    %144 = vector.broadcast %143 : vector<32x1xf32> to vector<32x128xf32>
    %145 = arith.mulf %135, %144 : vector<32x128xf32>
    %146 = vector.broadcast %127 : vector<1x128xf32> to vector<32x128xf32>
    %147 = arith.mulf %145, %146 : vector<32x128xf32>
    %148 = vector.broadcast %129 : vector<1x128xf32> to vector<32x128xf32>
    %149 = arith.addf %147, %148 : vector<32x128xf32>
    %c0_59 = arith.constant 0 : index
    %c0_60 = arith.constant 0 : index
    %c0_61 = arith.constant 0 : index
    %150 = vector.load %arg12[%c0_59, %c0_60, %c0_61] : memref<2x128x256xf32, #tpu.memory_space<vmem>>, vector<1x128x256xf32>
    %151 = vector.shape_cast %150 : vector<1x128x256xf32> to vector<128x256xf32>
    %cst_62 = arith.constant dense<0.000000e+00> : vector<32x256xf32>
    %152 = tpu.matmul %149, %151, %cst_62 {dimension_numbers = #tpu.dot_dimension_numbers<[1], [0], [0], [1], [0, 0, 1, 1], [], []>} : vector<32x128xf32>, vector<128x256xf32>, vector<32x256xf32> -> vector<32x256xf32>
    %c0_63 = arith.constant 0 : index
    %c0_64 = arith.constant 0 : index
    %c0_65 = arith.constant 0 : index
    %153 = vector.load %arg13[%c0_63, %c0_64, %c0_65] : memref<2x1x256xf32, #tpu.memory_space<vmem>>, vector<1x1x256xf32>
    %154 = vector.shape_cast %153 : vector<1x1x256xf32> to vector<1x256xf32>
    %155 = vector.broadcast %154 : vector<1x256xf32> to vector<32x256xf32>
    %156 = arith.addf %152, %155 : vector<32x256xf32>
    %cst_66 = arith.constant 0.000000e+00 : f32
    %157 = vector.broadcast %cst_66 : f32 to vector<32x256xf32>
    %158 = arith.maximumf %156, %157 : vector<32x256xf32>
    %c0_67 = arith.constant 0 : index
    %c0_68 = arith.constant 0 : index
    %c0_69 = arith.constant 0 : index
    %159 = vector.load %arg14[%c0_67, %c0_68, %c0_69] : memref<2x256x128xf32, #tpu.memory_space<vmem>>, vector<1x256x128xf32>
    %160 = vector.shape_cast %159 : vector<1x256x128xf32> to vector<256x128xf32>
    %cst_70 = arith.constant dense<0.000000e+00> : vector<32x128xf32>
    %161 = tpu.matmul %158, %160, %cst_70 {dimension_numbers = #tpu.dot_dimension_numbers<[1], [0], [0], [1], [0, 0, 1, 1], [], []>} : vector<32x256xf32>, vector<256x128xf32>, vector<32x128xf32> -> vector<32x128xf32>
    %c0_71 = arith.constant 0 : index
    %c0_72 = arith.constant 0 : index
    %c0_73 = arith.constant 0 : index
    %162 = vector.load %arg15[%c0_71, %c0_72, %c0_73] : memref<2x1x128xf32, #tpu.memory_space<vmem>>, vector<1x1x128xf32>
    %163 = vector.shape_cast %162 : vector<1x1x128xf32> to vector<1x128xf32>
    %164 = vector.broadcast %163 : vector<1x128xf32> to vector<32x128xf32>
    %165 = arith.addf %161, %164 : vector<32x128xf32>
    %166 = arith.addf %149, %165 : vector<32x128xf32>
    %c0_74 = arith.constant 0 : index
    %c0_75 = arith.constant 0 : index
    %c0_76 = arith.constant 0 : index
    %167 = vector.load %arg16[%c0_74, %c0_75, %c0_76] : memref<2x1x128xf32, #tpu.memory_space<vmem>>, vector<1x1x128xf32>
    %168 = vector.shape_cast %167 : vector<1x1x128xf32> to vector<1x128xf32>
    %c0_77 = arith.constant 0 : index
    %c0_78 = arith.constant 0 : index
    %c0_79 = arith.constant 0 : index
    %169 = vector.load %arg17[%c0_77, %c0_78, %c0_79] : memref<2x1x128xf32, #tpu.memory_space<vmem>>, vector<1x1x128xf32>
    %170 = vector.shape_cast %169 : vector<1x1x128xf32> to vector<1x128xf32>
    %cst_80 = arith.constant dense<0.000000e+00> : vector<32xf32>
    %171 = vector.multi_reduction <add>, %166, %cst_80 [1] : vector<32x128xf32> to vector<32xf32>
    %172 = vector.shape_cast %171 : vector<32xf32> to vector<32x1xf32>
    %cst_81 = arith.constant 1.280000e+02 : f32
    %173 = vector.broadcast %cst_81 : f32 to vector<32x1xf32>
    %174 = arith.divf %172, %173 : vector<32x1xf32>
    %175 = vector.broadcast %174 : vector<32x1xf32> to vector<32x128xf32>
    %176 = arith.subf %166, %175 : vector<32x128xf32>
    %177 = arith.mulf %176, %176 : vector<32x128xf32>
    %cst_82 = arith.constant dense<0.000000e+00> : vector<32xf32>
    %178 = vector.multi_reduction <add>, %177, %cst_82 [1] : vector<32x128xf32> to vector<32xf32>
    %179 = vector.shape_cast %178 : vector<32xf32> to vector<32x1xf32>
    %cst_83 = arith.constant 1.280000e+02 : f32
    %180 = vector.broadcast %cst_83 : f32 to vector<32x1xf32>
    %181 = arith.divf %179, %180 : vector<32x1xf32>
    %cst_84 = arith.constant 9.99999974E-6 : f32
    %182 = vector.broadcast %cst_84 : f32 to vector<32x1xf32>
    %183 = arith.addf %181, %182 : vector<32x1xf32>
    %184 = math.rsqrt %183 : vector<32x1xf32>
    %185 = vector.broadcast %184 : vector<32x1xf32> to vector<32x128xf32>
    %186 = arith.mulf %176, %185 : vector<32x128xf32>
    %187 = vector.broadcast %168 : vector<1x128xf32> to vector<32x128xf32>
    %188 = arith.mulf %186, %187 : vector<32x128xf32>
    %189 = vector.broadcast %170 : vector<1x128xf32> to vector<32x128xf32>
    %190 = arith.addf %188, %189 : vector<32x128xf32>
    %c1 = arith.constant 1 : index
    %c0_85 = arith.constant 0 : index
    %c0_86 = arith.constant 0 : index
    %191 = vector.load %arg6[%c1, %c0_85, %c0_86] : memref<2x128x384xf32, #tpu.memory_space<vmem>>, vector<1x128x384xf32>
    %192 = vector.shape_cast %191 : vector<1x128x384xf32> to vector<128x384xf32>
    %cst_87 = arith.constant dense<0.000000e+00> : vector<32x384xf32>
    %193 = tpu.matmul %190, %192, %cst_87 {dimension_numbers = #tpu.dot_dimension_numbers<[1], [0], [0], [1], [0, 0, 1, 1], [], []>} : vector<32x128xf32>, vector<128x384xf32>, vector<32x384xf32> -> vector<32x384xf32>
    %c1_88 = arith.constant 1 : index
    %c0_89 = arith.constant 0 : index
    %c0_90 = arith.constant 0 : index
    %194 = vector.load %arg7[%c1_88, %c0_89, %c0_90] : memref<2x1x384xf32, #tpu.memory_space<vmem>>, vector<1x1x384xf32>
    %195 = vector.shape_cast %194 : vector<1x1x384xf32> to vector<1x384xf32>
    %196 = vector.broadcast %195 : vector<1x384xf32> to vector<32x384xf32>
    %197 = arith.addf %193, %196 : vector<32x384xf32>
    %198 = vector.extract_strided_slice %197 {offsets = [0, 0], sizes = [32, 128], strides = [1, 1]} : vector<32x384xf32> to vector<32x128xf32>
    %199 = vector.shape_cast %198 : vector<32x128xf32> to vector<2x16x128xf32>
    %200 = vector.extract_strided_slice %197 {offsets = [0, 128], sizes = [32, 128], strides = [1, 1]} : vector<32x384xf32> to vector<32x128xf32>
    %201 = vector.shape_cast %200 : vector<32x128xf32> to vector<2x16x128xf32>
    %202 = vector.extract_strided_slice %197 {offsets = [0, 256], sizes = [32, 128], strides = [1, 1]} : vector<32x384xf32> to vector<32x128xf32>
    %203 = vector.shape_cast %202 : vector<32x128xf32> to vector<2x16x128xf32>
    %204 = vector.extract_strided_slice %199 {offsets = [0, 0, 0], sizes = [2, 16, 32], strides = [1, 1, 1]} : vector<2x16x128xf32> to vector<2x16x32xf32>
    %205 = vector.extract_strided_slice %201 {offsets = [0, 0, 0], sizes = [2, 16, 32], strides = [1, 1, 1]} : vector<2x16x128xf32> to vector<2x16x32xf32>
    %206 = vector.extract_strided_slice %203 {offsets = [0, 0, 0], sizes = [2, 16, 32], strides = [1, 1, 1]} : vector<2x16x128xf32> to vector<2x16x32xf32>
    "tpu.trace_start"() <{level = 10 : i32, message = "bqd,bkd->bqk"}> : () -> ()
    %cst_91 = arith.constant dense<0.000000e+00> : vector<2x16x16xf32>
    %207 = tpu.matmul %204, %205, %cst_91 {dimension_numbers = #tpu.dot_dimension_numbers<[2], [2], [1], [1], [0, 0, 0, 1, 1, 1], [0], [0]>} : vector<2x16x32xf32>, vector<2x16x32xf32>, vector<2x16x16xf32> -> vector<2x16x16xf32>
    "tpu.trace_stop"() : () -> ()
    %cst_92 = arith.constant 0.176776692 : f32
    %208 = vector.broadcast %cst_92 : f32 to vector<2x16x16xf32>
    %209 = arith.mulf %207, %208 : vector<2x16x16xf32>
    %210 = vector.shape_cast %26 : vector<16x16xf32> to vector<1x16x16xf32>
    %211 = vector.broadcast %210 : vector<1x16x16xf32> to vector<2x16x16xf32>
    %212 = arith.addf %209, %211 : vector<2x16x16xf32>
    %cst_93 = arith.constant dense<0xFF800000> : vector<2x16xf32>
    %213 = vector.multi_reduction <maximumf>, %212, %cst_93 [2] : vector<2x16x16xf32> to vector<2x16xf32>
    %214 = vector.shape_cast %213 : vector<2x16xf32> to vector<2x16x1xf32>
    %215 = vector.broadcast %214 : vector<2x16x1xf32> to vector<2x16x16xf32>
    %216 = arith.subf %212, %215 : vector<2x16x16xf32>
    %217 = math.exp %216 : vector<2x16x16xf32>
    %cst_94 = arith.constant dense<0.000000e+00> : vector<2x16xf32>
    %218 = vector.multi_reduction <add>, %217, %cst_94 [2] : vector<2x16x16xf32> to vector<2x16xf32>
    %219 = vector.shape_cast %218 : vector<2x16xf32> to vector<2x16x1xf32>
    %220 = vector.broadcast %219 : vector<2x16x1xf32> to vector<2x16x16xf32>
    %221 = arith.divf %217, %220 : vector<2x16x16xf32>
    "tpu.trace_start"() <{level = 10 : i32, message = "bqk,bkd->bqd"}> : () -> ()
    %cst_95 = arith.constant dense<0.000000e+00> : vector<2x16x32xf32>
    %222 = tpu.matmul %221, %206, %cst_95 {dimension_numbers = #tpu.dot_dimension_numbers<[2], [1], [1], [2], [0, 0, 0, 1, 1, 2], [0], [0]>} : vector<2x16x16xf32>, vector<2x16x32xf32>, vector<2x16x32xf32> -> vector<2x16x32xf32>
    "tpu.trace_stop"() : () -> ()
    %223 = vector.extract_strided_slice %199 {offsets = [0, 0, 32], sizes = [2, 16, 32], strides = [1, 1, 1]} : vector<2x16x128xf32> to vector<2x16x32xf32>
    %224 = vector.extract_strided_slice %201 {offsets = [0, 0, 32], sizes = [2, 16, 32], strides = [1, 1, 1]} : vector<2x16x128xf32> to vector<2x16x32xf32>
    %225 = vector.extract_strided_slice %203 {offsets = [0, 0, 32], sizes = [2, 16, 32], strides = [1, 1, 1]} : vector<2x16x128xf32> to vector<2x16x32xf32>
    "tpu.trace_start"() <{level = 10 : i32, message = "bqd,bkd->bqk"}> : () -> ()
    %cst_96 = arith.constant dense<0.000000e+00> : vector<2x16x16xf32>
    %226 = tpu.matmul %223, %224, %cst_96 {dimension_numbers = #tpu.dot_dimension_numbers<[2], [2], [1], [1], [0, 0, 0, 1, 1, 1], [0], [0]>} : vector<2x16x32xf32>, vector<2x16x32xf32>, vector<2x16x16xf32> -> vector<2x16x16xf32>
    "tpu.trace_stop"() : () -> ()
    %cst_97 = arith.constant 0.176776692 : f32
    %227 = vector.broadcast %cst_97 : f32 to vector<2x16x16xf32>
    %228 = arith.mulf %226, %227 : vector<2x16x16xf32>
    %229 = vector.shape_cast %26 : vector<16x16xf32> to vector<1x16x16xf32>
    %230 = vector.broadcast %229 : vector<1x16x16xf32> to vector<2x16x16xf32>
    %231 = arith.addf %228, %230 : vector<2x16x16xf32>
    %cst_98 = arith.constant dense<0xFF800000> : vector<2x16xf32>
    %232 = vector.multi_reduction <maximumf>, %231, %cst_98 [2] : vector<2x16x16xf32> to vector<2x16xf32>
    %233 = vector.shape_cast %232 : vector<2x16xf32> to vector<2x16x1xf32>
    %234 = vector.broadcast %233 : vector<2x16x1xf32> to vector<2x16x16xf32>
    %235 = arith.subf %231, %234 : vector<2x16x16xf32>
    %236 = math.exp %235 : vector<2x16x16xf32>
    %cst_99 = arith.constant dense<0.000000e+00> : vector<2x16xf32>
    %237 = vector.multi_reduction <add>, %236, %cst_99 [2] : vector<2x16x16xf32> to vector<2x16xf32>
    %238 = vector.shape_cast %237 : vector<2x16xf32> to vector<2x16x1xf32>
    %239 = vector.broadcast %238 : vector<2x16x1xf32> to vector<2x16x16xf32>
    %240 = arith.divf %236, %239 : vector<2x16x16xf32>
    "tpu.trace_start"() <{level = 10 : i32, message = "bqk,bkd->bqd"}> : () -> ()
    %cst_100 = arith.constant dense<0.000000e+00> : vector<2x16x32xf32>
    %241 = tpu.matmul %240, %225, %cst_100 {dimension_numbers = #tpu.dot_dimension_numbers<[2], [1], [1], [2], [0, 0, 0, 1, 1, 2], [0], [0]>} : vector<2x16x16xf32>, vector<2x16x32xf32>, vector<2x16x32xf32> -> vector<2x16x32xf32>
    "tpu.trace_stop"() : () -> ()
    %242 = vector.extract_strided_slice %199 {offsets = [0, 0, 64], sizes = [2, 16, 32], strides = [1, 1, 1]} : vector<2x16x128xf32> to vector<2x16x32xf32>
    %243 = vector.extract_strided_slice %201 {offsets = [0, 0, 64], sizes = [2, 16, 32], strides = [1, 1, 1]} : vector<2x16x128xf32> to vector<2x16x32xf32>
    %244 = vector.extract_strided_slice %203 {offsets = [0, 0, 64], sizes = [2, 16, 32], strides = [1, 1, 1]} : vector<2x16x128xf32> to vector<2x16x32xf32>
    "tpu.trace_start"() <{level = 10 : i32, message = "bqd,bkd->bqk"}> : () -> ()
    %cst_101 = arith.constant dense<0.000000e+00> : vector<2x16x16xf32>
    %245 = tpu.matmul %242, %243, %cst_101 {dimension_numbers = #tpu.dot_dimension_numbers<[2], [2], [1], [1], [0, 0, 0, 1, 1, 1], [0], [0]>} : vector<2x16x32xf32>, vector<2x16x32xf32>, vector<2x16x16xf32> -> vector<2x16x16xf32>
    "tpu.trace_stop"() : () -> ()
    %cst_102 = arith.constant 0.176776692 : f32
    %246 = vector.broadcast %cst_102 : f32 to vector<2x16x16xf32>
    %247 = arith.mulf %245, %246 : vector<2x16x16xf32>
    %248 = vector.shape_cast %26 : vector<16x16xf32> to vector<1x16x16xf32>
    %249 = vector.broadcast %248 : vector<1x16x16xf32> to vector<2x16x16xf32>
    %250 = arith.addf %247, %249 : vector<2x16x16xf32>
    %cst_103 = arith.constant dense<0xFF800000> : vector<2x16xf32>
    %251 = vector.multi_reduction <maximumf>, %250, %cst_103 [2] : vector<2x16x16xf32> to vector<2x16xf32>
    %252 = vector.shape_cast %251 : vector<2x16xf32> to vector<2x16x1xf32>
    %253 = vector.broadcast %252 : vector<2x16x1xf32> to vector<2x16x16xf32>
    %254 = arith.subf %250, %253 : vector<2x16x16xf32>
    %255 = math.exp %254 : vector<2x16x16xf32>
    %cst_104 = arith.constant dense<0.000000e+00> : vector<2x16xf32>
    %256 = vector.multi_reduction <add>, %255, %cst_104 [2] : vector<2x16x16xf32> to vector<2x16xf32>
    %257 = vector.shape_cast %256 : vector<2x16xf32> to vector<2x16x1xf32>
    %258 = vector.broadcast %257 : vector<2x16x1xf32> to vector<2x16x16xf32>
    %259 = arith.divf %255, %258 : vector<2x16x16xf32>
    "tpu.trace_start"() <{level = 10 : i32, message = "bqk,bkd->bqd"}> : () -> ()
    %cst_105 = arith.constant dense<0.000000e+00> : vector<2x16x32xf32>
    %260 = tpu.matmul %259, %244, %cst_105 {dimension_numbers = #tpu.dot_dimension_numbers<[2], [1], [1], [2], [0, 0, 0, 1, 1, 2], [0], [0]>} : vector<2x16x16xf32>, vector<2x16x32xf32>, vector<2x16x32xf32> -> vector<2x16x32xf32>
    "tpu.trace_stop"() : () -> ()
    %261 = vector.extract_strided_slice %199 {offsets = [0, 0, 96], sizes = [2, 16, 32], strides = [1, 1, 1]} : vector<2x16x128xf32> to vector<2x16x32xf32>
    %262 = vector.extract_strided_slice %201 {offsets = [0, 0, 96], sizes = [2, 16, 32], strides = [1, 1, 1]} : vector<2x16x128xf32> to vector<2x16x32xf32>
    %263 = vector.extract_strided_slice %203 {offsets = [0, 0, 96], sizes = [2, 16, 32], strides = [1, 1, 1]} : vector<2x16x128xf32> to vector<2x16x32xf32>
    "tpu.trace_start"() <{level = 10 : i32, message = "bqd,bkd->bqk"}> : () -> ()
    %cst_106 = arith.constant dense<0.000000e+00> : vector<2x16x16xf32>
    %264 = tpu.matmul %261, %262, %cst_106 {dimension_numbers = #tpu.dot_dimension_numbers<[2], [2], [1], [1], [0, 0, 0, 1, 1, 1], [0], [0]>} : vector<2x16x32xf32>, vector<2x16x32xf32>, vector<2x16x16xf32> -> vector<2x16x16xf32>
    "tpu.trace_stop"() : () -> ()
    %cst_107 = arith.constant 0.176776692 : f32
    %265 = vector.broadcast %cst_107 : f32 to vector<2x16x16xf32>
    %266 = arith.mulf %264, %265 : vector<2x16x16xf32>
    %267 = vector.shape_cast %26 : vector<16x16xf32> to vector<1x16x16xf32>
    %268 = vector.broadcast %267 : vector<1x16x16xf32> to vector<2x16x16xf32>
    %269 = arith.addf %266, %268 : vector<2x16x16xf32>
    %cst_108 = arith.constant dense<0xFF800000> : vector<2x16xf32>
    %270 = vector.multi_reduction <maximumf>, %269, %cst_108 [2] : vector<2x16x16xf32> to vector<2x16xf32>
    %271 = vector.shape_cast %270 : vector<2x16xf32> to vector<2x16x1xf32>
    %272 = vector.broadcast %271 : vector<2x16x1xf32> to vector<2x16x16xf32>
    %273 = arith.subf %269, %272 : vector<2x16x16xf32>
    %274 = math.exp %273 : vector<2x16x16xf32>
    %cst_109 = arith.constant dense<0.000000e+00> : vector<2x16xf32>
    %275 = vector.multi_reduction <add>, %274, %cst_109 [2] : vector<2x16x16xf32> to vector<2x16xf32>
    %276 = vector.shape_cast %275 : vector<2x16xf32> to vector<2x16x1xf32>
    %277 = vector.broadcast %276 : vector<2x16x1xf32> to vector<2x16x16xf32>
    %278 = arith.divf %274, %277 : vector<2x16x16xf32>
    "tpu.trace_start"() <{level = 10 : i32, message = "bqk,bkd->bqd"}> : () -> ()
    %cst_110 = arith.constant dense<0.000000e+00> : vector<2x16x32xf32>
    %279 = tpu.matmul %278, %263, %cst_110 {dimension_numbers = #tpu.dot_dimension_numbers<[2], [1], [1], [2], [0, 0, 0, 1, 1, 2], [0], [0]>} : vector<2x16x16xf32>, vector<2x16x32xf32>, vector<2x16x32xf32> -> vector<2x16x32xf32>
    "tpu.trace_stop"() : () -> ()
    %280 = tpu.concatenate %222, %241, %260, %279 in 2 : vector<2x16x32xf32>, vector<2x16x32xf32>, vector<2x16x32xf32>, vector<2x16x32xf32> -> vector<2x16x128xf32>
    %281 = vector.shape_cast %280 : vector<2x16x128xf32> to vector<32x128xf32>
    %c1_111 = arith.constant 1 : index
    %c0_112 = arith.constant 0 : index
    %c0_113 = arith.constant 0 : index
    %282 = vector.load %arg8[%c1_111, %c0_112, %c0_113] : memref<2x128x128xf32, #tpu.memory_space<vmem>>, vector<1x128x128xf32>
    %283 = vector.shape_cast %282 : vector<1x128x128xf32> to vector<128x128xf32>
    %cst_114 = arith.constant dense<0.000000e+00> : vector<32x128xf32>
    %284 = tpu.matmul %281, %283, %cst_114 {dimension_numbers = #tpu.dot_dimension_numbers<[1], [0], [0], [1], [0, 0, 1, 1], [], []>} : vector<32x128xf32>, vector<128x128xf32>, vector<32x128xf32> -> vector<32x128xf32>
    %c1_115 = arith.constant 1 : index
    %c0_116 = arith.constant 0 : index
    %c0_117 = arith.constant 0 : index
    %285 = vector.load %arg9[%c1_115, %c0_116, %c0_117] : memref<2x1x128xf32, #tpu.memory_space<vmem>>, vector<1x1x128xf32>
    %286 = vector.shape_cast %285 : vector<1x1x128xf32> to vector<1x128xf32>
    %287 = vector.broadcast %286 : vector<1x128xf32> to vector<32x128xf32>
    %288 = arith.addf %284, %287 : vector<32x128xf32>
    %289 = arith.addf %190, %288 : vector<32x128xf32>
    %c1_118 = arith.constant 1 : index
    %c0_119 = arith.constant 0 : index
    %c0_120 = arith.constant 0 : index
    %290 = vector.load %arg10[%c1_118, %c0_119, %c0_120] : memref<2x1x128xf32, #tpu.memory_space<vmem>>, vector<1x1x128xf32>
    %291 = vector.shape_cast %290 : vector<1x1x128xf32> to vector<1x128xf32>
    %c1_121 = arith.constant 1 : index
    %c0_122 = arith.constant 0 : index
    %c0_123 = arith.constant 0 : index
    %292 = vector.load %arg11[%c1_121, %c0_122, %c0_123] : memref<2x1x128xf32, #tpu.memory_space<vmem>>, vector<1x1x128xf32>
    %293 = vector.shape_cast %292 : vector<1x1x128xf32> to vector<1x128xf32>
    %cst_124 = arith.constant dense<0.000000e+00> : vector<32xf32>
    %294 = vector.multi_reduction <add>, %289, %cst_124 [1] : vector<32x128xf32> to vector<32xf32>
    %295 = vector.shape_cast %294 : vector<32xf32> to vector<32x1xf32>
    %cst_125 = arith.constant 1.280000e+02 : f32
    %296 = vector.broadcast %cst_125 : f32 to vector<32x1xf32>
    %297 = arith.divf %295, %296 : vector<32x1xf32>
    %298 = vector.broadcast %297 : vector<32x1xf32> to vector<32x128xf32>
    %299 = arith.subf %289, %298 : vector<32x128xf32>
    %300 = arith.mulf %299, %299 : vector<32x128xf32>
    %cst_126 = arith.constant dense<0.000000e+00> : vector<32xf32>
    %301 = vector.multi_reduction <add>, %300, %cst_126 [1] : vector<32x128xf32> to vector<32xf32>
    %302 = vector.shape_cast %301 : vector<32xf32> to vector<32x1xf32>
    %cst_127 = arith.constant 1.280000e+02 : f32
    %303 = vector.broadcast %cst_127 : f32 to vector<32x1xf32>
    %304 = arith.divf %302, %303 : vector<32x1xf32>
    %cst_128 = arith.constant 9.99999974E-6 : f32
    %305 = vector.broadcast %cst_128 : f32 to vector<32x1xf32>
    %306 = arith.addf %304, %305 : vector<32x1xf32>
    %307 = math.rsqrt %306 : vector<32x1xf32>
    %308 = vector.broadcast %307 : vector<32x1xf32> to vector<32x128xf32>
    %309 = arith.mulf %299, %308 : vector<32x128xf32>
    %310 = vector.broadcast %291 : vector<1x128xf32> to vector<32x128xf32>
    %311 = arith.mulf %309, %310 : vector<32x128xf32>
    %312 = vector.broadcast %293 : vector<1x128xf32> to vector<32x128xf32>
    %313 = arith.addf %311, %312 : vector<32x128xf32>
    %c1_129 = arith.constant 1 : index
    %c0_130 = arith.constant 0 : index
    %c0_131 = arith.constant 0 : index
    %314 = vector.load %arg12[%c1_129, %c0_130, %c0_131] : memref<2x128x256xf32, #tpu.memory_space<vmem>>, vector<1x128x256xf32>
    %315 = vector.shape_cast %314 : vector<1x128x256xf32> to vector<128x256xf32>
    %cst_132 = arith.constant dense<0.000000e+00> : vector<32x256xf32>
    %316 = tpu.matmul %313, %315, %cst_132 {dimension_numbers = #tpu.dot_dimension_numbers<[1], [0], [0], [1], [0, 0, 1, 1], [], []>} : vector<32x128xf32>, vector<128x256xf32>, vector<32x256xf32> -> vector<32x256xf32>
    %c1_133 = arith.constant 1 : index
    %c0_134 = arith.constant 0 : index
    %c0_135 = arith.constant 0 : index
    %317 = vector.load %arg13[%c1_133, %c0_134, %c0_135] : memref<2x1x256xf32, #tpu.memory_space<vmem>>, vector<1x1x256xf32>
    %318 = vector.shape_cast %317 : vector<1x1x256xf32> to vector<1x256xf32>
    %319 = vector.broadcast %318 : vector<1x256xf32> to vector<32x256xf32>
    %320 = arith.addf %316, %319 : vector<32x256xf32>
    %cst_136 = arith.constant 0.000000e+00 : f32
    %321 = vector.broadcast %cst_136 : f32 to vector<32x256xf32>
    %322 = arith.maximumf %320, %321 : vector<32x256xf32>
    %c1_137 = arith.constant 1 : index
    %c0_138 = arith.constant 0 : index
    %c0_139 = arith.constant 0 : index
    %323 = vector.load %arg14[%c1_137, %c0_138, %c0_139] : memref<2x256x128xf32, #tpu.memory_space<vmem>>, vector<1x256x128xf32>
    %324 = vector.shape_cast %323 : vector<1x256x128xf32> to vector<256x128xf32>
    %cst_140 = arith.constant dense<0.000000e+00> : vector<32x128xf32>
    %325 = tpu.matmul %322, %324, %cst_140 {dimension_numbers = #tpu.dot_dimension_numbers<[1], [0], [0], [1], [0, 0, 1, 1], [], []>} : vector<32x256xf32>, vector<256x128xf32>, vector<32x128xf32> -> vector<32x128xf32>
    %c1_141 = arith.constant 1 : index
    %c0_142 = arith.constant 0 : index
    %c0_143 = arith.constant 0 : index
    %326 = vector.load %arg15[%c1_141, %c0_142, %c0_143] : memref<2x1x128xf32, #tpu.memory_space<vmem>>, vector<1x1x128xf32>
    %327 = vector.shape_cast %326 : vector<1x1x128xf32> to vector<1x128xf32>
    %328 = vector.broadcast %327 : vector<1x128xf32> to vector<32x128xf32>
    %329 = arith.addf %325, %328 : vector<32x128xf32>
    %330 = arith.addf %313, %329 : vector<32x128xf32>
    %c1_144 = arith.constant 1 : index
    %c0_145 = arith.constant 0 : index
    %c0_146 = arith.constant 0 : index
    %331 = vector.load %arg16[%c1_144, %c0_145, %c0_146] : memref<2x1x128xf32, #tpu.memory_space<vmem>>, vector<1x1x128xf32>
    %332 = vector.shape_cast %331 : vector<1x1x128xf32> to vector<1x128xf32>
    %c1_147 = arith.constant 1 : index
    %c0_148 = arith.constant 0 : index
    %c0_149 = arith.constant 0 : index
    %333 = vector.load %arg17[%c1_147, %c0_148, %c0_149] : memref<2x1x128xf32, #tpu.memory_space<vmem>>, vector<1x1x128xf32>
    %334 = vector.shape_cast %333 : vector<1x1x128xf32> to vector<1x128xf32>
    %cst_150 = arith.constant dense<0.000000e+00> : vector<32xf32>
    %335 = vector.multi_reduction <add>, %330, %cst_150 [1] : vector<32x128xf32> to vector<32xf32>
    %336 = vector.shape_cast %335 : vector<32xf32> to vector<32x1xf32>
    %cst_151 = arith.constant 1.280000e+02 : f32
    %337 = vector.broadcast %cst_151 : f32 to vector<32x1xf32>
    %338 = arith.divf %336, %337 : vector<32x1xf32>
    %339 = vector.broadcast %338 : vector<32x1xf32> to vector<32x128xf32>
    %340 = arith.subf %330, %339 : vector<32x128xf32>
    %341 = arith.mulf %340, %340 : vector<32x128xf32>
    %cst_152 = arith.constant dense<0.000000e+00> : vector<32xf32>
    %342 = vector.multi_reduction <add>, %341, %cst_152 [1] : vector<32x128xf32> to vector<32xf32>
    %343 = vector.shape_cast %342 : vector<32xf32> to vector<32x1xf32>
    %cst_153 = arith.constant 1.280000e+02 : f32
    %344 = vector.broadcast %cst_153 : f32 to vector<32x1xf32>
    %345 = arith.divf %343, %344 : vector<32x1xf32>
    %cst_154 = arith.constant 9.99999974E-6 : f32
    %346 = vector.broadcast %cst_154 : f32 to vector<32x1xf32>
    %347 = arith.addf %345, %346 : vector<32x1xf32>
    %348 = math.rsqrt %347 : vector<32x1xf32>
    %349 = vector.broadcast %348 : vector<32x1xf32> to vector<32x128xf32>
    %350 = arith.mulf %340, %349 : vector<32x128xf32>
    %351 = vector.broadcast %332 : vector<1x128xf32> to vector<32x128xf32>
    %352 = arith.mulf %350, %351 : vector<32x128xf32>
    %353 = vector.broadcast %334 : vector<1x128xf32> to vector<32x128xf32>
    %354 = arith.addf %352, %353 : vector<32x128xf32>
    %c0_155 = arith.constant 0 : index
    %c0_156 = arith.constant 0 : index
    %355 = vector.load %arg18[%c0_155, %c0_156] : memref<128x64xf32, #tpu.memory_space<vmem>>, vector<128x64xf32>
    %cst_157 = arith.constant dense<0.000000e+00> : vector<32x64xf32>
    %356 = tpu.matmul %354, %355, %cst_157 {dimension_numbers = #tpu.dot_dimension_numbers<[1], [0], [0], [1], [0, 0, 1, 1], [], []>} : vector<32x128xf32>, vector<128x64xf32>, vector<32x64xf32> -> vector<32x64xf32>
    %c0_158 = arith.constant 0 : index
    %c0_159 = arith.constant 0 : index
    %357 = vector.load %arg19[%c0_158, %c0_159] : memref<1x64xf32, #tpu.memory_space<vmem>>, vector<1x64xf32>
    %358 = vector.broadcast %357 : vector<1x64xf32> to vector<32x64xf32>
    %359 = arith.addf %356, %358 : vector<32x64xf32>
    %cst_160 = arith.constant 0.000000e+00 : f32
    %360 = vector.broadcast %cst_160 : f32 to vector<32x64xf32>
    %361 = arith.maximumf %359, %360 : vector<32x64xf32>
    %362 = vector.shape_cast %361 : vector<32x64xf32> to vector<2x16x64xf32>
    %c0_161 = arith.constant 0 : index
    %c0_162 = arith.constant 0 : index
    %363 = vector.load %arg20[%c0_161, %c0_162] : memref<1x64xf32, #tpu.memory_space<vmem>>, vector<1x64xf32>
    %364 = vector.shape_cast %363 : vector<1x64xf32> to vector<1x1x64xf32>
    %365 = vector.broadcast %364 : vector<1x1x64xf32> to vector<2x16x64xf32>
    %366 = arith.mulf %362, %365 : vector<2x16x64xf32>
    %cst_163 = arith.constant dense<0.000000e+00> : vector<2x16xf32>
    %367 = vector.multi_reduction <add>, %366, %cst_163 [2] : vector<2x16x64xf32> to vector<2x16xf32>
    %c0_164 = arith.constant 0 : index
    %c0_165 = arith.constant 0 : index
    %368 = vector.load %arg21[%c0_164, %c0_165] : memref<1x1xf32, #tpu.memory_space<vmem>>, vector<1x1xf32>
    %369 = vector.broadcast %368 : vector<1x1xf32> to vector<2x16xf32>
    %370 = arith.addf %367, %369 : vector<2x16xf32>
    %c0_166 = arith.constant 0 : index
    %c0_167 = arith.constant 0 : index
    %371 = vector.load %arg22[%c0_166, %c0_167] : memref<16x8xf32, #tpu.memory_space<vmem>>, vector<16x8xf32>
    %cst_168 = arith.constant dense<0.000000e+00> : vector<2x8xf32>
    %372 = tpu.matmul %370, %371, %cst_168 {dimension_numbers = #tpu.dot_dimension_numbers<[1], [0], [0], [1], [0, 0, 1, 1], [], []>} : vector<2x16xf32>, vector<16x8xf32>, vector<2x8xf32> -> vector<2x8xf32>
    %c0_169 = arith.constant 0 : index
    %c0_170 = arith.constant 0 : index
    %373 = vector.load %arg23[%c0_169, %c0_170] : memref<1x8xf32, #tpu.memory_space<vmem>>, vector<1x8xf32>
    %374 = vector.broadcast %373 : vector<1x8xf32> to vector<2x8xf32>
    %375 = arith.addf %372, %374 : vector<2x8xf32>
    %cst_171 = arith.constant 0.000000e+00 : f32
    %376 = vector.broadcast %cst_171 : f32 to vector<2x8xf32>
    %377 = arith.maximumf %375, %376 : vector<2x8xf32>
    %c0_172 = arith.constant 0 : index
    %c0_173 = arith.constant 0 : index
    %378 = vector.load %arg24[%c0_172, %c0_173] : memref<8x1xf32, #tpu.memory_space<vmem>>, vector<8x1xf32>
    %cst_174 = arith.constant dense<0.000000e+00> : vector<2x1xf32>
    %379 = tpu.matmul %377, %378, %cst_174 {dimension_numbers = #tpu.dot_dimension_numbers<[1], [0], [0], [1], [0, 0, 1, 1], [], []>} : vector<2x8xf32>, vector<8x1xf32>, vector<2x1xf32> -> vector<2x1xf32>
    %c0_175 = arith.constant 0 : index
    %c0_176 = arith.constant 0 : index
    %380 = vector.load %arg25[%c0_175, %c0_176] : memref<1x1xf32, #tpu.memory_space<vmem>>, vector<1x1xf32>
    %381 = vector.broadcast %380 : vector<1x1xf32> to vector<2x1xf32>
    %382 = arith.addf %379, %381 : vector<2x1xf32>
    %c0_177 = arith.constant 0 : index
    %c0_178 = arith.constant 0 : index
    %383 = vector.load %arg26[%c0_177, %c0_178] : memref<2x1xf32, #tpu.memory_space<vmem>>, vector<2x1xf32>
    tpu.vector_store %arg26[%c0_177, %c0_178], %382 {strides = array<i32>} : memref<2x1xf32, #tpu.memory_space<vmem>>, vector<2x1xf32>,
    return
  }
}

</mosaic_0001>

<llo_original>
// kernel: transformer_forward.1
$region0: #{transformer_forward.1}
  #allocation0 [shape = 'u32[]', space=smem, size = 0x4, offset = 0x4, fixed_abs, tag = 'smem constant byte address 0x4 - core index']
  #allocation1 [shape = 'u32[144,128]{1,0:T(1,128)}', space=vmem, size = 0x12000, scoped, tag = 'internal scratch']
  #allocation2 [shape = 'f32[1,1]{1,0:T(1,128)S(1)}', space=vmem, size = 0x200, scoped, tag = 'scoped memory for transformer_forward.1']
  #allocation3 [shape = 'f32[1,1]{1,0:T(1,128)S(1)}', space=vmem, size = 0x200, scoped, tag = 'scoped memory for transformer_forward.1']
  %s0 = inlined_call_operand.vmem [shape: f32[32,1], index: 0, kind: input, shape index: {}]
  %s1 = inlined_call_operand.vmem [shape: f32[64,128], index: 1, kind: input, shape index: {}]
  %s2 = inlined_call_operand.vmem [shape: f32[1,64], index: 2, kind: input, shape index: {}]
  %s3 = inlined_call_operand.vmem [shape: f32[1,64], index: 3, kind: input, shape index: {}]
  %s4 = inlined_call_operand.hbm [shape: f32[64,128], index: 4, kind: input, shape index: {}]
  %s5 = inlined_call_operand.vmem [shape: f32[1,128], index: 5, kind: input, shape index: {}]
  %s6 = inlined_call_operand.hbm [shape: f32[2,128,384], index: 6, kind: input, shape index: {}]
  %s7 = inlined_call_operand.vmem [shape: f32[2,1,384], index: 7, kind: input, shape index: {}]
  %s8 = inlined_call_operand.vmem [shape: f32[2,128,128], index: 8, kind: input, shape index: {}]
  %s9 = inlined_call_operand.vmem [shape: f32[2,1,128], index: 9, kind: input, shape index: {}]
  %s10 = inlined_call_operand.vmem [shape: f32[2,1,128], index: 10, kind: input, shape index: {}]
  %s11 = inlined_call_operand.vmem [shape: f32[2,1,128], index: 11, kind: input, shape index: {}]
  %s12 = inlined_call_operand.hbm [shape: f32[2,128,256], index: 12, kind: input, shape index: {}]
  %s13 = inlined_call_operand.vmem [shape: f32[2,1,256], index: 13, kind: input, shape index: {}]
  %s14 = inlined_call_operand.hbm [shape: f32[2,256,128], index: 14, kind: input, shape index: {}]
  %s15 = inlined_call_operand.vmem [shape: f32[2,1,128], index: 15, kind: input, shape index: {}]
  %s16 = inlined_call_operand.vmem [shape: f32[2,1,128], index: 16, kind: input, shape index: {}]
  %s17 = inlined_call_operand.vmem [shape: f32[2,1,128], index: 17, kind: input, shape index: {}]
  %s18 = inlined_call_operand.vmem [shape: f32[128,64], index: 18, kind: input, shape index: {}]
  %s19 = inlined_call_operand.vmem [shape: f32[1,64], index: 19, kind: input, shape index: {}]
  %s20 = inlined_call_operand.vmem [shape: f32[1,64], index: 20, kind: input, shape index: {}]
  %s21 = inlined_call_operand.<no memory space> [shape: f32[1,1], index: 21, kind: input, shape index: {}]
  %s22 = inlined_call_operand.vmem [shape: f32[16,8], index: 22, kind: input, shape index: {}]
  %s23 = inlined_call_operand.vmem [shape: f32[1,8], index: 23, kind: input, shape index: {}]
  %s24 = inlined_call_operand.vmem [shape: f32[8,1], index: 24, kind: input, shape index: {}]
  %s25 = inlined_call_operand.<no memory space> [shape: f32[1,1], index: 25, kind: input, shape index: {}]
  %s26 = inlined_call_operand.vmem [shape: f32[2,1], index: 26, kind: output, shape index: {}]
  %s27 = sld [smem:[#allocation0]]
  $region130: #{transformer_forward.1} parent=0
    _
  %s29 = ssub.s32 1, %s27
  %s30 = scalar_select 0, %s29, %s27
  %v31 = vstv %s21
  %32 = vst [vmem:[#allocation2] sm:$0x1] %v31
  %v33 = vstv %s25
  %34 = vst [vmem:[#allocation3] sm:$0x1] %v33
  $region1: #{transformer_forward.1} parent=0
    #allocation4 [shape = 'u8[32768]{0}', space=vmem, size = 0x8000, scoped, tag = 'input window, operand 4, single buffered']
    #allocation5 [shape = 's32[1]{0}', space=sflag, size = 0x4, scoped, tag = 'scoped memory for transformer_forward.1']
    #allocation6 [shape = 'u8[393216]{0}', space=vmem, size = 0x60000, scoped, tag = 'input window, operand 6, single buffered']
    #allocation7 [shape = 's32[1]{0}', space=sflag, size = 0x4, scoped, tag = 'scoped memory for transformer_forward.1']
    #allocation8 [shape = 'u8[262144]{0}', space=vmem, size = 0x40000, scoped, tag = 'input window, operand 12, single buffered']
    #allocation9 [shape = 'u8[262144]{0}', space=vmem, size = 0x40000, scoped, tag = 'input window, operand 14, single buffered']
    #allocation10 [shape = 's32[1]{0}', space=sflag, size = 0x4, scoped, tag = 'scoped memory for transformer_forward.1']
    %35 = vsyncpa [#allocation5], 0
    %36 = vsyncpa [#allocation7], 0
    %37 = vsyncpa [#allocation10], 0
    // Predicated region
    $region2: #{transformer_forward.1} parent=1 // pred_check
      _
    $region3: #{transformer_forward.1} parent=1 // pred_check_branch
      %39 = sbr.rel (0) target = $region5
    $region4: #{transformer_forward.1} parent=1 // pred_region
      _
    $region5: #{transformer_forward.1} parent=1 // pred_fallthru
      _
    // Predicated region
    $region6: #{transformer_forward.1} parent=1 // pred_check
      _
    $region7: #{transformer_forward.1} parent=1 // pred_check_branch
      %41 = sbr.rel (0) target = $region9
    $region8: #{transformer_forward.1} parent=1 // pred_region
      _
    $region9: #{transformer_forward.1} parent=1 // pred_fallthru
      _
    // Predicated region
    $region10: #{transformer_forward.1} parent=1 // pred_check
      _
    $region11: #{transformer_forward.1} parent=1 // pred_check_branch
      %43 = sbr.rel (0) target = $region13
    $region12: #{transformer_forward.1} parent=1 // pred_region
      _
    $region13: #{transformer_forward.1} parent=1 // pred_fallthru
      _
    // Predicated region
    $region14: #{transformer_forward.1} parent=1 // pred_check
      _
    $region15: #{transformer_forward.1} parent=1 // pred_check_branch
      %45 = sbr.rel (0) target = $region17
    $region16: #{transformer_forward.1} parent=1 // pred_region
      _
    $region17: #{transformer_forward.1} parent=1 // pred_fallthru
      _
    // Predicated region
    $region18: #{transformer_forward.1} parent=1 // pred_check
      _
    $region19: #{transformer_forward.1} parent=1 // pred_check_branch
      %47 = sbr.rel (0) target = $region21
    $region20: #{transformer_forward.1} parent=1 // pred_region
      %s49 = ssub.s32 1024, 1024
      %50 = vsyncadd [#allocation5], %s49
      %s51 = sshll.u32 [#allocation4], 4
      %s52 = int_to_ptr.vmem [resolvable:$true] %s51
      %57 = dma.hbm_to_vmem [thread:$0]  %s4, 1024, %s52, [#allocation5], 128, 128, 8
    $region21: #{transformer_forward.1} parent=1 // pred_fallthru
      _
    // Predicated region
    $region22: #{transformer_forward.1} parent=1 // pred_check
      _
    $region23: #{transformer_forward.1} parent=1 // pred_check_branch
      %59 = sbr.rel (0) target = $region25
    $region24: #{transformer_forward.1} parent=1 // pred_region
      _
    $region25: #{transformer_forward.1} parent=1 // pred_fallthru
      _
    // Predicated region
    $region26: #{transformer_forward.1} parent=1 // pred_check
      _
    $region27: #{transformer_forward.1} parent=1 // pred_check_branch
      %61 = sbr.rel (0) target = $region29
    $region28: #{transformer_forward.1} parent=1 // pred_region
      %s63 = ssub.s32 12288, 12288
      %64 = vsyncadd [#allocation7], %s63
      %s65 = sshll.u32 [#allocation6], 4
      %s66 = int_to_ptr.vmem [resolvable:$true] %s65
      %71 = dma.hbm_to_vmem [thread:$0]  %s6, 12288, %s66, [#allocation7], 384, 384, 24
    $region29: #{transformer_forward.1} parent=1 // pred_fallthru
      _
    // Predicated region
    $region30: #{transformer_forward.1} parent=1 // pred_check
      _
    $region31: #{transformer_forward.1} parent=1 // pred_check_branch
      %73 = sbr.rel (0) target = $region33
    $region32: #{transformer_forward.1} parent=1 // pred_region
      _
    $region33: #{transformer_forward.1} parent=1 // pred_fallthru
      _
    // Predicated region
    $region34: #{transformer_forward.1} parent=1 // pred_check
      _
    $region35: #{transformer_forward.1} parent=1 // pred_check_branch
      %75 = sbr.rel (0) target = $region37
    $region36: #{transformer_forward.1} parent=1 // pred_region
      _
    $region37: #{transformer_forward.1} parent=1 // pred_fallthru
      _
    // Predicated region
    $region38: #{transformer_forward.1} parent=1 // pred_check
      _
    $region39: #{transformer_forward.1} parent=1 // pred_check_branch
      %77 = sbr.rel (0) target = $region41
    $region40: #{transformer_forward.1} parent=1 // pred_region
      _
    $region41: #{transformer_forward.1} parent=1 // pred_fallthru
      _
    // Predicated region
    $region42: #{transformer_forward.1} parent=1 // pred_check
      _
    $region43: #{transformer_forward.1} parent=1 // pred_check_branch
      %79 = sbr.rel (0) target = $region45
    $region44: #{transformer_forward.1} parent=1 // pred_region
      _
    $region45: #{transformer_forward.1} parent=1 // pred_fallthru
      _
    // Predicated region
    $region46: #{transformer_forward.1} parent=1 // pred_check
      _
    $region47: #{transformer_forward.1} parent=1 // pred_check_branch
      %81 = sbr.rel (0) target = $region49
    $region48: #{transformer_forward.1} parent=1 // pred_region
      _
    $region49: #{transformer_forward.1} parent=1 // pred_fallthru
      _
    // Predicated region
    $region50: #{transformer_forward.1} parent=1 // pred_check
      _
    $region51: #{transformer_forward.1} parent=1 // pred_check_branch
      %83 = sbr.rel (0) target = $region53
    $region52: #{transformer_forward.1} parent=1 // pred_region
      %s85 = ssub.s32 8192, 8192
      %86 = vsyncadd [#allocation7], %s85
      %s87 = sshll.u32 [#allocation8], 4
      %s88 = int_to_ptr.vmem [resolvable:$true] %s87
      %93 = dma.hbm_to_vmem [thread:$0]  %s12, 8192, %s88, [#allocation7], 256, 256, 16
    $region53: #{transformer_forward.1} parent=1 // pred_fallthru
      _
    // Predicated region
    $region54: #{transformer_forward.1} parent=1 // pred_check
      _
    $region55: #{transformer_forward.1} parent=1 // pred_check_branch
      %95 = sbr.rel (0) target = $region57
    $region56: #{transformer_forward.1} parent=1 // pred_region
      _
    $region57: #{transformer_forward.1} parent=1 // pred_fallthru
      _
    // Predicated region
    $region58: #{transformer_forward.1} parent=1 // pred_check
      _
    $region59: #{transformer_forward.1} parent=1 // pred_check_branch
      %97 = sbr.rel (0) target = $region61
    $region60: #{transformer_forward.1} parent=1 // pred_region
      %s99 = ssub.s32 8192, 8192
      %100 = vsyncadd [#allocation10], %s99
      %s101 = sshll.u32 [#allocation9], 4
      %s102 = int_to_ptr.vmem [resolvable:$true] %s101
      %107 = dma.hbm_to_vmem [thread:$0]  %s14, 8192, %s102, [#allocation10], 128, 128, 8
    $region61: #{transformer_forward.1} parent=1 // pred_fallthru
      _
    // Predicated region
    $region62: #{transformer_forward.1} parent=1 // pred_check
      _
    $region63: #{transformer_forward.1} parent=1 // pred_check_branch
      %109 = sbr.rel (0) target = $region65
    $region64: #{transformer_forward.1} parent=1 // pred_region
      _
    $region65: #{transformer_forward.1} parent=1 // pred_fallthru
      _
    // Predicated region
    $region66: #{transformer_forward.1} parent=1 // pred_check
      _
    $region67: #{transformer_forward.1} parent=1 // pred_check_branch
      %111 = sbr.rel (0) target = $region69
    $region68: #{transformer_forward.1} parent=1 // pred_region
      _
    $region69: #{transformer_forward.1} parent=1 // pred_fallthru
      _
    // Predicated region
    $region70: #{transformer_forward.1} parent=1 // pred_check
      _
    $region71: #{transformer_forward.1} parent=1 // pred_check_branch
      %113 = sbr.rel (0) target = $region73
    $region72: #{transformer_forward.1} parent=1 // pred_region
      _
    $region73: #{transformer_forward.1} parent=1 // pred_fallthru
      _
    // Predicated region
    $region74: #{transformer_forward.1} parent=1 // pred_check
      _
    $region75: #{transformer_forward.1} parent=1 // pred_check_branch
      %115 = sbr.rel (0) target = $region77
    $region76: #{transformer_forward.1} parent=1 // pred_region
      _
    $region77: #{transformer_forward.1} parent=1 // pred_fallthru
      _
    // Predicated region
    $region78: #{transformer_forward.1} parent=1 // pred_check
      _
    $region79: #{transformer_forward.1} parent=1 // pred_check_branch
      %117 = sbr.rel (0) target = $region81
    $region80: #{transformer_forward.1} parent=1 // pred_region
      _
    $region81: #{transformer_forward.1} parent=1 // pred_fallthru
      _
    // Predicated region
    $region82: #{transformer_forward.1} parent=1 // pred_check
      _
    $region83: #{transformer_forward.1} parent=1 // pred_check_branch
      %119 = sbr.rel (0) target = $region85
    $region84: #{transformer_forward.1} parent=1 // pred_region
      _
    $region85: #{transformer_forward.1} parent=1 // pred_fallthru
      _
    // Predicated region
    $region86: #{transformer_forward.1} parent=1 // pred_check
      _
    $region87: #{transformer_forward.1} parent=1 // pred_check_branch
      %121 = sbr.rel (0) target = $region89
    $region88: #{transformer_forward.1} parent=1 // pred_region
      _
    $region89: #{transformer_forward.1} parent=1 // pred_fallthru
      _
    // Predicated region
    $region90: #{transformer_forward.1} parent=1 // pred_check
      _
    $region91: #{transformer_forward.1} parent=1 // pred_check_branch
      %123 = sbr.rel (0) target = $region93
    $region92: #{transformer_forward.1} parent=1 // pred_region
      _
    $region93: #{transformer_forward.1} parent=1 // pred_fallthru
      _
    // Predicated region
    $region94: #{transformer_forward.1} parent=1 // pred_check
      _
    $region95: #{transformer_forward.1} parent=1 // pred_check_branch
      %125 = sbr.rel (0) target = $region97
    $region96: #{transformer_forward.1} parent=1 // pred_region
      _
    $region97: #{transformer_forward.1} parent=1 // pred_fallthru
      _
    // Predicated region
    $region98: #{transformer_forward.1} parent=1 // pred_check
      _
    $region99: #{transformer_forward.1} parent=1 // pred_check_branch
      %127 = sbr.rel (0) target = $region101
    $region100: #{transformer_forward.1} parent=1 // pred_region
      _
    $region101: #{transformer_forward.1} parent=1 // pred_fallthru
      _
    // Predicated region
    $region102: #{transformer_forward.1} parent=1 // pred_check
      _
    $region103: #{transformer_forward.1} parent=1 // pred_check_branch
      %129 = sbr.rel (0) target = $region105
    $region104: #{transformer_forward.1} parent=1 // pred_region
      _
    $region105: #{transformer_forward.1} parent=1 // pred_fallthru
      _
    // Predicated region
    $region106: #{transformer_forward.1} parent=1 // pred_check
      _
    $region107: #{transformer_forward.1} parent=1 // pred_check_branch
      %131 = sbr.rel (0) target = $region109
    $region108: #{transformer_forward.1} parent=1 // pred_region
      %132 = dma.done [#allocation5], 1024
    $region109: #{transformer_forward.1} parent=1 // pred_fallthru
      _
    // Predicated region
    $region110: #{transformer_forward.1} parent=1 // pred_check
      _
    $region111: #{transformer_forward.1} parent=1 // pred_check_branch
      %134 = sbr.rel (0) target = $region113
    $region112: #{transformer_forward.1} parent=1 // pred_region
      %135 = dma.done [#allocation7], 12288
    $region113: #{transformer_forward.1} parent=1 // pred_fallthru
      _
    // Predicated region
    $region114: #{transformer_forward.1} parent=1 // pred_check
      _
    $region115: #{transformer_forward.1} parent=1 // pred_check_branch
      %137 = sbr.rel (0) target = $region117
    $region116: #{transformer_forward.1} parent=1 // pred_region
      %138 = dma.done [#allocation7], 8192
    $region117: #{transformer_forward.1} parent=1 // pred_fallthru
      _
    // Predicated region
    $region118: #{transformer_forward.1} parent=1 // pred_check
      _
    $region119: #{transformer_forward.1} parent=1 // pred_check_branch
      %140 = sbr.rel (0) target = $region121
    $region120: #{transformer_forward.1} parent=1 // pred_region
      %141 = dma.done [#allocation10], 8192
    $region121: #{transformer_forward.1} parent=1 // pred_fallthru
      _
    %v142 = vld [vmem:[%s0] sm:$0xff]
    %v143 = vld [vmem:[%s0 + $0x8] sm:$0xff]
    %v144 = vld [vmem:[%s0 + $0x10] sm:$0xff]
    %v145 = vld [vmem:[%s0 + $0x18] sm:$0xff]
    %v146 = vld [vmem:[%s2] sm:$0x1]
    %148 = vset.pattern.permute.xlu0 0
    %149 = vperm.xlu0 %148, %v142
    %v150 = vpop.permute.xlu0 %149
    %153 = vset.pattern.permute.xlu0 0
    %154 = vperm.xlu0 %153, %v143
    %v155 = vpop.permute.xlu0 %154
    %158 = vset.pattern.permute.xlu0 0
    %159 = vperm.xlu0 %158, %v144
    %v160 = vpop.permute.xlu0 %159
    %163 = vset.pattern.permute.xlu0 0
    %164 = vperm.xlu0 %163, %v145
    %v165 = vpop.permute.xlu0 %164
    %v168 = vlaneseq
    %v169 = vshrl.u32 %v168, 7
    %v170 = vsub.s32 0, %v169
    %v171 = vrot.slane %v146, %v170
    %v173 = vmul.f32 %v150, %v171
    %v174 = vmul.f32 %v155, %v171
    %v175 = vmul.f32 %v160, %v171
    %v176 = vmul.f32 %v165, %v171
    %v177 = vld [vmem:[%s3] sm:$0x1]
    %v179 = vlaneseq
    %v180 = vshrl.u32 %v179, 7
    %v181 = vsub.s32 0, %v180
    %v182 = vrot.slane %v177, %v181
    %v184 = vadd.f32 %v173, %v182
    %v185 = vadd.f32 %v174, %v182
    %v186 = vadd.f32 %v175, %v182
    %v187 = vadd.f32 %v176, %v182
    %v188 = vmax.f32 %v184, 0.0
    %v189 = vmax.f32 %v185, 0.0
    %v190 = vmax.f32 %v186, 0.0
    %v191 = vmax.f32 %v187, 0.0
    %v192 = vld [vmem:[#allocation4] sm:$0xff]
    %v193 = vld [vmem:[#allocation4 + $0x8] sm:$0xff]
    %v194 = vld [vmem:[#allocation4 + $0x10] sm:$0xff]
    %v195 = vld [vmem:[#allocation4 + $0x18] sm:$0xff]
    %v196 = vld [vmem:[#allocation4 + $0x20] sm:$0xff]
    %v197 = vld [vmem:[#allocation4 + $0x28] sm:$0xff]
    %v198 = vld [vmem:[#allocation4 + $0x30] sm:$0xff]
    %v199 = vld [vmem:[#allocation4 + $0x38] sm:$0xff]
    %v200 = vld [vmem:[%s5] sm:$0x1]
    %v202 = vlaneseq
    %v203 = vshrl.u32 %v202, 7
    %v204 = vsub.s32 0, %v203
    %v205 = vrot.slane %v200, %v204
    %vm207 = vcmask 523264
    %v209 = vsel %vm207, %v188, 0
    %v212 = vsel %vm207, %v189, 0
    %v215 = vsel %vm207, %v190, 0
    %v218 = vsel %vm207, %v191, 0
    %220 = vmatprep.subr.mxu0 0.0
    %221 = vmatpush1.msra.mxu0 %v192
    %222 = vmatprep.subr.mxu0 0.0
    %223 = vmatpush1.msra.mxu0 %v193
    %224 = vmatprep.subr.mxu0 0.0
    %225 = vmatpush1.msra.mxu0 %v194
    %226 = vmatprep.subr.mxu0 0.0
    %227 = vmatpush1.msra.mxu0 %v195
    %228 = vmatprep.subr.mxu0 0.0
    %229 = vmatpush1.msra.mxu0 %v196
    %230 = vmatprep.subr.mxu0 0.0
    %231 = vmatpush1.msra.mxu0 %v197
    %232 = vmatprep.subr.mxu0 0.0
    %233 = vmatpush1.msra.mxu0 %v198
    %234 = vmatprep.subr.mxu0 0.0
    %235 = vmatpush1.msra.mxu0 %v199
    %236 = vmatprep.subr.mxu0 0.0
    %237 = vmatpush1.msra.mxu0 0.0
    %238 = vmatprep.subr.mxu0 0.0
    %239 = vmatpush1.msra.mxu0 0.0
    %240 = vmatprep.subr.mxu0 0.0
    %241 = vmatpush1.msra.mxu0 0.0
    %242 = vmatprep.subr.mxu0 0.0
    %243 = vmatpush1.msra.mxu0 0.0
    %244 = vmatprep.subr.mxu0 0.0
    %245 = vmatpush1.msra.mxu0 0.0
    %246 = vmatprep.subr.mxu0 0.0
    %247 = vmatpush1.msra.mxu0 0.0
    %248 = vmatprep.subr.mxu0 0.0
    %249 = vmatpush1.msra.mxu0 0.0
    %250 = vmatprep.subr.mxu0 0.0
    %251 = vmatpush1.msra.mxu0 0.0
    %252 = vmatprep.subr.mxu0 0.0
    %253 = vmatpush1.msra.mxu0 0.0
    %254 = vmatprep.subr.mxu0 0.0
    %255 = vmatpush1.msra.mxu0 0.0
    %256 = vmatprep.subr.mxu0 0.0
    %257 = vmatpush1.msra.mxu0 0.0
    %258 = vmatprep.subr.mxu0 0.0
    %259 = vmatpush1.msra.mxu0 0.0
    %260 = vmatprep.subr.mxu0 0.0
    %261 = vmatpush1.msra.mxu0 0.0
    %262 = vmatprep.subr.mxu0 0.0
    %263 = vmatpush1.msra.mxu0 0.0
    %264 = vmatprep.subr.mxu0 0.0
    %265 = vmatpush1.msra.mxu0 0.0
    %266 = vmatprep.subr.mxu0 0.0
    %267 = vmatpush1.msra.mxu0 0.0
    %268 = vmatprep.subr.mxu0 0.0
    %269 = vmatpush1.msra.mxu0 0.0
    %270 = vmatprep.subr.mxu0 0.0
    %271 = vmatpush1.msra.mxu0 0.0
    %272 = vmatprep.subr.mxu0 0.0
    %273 = vmatpush1.msra.mxu0 0.0
    %274 = vmatprep.subr.mxu0 0.0
    %275 = vmatpush1.msra.mxu0 0.0
    %276 = vmatprep.subr.mxu0 0.0
    %277 = vmatpush1.msra.mxu0 0.0
    %278 = vmatprep.subr.mxu0 0.0
    %279 = vmatpush1.msra.mxu0 0.0
    %280 = vmatprep.subr.mxu0 0.0
    %281 = vmatpush1.msra.mxu0 0.0
    %282 = vmatprep.subr.mxu0 0.0
    %283 = vmatpush1.msra.mxu0 0.0
    %284 = vmatprep.mubr.f32.mxu0 0.0
    %285 = vmatmul.mubr.f32.gmra.mrb[0].mxu0 %v209
    %v286 = vpop.f32.mrb[0].mxu0
    %v287 = vadd.f32 %v205, %v286
    %v288 = vpop.f32.mrb[0].mxu0
    %289 = vmatprep.mubr.f32.mxu0 0.0
    %290 = vmatmul.mubr.f32.gmra.mrb[0].mxu0 %v212
    %v291 = vpop.f32.mrb[0].mxu0
    %v292 = vadd.f32 %v205, %v291
    %v293 = vpop.f32.mrb[0].mxu0
    %294 = vmatprep.mubr.f32.mxu0 0.0
    %295 = vmatmul.mubr.f32.gmra.mrb[0].mxu0 %v215
    %v296 = vpop.f32.mrb[0].mxu0
    %v297 = vadd.f32 %v205, %v296
    %v298 = vpop.f32.mrb[0].mxu0
    %299 = vmatprep.mubr.f32.mxu0 0.0
    %300 = vmatmul.mubr.f32.gmra.mrb[0].mxu0 %v218
    %v301 = vpop.f32.mrb[0].mxu0
    %v302 = vadd.f32 %v205, %v301
    %v303 = vpop.f32.mrb[0].mxu0
    %304 = vdwg.mxu0
    %v305 = vld [vmem:[%s1] sm:$0x3]
    %v308 = vunpack.c.l.s4 1966171168
    %v309 = vunpack.c.0.s8 %v308
    %v310 = vlaneseq
    %v311 = vshrl.u32 %v310, 7
    %v312 = vsub.s32 %v309, %v311
    %v313 = vrot.slane %v305, %v312
    %v314 = vcombine.high %v313, %v313
    %v316 = vunpack.c.l.s4 1966171168
    %v317 = vunpack.c.0.s8 %v316
    %v318 = vlaneseq
    %v319 = vshrl.u32 %v318, 7
    %v320 = vsub.s32 %v317, %v319
    %v321 = vrot.slane %v313, %v320
    %v323 = vunpack.c.l.s4 1966171168
    %v324 = vunpack.c.0.s8 %v323
    %v325 = vlaneseq
    %v326 = vshrl.u32 %v325, 7
    %v327 = vsub.s32 %v324, %v326
    %v328 = vrot.slane %v314, %v327
    %v329 = vlaneseq
    %v330 = vshrl.u32 %v329, 7
    %v331 = vsub.s32 0, %v330
    %v332 = vrot.slane %v321, %v331
    %v333 = vlaneseq
    %v334 = vshrl.u32 %v333, 7
    %v335 = vsub.s32 0, %v334
    %v336 = vrot.slane %v328, %v335
    %v339 = vadd.f32 %v287, %v332
    %v340 = vadd.f32 %v292, %v332
    %v341 = vadd.f32 %v297, %v336
    %v342 = vadd.f32 %v302, %v336
    %v343 = vlaneseq
    %v344 = vshrl.u32 %v343, 7
    %v345 = vadd.s32 %v344, 8
    %v346 = vlaneseq
    %v347 = vand.u32 %v346, 127
    %vm348 = vcmp.ge.s32.totalorder %v344, %v347
    %vm349 = vcmp.ge.s32.totalorder %v345, %v347
    %v350 = vsel %vm348, 0.0, -1e+30
    %v351 = vsel %vm349, 0.0, -1e+30
    %v352 = vld [vmem:[#allocation6] sm:$0xff]
    %v353 = vld [vmem:[#allocation6 + $0x8] sm:$0xff]
    %v354 = vld [vmem:[#allocation6 + $0x10] sm:$0xff]
    %v355 = vld [vmem:[#allocation6 + $0x18] sm:$0xff]
    %v356 = vld [vmem:[#allocation6 + $0x20] sm:$0xff]
    %v357 = vld [vmem:[#allocation6 + $0x28] sm:$0xff]
    %v358 = vld [vmem:[#allocation6 + $0x30] sm:$0xff]
    %v359 = vld [vmem:[#allocation6 + $0x38] sm:$0xff]
    %v360 = vld [vmem:[#allocation6 + $0x40] sm:$0xff]
    %v361 = vld [vmem:[#allocation6 + $0x48] sm:$0xff]
    %v362 = vld [vmem:[#allocation6 + $0x50] sm:$0xff]
    %v363 = vld [vmem:[#allocation6 + $0x58] sm:$0xff]
    %v364 = vld [vmem:[#allocation6 + $0x60] sm:$0xff]
    %v365 = vld [vmem:[#allocation6 + $0x68] sm:$0xff]
    %v366 = vld [vmem:[#allocation6 + $0x70] sm:$0xff]
    %v367 = vld [vmem:[#allocation6 + $0x78] sm:$0xff]
    %v368 = vld [vmem:[#allocation6 + $0x80] sm:$0xff]
    %v369 = vld [vmem:[#allocation6 + $0x88] sm:$0xff]
    %v370 = vld [vmem:[#allocation6 + $0x90] sm:$0xff]
    %v371 = vld [vmem:[#allocation6 + $0x98] sm:$0xff]
    %v372 = vld [vmem:[#allocation6 + $0xa0] sm:$0xff]
    %v373 = vld [vmem:[#allocation6 + $0xa8] sm:$0xff]
    %v374 = vld [vmem:[#allocation6 + $0xb0] sm:$0xff]
    %v375 = vld [vmem:[#allocation6 + $0xb8] sm:$0xff]
    %v376 = vld [vmem:[#allocation6 + $0xc0] sm:$0xff]
    %v377 = vld [vmem:[#allocation6 + $0xc8] sm:$0xff]
    %v378 = vld [vmem:[#allocation6 + $0xd0] sm:$0xff]
    %v379 = vld [vmem:[#allocation6 + $0xd8] sm:$0xff]
    %v380 = vld [vmem:[#allocation6 + $0xe0] sm:$0xff]
    %v381 = vld [vmem:[#allocation6 + $0xe8] sm:$0xff]
    %v382 = vld [vmem:[#allocation6 + $0xf0] sm:$0xff]
    %v383 = vld [vmem:[#allocation6 + $0xf8] sm:$0xff]
    %v384 = vld [vmem:[#allocation6 + $0x100] sm:$0xff]
    %v385 = vld [vmem:[#allocation6 + $0x108] sm:$0xff]
    %v386 = vld [vmem:[#allocation6 + $0x110] sm:$0xff]
    %v387 = vld [vmem:[#allocation6 + $0x118] sm:$0xff]
    %v388 = vld [vmem:[#allocation6 + $0x120] sm:$0xff]
    %v389 = vld [vmem:[#allocation6 + $0x128] sm:$0xff]
    %v390 = vld [vmem:[#allocation6 + $0x130] sm:$0xff]
    %v391 = vld [vmem:[#allocation6 + $0x138] sm:$0xff]
    %v392 = vld [vmem:[#allocation6 + $0x140] sm:$0xff]
    %v393 = vld [vmem:[#allocation6 + $0x148] sm:$0xff]
    %v394 = vld [vmem:[#allocation6 + $0x150] sm:$0xff]
    %v395 = vld [vmem:[#allocation6 + $0x158] sm:$0xff]
    %v396 = vld [vmem:[#allocation6 + $0x160] sm:$0xff]
    %v397 = vld [vmem:[#allocation6 + $0x168] sm:$0xff]
    %v398 = vld [vmem:[#allocation6 + $0x170] sm:$0xff]
    %v399 = vld [vmem:[#allocation6 + $0x178] sm:$0xff]
    %v400 = vld [vmem:[%s7] sm:$0x7]
    %v402 = vlaneseq
    %v403 = vshrl.u32 %v402, 7
    %v404 = vsub.s32 0, %v403
    %v405 = vrot.slane %v400, %v404
    %v406 = vlaneseq
    %v407 = vshrl.u32 %v406, 7
    %v408 = vsub.s32 1, %v407
    %v409 = vrot.slane %v400, %v408
    %v410 = vlaneseq
    %v411 = vshrl.u32 %v410, 7
    %v412 = vsub.s32 2, %v411
    %v413 = vrot.slane %v400, %v412
    %417 = vmatprep.subr.mxu0 %v353
    %418 = vmatpush1.msra.mxu0 %v352
    %419 = vmatprep.subr.mxu0 %v356
    %420 = vmatpush1.msra.mxu0 %v355
    %421 = vmatprep.subr.mxu0 %v359
    %422 = vmatpush1.msra.mxu0 %v358
    %423 = vmatprep.subr.mxu0 %v362
    %424 = vmatpush1.msra.mxu0 %v361
    %425 = vmatprep.subr.mxu0 %v365
    %426 = vmatpush1.msra.mxu0 %v364
    %427 = vmatprep.subr.mxu0 %v368
    %428 = vmatpush1.msra.mxu0 %v367
    %429 = vmatprep.subr.mxu0 %v371
    %430 = vmatpush1.msra.mxu0 %v370
    %431 = vmatprep.subr.mxu0 %v374
    %432 = vmatpush1.msra.mxu0 %v373
    %433 = vmatprep.subr.mxu0 %v377
    %434 = vmatpush1.msra.mxu0 %v376
    %435 = vmatprep.subr.mxu0 %v380
    %436 = vmatpush1.msra.mxu0 %v379
    %437 = vmatprep.subr.mxu0 %v383
    %438 = vmatpush1.msra.mxu0 %v382
    %439 = vmatprep.subr.mxu0 %v386
    %440 = vmatpush1.msra.mxu0 %v385
    %441 = vmatprep.subr.mxu0 %v389
    %442 = vmatpush1.msra.mxu0 %v388
    %443 = vmatprep.subr.mxu0 %v392
    %444 = vmatpush1.msra.mxu0 %v391
    %445 = vmatprep.subr.mxu0 %v395
    %446 = vmatpush1.msra.mxu0 %v394
    %447 = vmatprep.subr.mxu0 %v398
    %448 = vmatpush1.msra.mxu0 %v397
    %449 = vmatprep.subr.mxu0 0.0
    %450 = vmatpush1.msra.mxu0 0.0
    %451 = vmatprep.subr.mxu0 0.0
    %452 = vmatpush1.msra.mxu0 0.0
    %453 = vmatprep.subr.mxu0 0.0
    %454 = vmatpush1.msra.mxu0 0.0
    %455 = vmatprep.subr.mxu0 0.0
    %456 = vmatpush1.msra.mxu0 0.0
    %457 = vmatprep.subr.mxu0 0.0
    %458 = vmatpush1.msra.mxu0 0.0
    %459 = vmatprep.subr.mxu0 0.0
    %460 = vmatpush1.msra.mxu0 0.0
    %461 = vmatprep.subr.mxu0 0.0
    %462 = vmatpush1.msra.mxu0 0.0
    %463 = vmatprep.subr.mxu0 0.0
    %464 = vmatpush1.msra.mxu0 0.0
    %465 = vmatprep.subr.mxu0 0.0
    %466 = vmatpush1.msra.mxu0 0.0
    %467 = vmatprep.subr.mxu0 0.0
    %468 = vmatpush1.msra.mxu0 0.0
    %469 = vmatprep.subr.mxu0 0.0
    %470 = vmatpush1.msra.mxu0 0.0
    %471 = vmatprep.subr.mxu0 0.0
    %472 = vmatpush1.msra.mxu0 0.0
    %473 = vmatprep.subr.mxu0 0.0
    %474 = vmatpush1.msra.mxu0 0.0
    %475 = vmatprep.subr.mxu0 0.0
    %476 = vmatpush1.msra.mxu0 0.0
    %477 = vmatprep.subr.mxu0 0.0
    %478 = vmatpush1.msra.mxu0 0.0
    %479 = vmatprep.subr.mxu0 0.0
    %480 = vmatpush1.msra.mxu0 0.0
    %481 = vmatprep.mubr.f32.mxu0 0.0
    %482 = vmatmul.mubr.f32.gmra.mrb[0].mxu0 %v339
    %v483 = vpop.f32.mrb[0].mxu0
    %v484 = vadd.f32 %v405, %v483
    %v485 = vpop.f32.mrb[0].mxu0
    %v486 = vadd.f32 %v409, %v485
    %487 = vmatprep.mubr.f32.mxu0 0.0
    %488 = vmatmul.mubr.f32.gmra.mrb[0].mxu0 %v340
    %v489 = vpop.f32.mrb[0].mxu0
    %v490 = vadd.f32 %v405, %v489
    %v491 = vpop.f32.mrb[0].mxu0
    %v492 = vadd.f32 %v409, %v491
    %493 = vmatprep.mubr.f32.mxu0 0.0
    %494 = vmatmul.mubr.f32.gmra.mrb[0].mxu0 %v341
    %v495 = vpop.f32.mrb[0].mxu0
    %v496 = vadd.f32 %v405, %v495
    %v497 = vpop.f32.mrb[0].mxu0
    %v498 = vadd.f32 %v409, %v497
    %499 = vmatprep.mubr.f32.mxu0 0.0
    %500 = vmatmul.mubr.f32.gmra.mrb[0].mxu0 %v342
    %v501 = vpop.f32.mrb[0].mxu0
    %v502 = vadd.f32 %v405, %v501
    %v503 = vpop.f32.mrb[0].mxu0
    %v504 = vadd.f32 %v409, %v503
    %505 = vdwg.mxu0
    %506 = vmatprep.subr.mxu0 0.0
    %507 = vmatpush1.msra.mxu0 %v354
    %508 = vmatprep.subr.mxu0 0.0
    %509 = vmatpush1.msra.mxu0 %v357
    %510 = vmatprep.subr.mxu0 0.0
    %511 = vmatpush1.msra.mxu0 %v360
    %512 = vmatprep.subr.mxu0 0.0
    %513 = vmatpush1.msra.mxu0 %v363
    %514 = vmatprep.subr.mxu0 0.0
    %515 = vmatpush1.msra.mxu0 %v366
    %516 = vmatprep.subr.mxu0 0.0
    %517 = vmatpush1.msra.mxu0 %v369
    %518 = vmatprep.subr.mxu0 0.0
    %519 = vmatpush1.msra.mxu0 %v372
    %520 = vmatprep.subr.mxu0 0.0
    %521 = vmatpush1.msra.mxu0 %v375
    %522 = vmatprep.subr.mxu0 0.0
    %523 = vmatpush1.msra.mxu0 %v378
    %524 = vmatprep.subr.mxu0 0.0
    %525 = vmatpush1.msra.mxu0 %v381
    %526 = vmatprep.subr.mxu0 0.0
    %527 = vmatpush1.msra.mxu0 %v384
    %528 = vmatprep.subr.mxu0 0.0
    %529 = vmatpush1.msra.mxu0 %v387
    %530 = vmatprep.subr.mxu0 0.0
    %531 = vmatpush1.msra.mxu0 %v390
    %532 = vmatprep.subr.mxu0 0.0
    %533 = vmatpush1.msra.mxu0 %v393
    %534 = vmatprep.subr.mxu0 0.0
    %535 = vmatpush1.msra.mxu0 %v396
    %536 = vmatprep.subr.mxu0 0.0
    %537 = vmatpush1.msra.mxu0 %v399
    %538 = vmatprep.subr.mxu0 0.0
    %539 = vmatpush1.msra.mxu0 0.0
    %540 = vmatprep.subr.mxu0 0.0
    %541 = vmatpush1.msra.mxu0 0.0
    %542 = vmatprep.subr.mxu0 0.0
    %543 = vmatpush1.msra.mxu0 0.0
    %544 = vmatprep.subr.mxu0 0.0
    %545 = vmatpush1.msra.mxu0 0.0
    %546 = vmatprep.subr.mxu0 0.0
    %547 = vmatpush1.msra.mxu0 0.0
    %548 = vmatprep.subr.mxu0 0.0
    %549 = vmatpush1.msra.mxu0 0.0
    %550 = vmatprep.subr.mxu0 0.0
    %551 = vmatpush1.msra.mxu0 0.0
    %552 = vmatprep.subr.mxu0 0.0
    %553 = vmatpush1.msra.mxu0 0.0
    %554 = vmatprep.subr.mxu0 0.0
    %555 = vmatpush1.msra.mxu0 0.0
    %556 = vmatprep.subr.mxu0 0.0
    %557 = vmatpush1.msra.mxu0 0.0
    %558 = vmatprep.subr.mxu0 0.0
    %559 = vmatpush1.msra.mxu0 0.0
    %560 = vmatprep.subr.mxu0 0.0
    %561 = vmatpush1.msra.mxu0 0.0
    %562 = vmatprep.subr.mxu0 0.0
    %563 = vmatpush1.msra.mxu0 0.0
    %564 = vmatprep.subr.mxu0 0.0
    %565 = vmatpush1.msra.mxu0 0.0
    %566 = vmatprep.subr.mxu0 0.0
    %567 = vmatpush1.msra.mxu0 0.0
    %568 = vmatprep.subr.mxu0 0.0
    %569 = vmatpush1.msra.mxu0 0.0
    %570 = vmatprep.mubr.f32.mxu0 0.0
    %571 = vmatmul.mubr.f32.gmra.mrb[0].mxu0 %v339
    %v572 = vpop.f32.mrb[0].mxu0
    %v573 = vadd.f32 %v413, %v572
    %v574 = vpop.f32.mrb[0].mxu0
    %575 = vmatprep.mubr.f32.mxu0 0.0
    %576 = vmatmul.mubr.f32.gmra.mrb[0].mxu0 %v340
    %v577 = vpop.f32.mrb[0].mxu0
    %v578 = vadd.f32 %v413, %v577
    %v579 = vpop.f32.mrb[0].mxu0
    %580 = vmatprep.mubr.f32.mxu0 0.0
    %581 = vmatmul.mubr.f32.gmra.mrb[0].mxu0 %v341
    %v582 = vpop.f32.mrb[0].mxu0
    %v583 = vadd.f32 %v413, %v582
    %v584 = vpop.f32.mrb[0].mxu0
    %585 = vmatprep.mubr.f32.mxu0 0.0
    %586 = vmatmul.mubr.f32.gmra.mrb[0].mxu0 %v342
    %v587 = vpop.f32.mrb[0].mxu0
    %v588 = vadd.f32 %v413, %v587
    %v589 = vpop.f32.mrb[0].mxu0
    %590 = vdwg.mxu0
    %vm591 = vcmask 261120
    %v593 = vsel %vm591, %v484, 0
    %v596 = vsel %vm591, %v490, 0
    %v599 = vsel %vm591, %v486, 0
    %v602 = vsel %vm591, %v492, 0
    %604 = vmatprep.subr.mxu0 0.0
    %605 = vmatpush1.xpose.msra.mxu0 %v599
    %606 = vmatprep.subr.mxu0 0.0
    %607 = vmatpush1.xpose.msra.mxu0 %v602
    %608 = vmatprep.subr.mxu0 0.0
    %609 = vmatpush1.xpose.msra.mxu0 0.0
    %610 = vmatprep.subr.mxu0 0.0
    %611 = vmatpush1.xpose.msra.mxu0 0.0
    %612 = vmatprep.subr.mxu0 0.0
    %613 = vmatpush1.xpose.msra.mxu0 0.0
    %614 = vmatprep.subr.mxu0 0.0
    %615 = vmatpush1.xpose.msra.mxu0 0.0
    %616 = vmatprep.subr.mxu0 0.0
    %617 = vmatpush1.xpose.msra.mxu0 0.0
    %618 = vmatprep.subr.mxu0 0.0
    %619 = vmatpush1.xpose.msra.mxu0 0.0
    %620 = vmatprep.subr.mxu0 0.0
    %621 = vmatpush1.xpose.msra.mxu0 0.0
    %622 = vmatprep.subr.mxu0 0.0
    %623 = vmatpush1.xpose.msra.mxu0 0.0
    %624 = vmatprep.subr.mxu0 0.0
    %625 = vmatpush1.xpose.msra.mxu0 0.0
    %626 = vmatprep.subr.mxu0 0.0
    %627 = vmatpush1.xpose.msra.mxu0 0.0
    %628 = vmatprep.subr.mxu0 0.0
    %629 = vmatpush1.xpose.msra.mxu0 0.0
    %630 = vmatprep.subr.mxu0 0.0
    %631 = vmatpush1.xpose.msra.mxu0 0.0
    %632 = vmatprep.subr.mxu0 0.0
    %633 = vmatpush1.xpose.msra.mxu0 0.0
    %634 = vmatprep.subr.mxu0 0.0
    %635 = vmatpush1.xpose.msra.mxu0 0.0
    %636 = vmatprep.subr.mxu0 0.0
    %637 = vmatpush1.xpose.msra.mxu0 0.0
    %638 = vmatprep.subr.mxu0 0.0
    %639 = vmatpush1.xpose.msra.mxu0 0.0
    %640 = vmatprep.subr.mxu0 0.0
    %641 = vmatpush1.xpose.msra.mxu0 0.0
    %642 = vmatprep.subr.mxu0 0.0
    %643 = vmatpush1.xpose.msra.mxu0 0.0
    %644 = vmatprep.subr.mxu0 0.0
    %645 = vmatpush1.xpose.msra.mxu0 0.0
    %646 = vmatprep.subr.mxu0 0.0
    %647 = vmatpush1.xpose.msra.mxu0 0.0
    %648 = vmatprep.subr.mxu0 0.0
    %649 = vmatpush1.xpose.msra.mxu0 0.0
    %650 = vmatprep.subr.mxu0 0.0
    %651 = vmatpush1.xpose.msra.mxu0 0.0
    %652 = vmatprep.subr.mxu0 0.0
    %653 = vmatpush1.xpose.msra.mxu0 0.0
    %654 = vmatprep.subr.mxu0 0.0
    %655 = vmatpush1.xpose.msra.mxu0 0.0
    %656 = vmatprep.subr.mxu0 0.0
    %657 = vmatpush1.xpose.msra.mxu0 0.0
    %658 = vmatprep.subr.mxu0 0.0
    %659 = vmatpush1.xpose.msra.mxu0 0.0
    %660 = vmatprep.subr.mxu0 0.0
    %661 = vmatpush1.xpose.msra.mxu0 0.0
    %662 = vmatprep.subr.mxu0 0.0
    %663 = vmatpush1.xpose.msra.mxu0 0.0
    %664 = vmatprep.subr.mxu0 0.0
    %665 = vmatpush1.xpose.msra.mxu0 0.0
    %666 = vmatprep.subr.mxu0 0.0
    %667 = vmatpush1.xpose.msra.mxu0 0.0
    %668 = vmatprep.mubr.f32.mxu0 0.0
    %669 = vmatmul.mubr.f32.gmra.mrb[0].mxu0 %v593
    %v670 = vpop.f32.mrb[0].mxu0
    %v671 = vadd.f32 0.0, %v670
    %v672 = vpop.f32.mrb[0].mxu0
    %673 = vmatprep.mubr.f32.mxu0 0.0
    %674 = vmatmul.mubr.f32.gmra.mrb[0].mxu0 %v596
    %v675 = vpop.f32.mrb[0].mxu0
    %v676 = vadd.f32 0.0, %v675
    %v677 = vpop.f32.mrb[0].mxu0
    %678 = vdwg.mxu0
    %v680 = vsel %vm591, %v496, 0
    %v683 = vsel %vm591, %v502, 0
    %v686 = vsel %vm591, %v498, 0
    %v689 = vsel %vm591, %v504, 0
    %691 = vmatprep.subr.mxu0 0.0
    %692 = vmatpush1.xpose.msra.mxu0 %v686
    %693 = vmatprep.subr.mxu0 0.0
    %694 = vmatpush1.xpose.msra.mxu0 %v689
    %695 = vmatprep.subr.mxu0 0.0
    %696 = vmatpush1.xpose.msra.mxu0 0.0
    %697 = vmatprep.subr.mxu0 0.0
    %698 = vmatpush1.xpose.msra.mxu0 0.0
    %699 = vmatprep.subr.mxu0 0.0
    %700 = vmatpush1.xpose.msra.mxu0 0.0
    %701 = vmatprep.subr.mxu0 0.0
    %702 = vmatpush1.xpose.msra.mxu0 0.0
    %703 = vmatprep.subr.mxu0 0.0
    %704 = vmatpush1.xpose.msra.mxu0 0.0
    %705 = vmatprep.subr.mxu0 0.0
    %706 = vmatpush1.xpose.msra.mxu0 0.0
    %707 = vmatprep.subr.mxu0 0.0
    %708 = vmatpush1.xpose.msra.mxu0 0.0
    %709 = vmatprep.subr.mxu0 0.0
    %710 = vmatpush1.xpose.msra.mxu0 0.0
    %711 = vmatprep.subr.mxu0 0.0
    %712 = vmatpush1.xpose.msra.mxu0 0.0
    %713 = vmatprep.subr.mxu0 0.0
    %714 = vmatpush1.xpose.msra.mxu0 0.0
    %715 = vmatprep.subr.mxu0 0.0
    %716 = vmatpush1.xpose.msra.mxu0 0.0
    %717 = vmatprep.subr.mxu0 0.0
    %718 = vmatpush1.xpose.msra.mxu0 0.0
    %719 = vmatprep.subr.mxu0 0.0
    %720 = vmatpush1.xpose.msra.mxu0 0.0
    %721 = vmatprep.subr.mxu0 0.0
    %722 = vmatpush1.xpose.msra.mxu0 0.0
    %723 = vmatprep.subr.mxu0 0.0
    %724 = vmatpush1.xpose.msra.mxu0 0.0
    %725 = vmatprep.subr.mxu0 0.0
    %726 = vmatpush1.xpose.msra.mxu0 0.0
    %727 = vmatprep.subr.mxu0 0.0
    %728 = vmatpush1.xpose.msra.mxu0 0.0
    %729 = vmatprep.subr.mxu0 0.0
    %730 = vmatpush1.xpose.msra.mxu0 0.0
    %731 = vmatprep.subr.mxu0 0.0
    %732 = vmatpush1.xpose.msra.mxu0 0.0
    %733 = vmatprep.subr.mxu0 0.0
    %734 = vmatpush1.xpose.msra.mxu0 0.0
    %735 = vmatprep.subr.mxu0 0.0
    %736 = vmatpush1.xpose.msra.mxu0 0.0
    %737 = vmatprep.subr.mxu0 0.0
    %738 = vmatpush1.xpose.msra.mxu0 0.0
    %739 = vmatprep.subr.mxu0 0.0
    %740 = vmatpush1.xpose.msra.mxu0 0.0
    %741 = vmatprep.subr.mxu0 0.0
    %742 = vmatpush1.xpose.msra.mxu0 0.0
    %743 = vmatprep.subr.mxu0 0.0
    %744 = vmatpush1.xpose.msra.mxu0 0.0
    %745 = vmatprep.subr.mxu0 0.0
    %746 = vmatpush1.xpose.msra.mxu0 0.0
    %747 = vmatprep.subr.mxu0 0.0
    %748 = vmatpush1.xpose.msra.mxu0 0.0
    %749 = vmatprep.subr.mxu0 0.0
    %750 = vmatpush1.xpose.msra.mxu0 0.0
    %751 = vmatprep.subr.mxu0 0.0
    %752 = vmatpush1.xpose.msra.mxu0 0.0
    %753 = vmatprep.subr.mxu0 0.0
    %754 = vmatpush1.xpose.msra.mxu0 0.0
    %755 = vmatprep.mubr.f32.mxu0 0.0
    %756 = vmatmul.mubr.f32.gmra.mrb[0].mxu0 %v680
    %v757 = vpop.f32.mrb[0].mxu0
    %v758 = vadd.f32 0.0, %v757
    %v759 = vpop.f32.mrb[0].mxu0
    %760 = vmatprep.mubr.f32.mxu0 0.0
    %761 = vmatmul.mubr.f32.gmra.mrb[0].mxu0 %v683
    %v762 = vpop.f32.mrb[0].mxu0
    %v763 = vadd.f32 0.0, %v762
    %v764 = vpop.f32.mrb[0].mxu0
    %765 = vdwg.mxu0
    %v766 = vmul.f32 %v671, 0.17677669
    %v767 = vmul.f32 %v676, 0.17677669
    %v768 = vmul.f32 %v758, 0.17677669
    %v769 = vmul.f32 %v763, 0.17677669
    %v770 = vadd.f32 %v766, %v350
    %v771 = vadd.f32 %v767, %v351
    %v772 = vadd.f32 %v768, %v350
    %v773 = vadd.f32 %v769, %v351
    %vm774 = vcmask 130048
    %v775 = vsel %vm774, %v770, -inf
    %776 = vmax.xlane.f32.xlu0 %v775
    %v777 = vpop.xlane.xlu0 %776
    %v778 = vsel %vm774, %v771, -inf
    %779 = vmax.xlane.f32.xlu0 %v778
    %v780 = vpop.xlane.xlu0 %779
    %v781 = vsel %vm774, %v772, -inf
    %782 = vmax.xlane.f32.xlu0 %v781
    %v783 = vpop.xlane.xlu0 %782
    %v784 = vsel %vm774, %v773, -inf
    %785 = vmax.xlane.f32.xlu0 %v784
    %v786 = vpop.xlane.xlu0 %785
    %v787 = vsub.f32 %v770, %v777
    %v788 = vsub.f32 %v771, %v780
    %v789 = vsub.f32 %v772, %v783
    %v790 = vsub.f32 %v773, %v786
    %v791 = vmul.f32 %v787, 1.442695
    %v792 = vpow.pop %v791
    %v793 = vmul.f32 %v788, 1.442695
    %v794 = vpow.pop %v793
    %v795 = vmul.f32 %v789, 1.442695
    %v796 = vpow.pop %v795
    %v797 = vmul.f32 %v790, 1.442695
    %v798 = vpow.pop %v797
    %v799 = vsel %vm774, %v792, 0.0
    %800 = vadd.xlane.f32.xlu0 %v799
    %v801 = vpop.xlane.xlu0 %800
    %v802 = vsel %vm774, %v794, 0.0
    %803 = vadd.xlane.f32.xlu0 %v802
    %v804 = vpop.xlane.xlu0 %803
    %v805 = vsel %vm774, %v796, 0.0
    %806 = vadd.xlane.f32.xlu0 %v805
    %v807 = vpop.xlane.xlu0 %806
    %v808 = vsel %vm774, %v798, 0.0
    %809 = vadd.xlane.f32.xlu0 %v808
    %v810 = vpop.xlane.xlu0 %809
    %v811 = vrcp.pop %v801
    %v812 = vmul.f32 %v792, %v811
    %v813 = vrcp.pop %v804
    %v814 = vmul.f32 %v794, %v813
    %v815 = vrcp.pop %v807
    %v816 = vmul.f32 %v796, %v815
    %v817 = vrcp.pop %v810
    %v818 = vmul.f32 %v798, %v817
    %v820 = vsel %vm774, %v812, 0
    %v823 = vsel %vm774, %v814, 0
    %825 = vmatprep.subr.mxu0 0.0
    %826 = vmatpush1.msra.mxu0 %v573
    %827 = vmatprep.subr.mxu0 0.0
    %828 = vmatpush1.msra.mxu0 %v578
    %829 = vmatprep.subr.mxu0 0.0
    %830 = vmatpush1.msra.mxu0 0.0
    %831 = vmatprep.subr.mxu0 0.0
    %832 = vmatpush1.msra.mxu0 0.0
    %833 = vmatprep.subr.mxu0 0.0
    %834 = vmatpush1.msra.mxu0 0.0
    %835 = vmatprep.subr.mxu0 0.0
    %836 = vmatpush1.msra.mxu0 0.0
    %837 = vmatprep.subr.mxu0 0.0
    %838 = vmatpush1.msra.mxu0 0.0
    %839 = vmatprep.subr.mxu0 0.0
    %840 = vmatpush1.msra.mxu0 0.0
    %841 = vmatprep.subr.mxu0 0.0
    %842 = vmatpush1.msra.mxu0 0.0
    %843 = vmatprep.subr.mxu0 0.0
    %844 = vmatpush1.msra.mxu0 0.0
    %845 = vmatprep.subr.mxu0 0.0
    %846 = vmatpush1.msra.mxu0 0.0
    %847 = vmatprep.subr.mxu0 0.0
    %848 = vmatpush1.msra.mxu0 0.0
    %849 = vmatprep.subr.mxu0 0.0
    %850 = vmatpush1.msra.mxu0 0.0
    %851 = vmatprep.subr.mxu0 0.0
    %852 = vmatpush1.msra.mxu0 0.0
    %853 = vmatprep.subr.mxu0 0.0
    %854 = vmatpush1.msra.mxu0 0.0
    %855 = vmatprep.subr.mxu0 0.0
    %856 = vmatpush1.msra.mxu0 0.0
    %857 = vmatprep.subr.mxu0 0.0
    %858 = vmatpush1.msra.mxu0 0.0
    %859 = vmatprep.subr.mxu0 0.0
    %860 = vmatpush1.msra.mxu0 0.0
    %861 = vmatprep.subr.mxu0 0.0
    %862 = vmatpush1.msra.mxu0 0.0
    %863 = vmatprep.subr.mxu0 0.0
    %864 = vmatpush1.msra.mxu0 0.0
    %865 = vmatprep.subr.mxu0 0.0
    %866 = vmatpush1.msra.mxu0 0.0
    %867 = vmatprep.subr.mxu0 0.0
    %868 = vmatpush1.msra.mxu0 0.0
    %869 = vmatprep.subr.mxu0 0.0
    %870 = vmatpush1.msra.mxu0 0.0
    %871 = vmatprep.subr.mxu0 0.0
    %872 = vmatpush1.msra.mxu0 0.0
    %873 = vmatprep.subr.mxu0 0.0
    %874 = vmatpush1.msra.mxu0 0.0
    %875 = vmatprep.subr.mxu0 0.0
    %876 = vmatpush1.msra.mxu0 0.0
    %877 = vmatprep.subr.mxu0 0.0
    %878 = vmatpush1.msra.mxu0 0.0
    %879 = vmatprep.subr.mxu0 0.0
    %880 = vmatpush1.msra.mxu0 0.0
    %881 = vmatprep.subr.mxu0 0.0
    %882 = vmatpush1.msra.mxu0 0.0
    %883 = vmatprep.subr.mxu0 0.0
    %884 = vmatpush1.msra.mxu0 0.0
    %885 = vmatprep.subr.mxu0 0.0
    %886 = vmatpush1.msra.mxu0 0.0
    %887 = vmatprep.subr.mxu0 0.0
    %888 = vmatpush1.msra.mxu0 0.0
    %889 = vmatprep.mubr.f32.mxu0 0.0
    %890 = vmatmul.mubr.f32.gmra.mrb[0].mxu0 %v820
    %v891 = vpop.f32.mrb[0].mxu0
    %v892 = vadd.f32 0.0, %v891
    %v893 = vpop.f32.mrb[0].mxu0
    %894 = vmatprep.mubr.f32.mxu0 0.0
    %895 = vmatmul.mubr.f32.gmra.mrb[0].mxu0 %v823
    %v896 = vpop.f32.mrb[0].mxu0
    %v897 = vadd.f32 0.0, %v896
    %v898 = vpop.f32.mrb[0].mxu0
    %899 = vdwg.mxu0
    %v901 = vsel %vm774, %v816, 0
    %v904 = vsel %vm774, %v818, 0
    %906 = vmatprep.subr.mxu0 0.0
    %907 = vmatpush1.msra.mxu0 %v583
    %908 = vmatprep.subr.mxu0 0.0
    %909 = vmatpush1.msra.mxu0 %v588
    %910 = vmatprep.subr.mxu0 0.0
    %911 = vmatpush1.msra.mxu0 0.0
    %912 = vmatprep.subr.mxu0 0.0
    %913 = vmatpush1.msra.mxu0 0.0
    %914 = vmatprep.subr.mxu0 0.0
    %915 = vmatpush1.msra.mxu0 0.0
    %916 = vmatprep.subr.mxu0 0.0
    %917 = vmatpush1.msra.mxu0 0.0
    %918 = vmatprep.subr.mxu0 0.0
    %919 = vmatpush1.msra.mxu0 0.0
    %920 = vmatprep.subr.mxu0 0.0
    %921 = vmatpush1.msra.mxu0 0.0
    %922 = vmatprep.subr.mxu0 0.0
    %923 = vmatpush1.msra.mxu0 0.0
    %924 = vmatprep.subr.mxu0 0.0
    %925 = vmatpush1.msra.mxu0 0.0
    %926 = vmatprep.subr.mxu0 0.0
    %927 = vmatpush1.msra.mxu0 0.0
    %928 = vmatprep.subr.mxu0 0.0
    %929 = vmatpush1.msra.mxu0 0.0
    %930 = vmatprep.subr.mxu0 0.0
    %931 = vmatpush1.msra.mxu0 0.0
    %932 = vmatprep.subr.mxu0 0.0
    %933 = vmatpush1.msra.mxu0 0.0
    %934 = vmatprep.subr.mxu0 0.0
    %935 = vmatpush1.msra.mxu0 0.0
    %936 = vmatprep.subr.mxu0 0.0
    %937 = vmatpush1.msra.mxu0 0.0
    %938 = vmatprep.subr.mxu0 0.0
    %939 = vmatpush1.msra.mxu0 0.0
    %940 = vmatprep.subr.mxu0 0.0
    %941 = vmatpush1.msra.mxu0 0.0
    %942 = vmatprep.subr.mxu0 0.0
    %943 = vmatpush1.msra.mxu0 0.0
    %944 = vmatprep.subr.mxu0 0.0
    %945 = vmatpush1.msra.mxu0 0.0
    %946 = vmatprep.subr.mxu0 0.0
    %947 = vmatpush1.msra.mxu0 0.0
    %948 = vmatprep.subr.mxu0 0.0
    %949 = vmatpush1.msra.mxu0 0.0
    %950 = vmatprep.subr.mxu0 0.0
    %951 = vmatpush1.msra.mxu0 0.0
    %952 = vmatprep.subr.mxu0 0.0
    %953 = vmatpush1.msra.mxu0 0.0
    %954 = vmatprep.subr.mxu0 0.0
    %955 = vmatpush1.msra.mxu0 0.0
    %956 = vmatprep.subr.mxu0 0.0
    %957 = vmatpush1.msra.mxu0 0.0
    %958 = vmatprep.subr.mxu0 0.0
    %959 = vmatpush1.msra.mxu0 0.0
    %960 = vmatprep.subr.mxu0 0.0
    %961 = vmatpush1.msra.mxu0 0.0
    %962 = vmatprep.subr.mxu0 0.0
    %963 = vmatpush1.msra.mxu0 0.0
    %964 = vmatprep.subr.mxu0 0.0
    %965 = vmatpush1.msra.mxu0 0.0
    %966 = vmatprep.subr.mxu0 0.0
    %967 = vmatpush1.msra.mxu0 0.0
    %968 = vmatprep.subr.mxu0 0.0
    %969 = vmatpush1.msra.mxu0 0.0
    %970 = vmatprep.mubr.f32.mxu0 0.0
    %971 = vmatmul.mubr.f32.gmra.mrb[0].mxu0 %v901
    %v972 = vpop.f32.mrb[0].mxu0
    %v973 = vadd.f32 0.0, %v972
    %v974 = vpop.f32.mrb[0].mxu0
    %975 = vmatprep.mubr.f32.mxu0 0.0
    %976 = vmatmul.mubr.f32.gmra.mrb[0].mxu0 %v904
    %v977 = vpop.f32.mrb[0].mxu0
    %v978 = vadd.f32 0.0, %v977
    %v979 = vpop.f32.mrb[0].mxu0
    %980 = vdwg.mxu0
    %981 = vrot.lane.b32.xlu0 %v484, 96
    %v982 = vpop.permute.xlu0 %981
    %983 = vrot.lane.b32.xlu0 %v490, 96
    %v984 = vpop.permute.xlu0 %983
    %985 = vrot.lane.b32.xlu0 %v486, 96
    %v986 = vpop.permute.xlu0 %985
    %987 = vrot.lane.b32.xlu0 %v492, 96
    %v988 = vpop.permute.xlu0 %987
    %v989 = vsel %vm591, %v982, 0
    %v991 = vsel %vm591, %v984, 0
    %v993 = vsel %vm591, %v986, 0
    %v995 = vsel %vm591, %v988, 0
    %997 = vmatprep.subr.mxu0 0.0
    %998 = vmatpush1.xpose.msra.mxu0 %v993
    %999 = vmatprep.subr.mxu0 0.0
    %1000 = vmatpush1.xpose.msra.mxu0 %v995
    %1001 = vmatprep.subr.mxu0 0.0
    %1002 = vmatpush1.xpose.msra.mxu0 0.0
    %1003 = vmatprep.subr.mxu0 0.0
    %1004 = vmatpush1.xpose.msra.mxu0 0.0
    %1005 = vmatprep.subr.mxu0 0.0
    %1006 = vmatpush1.xpose.msra.mxu0 0.0
    %1007 = vmatprep.subr.mxu0 0.0
    %1008 = vmatpush1.xpose.msra.mxu0 0.0
    %1009 = vmatprep.subr.mxu0 0.0
    %1010 = vmatpush1.xpose.msra.mxu0 0.0
    %1011 = vmatprep.subr.mxu0 0.0
    %1012 = vmatpush1.xpose.msra.mxu0 0.0
    %1013 = vmatprep.subr.mxu0 0.0
    %1014 = vmatpush1.xpose.msra.mxu0 0.0
    %1015 = vmatprep.subr.mxu0 0.0
    %1016 = vmatpush1.xpose.msra.mxu0 0.0
    %1017 = vmatprep.subr.mxu0 0.0
    %1018 = vmatpush1.xpose.msra.mxu0 0.0
    %1019 = vmatprep.subr.mxu0 0.0
    %1020 = vmatpush1.xpose.msra.mxu0 0.0
    %1021 = vmatprep.subr.mxu0 0.0
    %1022 = vmatpush1.xpose.msra.mxu0 0.0
    %1023 = vmatprep.subr.mxu0 0.0
    %1024 = vmatpush1.xpose.msra.mxu0 0.0
    %1025 = vmatprep.subr.mxu0 0.0
    %1026 = vmatpush1.xpose.msra.mxu0 0.0
    %1027 = vmatprep.subr.mxu0 0.0
    %1028 = vmatpush1.xpose.msra.mxu0 0.0
    %1029 = vmatprep.subr.mxu0 0.0
    %1030 = vmatpush1.xpose.msra.mxu0 0.0
    %1031 = vmatprep.subr.mxu0 0.0
    %1032 = vmatpush1.xpose.msra.mxu0 0.0
    %1033 = vmatprep.subr.mxu0 0.0
    %1034 = vmatpush1.xpose.msra.mxu0 0.0
    %1035 = vmatprep.subr.mxu0 0.0
    %1036 = vmatpush1.xpose.msra.mxu0 0.0
    %1037 = vmatprep.subr.mxu0 0.0
    %1038 = vmatpush1.xpose.msra.mxu0 0.0
    %1039 = vmatprep.subr.mxu0 0.0
    %1040 = vmatpush1.xpose.msra.mxu0 0.0
    %1041 = vmatprep.subr.mxu0 0.0
    %1042 = vmatpush1.xpose.msra.mxu0 0.0
    %1043 = vmatprep.subr.mxu0 0.0
    %1044 = vmatpush1.xpose.msra.mxu0 0.0
    %1045 = vmatprep.subr.mxu0 0.0
    %1046 = vmatpush1.xpose.msra.mxu0 0.0
    %1047 = vmatprep.subr.mxu0 0.0
    %1048 = vmatpush1.xpose.msra.mxu0 0.0
    %1049 = vmatprep.subr.mxu0 0.0
    %1050 = vmatpush1.xpose.msra.mxu0 0.0
    %1051 = vmatprep.subr.mxu0 0.0
    %1052 = vmatpush1.xpose.msra.mxu0 0.0
    %1053 = vmatprep.subr.mxu0 0.0
    %1054 = vmatpush1.xpose.msra.mxu0 0.0
    %1055 = vmatprep.subr.mxu0 0.0
    %1056 = vmatpush1.xpose.msra.mxu0 0.0
    %1057 = vmatprep.subr.mxu0 0.0
    %1058 = vmatpush1.xpose.msra.mxu0 0.0
    %1059 = vmatprep.subr.mxu0 0.0
    %1060 = vmatpush1.xpose.msra.mxu0 0.0
    %1061 = vmatprep.mubr.f32.mxu0 0.0
    %1062 = vmatmul.mubr.f32.gmra.mrb[0].mxu0 %v989
    %v1063 = vpop.f32.mrb[0].mxu0
    %v1064 = vadd.f32 0.0, %v1063
    %v1065 = vpop.f32.mrb[0].mxu0
    %1066 = vmatprep.mubr.f32.mxu0 0.0
    %1067 = vmatmul.mubr.f32.gmra.mrb[0].mxu0 %v991
    %v1068 = vpop.f32.mrb[0].mxu0
    %v1069 = vadd.f32 0.0, %v1068
    %v1070 = vpop.f32.mrb[0].mxu0
    %1071 = vdwg.mxu0
    %1072 = vrot.lane.b32.xlu0 %v496, 96
    %v1073 = vpop.permute.xlu0 %1072
    %1074 = vrot.lane.b32.xlu0 %v502, 96
    %v1075 = vpop.permute.xlu0 %1074
    %1076 = vrot.lane.b32.xlu0 %v498, 96
    %v1077 = vpop.permute.xlu0 %1076
    %1078 = vrot.lane.b32.xlu0 %v504, 96
    %v1079 = vpop.permute.xlu0 %1078
    %v1080 = vsel %vm591, %v1073, 0
    %v1082 = vsel %vm591, %v1075, 0
    %v1084 = vsel %vm591, %v1077, 0
    %v1086 = vsel %vm591, %v1079, 0
    %1088 = vmatprep.subr.mxu0 0.0
    %1089 = vmatpush1.xpose.msra.mxu0 %v1084
    %1090 = vmatprep.subr.mxu0 0.0
    %1091 = vmatpush1.xpose.msra.mxu0 %v1086
    %1092 = vmatprep.subr.mxu0 0.0
    %1093 = vmatpush1.xpose.msra.mxu0 0.0
    %1094 = vmatprep.subr.mxu0 0.0
    %1095 = vmatpush1.xpose.msra.mxu0 0.0
    %1096 = vmatprep.subr.mxu0 0.0
    %1097 = vmatpush1.xpose.msra.mxu0 0.0
    %1098 = vmatprep.subr.mxu0 0.0
    %1099 = vmatpush1.xpose.msra.mxu0 0.0
    %1100 = vmatprep.subr.mxu0 0.0
    %1101 = vmatpush1.xpose.msra.mxu0 0.0
    %1102 = vmatprep.subr.mxu0 0.0
    %1103 = vmatpush1.xpose.msra.mxu0 0.0
    %1104 = vmatprep.subr.mxu0 0.0
    %1105 = vmatpush1.xpose.msra.mxu0 0.0
    %1106 = vmatprep.subr.mxu0 0.0
    %1107 = vmatpush1.xpose.msra.mxu0 0.0
    %1108 = vmatprep.subr.mxu0 0.0
    %1109 = vmatpush1.xpose.msra.mxu0 0.0
    %1110 = vmatprep.subr.mxu0 0.0
    %1111 = vmatpush1.xpose.msra.mxu0 0.0
    %1112 = vmatprep.subr.mxu0 0.0
    %1113 = vmatpush1.xpose.msra.mxu0 0.0
    %1114 = vmatprep.subr.mxu0 0.0
    %1115 = vmatpush1.xpose.msra.mxu0 0.0
    %1116 = vmatprep.subr.mxu0 0.0
    %1117 = vmatpush1.xpose.msra.mxu0 0.0
    %1118 = vmatprep.subr.mxu0 0.0
    %1119 = vmatpush1.xpose.msra.mxu0 0.0
    %1120 = vmatprep.subr.mxu0 0.0
    %1121 = vmatpush1.xpose.msra.mxu0 0.0
    %1122 = vmatprep.subr.mxu0 0.0
    %1123 = vmatpush1.xpose.msra.mxu0 0.0
    %1124 = vmatprep.subr.mxu0 0.0
    %1125 = vmatpush1.xpose.msra.mxu0 0.0
    %1126 = vmatprep.subr.mxu0 0.0
    %1127 = vmatpush1.xpose.msra.mxu0 0.0
    %1128 = vmatprep.subr.mxu0 0.0
    %1129 = vmatpush1.xpose.msra.mxu0 0.0
    %1130 = vmatprep.subr.mxu0 0.0
    %1131 = vmatpush1.xpose.msra.mxu0 0.0
    %1132 = vmatprep.subr.mxu0 0.0
    %1133 = vmatpush1.xpose.msra.mxu0 0.0
    %1134 = vmatprep.subr.mxu0 0.0
    %1135 = vmatpush1.xpose.msra.mxu0 0.0
    %1136 = vmatprep.subr.mxu0 0.0
    %1137 = vmatpush1.xpose.msra.mxu0 0.0
    %1138 = vmatprep.subr.mxu0 0.0
    %1139 = vmatpush1.xpose.msra.mxu0 0.0
    %1140 = vmatprep.subr.mxu0 0.0
    %1141 = vmatpush1.xpose.msra.mxu0 0.0
    %1142 = vmatprep.subr.mxu0 0.0
    %1143 = vmatpush1.xpose.msra.mxu0 0.0
    %1144 = vmatprep.subr.mxu0 0.0
    %1145 = vmatpush1.xpose.msra.mxu0 0.0
    %1146 = vmatprep.subr.mxu0 0.0
    %1147 = vmatpush1.xpose.msra.mxu0 0.0
    %1148 = vmatprep.subr.mxu0 0.0
    %1149 = vmatpush1.xpose.msra.mxu0 0.0
    %1150 = vmatprep.subr.mxu0 0.0
    %1151 = vmatpush1.xpose.msra.mxu0 0.0
    %1152 = vmatprep.mubr.f32.mxu0 0.0
    %1153 = vmatmul.mubr.f32.gmra.mrb[0].mxu0 %v1080
    %v1154 = vpop.f32.mrb[0].mxu0
    %v1155 = vadd.f32 0.0, %v1154
    %v1156 = vpop.f32.mrb[0].mxu0
    %1157 = vmatprep.mubr.f32.mxu0 0.0
    %1158 = vmatmul.mubr.f32.gmra.mrb[0].mxu0 %v1082
    %v1159 = vpop.f32.mrb[0].mxu0
    %v1160 = vadd.f32 0.0, %v1159
    %v1161 = vpop.f32.mrb[0].mxu0
    %1162 = vdwg.mxu0
    %v1163 = vmul.f32 %v1064, 0.17677669
    %v1164 = vmul.f32 %v1069, 0.17677669
    %v1165 = vmul.f32 %v1155, 0.17677669
    %v1166 = vmul.f32 %v1160, 0.17677669
    %v1167 = vadd.f32 %v1163, %v350
    %v1168 = vadd.f32 %v1164, %v351
    %v1169 = vadd.f32 %v1165, %v350
    %v1170 = vadd.f32 %v1166, %v351
    %v1171 = vsel %vm774, %v1167, -inf
    %1172 = vmax.xlane.f32.xlu0 %v1171
    %v1173 = vpop.xlane.xlu0 %1172
    %v1174 = vsel %vm774, %v1168, -inf
    %1175 = vmax.xlane.f32.xlu0 %v1174
    %v1176 = vpop.xlane.xlu0 %1175
    %v1177 = vsel %vm774, %v1169, -inf
    %1178 = vmax.xlane.f32.xlu0 %v1177
    %v1179 = vpop.xlane.xlu0 %1178
    %v1180 = vsel %vm774, %v1170, -inf
    %1181 = vmax.xlane.f32.xlu0 %v1180
    %v1182 = vpop.xlane.xlu0 %1181
    %v1183 = vsub.f32 %v1167, %v1173
    %v1184 = vsub.f32 %v1168, %v1176
    %v1185 = vsub.f32 %v1169, %v1179
    %v1186 = vsub.f32 %v1170, %v1182
    %v1187 = vmul.f32 %v1183, 1.442695
    %v1188 = vpow.pop %v1187
    %v1189 = vmul.f32 %v1184, 1.442695
    %v1190 = vpow.pop %v1189
    %v1191 = vmul.f32 %v1185, 1.442695
    %v1192 = vpow.pop %v1191
    %v1193 = vmul.f32 %v1186, 1.442695
    %v1194 = vpow.pop %v1193
    %v1195 = vsel %vm774, %v1188, 0.0
    %1196 = vadd.xlane.f32.xlu0 %v1195
    %v1197 = vpop.xlane.xlu0 %1196
    %v1198 = vsel %vm774, %v1190, 0.0
    %1199 = vadd.xlane.f32.xlu0 %v1198
    %v1200 = vpop.xlane.xlu0 %1199
    %v1201 = vsel %vm774, %v1192, 0.0
    %1202 = vadd.xlane.f32.xlu0 %v1201
    %v1203 = vpop.xlane.xlu0 %1202
    %v1204 = vsel %vm774, %v1194, 0.0
    %1205 = vadd.xlane.f32.xlu0 %v1204
    %v1206 = vpop.xlane.xlu0 %1205
    %v1207 = vrcp.pop %v1197
    %v1208 = vmul.f32 %v1188, %v1207
    %v1209 = vrcp.pop %v1200
    %v1210 = vmul.f32 %v1190, %v1209
    %v1211 = vrcp.pop %v1203
    %v1212 = vmul.f32 %v1192, %v1211
    %v1213 = vrcp.pop %v1206
    %v1214 = vmul.f32 %v1194, %v1213
    %1217 = vrot.lane.b32.xlu0 %v573, 96
    %v1218 = vpop.permute.xlu0 %1217
    %1219 = vrot.lane.b32.xlu0 %v578, 96
    %v1220 = vpop.permute.xlu0 %1219
    %v1224 = vsel %vm774, %v1208, 0
    %v1227 = vsel %vm774, %v1210, 0
    %1229 = vmatprep.subr.mxu0 0.0
    %1230 = vmatpush1.msra.mxu0 %v1218
    %1231 = vmatprep.subr.mxu0 0.0
    %1232 = vmatpush1.msra.mxu0 %v1220
    %1233 = vmatprep.subr.mxu0 0.0
    %1234 = vmatpush1.msra.mxu0 0.0
    %1235 = vmatprep.subr.mxu0 0.0
    %1236 = vmatpush1.msra.mxu0 0.0
    %1237 = vmatprep.subr.mxu0 0.0
    %1238 = vmatpush1.msra.mxu0 0.0
    %1239 = vmatprep.subr.mxu0 0.0
    %1240 = vmatpush1.msra.mxu0 0.0
    %1241 = vmatprep.subr.mxu0 0.0
    %1242 = vmatpush1.msra.mxu0 0.0
    %1243 = vmatprep.subr.mxu0 0.0
    %1244 = vmatpush1.msra.mxu0 0.0
    %1245 = vmatprep.subr.mxu0 0.0
    %1246 = vmatpush1.msra.mxu0 0.0
    %1247 = vmatprep.subr.mxu0 0.0
    %1248 = vmatpush1.msra.mxu0 0.0
    %1249 = vmatprep.subr.mxu0 0.0
    %1250 = vmatpush1.msra.mxu0 0.0
    %1251 = vmatprep.subr.mxu0 0.0
    %1252 = vmatpush1.msra.mxu0 0.0
    %1253 = vmatprep.subr.mxu0 0.0
    %1254 = vmatpush1.msra.mxu0 0.0
    %1255 = vmatprep.subr.mxu0 0.0
    %1256 = vmatpush1.msra.mxu0 0.0
    %1257 = vmatprep.subr.mxu0 0.0
    %1258 = vmatpush1.msra.mxu0 0.0
    %1259 = vmatprep.subr.mxu0 0.0
    %1260 = vmatpush1.msra.mxu0 0.0
    %1261 = vmatprep.subr.mxu0 0.0
    %1262 = vmatpush1.msra.mxu0 0.0
    %1263 = vmatprep.subr.mxu0 0.0
    %1264 = vmatpush1.msra.mxu0 0.0
    %1265 = vmatprep.subr.mxu0 0.0
    %1266 = vmatpush1.msra.mxu0 0.0
    %1267 = vmatprep.subr.mxu0 0.0
    %1268 = vmatpush1.msra.mxu0 0.0
    %1269 = vmatprep.subr.mxu0 0.0
    %1270 = vmatpush1.msra.mxu0 0.0
    %1271 = vmatprep.subr.mxu0 0.0
    %1272 = vmatpush1.msra.mxu0 0.0
    %1273 = vmatprep.subr.mxu0 0.0
    %1274 = vmatpush1.msra.mxu0 0.0
    %1275 = vmatprep.subr.mxu0 0.0
    %1276 = vmatpush1.msra.mxu0 0.0
    %1277 = vmatprep.subr.mxu0 0.0
    %1278 = vmatpush1.msra.mxu0 0.0
    %1279 = vmatprep.subr.mxu0 0.0
    %1280 = vmatpush1.msra.mxu0 0.0
    %1281 = vmatprep.subr.mxu0 0.0
    %1282 = vmatpush1.msra.mxu0 0.0
    %1283 = vmatprep.subr.mxu0 0.0
    %1284 = vmatpush1.msra.mxu0 0.0
    %1285 = vmatprep.subr.mxu0 0.0
    %1286 = vmatpush1.msra.mxu0 0.0
    %1287 = vmatprep.subr.mxu0 0.0
    %1288 = vmatpush1.msra.mxu0 0.0
    %1289 = vmatprep.subr.mxu0 0.0
    %1290 = vmatpush1.msra.mxu0 0.0
    %1291 = vmatprep.subr.mxu0 0.0
    %1292 = vmatpush1.msra.mxu0 0.0
    %1293 = vmatprep.mubr.f32.mxu0 0.0
    %1294 = vmatmul.mubr.f32.gmra.mrb[0].mxu0 %v1224
    %v1295 = vpop.f32.mrb[0].mxu0
    %v1296 = vadd.f32 0.0, %v1295
    %v1297 = vpop.f32.mrb[0].mxu0
    %1298 = vmatprep.mubr.f32.mxu0 0.0
    %1299 = vmatmul.mubr.f32.gmra.mrb[0].mxu0 %v1227
    %v1300 = vpop.f32.mrb[0].mxu0
    %v1301 = vadd.f32 0.0, %v1300
    %v1302 = vpop.f32.mrb[0].mxu0
    %1303 = vdwg.mxu0
    %1306 = vrot.lane.b32.xlu0 %v583, 96
    %v1307 = vpop.permute.xlu0 %1306
    %1308 = vrot.lane.b32.xlu0 %v588, 96
    %v1309 = vpop.permute.xlu0 %1308
    %v1313 = vsel %vm774, %v1212, 0
    %v1316 = vsel %vm774, %v1214, 0
    %1318 = vmatprep.subr.mxu0 0.0
    %1319 = vmatpush1.msra.mxu0 %v1307
    %1320 = vmatprep.subr.mxu0 0.0
    %1321 = vmatpush1.msra.mxu0 %v1309
    %1322 = vmatprep.subr.mxu0 0.0
    %1323 = vmatpush1.msra.mxu0 0.0
    %1324 = vmatprep.subr.mxu0 0.0
    %1325 = vmatpush1.msra.mxu0 0.0
    %1326 = vmatprep.subr.mxu0 0.0
    %1327 = vmatpush1.msra.mxu0 0.0
    %1328 = vmatprep.subr.mxu0 0.0
    %1329 = vmatpush1.msra.mxu0 0.0
    %1330 = vmatprep.subr.mxu0 0.0
    %1331 = vmatpush1.msra.mxu0 0.0
    %1332 = vmatprep.subr.mxu0 0.0
    %1333 = vmatpush1.msra.mxu0 0.0
    %1334 = vmatprep.subr.mxu0 0.0
    %1335 = vmatpush1.msra.mxu0 0.0
    %1336 = vmatprep.subr.mxu0 0.0
    %1337 = vmatpush1.msra.mxu0 0.0
    %1338 = vmatprep.subr.mxu0 0.0
    %1339 = vmatpush1.msra.mxu0 0.0
    %1340 = vmatprep.subr.mxu0 0.0
    %1341 = vmatpush1.msra.mxu0 0.0
    %1342 = vmatprep.subr.mxu0 0.0
    %1343 = vmatpush1.msra.mxu0 0.0
    %1344 = vmatprep.subr.mxu0 0.0
    %1345 = vmatpush1.msra.mxu0 0.0
    %1346 = vmatprep.subr.mxu0 0.0
    %1347 = vmatpush1.msra.mxu0 0.0
    %1348 = vmatprep.subr.mxu0 0.0
    %1349 = vmatpush1.msra.mxu0 0.0
    %1350 = vmatprep.subr.mxu0 0.0
    %1351 = vmatpush1.msra.mxu0 0.0
    %1352 = vmatprep.subr.mxu0 0.0
    %1353 = vmatpush1.msra.mxu0 0.0
    %1354 = vmatprep.subr.mxu0 0.0
    %1355 = vmatpush1.msra.mxu0 0.0
    %1356 = vmatprep.subr.mxu0 0.0
    %1357 = vmatpush1.msra.mxu0 0.0
    %1358 = vmatprep.subr.mxu0 0.0
    %1359 = vmatpush1.msra.mxu0 0.0
    %1360 = vmatprep.subr.mxu0 0.0
    %1361 = vmatpush1.msra.mxu0 0.0
    %1362 = vmatprep.subr.mxu0 0.0
    %1363 = vmatpush1.msra.mxu0 0.0
    %1364 = vmatprep.subr.mxu0 0.0
    %1365 = vmatpush1.msra.mxu0 0.0
    %1366 = vmatprep.subr.mxu0 0.0
    %1367 = vmatpush1.msra.mxu0 0.0
    %1368 = vmatprep.subr.mxu0 0.0
    %1369 = vmatpush1.msra.mxu0 0.0
    %1370 = vmatprep.subr.mxu0 0.0
    %1371 = vmatpush1.msra.mxu0 0.0
    %1372 = vmatprep.subr.mxu0 0.0
    %1373 = vmatpush1.msra.mxu0 0.0
    %1374 = vmatprep.subr.mxu0 0.0
    %1375 = vmatpush1.msra.mxu0 0.0
    %1376 = vmatprep.subr.mxu0 0.0
    %1377 = vmatpush1.msra.mxu0 0.0
    %1378 = vmatprep.subr.mxu0 0.0
    %1379 = vmatpush1.msra.mxu0 0.0
    %1380 = vmatprep.subr.mxu0 0.0
    %1381 = vmatpush1.msra.mxu0 0.0
    %1382 = vmatprep.mubr.f32.mxu0 0.0
    %1383 = vmatmul.mubr.f32.gmra.mrb[0].mxu0 %v1313
    %v1384 = vpop.f32.mrb[0].mxu0
    %v1385 = vadd.f32 0.0, %v1384
    %v1386 = vpop.f32.mrb[0].mxu0
    %1387 = vmatprep.mubr.f32.mxu0 0.0
    %1388 = vmatmul.mubr.f32.gmra.mrb[0].mxu0 %v1316
    %v1389 = vpop.f32.mrb[0].mxu0
    %v1390 = vadd.f32 0.0, %v1389
    %v1391 = vpop.f32.mrb[0].mxu0
    %1392 = vdwg.mxu0
    %1393 = vrot.lane.b32.xlu0 %v484, 64
    %v1394 = vpop.permute.xlu0 %1393
    %1395 = vrot.lane.b32.xlu0 %v490, 64
    %v1396 = vpop.permute.xlu0 %1395
    %1397 = vrot.lane.b32.xlu0 %v486, 64
    %v1398 = vpop.permute.xlu0 %1397
    %1399 = vrot.lane.b32.xlu0 %v492, 64
    %v1400 = vpop.permute.xlu0 %1399
    %v1401 = vsel %vm591, %v1394, 0
    %v1403 = vsel %vm591, %v1396, 0
    %v1405 = vsel %vm591, %v1398, 0
    %v1407 = vsel %vm591, %v1400, 0
    %1409 = vmatprep.subr.mxu0 0.0
    %1410 = vmatpush1.xpose.msra.mxu0 %v1405
    %1411 = vmatprep.subr.mxu0 0.0
    %1412 = vmatpush1.xpose.msra.mxu0 %v1407
    %1413 = vmatprep.subr.mxu0 0.0
    %1414 = vmatpush1.xpose.msra.mxu0 0.0
    %1415 = vmatprep.subr.mxu0 0.0
    %1416 = vmatpush1.xpose.msra.mxu0 0.0
    %1417 = vmatprep.subr.mxu0 0.0
    %1418 = vmatpush1.xpose.msra.mxu0 0.0
    %1419 = vmatprep.subr.mxu0 0.0
    %1420 = vmatpush1.xpose.msra.mxu0 0.0
    %1421 = vmatprep.subr.mxu0 0.0
    %1422 = vmatpush1.xpose.msra.mxu0 0.0
    %1423 = vmatprep.subr.mxu0 0.0
    %1424 = vmatpush1.xpose.msra.mxu0 0.0
    %1425 = vmatprep.subr.mxu0 0.0
    %1426 = vmatpush1.xpose.msra.mxu0 0.0
    %1427 = vmatprep.subr.mxu0 0.0
    %1428 = vmatpush1.xpose.msra.mxu0 0.0
    %1429 = vmatprep.subr.mxu0 0.0
    %1430 = vmatpush1.xpose.msra.mxu0 0.0
    %1431 = vmatprep.subr.mxu0 0.0
    %1432 = vmatpush1.xpose.msra.mxu0 0.0
    %1433 = vmatprep.subr.mxu0 0.0
    %1434 = vmatpush1.xpose.msra.mxu0 0.0
    %1435 = vmatprep.subr.mxu0 0.0
    %1436 = vmatpush1.xpose.msra.mxu0 0.0
    %1437 = vmatprep.subr.mxu0 0.0
    %1438 = vmatpush1.xpose.msra.mxu0 0.0
    %1439 = vmatprep.subr.mxu0 0.0
    %1440 = vmatpush1.xpose.msra.mxu0 0.0
    %1441 = vmatprep.subr.mxu0 0.0
    %1442 = vmatpush1.xpose.msra.mxu0 0.0
    %1443 = vmatprep.subr.mxu0 0.0
    %1444 = vmatpush1.xpose.msra.mxu0 0.0
    %1445 = vmatprep.subr.mxu0 0.0
    %1446 = vmatpush1.xpose.msra.mxu0 0.0
    %1447 = vmatprep.subr.mxu0 0.0
    %1448 = vmatpush1.xpose.msra.mxu0 0.0
    %1449 = vmatprep.subr.mxu0 0.0
    %1450 = vmatpush1.xpose.msra.mxu0 0.0
    %1451 = vmatprep.subr.mxu0 0.0
    %1452 = vmatpush1.xpose.msra.mxu0 0.0
    %1453 = vmatprep.subr.mxu0 0.0
    %1454 = vmatpush1.xpose.msra.mxu0 0.0
    %1455 = vmatprep.subr.mxu0 0.0
    %1456 = vmatpush1.xpose.msra.mxu0 0.0
    %1457 = vmatprep.subr.mxu0 0.0
    %1458 = vmatpush1.xpose.msra.mxu0 0.0
    %1459 = vmatprep.subr.mxu0 0.0
    %1460 = vmatpush1.xpose.msra.mxu0 0.0
    %1461 = vmatprep.subr.mxu0 0.0
    %1462 = vmatpush1.xpose.msra.mxu0 0.0
    %1463 = vmatprep.subr.mxu0 0.0
    %1464 = vmatpush1.xpose.msra.mxu0 0.0
    %1465 = vmatprep.subr.mxu0 0.0
    %1466 = vmatpush1.xpose.msra.mxu0 0.0
    %1467 = vmatprep.subr.mxu0 0.0
    %1468 = vmatpush1.xpose.msra.mxu0 0.0
    %1469 = vmatprep.subr.mxu0 0.0
    %1470 = vmatpush1.xpose.msra.mxu0 0.0
    %1471 = vmatprep.subr.mxu0 0.0
    %1472 = vmatpush1.xpose.msra.mxu0 0.0
    %1473 = vmatprep.mubr.f32.mxu0 0.0
    %1474 = vmatmul.mubr.f32.gmra.mrb[0].mxu0 %v1401
    %v1475 = vpop.f32.mrb[0].mxu0
    %v1476 = vadd.f32 0.0, %v1475
    %v1477 = vpop.f32.mrb[0].mxu0
    %1478 = vmatprep.mubr.f32.mxu0 0.0
    %1479 = vmatmul.mubr.f32.gmra.mrb[0].mxu0 %v1403
    %v1480 = vpop.f32.mrb[0].mxu0
    %v1481 = vadd.f32 0.0, %v1480
    %v1482 = vpop.f32.mrb[0].mxu0
    %1483 = vdwg.mxu0
    %1484 = vrot.lane.b32.xlu0 %v496, 64
    %v1485 = vpop.permute.xlu0 %1484
    %1486 = vrot.lane.b32.xlu0 %v502, 64
    %v1487 = vpop.permute.xlu0 %1486
    %1488 = vrot.lane.b32.xlu0 %v498, 64
    %v1489 = vpop.permute.xlu0 %1488
    %1490 = vrot.lane.b32.xlu0 %v504, 64
    %v1491 = vpop.permute.xlu0 %1490
    %v1492 = vsel %vm591, %v1485, 0
    %v1494 = vsel %vm591, %v1487, 0
    %v1496 = vsel %vm591, %v1489, 0
    %v1498 = vsel %vm591, %v1491, 0
    %1500 = vmatprep.subr.mxu0 0.0
    %1501 = vmatpush1.xpose.msra.mxu0 %v1496
    %1502 = vmatprep.subr.mxu0 0.0
    %1503 = vmatpush1.xpose.msra.mxu0 %v1498
    %1504 = vmatprep.subr.mxu0 0.0
    %1505 = vmatpush1.xpose.msra.mxu0 0.0
    %1506 = vmatprep.subr.mxu0 0.0
    %1507 = vmatpush1.xpose.msra.mxu0 0.0
    %1508 = vmatprep.subr.mxu0 0.0
    %1509 = vmatpush1.xpose.msra.mxu0 0.0
    %1510 = vmatprep.subr.mxu0 0.0
    %1511 = vmatpush1.xpose.msra.mxu0 0.0
    %1512 = vmatprep.subr.mxu0 0.0
    %1513 = vmatpush1.xpose.msra.mxu0 0.0
    %1514 = vmatprep.subr.mxu0 0.0
    %1515 = vmatpush1.xpose.msra.mxu0 0.0
    %1516 = vmatprep.subr.mxu0 0.0
    %1517 = vmatpush1.xpose.msra.mxu0 0.0
    %1518 = vmatprep.subr.mxu0 0.0
    %1519 = vmatpush1.xpose.msra.mxu0 0.0
    %1520 = vmatprep.subr.mxu0 0.0
    %1521 = vmatpush1.xpose.msra.mxu0 0.0
    %1522 = vmatprep.subr.mxu0 0.0
    %1523 = vmatpush1.xpose.msra.mxu0 0.0
    %1524 = vmatprep.subr.mxu0 0.0
    %1525 = vmatpush1.xpose.msra.mxu0 0.0
    %1526 = vmatprep.subr.mxu0 0.0
    %1527 = vmatpush1.xpose.msra.mxu0 0.0
    %1528 = vmatprep.subr.mxu0 0.0
    %1529 = vmatpush1.xpose.msra.mxu0 0.0
    %1530 = vmatprep.subr.mxu0 0.0
    %1531 = vmatpush1.xpose.msra.mxu0 0.0
    %1532 = vmatprep.subr.mxu0 0.0
    %1533 = vmatpush1.xpose.msra.mxu0 0.0
    %1534 = vmatprep.subr.mxu0 0.0
    %1535 = vmatpush1.xpose.msra.mxu0 0.0
    %1536 = vmatprep.subr.mxu0 0.0
    %1537 = vmatpush1.xpose.msra.mxu0 0.0
    %1538 = vmatprep.subr.mxu0 0.0
    %1539 = vmatpush1.xpose.msra.mxu0 0.0
    %1540 = vmatprep.subr.mxu0 0.0
    %1541 = vmatpush1.xpose.msra.mxu0 0.0
    %1542 = vmatprep.subr.mxu0 0.0
    %1543 = vmatpush1.xpose.msra.mxu0 0.0
    %1544 = vmatprep.subr.mxu0 0.0
    %1545 = vmatpush1.xpose.msra.mxu0 0.0
    %1546 = vmatprep.subr.mxu0 0.0
    %1547 = vmatpush1.xpose.msra.mxu0 0.0
    %1548 = vmatprep.subr.mxu0 0.0
    %1549 = vmatpush1.xpose.msra.mxu0 0.0
    %1550 = vmatprep.subr.mxu0 0.0
    %1551 = vmatpush1.xpose.msra.mxu0 0.0
    %1552 = vmatprep.subr.mxu0 0.0
    %1553 = vmatpush1.xpose.msra.mxu0 0.0
    %1554 = vmatprep.subr.mxu0 0.0
    %1555 = vmatpush1.xpose.msra.mxu0 0.0
    %1556 = vmatprep.subr.mxu0 0.0
    %1557 = vmatpush1.xpose.msra.mxu0 0.0
    %1558 = vmatprep.subr.mxu0 0.0
    %1559 = vmatpush1.xpose.msra.mxu0 0.0
    %1560 = vmatprep.subr.mxu0 0.0
    %1561 = vmatpush1.xpose.msra.mxu0 0.0
    %1562 = vmatprep.subr.mxu0 0.0
    %1563 = vmatpush1.xpose.msra.mxu0 0.0
    %1564 = vmatprep.mubr.f32.mxu0 0.0
    %1565 = vmatmul.mubr.f32.gmra.mrb[0].mxu0 %v1492
    %v1566 = vpop.f32.mrb[0].mxu0
    %v1567 = vadd.f32 0.0, %v1566
    %v1568 = vpop.f32.mrb[0].mxu0
    %1569 = vmatprep.mubr.f32.mxu0 0.0
    %1570 = vmatmul.mubr.f32.gmra.mrb[0].mxu0 %v1494
    %v1571 = vpop.f32.mrb[0].mxu0
    %v1572 = vadd.f32 0.0, %v1571
    %v1573 = vpop.f32.mrb[0].mxu0
    %1574 = vdwg.mxu0
    %v1575 = vmul.f32 %v1476, 0.17677669
    %v1576 = vmul.f32 %v1481, 0.17677669
    %v1577 = vmul.f32 %v1567, 0.17677669
    %v1578 = vmul.f32 %v1572, 0.17677669
    %v1579 = vadd.f32 %v1575, %v350
    %v1580 = vadd.f32 %v1576, %v351
    %v1581 = vadd.f32 %v1577, %v350
    %v1582 = vadd.f32 %v1578, %v351
    %v1583 = vsel %vm774, %v1579, -inf
    %1584 = vmax.xlane.f32.xlu0 %v1583
    %v1585 = vpop.xlane.xlu0 %1584
    %v1586 = vsel %vm774, %v1580, -inf
    %1587 = vmax.xlane.f32.xlu0 %v1586
    %v1588 = vpop.xlane.xlu0 %1587
    %v1589 = vsel %vm774, %v1581, -inf
    %1590 = vmax.xlane.f32.xlu0 %v1589
    %v1591 = vpop.xlane.xlu0 %1590
    %v1592 = vsel %vm774, %v1582, -inf
    %1593 = vmax.xlane.f32.xlu0 %v1592
    %v1594 = vpop.xlane.xlu0 %1593
    %v1595 = vsub.f32 %v1579, %v1585
    %v1596 = vsub.f32 %v1580, %v1588
    %v1597 = vsub.f32 %v1581, %v1591
    %v1598 = vsub.f32 %v1582, %v1594
    %v1599 = vmul.f32 %v1595, 1.442695
    %v1600 = vpow.pop %v1599
    %v1601 = vmul.f32 %v1596, 1.442695
    %v1602 = vpow.pop %v1601
    %v1603 = vmul.f32 %v1597, 1.442695
    %v1604 = vpow.pop %v1603
    %v1605 = vmul.f32 %v1598, 1.442695
    %v1606 = vpow.pop %v1605
    %v1607 = vsel %vm774, %v1600, 0.0
    %1608 = vadd.xlane.f32.xlu0 %v1607
    %v1609 = vpop.xlane.xlu0 %1608
    %v1610 = vsel %vm774, %v1602, 0.0
    %1611 = vadd.xlane.f32.xlu0 %v1610
    %v1612 = vpop.xlane.xlu0 %1611
    %v1613 = vsel %vm774, %v1604, 0.0
    %1614 = vadd.xlane.f32.xlu0 %v1613
    %v1615 = vpop.xlane.xlu0 %1614
    %v1616 = vsel %vm774, %v1606, 0.0
    %1617 = vadd.xlane.f32.xlu0 %v1616
    %v1618 = vpop.xlane.xlu0 %1617
    %v1619 = vrcp.pop %v1609
    %v1620 = vmul.f32 %v1600, %v1619
    %v1621 = vrcp.pop %v1612
    %v1622 = vmul.f32 %v1602, %v1621
    %v1623 = vrcp.pop %v1615
    %v1624 = vmul.f32 %v1604, %v1623
    %v1625 = vrcp.pop %v1618
    %v1626 = vmul.f32 %v1606, %v1625
    %1627 = vrot.lane.b32.xlu0 %v573, 64
    %v1628 = vpop.permute.xlu0 %1627
    %1629 = vrot.lane.b32.xlu0 %v578, 64
    %v1630 = vpop.permute.xlu0 %1629
    %v1634 = vsel %vm774, %v1620, 0
    %v1637 = vsel %vm774, %v1622, 0
    %1639 = vmatprep.subr.mxu0 0.0
    %1640 = vmatpush1.msra.mxu0 %v1628
    %1641 = vmatprep.subr.mxu0 0.0
    %1642 = vmatpush1.msra.mxu0 %v1630
    %1643 = vmatprep.subr.mxu0 0.0
    %1644 = vmatpush1.msra.mxu0 0.0
    %1645 = vmatprep.subr.mxu0 0.0
    %1646 = vmatpush1.msra.mxu0 0.0
    %1647 = vmatprep.subr.mxu0 0.0
    %1648 = vmatpush1.msra.mxu0 0.0
    %1649 = vmatprep.subr.mxu0 0.0
    %1650 = vmatpush1.msra.mxu0 0.0
    %1651 = vmatprep.subr.mxu0 0.0
    %1652 = vmatpush1.msra.mxu0 0.0
    %1653 = vmatprep.subr.mxu0 0.0
    %1654 = vmatpush1.msra.mxu0 0.0
    %1655 = vmatprep.subr.mxu0 0.0
    %1656 = vmatpush1.msra.mxu0 0.0
    %1657 = vmatprep.subr.mxu0 0.0
    %1658 = vmatpush1.msra.mxu0 0.0
    %1659 = vmatprep.subr.mxu0 0.0
    %1660 = vmatpush1.msra.mxu0 0.0
    %1661 = vmatprep.subr.mxu0 0.0
    %1662 = vmatpush1.msra.mxu0 0.0
    %1663 = vmatprep.subr.mxu0 0.0
    %1664 = vmatpush1.msra.mxu0 0.0
    %1665 = vmatprep.subr.mxu0 0.0
    %1666 = vmatpush1.msra.mxu0 0.0
    %1667 = vmatprep.subr.mxu0 0.0
    %1668 = vmatpush1.msra.mxu0 0.0
    %1669 = vmatprep.subr.mxu0 0.0
    %1670 = vmatpush1.msra.mxu0 0.0
    %1671 = vmatprep.subr.mxu0 0.0
    %1672 = vmatpush1.msra.mxu0 0.0
    %1673 = vmatprep.subr.mxu0 0.0
    %1674 = vmatpush1.msra.mxu0 0.0
    %1675 = vmatprep.subr.mxu0 0.0
    %1676 = vmatpush1.msra.mxu0 0.0
    %1677 = vmatprep.subr.mxu0 0.0
    %1678 = vmatpush1.msra.mxu0 0.0
    %1679 = vmatprep.subr.mxu0 0.0
    %1680 = vmatpush1.msra.mxu0 0.0
    %1681 = vmatprep.subr.mxu0 0.0
    %1682 = vmatpush1.msra.mxu0 0.0
    %1683 = vmatprep.subr.mxu0 0.0
    %1684 = vmatpush1.msra.mxu0 0.0
    %1685 = vmatprep.subr.mxu0 0.0
    %1686 = vmatpush1.msra.mxu0 0.0
    %1687 = vmatprep.subr.mxu0 0.0
    %1688 = vmatpush1.msra.mxu0 0.0
    %1689 = vmatprep.subr.mxu0 0.0
    %1690 = vmatpush1.msra.mxu0 0.0
    %1691 = vmatprep.subr.mxu0 0.0
    %1692 = vmatpush1.msra.mxu0 0.0
    %1693 = vmatprep.subr.mxu0 0.0
    %1694 = vmatpush1.msra.mxu0 0.0
    %1695 = vmatprep.subr.mxu0 0.0
    %1696 = vmatpush1.msra.mxu0 0.0
    %1697 = vmatprep.subr.mxu0 0.0
    %1698 = vmatpush1.msra.mxu0 0.0
    %1699 = vmatprep.subr.mxu0 0.0
    %1700 = vmatpush1.msra.mxu0 0.0
    %1701 = vmatprep.subr.mxu0 0.0
    %1702 = vmatpush1.msra.mxu0 0.0
    %1703 = vmatprep.mubr.f32.mxu0 0.0
    %1704 = vmatmul.mubr.f32.gmra.mrb[0].mxu0 %v1634
    %v1705 = vpop.f32.mrb[0].mxu0
    %v1706 = vadd.f32 0.0, %v1705
    %v1707 = vpop.f32.mrb[0].mxu0
    %1708 = vmatprep.mubr.f32.mxu0 0.0
    %1709 = vmatmul.mubr.f32.gmra.mrb[0].mxu0 %v1637
    %v1710 = vpop.f32.mrb[0].mxu0
    %v1711 = vadd.f32 0.0, %v1710
    %v1712 = vpop.f32.mrb[0].mxu0
    %1713 = vdwg.mxu0
    %1714 = vrot.lane.b32.xlu0 %v583, 64
    %v1715 = vpop.permute.xlu0 %1714
    %1716 = vrot.lane.b32.xlu0 %v588, 64
    %v1717 = vpop.permute.xlu0 %1716
    %v1721 = vsel %vm774, %v1624, 0
    %v1724 = vsel %vm774, %v1626, 0
    %1726 = vmatprep.subr.mxu0 0.0
    %1727 = vmatpush1.msra.mxu0 %v1715
    %1728 = vmatprep.subr.mxu0 0.0
    %1729 = vmatpush1.msra.mxu0 %v1717
    %1730 = vmatprep.subr.mxu0 0.0
    %1731 = vmatpush1.msra.mxu0 0.0
    %1732 = vmatprep.subr.mxu0 0.0
    %1733 = vmatpush1.msra.mxu0 0.0
    %1734 = vmatprep.subr.mxu0 0.0
    %1735 = vmatpush1.msra.mxu0 0.0
    %1736 = vmatprep.subr.mxu0 0.0
    %1737 = vmatpush1.msra.mxu0 0.0
    %1738 = vmatprep.subr.mxu0 0.0
    %1739 = vmatpush1.msra.mxu0 0.0
    %1740 = vmatprep.subr.mxu0 0.0
    %1741 = vmatpush1.msra.mxu0 0.0
    %1742 = vmatprep.subr.mxu0 0.0
    %1743 = vmatpush1.msra.mxu0 0.0
    %1744 = vmatprep.subr.mxu0 0.0
    %1745 = vmatpush1.msra.mxu0 0.0
    %1746 = vmatprep.subr.mxu0 0.0
    %1747 = vmatpush1.msra.mxu0 0.0
    %1748 = vmatprep.subr.mxu0 0.0
    %1749 = vmatpush1.msra.mxu0 0.0
    %1750 = vmatprep.subr.mxu0 0.0
    %1751 = vmatpush1.msra.mxu0 0.0
    %1752 = vmatprep.subr.mxu0 0.0
    %1753 = vmatpush1.msra.mxu0 0.0
    %1754 = vmatprep.subr.mxu0 0.0
    %1755 = vmatpush1.msra.mxu0 0.0
    %1756 = vmatprep.subr.mxu0 0.0
    %1757 = vmatpush1.msra.mxu0 0.0
    %1758 = vmatprep.subr.mxu0 0.0
    %1759 = vmatpush1.msra.mxu0 0.0
    %1760 = vmatprep.subr.mxu0 0.0
    %1761 = vmatpush1.msra.mxu0 0.0
    %1762 = vmatprep.subr.mxu0 0.0
    %1763 = vmatpush1.msra.mxu0 0.0
    %1764 = vmatprep.subr.mxu0 0.0
    %1765 = vmatpush1.msra.mxu0 0.0
    %1766 = vmatprep.subr.mxu0 0.0
    %1767 = vmatpush1.msra.mxu0 0.0
    %1768 = vmatprep.subr.mxu0 0.0
    %1769 = vmatpush1.msra.mxu0 0.0
    %1770 = vmatprep.subr.mxu0 0.0
    %1771 = vmatpush1.msra.mxu0 0.0
    %1772 = vmatprep.subr.mxu0 0.0
    %1773 = vmatpush1.msra.mxu0 0.0
    %1774 = vmatprep.subr.mxu0 0.0
    %1775 = vmatpush1.msra.mxu0 0.0
    %1776 = vmatprep.subr.mxu0 0.0
    %1777 = vmatpush1.msra.mxu0 0.0
    %1778 = vmatprep.subr.mxu0 0.0
    %1779 = vmatpush1.msra.mxu0 0.0
    %1780 = vmatprep.subr.mxu0 0.0
    %1781 = vmatpush1.msra.mxu0 0.0
    %1782 = vmatprep.subr.mxu0 0.0
    %1783 = vmatpush1.msra.mxu0 0.0
    %1784 = vmatprep.subr.mxu0 0.0
    %1785 = vmatpush1.msra.mxu0 0.0
    %1786 = vmatprep.subr.mxu0 0.0
    %1787 = vmatpush1.msra.mxu0 0.0
    %1788 = vmatprep.subr.mxu0 0.0
    %1789 = vmatpush1.msra.mxu0 0.0
    %1790 = vmatprep.mubr.f32.mxu0 0.0
    %1791 = vmatmul.mubr.f32.gmra.mrb[0].mxu0 %v1721
    %v1792 = vpop.f32.mrb[0].mxu0
    %v1793 = vadd.f32 0.0, %v1792
    %v1794 = vpop.f32.mrb[0].mxu0
    %1795 = vmatprep.mubr.f32.mxu0 0.0
    %1796 = vmatmul.mubr.f32.gmra.mrb[0].mxu0 %v1724
    %v1797 = vpop.f32.mrb[0].mxu0
    %v1798 = vadd.f32 0.0, %v1797
    %v1799 = vpop.f32.mrb[0].mxu0
    %1800 = vdwg.mxu0
    %1801 = vrot.lane.b32.xlu0 %v484, 32
    %v1802 = vpop.permute.xlu0 %1801
    %1803 = vrot.lane.b32.xlu0 %v490, 32
    %v1804 = vpop.permute.xlu0 %1803
    %1805 = vrot.lane.b32.xlu0 %v486, 32
    %v1806 = vpop.permute.xlu0 %1805
    %1807 = vrot.lane.b32.xlu0 %v492, 32
    %v1808 = vpop.permute.xlu0 %1807
    %v1809 = vsel %vm591, %v1802, 0
    %v1811 = vsel %vm591, %v1804, 0
    %v1813 = vsel %vm591, %v1806, 0
    %v1815 = vsel %vm591, %v1808, 0
    %1817 = vmatprep.subr.mxu0 0.0
    %1818 = vmatpush1.xpose.msra.mxu0 %v1813
    %1819 = vmatprep.subr.mxu0 0.0
    %1820 = vmatpush1.xpose.msra.mxu0 %v1815
    %1821 = vmatprep.subr.mxu0 0.0
    %1822 = vmatpush1.xpose.msra.mxu0 0.0
    %1823 = vmatprep.subr.mxu0 0.0
    %1824 = vmatpush1.xpose.msra.mxu0 0.0
    %1825 = vmatprep.subr.mxu0 0.0
    %1826 = vmatpush1.xpose.msra.mxu0 0.0
    %1827 = vmatprep.subr.mxu0 0.0
    %1828 = vmatpush1.xpose.msra.mxu0 0.0
    %1829 = vmatprep.subr.mxu0 0.0
    %1830 = vmatpush1.xpose.msra.mxu0 0.0
    %1831 = vmatprep.subr.mxu0 0.0
    %1832 = vmatpush1.xpose.msra.mxu0 0.0
    %1833 = vmatprep.subr.mxu0 0.0
    %1834 = vmatpush1.xpose.msra.mxu0 0.0
    %1835 = vmatprep.subr.mxu0 0.0
    %1836 = vmatpush1.xpose.msra.mxu0 0.0
    %1837 = vmatprep.subr.mxu0 0.0
    %1838 = vmatpush1.xpose.msra.mxu0 0.0
    %1839 = vmatprep.subr.mxu0 0.0
    %1840 = vmatpush1.xpose.msra.mxu0 0.0
    %1841 = vmatprep.subr.mxu0 0.0
    %1842 = vmatpush1.xpose.msra.mxu0 0.0
    %1843 = vmatprep.subr.mxu0 0.0
    %1844 = vmatpush1.xpose.msra.mxu0 0.0
    %1845 = vmatprep.subr.mxu0 0.0
    %1846 = vmatpush1.xpose.msra.mxu0 0.0
    %1847 = vmatprep.subr.mxu0 0.0
    %1848 = vmatpush1.xpose.msra.mxu0 0.0
    %1849 = vmatprep.subr.mxu0 0.0
    %1850 = vmatpush1.xpose.msra.mxu0 0.0
    %1851 = vmatprep.subr.mxu0 0.0
    %1852 = vmatpush1.xpose.msra.mxu0 0.0
    %1853 = vmatprep.subr.mxu0 0.0
    %1854 = vmatpush1.xpose.msra.mxu0 0.0
    %1855 = vmatprep.subr.mxu0 0.0
    %1856 = vmatpush1.xpose.msra.mxu0 0.0
    %1857 = vmatprep.subr.mxu0 0.0
    %1858 = vmatpush1.xpose.msra.mxu0 0.0
    %1859 = vmatprep.subr.mxu0 0.0
    %1860 = vmatpush1.xpose.msra.mxu0 0.0
    %1861 = vmatprep.subr.mxu0 0.0
    %1862 = vmatpush1.xpose.msra.mxu0 0.0
    %1863 = vmatprep.subr.mxu0 0.0
    %1864 = vmatpush1.xpose.msra.mxu0 0.0
    %1865 = vmatprep.subr.mxu0 0.0
    %1866 = vmatpush1.xpose.msra.mxu0 0.0
    %1867 = vmatprep.subr.mxu0 0.0
    %1868 = vmatpush1.xpose.msra.mxu0 0.0
    %1869 = vmatprep.subr.mxu0 0.0
    %1870 = vmatpush1.xpose.msra.mxu0 0.0
    %1871 = vmatprep.subr.mxu0 0.0
    %1872 = vmatpush1.xpose.msra.mxu0 0.0
    %1873 = vmatprep.subr.mxu0 0.0
    %1874 = vmatpush1.xpose.msra.mxu0 0.0
    %1875 = vmatprep.subr.mxu0 0.0
    %1876 = vmatpush1.xpose.msra.mxu0 0.0
    %1877 = vmatprep.subr.mxu0 0.0
    %1878 = vmatpush1.xpose.msra.mxu0 0.0
    %1879 = vmatprep.subr.mxu0 0.0
    %1880 = vmatpush1.xpose.msra.mxu0 0.0
    %1881 = vmatprep.mubr.f32.mxu0 0.0
    %1882 = vmatmul.mubr.f32.gmra.mrb[0].mxu0 %v1809
    %v1883 = vpop.f32.mrb[0].mxu0
    %v1884 = vadd.f32 0.0, %v1883
    %v1885 = vpop.f32.mrb[0].mxu0
    %1886 = vmatprep.mubr.f32.mxu0 0.0
    %1887 = vmatmul.mubr.f32.gmra.mrb[0].mxu0 %v1811
    %v1888 = vpop.f32.mrb[0].mxu0
    %v1889 = vadd.f32 0.0, %v1888
    %v1890 = vpop.f32.mrb[0].mxu0
    %1891 = vdwg.mxu0
    %1892 = vrot.lane.b32.xlu0 %v496, 32
    %v1893 = vpop.permute.xlu0 %1892
    %1894 = vrot.lane.b32.xlu0 %v502, 32
    %v1895 = vpop.permute.xlu0 %1894
    %1896 = vrot.lane.b32.xlu0 %v498, 32
    %v1897 = vpop.permute.xlu0 %1896
    %1898 = vrot.lane.b32.xlu0 %v504, 32
    %v1899 = vpop.permute.xlu0 %1898
    %v1900 = vsel %vm591, %v1893, 0
    %v1902 = vsel %vm591, %v1895, 0
    %v1904 = vsel %vm591, %v1897, 0
    %v1906 = vsel %vm591, %v1899, 0
    %1908 = vmatprep.subr.mxu0 0.0
    %1909 = vmatpush1.xpose.msra.mxu0 %v1904
    %1910 = vmatprep.subr.mxu0 0.0
    %1911 = vmatpush1.xpose.msra.mxu0 %v1906
    %1912 = vmatprep.subr.mxu0 0.0
    %1913 = vmatpush1.xpose.msra.mxu0 0.0
    %1914 = vmatprep.subr.mxu0 0.0
    %1915 = vmatpush1.xpose.msra.mxu0 0.0
    %1916 = vmatprep.subr.mxu0 0.0
    %1917 = vmatpush1.xpose.msra.mxu0 0.0
    %1918 = vmatprep.subr.mxu0 0.0
    %1919 = vmatpush1.xpose.msra.mxu0 0.0
    %1920 = vmatprep.subr.mxu0 0.0
    %1921 = vmatpush1.xpose.msra.mxu0 0.0
    %1922 = vmatprep.subr.mxu0 0.0
    %1923 = vmatpush1.xpose.msra.mxu0 0.0
    %1924 = vmatprep.subr.mxu0 0.0
    %1925 = vmatpush1.xpose.msra.mxu0 0.0
    %1926 = vmatprep.subr.mxu0 0.0
    %1927 = vmatpush1.xpose.msra.mxu0 0.0
    %1928 = vmatprep.subr.mxu0 0.0
    %1929 = vmatpush1.xpose.msra.mxu0 0.0
    %1930 = vmatprep.subr.mxu0 0.0
    %1931 = vmatpush1.xpose.msra.mxu0 0.0
    %1932 = vmatprep.subr.mxu0 0.0
    %1933 = vmatpush1.xpose.msra.mxu0 0.0
    %1934 = vmatprep.subr.mxu0 0.0
    %1935 = vmatpush1.xpose.msra.mxu0 0.0
    %1936 = vmatprep.subr.mxu0 0.0
    %1937 = vmatpush1.xpose.msra.mxu0 0.0
    %1938 = vmatprep.subr.mxu0 0.0
    %1939 = vmatpush1.xpose.msra.mxu0 0.0
    %1940 = vmatprep.subr.mxu0 0.0
    %1941 = vmatpush1.xpose.msra.mxu0 0.0
    %1942 = vmatprep.subr.mxu0 0.0
    %1943 = vmatpush1.xpose.msra.mxu0 0.0
    %1944 = vmatprep.subr.mxu0 0.0
    %1945 = vmatpush1.xpose.msra.mxu0 0.0
    %1946 = vmatprep.subr.mxu0 0.0
    %1947 = vmatpush1.xpose.msra.mxu0 0.0
    %1948 = vmatprep.subr.mxu0 0.0
    %1949 = vmatpush1.xpose.msra.mxu0 0.0
    %1950 = vmatprep.subr.mxu0 0.0
    %1951 = vmatpush1.xpose.msra.mxu0 0.0
    %1952 = vmatprep.subr.mxu0 0.0
    %1953 = vmatpush1.xpose.msra.mxu0 0.0
    %1954 = vmatprep.subr.mxu0 0.0
    %1955 = vmatpush1.xpose.msra.mxu0 0.0
    %1956 = vmatprep.subr.mxu0 0.0
    %1957 = vmatpush1.xpose.msra.mxu0 0.0
    %1958 = vmatprep.subr.mxu0 0.0
    %1959 = vmatpush1.xpose.msra.mxu0 0.0
    %1960 = vmatprep.subr.mxu0 0.0
    %1961 = vmatpush1.xpose.msra.mxu0 0.0
    %1962 = vmatprep.subr.mxu0 0.0
    %1963 = vmatpush1.xpose.msra.mxu0 0.0
    %1964 = vmatprep.subr.mxu0 0.0
    %1965 = vmatpush1.xpose.msra.mxu0 0.0
    %1966 = vmatprep.subr.mxu0 0.0
    %1967 = vmatpush1.xpose.msra.mxu0 0.0
    %1968 = vmatprep.subr.mxu0 0.0
    %1969 = vmatpush1.xpose.msra.mxu0 0.0
    %1970 = vmatprep.subr.mxu0 0.0
    %1971 = vmatpush1.xpose.msra.mxu0 0.0
    %1972 = vmatprep.mubr.f32.mxu0 0.0
    %1973 = vmatmul.mubr.f32.gmra.mrb[0].mxu0 %v1900
    %v1974 = vpop.f32.mrb[0].mxu0
    %v1975 = vadd.f32 0.0, %v1974
    %v1976 = vpop.f32.mrb[0].mxu0
    %1977 = vmatprep.mubr.f32.mxu0 0.0
    %1978 = vmatmul.mubr.f32.gmra.mrb[0].mxu0 %v1902
    %v1979 = vpop.f32.mrb[0].mxu0
    %v1980 = vadd.f32 0.0, %v1979
    %v1981 = vpop.f32.mrb[0].mxu0
    %1982 = vdwg.mxu0
    %v1983 = vmul.f32 %v1884, 0.17677669
    %v1984 = vmul.f32 %v1889, 0.17677669
    %v1985 = vmul.f32 %v1975, 0.17677669
    %v1986 = vmul.f32 %v1980, 0.17677669
    %v1987 = vadd.f32 %v1983, %v350
    %v1988 = vadd.f32 %v1984, %v351
    %v1989 = vadd.f32 %v1985, %v350
    %v1990 = vadd.f32 %v1986, %v351
    %v1991 = vsel %vm774, %v1987, -inf
    %1992 = vmax.xlane.f32.xlu0 %v1991
    %v1993 = vpop.xlane.xlu0 %1992
    %v1994 = vsel %vm774, %v1988, -inf
    %1995 = vmax.xlane.f32.xlu0 %v1994
    %v1996 = vpop.xlane.xlu0 %1995
    %v1997 = vsel %vm774, %v1989, -inf
    %1998 = vmax.xlane.f32.xlu0 %v1997
    %v1999 = vpop.xlane.xlu0 %1998
    %v2000 = vsel %vm774, %v1990, -inf
    %2001 = vmax.xlane.f32.xlu0 %v2000
    %v2002 = vpop.xlane.xlu0 %2001
    %v2003 = vsub.f32 %v1987, %v1993
    %v2004 = vsub.f32 %v1988, %v1996
    %v2005 = vsub.f32 %v1989, %v1999
    %v2006 = vsub.f32 %v1990, %v2002
    %v2007 = vmul.f32 %v2003, 1.442695
    %v2008 = vpow.pop %v2007
    %v2009 = vmul.f32 %v2004, 1.442695
    %v2010 = vpow.pop %v2009
    %v2011 = vmul.f32 %v2005, 1.442695
    %v2012 = vpow.pop %v2011
    %v2013 = vmul.f32 %v2006, 1.442695
    %v2014 = vpow.pop %v2013
    %v2015 = vsel %vm774, %v2008, 0.0
    %2016 = vadd.xlane.f32.xlu0 %v2015
    %v2017 = vpop.xlane.xlu0 %2016
    %v2018 = vsel %vm774, %v2010, 0.0
    %2019 = vadd.xlane.f32.xlu0 %v2018
    %v2020 = vpop.xlane.xlu0 %2019
    %v2021 = vsel %vm774, %v2012, 0.0
    %2022 = vadd.xlane.f32.xlu0 %v2021
    %v2023 = vpop.xlane.xlu0 %2022
    %v2024 = vsel %vm774, %v2014, 0.0
    %2025 = vadd.xlane.f32.xlu0 %v2024
    %v2026 = vpop.xlane.xlu0 %2025
    %v2027 = vrcp.pop %v2017
    %v2028 = vmul.f32 %v2008, %v2027
    %v2029 = vrcp.pop %v2020
    %v2030 = vmul.f32 %v2010, %v2029
    %v2031 = vrcp.pop %v2023
    %v2032 = vmul.f32 %v2012, %v2031
    %v2033 = vrcp.pop %v2026
    %v2034 = vmul.f32 %v2014, %v2033
    %2035 = vrot.lane.b32.xlu0 %v573, 32
    %v2036 = vpop.permute.xlu0 %2035
    %2037 = vrot.lane.b32.xlu0 %v578, 32
    %v2038 = vpop.permute.xlu0 %2037
    %v2042 = vsel %vm774, %v2028, 0
    %v2045 = vsel %vm774, %v2030, 0
    %2047 = vmatprep.subr.mxu0 0.0
    %2048 = vmatpush1.msra.mxu0 %v2036
    %2049 = vmatprep.subr.mxu0 0.0
    %2050 = vmatpush1.msra.mxu0 %v2038
    %2051 = vmatprep.subr.mxu0 0.0
    %2052 = vmatpush1.msra.mxu0 0.0
    %2053 = vmatprep.subr.mxu0 0.0
    %2054 = vmatpush1.msra.mxu0 0.0
    %2055 = vmatprep.subr.mxu0 0.0
    %2056 = vmatpush1.msra.mxu0 0.0
    %2057 = vmatprep.subr.mxu0 0.0
    %2058 = vmatpush1.msra.mxu0 0.0
    %2059 = vmatprep.subr.mxu0 0.0
    %2060 = vmatpush1.msra.mxu0 0.0
    %2061 = vmatprep.subr.mxu0 0.0
    %2062 = vmatpush1.msra.mxu0 0.0
    %2063 = vmatprep.subr.mxu0 0.0
    %2064 = vmatpush1.msra.mxu0 0.0
    %2065 = vmatprep.subr.mxu0 0.0
    %2066 = vmatpush1.msra.mxu0 0.0
    %2067 = vmatprep.subr.mxu0 0.0
    %2068 = vmatpush1.msra.mxu0 0.0
    %2069 = vmatprep.subr.mxu0 0.0
    %2070 = vmatpush1.msra.mxu0 0.0
    %2071 = vmatprep.subr.mxu0 0.0
    %2072 = vmatpush1.msra.mxu0 0.0
    %2073 = vmatprep.subr.mxu0 0.0
    %2074 = vmatpush1.msra.mxu0 0.0
    %2075 = vmatprep.subr.mxu0 0.0
    %2076 = vmatpush1.msra.mxu0 0.0
    %2077 = vmatprep.subr.mxu0 0.0
    %2078 = vmatpush1.msra.mxu0 0.0
    %2079 = vmatprep.subr.mxu0 0.0
    %2080 = vmatpush1.msra.mxu0 0.0
    %2081 = vmatprep.subr.mxu0 0.0
    %2082 = vmatpush1.msra.mxu0 0.0
    %2083 = vmatprep.subr.mxu0 0.0
    %2084 = vmatpush1.msra.mxu0 0.0
    %2085 = vmatprep.subr.mxu0 0.0
    %2086 = vmatpush1.msra.mxu0 0.0
    %2087 = vmatprep.subr.mxu0 0.0
    %2088 = vmatpush1.msra.mxu0 0.0
    %2089 = vmatprep.subr.mxu0 0.0
    %2090 = vmatpush1.msra.mxu0 0.0
    %2091 = vmatprep.subr.mxu0 0.0
    %2092 = vmatpush1.msra.mxu0 0.0
    %2093 = vmatprep.subr.mxu0 0.0
    %2094 = vmatpush1.msra.mxu0 0.0
    %2095 = vmatprep.subr.mxu0 0.0
    %2096 = vmatpush1.msra.mxu0 0.0
    %2097 = vmatprep.subr.mxu0 0.0
    %2098 = vmatpush1.msra.mxu0 0.0
    %2099 = vmatprep.subr.mxu0 0.0
    %2100 = vmatpush1.msra.mxu0 0.0
    %2101 = vmatprep.subr.mxu0 0.0
    %2102 = vmatpush1.msra.mxu0 0.0
    %2103 = vmatprep.subr.mxu0 0.0
    %2104 = vmatpush1.msra.mxu0 0.0
    %2105 = vmatprep.subr.mxu0 0.0
    %2106 = vmatpush1.msra.mxu0 0.0
    %2107 = vmatprep.subr.mxu0 0.0
    %2108 = vmatpush1.msra.mxu0 0.0
    %2109 = vmatprep.subr.mxu0 0.0
    %2110 = vmatpush1.msra.mxu0 0.0
    %2111 = vmatprep.mubr.f32.mxu0 0.0
    %2112 = vmatmul.mubr.f32.gmra.mrb[0].mxu0 %v2042
    %v2113 = vpop.f32.mrb[0].mxu0
    %v2114 = vadd.f32 0.0, %v2113
    %v2115 = vpop.f32.mrb[0].mxu0
    %2116 = vmatprep.mubr.f32.mxu0 0.0
    %2117 = vmatmul.mubr.f32.gmra.mrb[0].mxu0 %v2045
    %v2118 = vpop.f32.mrb[0].mxu0
    %v2119 = vadd.f32 0.0, %v2118
    %v2120 = vpop.f32.mrb[0].mxu0
    %2121 = vdwg.mxu0
    %2122 = vrot.lane.b32.xlu0 %v583, 32
    %v2123 = vpop.permute.xlu0 %2122
    %2124 = vrot.lane.b32.xlu0 %v588, 32
    %v2125 = vpop.permute.xlu0 %2124
    %v2129 = vsel %vm774, %v2032, 0
    %v2132 = vsel %vm774, %v2034, 0
    %2134 = vmatprep.subr.mxu0 0.0
    %2135 = vmatpush1.msra.mxu0 %v2123
    %2136 = vmatprep.subr.mxu0 0.0
    %2137 = vmatpush1.msra.mxu0 %v2125
    %2138 = vmatprep.subr.mxu0 0.0
    %2139 = vmatpush1.msra.mxu0 0.0
    %2140 = vmatprep.subr.mxu0 0.0
    %2141 = vmatpush1.msra.mxu0 0.0
    %2142 = vmatprep.subr.mxu0 0.0
    %2143 = vmatpush1.msra.mxu0 0.0
    %2144 = vmatprep.subr.mxu0 0.0
    %2145 = vmatpush1.msra.mxu0 0.0
    %2146 = vmatprep.subr.mxu0 0.0
    %2147 = vmatpush1.msra.mxu0 0.0
    %2148 = vmatprep.subr.mxu0 0.0
    %2149 = vmatpush1.msra.mxu0 0.0
    %2150 = vmatprep.subr.mxu0 0.0
    %2151 = vmatpush1.msra.mxu0 0.0
    %2152 = vmatprep.subr.mxu0 0.0
    %2153 = vmatpush1.msra.mxu0 0.0
    %2154 = vmatprep.subr.mxu0 0.0
    %2155 = vmatpush1.msra.mxu0 0.0
    %2156 = vmatprep.subr.mxu0 0.0
    %2157 = vmatpush1.msra.mxu0 0.0
    %2158 = vmatprep.subr.mxu0 0.0
    %2159 = vmatpush1.msra.mxu0 0.0
    %2160 = vmatprep.subr.mxu0 0.0
    %2161 = vmatpush1.msra.mxu0 0.0
    %2162 = vmatprep.subr.mxu0 0.0
    %2163 = vmatpush1.msra.mxu0 0.0
    %2164 = vmatprep.subr.mxu0 0.0
    %2165 = vmatpush1.msra.mxu0 0.0
    %2166 = vmatprep.subr.mxu0 0.0
    %2167 = vmatpush1.msra.mxu0 0.0
    %2168 = vmatprep.subr.mxu0 0.0
    %2169 = vmatpush1.msra.mxu0 0.0
    %2170 = vmatprep.subr.mxu0 0.0
    %2171 = vmatpush1.msra.mxu0 0.0
    %2172 = vmatprep.subr.mxu0 0.0
    %2173 = vmatpush1.msra.mxu0 0.0
    %2174 = vmatprep.subr.mxu0 0.0
    %2175 = vmatpush1.msra.mxu0 0.0
    %2176 = vmatprep.subr.mxu0 0.0
    %2177 = vmatpush1.msra.mxu0 0.0
    %2178 = vmatprep.subr.mxu0 0.0
    %2179 = vmatpush1.msra.mxu0 0.0
    %2180 = vmatprep.subr.mxu0 0.0
    %2181 = vmatpush1.msra.mxu0 0.0
    %2182 = vmatprep.subr.mxu0 0.0
    %2183 = vmatpush1.msra.mxu0 0.0
    %2184 = vmatprep.subr.mxu0 0.0
    %2185 = vmatpush1.msra.mxu0 0.0
    %2186 = vmatprep.subr.mxu0 0.0
    %2187 = vmatpush1.msra.mxu0 0.0
    %2188 = vmatprep.subr.mxu0 0.0
    %2189 = vmatpush1.msra.mxu0 0.0
    %2190 = vmatprep.subr.mxu0 0.0
    %2191 = vmatpush1.msra.mxu0 0.0
    %2192 = vmatprep.subr.mxu0 0.0
    %2193 = vmatpush1.msra.mxu0 0.0
    %2194 = vmatprep.subr.mxu0 0.0
    %2195 = vmatpush1.msra.mxu0 0.0
    %2196 = vmatprep.subr.mxu0 0.0
    %2197 = vmatpush1.msra.mxu0 0.0
    %2198 = vmatprep.mubr.f32.mxu0 0.0
    %2199 = vmatmul.mubr.f32.gmra.mrb[0].mxu0 %v2129
    %v2200 = vpop.f32.mrb[0].mxu0
    %v2201 = vadd.f32 0.0, %v2200
    %v2202 = vpop.f32.mrb[0].mxu0
    %2203 = vmatprep.mubr.f32.mxu0 0.0
    %2204 = vmatmul.mubr.f32.gmra.mrb[0].mxu0 %v2132
    %v2205 = vpop.f32.mrb[0].mxu0
    %v2206 = vadd.f32 0.0, %v2205
    %v2207 = vpop.f32.mrb[0].mxu0
    %2208 = vdwg.mxu0
    %2213 = vrot.lane.b32.xlu0 %v1296, 32
    %v2214 = vpop.permute.xlu0 %2213
    %2215 = vrot.lane.b32.xlu0 %v1301, 32
    %v2216 = vpop.permute.xlu0 %2215
    %2217 = vrot.lane.b32.xlu0 %v1385, 32
    %v2218 = vpop.permute.xlu0 %2217
    %2219 = vrot.lane.b32.xlu0 %v1390, 32
    %v2220 = vpop.permute.xlu0 %2219
    %2229 = vrot.lane.b32.xlu0 %v1706, 64
    %v2230 = vpop.permute.xlu0 %2229
    %2231 = vrot.lane.b32.xlu0 %v1711, 64
    %v2232 = vpop.permute.xlu0 %2231
    %2233 = vrot.lane.b32.xlu0 %v1793, 64
    %v2234 = vpop.permute.xlu0 %2233
    %2235 = vrot.lane.b32.xlu0 %v1798, 64
    %v2236 = vpop.permute.xlu0 %2235
    %2245 = vrot.lane.b32.xlu0 %v2114, 96
    %v2246 = vpop.permute.xlu0 %2245
    %2247 = vrot.lane.b32.xlu0 %v2119, 96
    %v2248 = vpop.permute.xlu0 %2247
    %2249 = vrot.lane.b32.xlu0 %v2201, 96
    %v2250 = vpop.permute.xlu0 %2249
    %2251 = vrot.lane.b32.xlu0 %v2206, 96
    %v2252 = vpop.permute.xlu0 %2251
    %v2257 = vsel %vm591, %v892, %v2214
    %v2258 = vsel %vm591, %v897, %v2216
    %v2259 = vsel %vm591, %v973, %v2218
    %v2260 = vsel %vm591, %v978, %v2220
    %v2261 = vsel %vm207, %v2257, %v2230
    %v2262 = vsel %vm207, %v2258, %v2232
    %v2263 = vsel %vm207, %v2259, %v2234
    %v2264 = vsel %vm207, %v2260, %v2236
    %vm2265 = vcmask 785408
    %v2266 = vsel %vm2265, %v2261, %v2246
    %v2267 = vsel %vm2265, %v2262, %v2248
    %v2268 = vsel %vm2265, %v2263, %v2250
    %v2269 = vsel %vm2265, %v2264, %v2252
    %v2270 = vld [vmem:[%s8] sm:$0xff]
    %v2271 = vld [vmem:[%s8 + $0x8] sm:$0xff]
    %v2272 = vld [vmem:[%s8 + $0x10] sm:$0xff]
    %v2273 = vld [vmem:[%s8 + $0x18] sm:$0xff]
    %v2274 = vld [vmem:[%s8 + $0x20] sm:$0xff]
    %v2275 = vld [vmem:[%s8 + $0x28] sm:$0xff]
    %v2276 = vld [vmem:[%s8 + $0x30] sm:$0xff]
    %v2277 = vld [vmem:[%s8 + $0x38] sm:$0xff]
    %v2278 = vld [vmem:[%s8 + $0x40] sm:$0xff]
    %v2279 = vld [vmem:[%s8 + $0x48] sm:$0xff]
    %v2280 = vld [vmem:[%s8 + $0x50] sm:$0xff]
    %v2281 = vld [vmem:[%s8 + $0x58] sm:$0xff]
    %v2282 = vld [vmem:[%s8 + $0x60] sm:$0xff]
    %v2283 = vld [vmem:[%s8 + $0x68] sm:$0xff]
    %v2284 = vld [vmem:[%s8 + $0x70] sm:$0xff]
    %v2285 = vld [vmem:[%s8 + $0x78] sm:$0xff]
    %v2286 = vld [vmem:[%s9] sm:$0x1]
    %v2288 = vlaneseq
    %v2289 = vshrl.u32 %v2288, 7
    %v2290 = vsub.s32 0, %v2289
    %v2291 = vrot.slane %v2286, %v2290
    %2293 = vmatprep.subr.mxu0 0.0
    %2294 = vmatpush1.msra.mxu0 %v2270
    %2295 = vmatprep.subr.mxu0 0.0
    %2296 = vmatpush1.msra.mxu0 %v2271
    %2297 = vmatprep.subr.mxu0 0.0
    %2298 = vmatpush1.msra.mxu0 %v2272
    %2299 = vmatprep.subr.mxu0 0.0
    %2300 = vmatpush1.msra.mxu0 %v2273
    %2301 = vmatprep.subr.mxu0 0.0
    %2302 = vmatpush1.msra.mxu0 %v2274
    %2303 = vmatprep.subr.mxu0 0.0
    %2304 = vmatpush1.msra.mxu0 %v2275
    %2305 = vmatprep.subr.mxu0 0.0
    %2306 = vmatpush1.msra.mxu0 %v2276
    %2307 = vmatprep.subr.mxu0 0.0
    %2308 = vmatpush1.msra.mxu0 %v2277
    %2309 = vmatprep.subr.mxu0 0.0
    %2310 = vmatpush1.msra.mxu0 %v2278
    %2311 = vmatprep.subr.mxu0 0.0
    %2312 = vmatpush1.msra.mxu0 %v2279
    %2313 = vmatprep.subr.mxu0 0.0
    %2314 = vmatpush1.msra.mxu0 %v2280
    %2315 = vmatprep.subr.mxu0 0.0
    %2316 = vmatpush1.msra.mxu0 %v2281
    %2317 = vmatprep.subr.mxu0 0.0
    %2318 = vmatpush1.msra.mxu0 %v2282
    %2319 = vmatprep.subr.mxu0 0.0
    %2320 = vmatpush1.msra.mxu0 %v2283
    %2321 = vmatprep.subr.mxu0 0.0
    %2322 = vmatpush1.msra.mxu0 %v2284
    %2323 = vmatprep.subr.mxu0 0.0
    %2324 = vmatpush1.msra.mxu0 %v2285
    %2325 = vmatprep.subr.mxu0 0.0
    %2326 = vmatpush1.msra.mxu0 0.0
    %2327 = vmatprep.subr.mxu0 0.0
    %2328 = vmatpush1.msra.mxu0 0.0
    %2329 = vmatprep.subr.mxu0 0.0
    %2330 = vmatpush1.msra.mxu0 0.0
    %2331 = vmatprep.subr.mxu0 0.0
    %2332 = vmatpush1.msra.mxu0 0.0
    %2333 = vmatprep.subr.mxu0 0.0
    %2334 = vmatpush1.msra.mxu0 0.0
    %2335 = vmatprep.subr.mxu0 0.0
    %2336 = vmatpush1.msra.mxu0 0.0
    %2337 = vmatprep.subr.mxu0 0.0
    %2338 = vmatpush1.msra.mxu0 0.0
    %2339 = vmatprep.subr.mxu0 0.0
    %2340 = vmatpush1.msra.mxu0 0.0
    %2341 = vmatprep.subr.mxu0 0.0
    %2342 = vmatpush1.msra.mxu0 0.0
    %2343 = vmatprep.subr.mxu0 0.0
    %2344 = vmatpush1.msra.mxu0 0.0
    %2345 = vmatprep.subr.mxu0 0.0
    %2346 = vmatpush1.msra.mxu0 0.0
    %2347 = vmatprep.subr.mxu0 0.0
    %2348 = vmatpush1.msra.mxu0 0.0
    %2349 = vmatprep.subr.mxu0 0.0
    %2350 = vmatpush1.msra.mxu0 0.0
    %2351 = vmatprep.subr.mxu0 0.0
    %2352 = vmatpush1.msra.mxu0 0.0
    %2353 = vmatprep.subr.mxu0 0.0
    %2354 = vmatpush1.msra.mxu0 0.0
    %2355 = vmatprep.subr.mxu0 0.0
    %2356 = vmatpush1.msra.mxu0 0.0
    %2357 = vmatprep.mubr.f32.mxu0 0.0
    %2358 = vmatmul.mubr.f32.gmra.mrb[0].mxu0 %v2266
    %v2359 = vpop.f32.mrb[0].mxu0
    %v2360 = vadd.f32 %v2291, %v2359
    %v2361 = vpop.f32.mrb[0].mxu0
    %2362 = vmatprep.mubr.f32.mxu0 0.0
    %2363 = vmatmul.mubr.f32.gmra.mrb[0].mxu0 %v2267
    %v2364 = vpop.f32.mrb[0].mxu0
    %v2365 = vadd.f32 %v2291, %v2364
    %v2366 = vpop.f32.mrb[0].mxu0
    %2367 = vmatprep.mubr.f32.mxu0 0.0
    %2368 = vmatmul.mubr.f32.gmra.mrb[0].mxu0 %v2268
    %v2369 = vpop.f32.mrb[0].mxu0
    %v2370 = vadd.f32 %v2291, %v2369
    %v2371 = vpop.f32.mrb[0].mxu0
    %2372 = vmatprep.mubr.f32.mxu0 0.0
    %2373 = vmatmul.mubr.f32.gmra.mrb[0].mxu0 %v2269
    %v2374 = vpop.f32.mrb[0].mxu0
    %v2375 = vadd.f32 %v2291, %v2374
    %v2376 = vpop.f32.mrb[0].mxu0
    %2377 = vdwg.mxu0
    %v2378 = vadd.f32 %v339, %v2360
    %v2379 = vadd.f32 %v340, %v2365
    %v2380 = vadd.f32 %v341, %v2370
    %v2381 = vadd.f32 %v342, %v2375
    %v2382 = vld [vmem:[%s10] sm:$0x1]
    %v2383 = vld [vmem:[%s11] sm:$0x1]
    %2384 = vadd.xlane.f32.xlu0 %v2378
    %v2385 = vpop.xlane.xlu0 %2384
    %2386 = vadd.xlane.f32.xlu0 %v2379
    %v2387 = vpop.xlane.xlu0 %2386
    %2388 = vadd.xlane.f32.xlu0 %v2380
    %v2389 = vpop.xlane.xlu0 %2388
    %2390 = vadd.xlane.f32.xlu0 %v2381
    %v2391 = vpop.xlane.xlu0 %2390
    %v2392 = vrcp.pop 128.0
    %v2393 = vmul.f32 %v2385, %v2392
    %v2394 = vmul.f32 %v2387, %v2392
    %v2395 = vmul.f32 %v2389, %v2392
    %v2396 = vmul.f32 %v2391, %v2392
    %v2397 = vsub.f32 %v2378, %v2393
    %v2398 = vsub.f32 %v2379, %v2394
    %v2399 = vsub.f32 %v2380, %v2395
    %v2400 = vsub.f32 %v2381, %v2396
    %v2401 = vmul.f32 %v2397, %v2397
    %v2402 = vmul.f32 %v2398, %v2398
    %v2403 = vmul.f32 %v2399, %v2399
    %v2404 = vmul.f32 %v2400, %v2400
    %2405 = vadd.xlane.f32.xlu0 %v2401
    %v2406 = vpop.xlane.xlu0 %2405
    %2407 = vadd.xlane.f32.xlu0 %v2402
    %v2408 = vpop.xlane.xlu0 %2407
    %2409 = vadd.xlane.f32.xlu0 %v2403
    %v2410 = vpop.xlane.xlu0 %2409
    %2411 = vadd.xlane.f32.xlu0 %v2404
    %v2412 = vpop.xlane.xlu0 %2411
    %v2413 = vmul.f32 %v2406, %v2392
    %v2414 = vmul.f32 %v2408, %v2392
    %v2415 = vmul.f32 %v2410, %v2392
    %v2416 = vmul.f32 %v2412, %v2392
    %v2417 = vadd.f32 %v2413, 1e-05
    %v2418 = vadd.f32 %v2414, 1e-05
    %v2419 = vadd.f32 %v2415, 1e-05
    %v2420 = vadd.f32 %v2416, 1e-05
    %v2421 = vrsqrt.pop %v2417
    %v2422 = vrsqrt.pop %v2418
    %v2423 = vrsqrt.pop %v2419
    %v2424 = vrsqrt.pop %v2420
    %v2425 = vmul.f32 %v2397, %v2421
    %v2426 = vmul.f32 %v2398, %v2422
    %v2427 = vmul.f32 %v2399, %v2423
    %v2428 = vmul.f32 %v2400, %v2424
    %v2430 = vlaneseq
    %v2431 = vshrl.u32 %v2430, 7
    %v2432 = vsub.s32 0, %v2431
    %v2433 = vrot.slane %v2382, %v2432
    %v2435 = vmul.f32 %v2425, %v2433
    %v2436 = vmul.f32 %v2426, %v2433
    %v2437 = vmul.f32 %v2427, %v2433
    %v2438 = vmul.f32 %v2428, %v2433
    %v2440 = vlaneseq
    %v2441 = vshrl.u32 %v2440, 7
    %v2442 = vsub.s32 0, %v2441
    %v2443 = vrot.slane %v2383, %v2442
    %v2445 = vadd.f32 %v2435, %v2443
    %v2446 = vadd.f32 %v2436, %v2443
    %v2447 = vadd.f32 %v2437, %v2443
    %v2448 = vadd.f32 %v2438, %v2443
    %v2449 = vld [vmem:[#allocation8] sm:$0xff]
    %v2450 = vld [vmem:[#allocation8 + $0x8] sm:$0xff]
    %v2451 = vld [vmem:[#allocation8 + $0x10] sm:$0xff]
    %v2452 = vld [vmem:[#allocation8 + $0x18] sm:$0xff]
    %v2453 = vld [vmem:[#allocation8 + $0x20] sm:$0xff]
    %v2454 = vld [vmem:[#allocation8 + $0x28] sm:$0xff]
    %v2455 = vld [vmem:[#allocation8 + $0x30] sm:$0xff]
    %v2456 = vld [vmem:[#allocation8 + $0x38] sm:$0xff]
    %v2457 = vld [vmem:[#allocation8 + $0x40] sm:$0xff]
    %v2458 = vld [vmem:[#allocation8 + $0x48] sm:$0xff]
    %v2459 = vld [vmem:[#allocation8 + $0x50] sm:$0xff]
    %v2460 = vld [vmem:[#allocation8 + $0x58] sm:$0xff]
    %v2461 = vld [vmem:[#allocation8 + $0x60] sm:$0xff]
    %v2462 = vld [vmem:[#allocation8 + $0x68] sm:$0xff]
    %v2463 = vld [vmem:[#allocation8 + $0x70] sm:$0xff]
    %v2464 = vld [vmem:[#allocation8 + $0x78] sm:$0xff]
    %v2465 = vld [vmem:[#allocation8 + $0x80] sm:$0xff]
    %v2466 = vld [vmem:[#allocation8 + $0x88] sm:$0xff]
    %v2467 = vld [vmem:[#allocation8 + $0x90] sm:$0xff]
    %v2468 = vld [vmem:[#allocation8 + $0x98] sm:$0xff]
    %v2469 = vld [vmem:[#allocation8 + $0xa0] sm:$0xff]
    %v2470 = vld [vmem:[#allocation8 + $0xa8] sm:$0xff]
    %v2471 = vld [vmem:[#allocation8 + $0xb0] sm:$0xff]
    %v2472 = vld [vmem:[#allocation8 + $0xb8] sm:$0xff]
    %v2473 = vld [vmem:[#allocation8 + $0xc0] sm:$0xff]
    %v2474 = vld [vmem:[#allocation8 + $0xc8] sm:$0xff]
    %v2475 = vld [vmem:[#allocation8 + $0xd0] sm:$0xff]
    %v2476 = vld [vmem:[#allocation8 + $0xd8] sm:$0xff]
    %v2477 = vld [vmem:[#allocation8 + $0xe0] sm:$0xff]
    %v2478 = vld [vmem:[#allocation8 + $0xe8] sm:$0xff]
    %v2479 = vld [vmem:[#allocation8 + $0xf0] sm:$0xff]
    %v2480 = vld [vmem:[#allocation8 + $0xf8] sm:$0xff]
    %v2481 = vld [vmem:[%s13] sm:$0x3]
    %v2483 = vlaneseq
    %v2484 = vshrl.u32 %v2483, 7
    %v2485 = vsub.s32 0, %v2484
    %v2486 = vrot.slane %v2481, %v2485
    %v2487 = vlaneseq
    %v2488 = vshrl.u32 %v2487, 7
    %v2489 = vsub.s32 1, %v2488
    %v2490 = vrot.slane %v2481, %v2489
    %2493 = vmatprep.subr.mxu0 %v2450
    %2494 = vmatpush1.msra.mxu0 %v2449
    %2495 = vmatprep.subr.mxu0 %v2452
    %2496 = vmatpush1.msra.mxu0 %v2451
    %2497 = vmatprep.subr.mxu0 %v2454
    %2498 = vmatpush1.msra.mxu0 %v2453
    %2499 = vmatprep.subr.mxu0 %v2456
    %2500 = vmatpush1.msra.mxu0 %v2455
    %2501 = vmatprep.subr.mxu0 %v2458
    %2502 = vmatpush1.msra.mxu0 %v2457
    %2503 = vmatprep.subr.mxu0 %v2460
    %2504 = vmatpush1.msra.mxu0 %v2459
    %2505 = vmatprep.subr.mxu0 %v2462
    %2506 = vmatpush1.msra.mxu0 %v2461
    %2507 = vmatprep.subr.mxu0 %v2464
    %2508 = vmatpush1.msra.mxu0 %v2463
    %2509 = vmatprep.subr.mxu0 %v2466
    %2510 = vmatpush1.msra.mxu0 %v2465
    %2511 = vmatprep.subr.mxu0 %v2468
    %2512 = vmatpush1.msra.mxu0 %v2467
    %2513 = vmatprep.subr.mxu0 %v2470
    %2514 = vmatpush1.msra.mxu0 %v2469
    %2515 = vmatprep.subr.mxu0 %v2472
    %2516 = vmatpush1.msra.mxu0 %v2471
    %2517 = vmatprep.subr.mxu0 %v2474
    %2518 = vmatpush1.msra.mxu0 %v2473
    %2519 = vmatprep.subr.mxu0 %v2476
    %2520 = vmatpush1.msra.mxu0 %v2475
    %2521 = vmatprep.subr.mxu0 %v2478
    %2522 = vmatpush1.msra.mxu0 %v2477
    %2523 = vmatprep.subr.mxu0 %v2480
    %2524 = vmatpush1.msra.mxu0 %v2479
    %2525 = vmatprep.subr.mxu0 0.0
    %2526 = vmatpush1.msra.mxu0 0.0
    %2527 = vmatprep.subr.mxu0 0.0
    %2528 = vmatpush1.msra.mxu0 0.0
    %2529 = vmatprep.subr.mxu0 0.0
    %2530 = vmatpush1.msra.mxu0 0.0
    %2531 = vmatprep.subr.mxu0 0.0
    %2532 = vmatpush1.msra.mxu0 0.0
    %2533 = vmatprep.subr.mxu0 0.0
    %2534 = vmatpush1.msra.mxu0 0.0
    %2535 = vmatprep.subr.mxu0 0.0
    %2536 = vmatpush1.msra.mxu0 0.0
    %2537 = vmatprep.subr.mxu0 0.0
    %2538 = vmatpush1.msra.mxu0 0.0
    %2539 = vmatprep.subr.mxu0 0.0
    %2540 = vmatpush1.msra.mxu0 0.0
    %2541 = vmatprep.subr.mxu0 0.0
    %2542 = vmatpush1.msra.mxu0 0.0
    %2543 = vmatprep.subr.mxu0 0.0
    %2544 = vmatpush1.msra.mxu0 0.0
    %2545 = vmatprep.subr.mxu0 0.0
    %2546 = vmatpush1.msra.mxu0 0.0
    %2547 = vmatprep.subr.mxu0 0.0
    %2548 = vmatpush1.msra.mxu0 0.0
    %2549 = vmatprep.subr.mxu0 0.0
    %2550 = vmatpush1.msra.mxu0 0.0
    %2551 = vmatprep.subr.mxu0 0.0
    %2552 = vmatpush1.msra.mxu0 0.0
    %2553 = vmatprep.subr.mxu0 0.0
    %2554 = vmatpush1.msra.mxu0 0.0
    %2555 = vmatprep.subr.mxu0 0.0
    %2556 = vmatpush1.msra.mxu0 0.0
    %2557 = vmatprep.mubr.f32.mxu0 0.0
    %2558 = vmatmul.mubr.f32.gmra.mrb[0].mxu0 %v2445
    %v2559 = vpop.f32.mrb[0].mxu0
    %v2560 = vadd.f32 %v2486, %v2559
    %v2561 = vpop.f32.mrb[0].mxu0
    %v2562 = vadd.f32 %v2490, %v2561
    %2563 = vmatprep.mubr.f32.mxu0 0.0
    %2564 = vmatmul.mubr.f32.gmra.mrb[0].mxu0 %v2446
    %v2565 = vpop.f32.mrb[0].mxu0
    %v2566 = vadd.f32 %v2486, %v2565
    %v2567 = vpop.f32.mrb[0].mxu0
    %v2568 = vadd.f32 %v2490, %v2567
    %2569 = vmatprep.mubr.f32.mxu0 0.0
    %2570 = vmatmul.mubr.f32.gmra.mrb[0].mxu0 %v2447
    %v2571 = vpop.f32.mrb[0].mxu0
    %v2572 = vadd.f32 %v2486, %v2571
    %v2573 = vpop.f32.mrb[0].mxu0
    %v2574 = vadd.f32 %v2490, %v2573
    %2575 = vmatprep.mubr.f32.mxu0 0.0
    %2576 = vmatmul.mubr.f32.gmra.mrb[0].mxu0 %v2448
    %v2577 = vpop.f32.mrb[0].mxu0
    %v2578 = vadd.f32 %v2486, %v2577
    %v2579 = vpop.f32.mrb[0].mxu0
    %v2580 = vadd.f32 %v2490, %v2579
    %2581 = vdwg.mxu0
    %v2582 = vmax.f32 %v2560, 0.0
    %v2583 = vmax.f32 %v2562, 0.0
    %v2584 = vmax.f32 %v2566, 0.0
    %v2585 = vmax.f32 %v2568, 0.0
    %v2586 = vmax.f32 %v2572, 0.0
    %v2587 = vmax.f32 %v2574, 0.0
    %v2588 = vmax.f32 %v2578, 0.0
    %v2589 = vmax.f32 %v2580, 0.0
    %v2590 = vld [vmem:[#allocation9] sm:$0xff]
    %v2591 = vld [vmem:[#allocation9 + $0x8] sm:$0xff]
    %v2592 = vld [vmem:[#allocation9 + $0x10] sm:$0xff]
    %v2593 = vld [vmem:[#allocation9 + $0x18] sm:$0xff]
    %v2594 = vld [vmem:[#allocation9 + $0x20] sm:$0xff]
    %v2595 = vld [vmem:[#allocation9 + $0x28] sm:$0xff]
    %v2596 = vld [vmem:[#allocation9 + $0x30] sm:$0xff]
    %v2597 = vld [vmem:[#allocation9 + $0x38] sm:$0xff]
    %v2598 = vld [vmem:[#allocation9 + $0x40] sm:$0xff]
    %v2599 = vld [vmem:[#allocation9 + $0x48] sm:$0xff]
    %v2600 = vld [vmem:[#allocation9 + $0x50] sm:$0xff]
    %v2601 = vld [vmem:[#allocation9 + $0x58] sm:$0xff]
    %v2602 = vld [vmem:[#allocation9 + $0x60] sm:$0xff]
    %v2603 = vld [vmem:[#allocation9 + $0x68] sm:$0xff]
    %v2604 = vld [vmem:[#allocation9 + $0x70] sm:$0xff]
    %v2605 = vld [vmem:[#allocation9 + $0x78] sm:$0xff]
    %v2606 = vld [vmem:[#allocation9 + $0x80] sm:$0xff]
    %v2607 = vld [vmem:[#allocation9 + $0x88] sm:$0xff]
    %v2608 = vld [vmem:[#allocation9 + $0x90] sm:$0xff]
    %v2609 = vld [vmem:[#allocation9 + $0x98] sm:$0xff]
    %v2610 = vld [vmem:[#allocation9 + $0xa0] sm:$0xff]
    %v2611 = vld [vmem:[#allocation9 + $0xa8] sm:$0xff]
    %v2612 = vld [vmem:[#allocation9 + $0xb0] sm:$0xff]
    %v2613 = vld [vmem:[#allocation9 + $0xb8] sm:$0xff]
    %v2614 = vld [vmem:[#allocation9 + $0xc0] sm:$0xff]
    %v2615 = vld [vmem:[#allocation9 + $0xc8] sm:$0xff]
    %v2616 = vld [vmem:[#allocation9 + $0xd0] sm:$0xff]
    %v2617 = vld [vmem:[#allocation9 + $0xd8] sm:$0xff]
    %v2618 = vld [vmem:[#allocation9 + $0xe0] sm:$0xff]
    %v2619 = vld [vmem:[#allocation9 + $0xe8] sm:$0xff]
    %v2620 = vld [vmem:[#allocation9 + $0xf0] sm:$0xff]
    %v2621 = vld [vmem:[#allocation9 + $0xf8] sm:$0xff]
    %v2622 = vld [vmem:[%s15] sm:$0x1]
    %v2624 = vlaneseq
    %v2625 = vshrl.u32 %v2624, 7
    %v2626 = vsub.s32 0, %v2625
    %v2627 = vrot.slane %v2622, %v2626
    %2629 = vmatprep.subr.mxu0 0.0
    %2630 = vmatpush1.msra.mxu0 %v2590
    %2631 = vmatprep.subr.mxu0 0.0
    %2632 = vmatpush1.msra.mxu0 %v2591
    %2633 = vmatprep.subr.mxu0 0.0
    %2634 = vmatpush1.msra.mxu0 %v2592
    %2635 = vmatprep.subr.mxu0 0.0
    %2636 = vmatpush1.msra.mxu0 %v2593
    %2637 = vmatprep.subr.mxu0 0.0
    %2638 = vmatpush1.msra.mxu0 %v2594
    %2639 = vmatprep.subr.mxu0 0.0
    %2640 = vmatpush1.msra.mxu0 %v2595
    %2641 = vmatprep.subr.mxu0 0.0
    %2642 = vmatpush1.msra.mxu0 %v2596
    %2643 = vmatprep.subr.mxu0 0.0
    %2644 = vmatpush1.msra.mxu0 %v2597
    %2645 = vmatprep.subr.mxu0 0.0
    %2646 = vmatpush1.msra.mxu0 %v2598
    %2647 = vmatprep.subr.mxu0 0.0
    %2648 = vmatpush1.msra.mxu0 %v2599
    %2649 = vmatprep.subr.mxu0 0.0
    %2650 = vmatpush1.msra.mxu0 %v2600
    %2651 = vmatprep.subr.mxu0 0.0
    %2652 = vmatpush1.msra.mxu0 %v2601
    %2653 = vmatprep.subr.mxu0 0.0
    %2654 = vmatpush1.msra.mxu0 %v2602
    %2655 = vmatprep.subr.mxu0 0.0
    %2656 = vmatpush1.msra.mxu0 %v2603
    %2657 = vmatprep.subr.mxu0 0.0
    %2658 = vmatpush1.msra.mxu0 %v2604
    %2659 = vmatprep.subr.mxu0 0.0
    %2660 = vmatpush1.msra.mxu0 %v2605
    %2661 = vmatprep.subr.mxu0 0.0
    %2662 = vmatpush1.msra.mxu0 %v2606
    %2663 = vmatprep.subr.mxu0 0.0
    %2664 = vmatpush1.msra.mxu0 %v2607
    %2665 = vmatprep.subr.mxu0 0.0
    %2666 = vmatpush1.msra.mxu0 %v2608
    %2667 = vmatprep.subr.mxu0 0.0
    %2668 = vmatpush1.msra.mxu0 %v2609
    %2669 = vmatprep.subr.mxu0 0.0
    %2670 = vmatpush1.msra.mxu0 %v2610
    %2671 = vmatprep.subr.mxu0 0.0
    %2672 = vmatpush1.msra.mxu0 %v2611
    %2673 = vmatprep.subr.mxu0 0.0
    %2674 = vmatpush1.msra.mxu0 %v2612
    %2675 = vmatprep.subr.mxu0 0.0
    %2676 = vmatpush1.msra.mxu0 %v2613
    %2677 = vmatprep.subr.mxu0 0.0
    %2678 = vmatpush1.msra.mxu0 %v2614
    %2679 = vmatprep.subr.mxu0 0.0
    %2680 = vmatpush1.msra.mxu0 %v2615
    %2681 = vmatprep.subr.mxu0 0.0
    %2682 = vmatpush1.msra.mxu0 %v2616
    %2683 = vmatprep.subr.mxu0 0.0
    %2684 = vmatpush1.msra.mxu0 %v2617
    %2685 = vmatprep.subr.mxu0 0.0
    %2686 = vmatpush1.msra.mxu0 %v2618
    %2687 = vmatprep.subr.mxu0 0.0
    %2688 = vmatpush1.msra.mxu0 %v2619
    %2689 = vmatprep.subr.mxu0 0.0
    %2690 = vmatpush1.msra.mxu0 %v2620
    %2691 = vmatprep.subr.mxu0 0.0
    %2692 = vmatpush1.msra.mxu0 %v2621
    %2693 = vmatprep.mubr.f32.mxu0 %v2583
    %2694 = vmatmul.mubr.f32.gmra.mrb[0].mxu0 %v2582
    %v2695 = vpop.f32.mrb[0].mxu0
    %v2696 = vadd.f32 %v2627, %v2695
    %v2697 = vpop.f32.mrb[0].mxu0
    %2698 = vmatprep.mubr.f32.mxu0 %v2585
    %2699 = vmatmul.mubr.f32.gmra.mrb[0].mxu0 %v2584
    %v2700 = vpop.f32.mrb[0].mxu0
    %v2701 = vadd.f32 %v2627, %v2700
    %v2702 = vpop.f32.mrb[0].mxu0
    %2703 = vmatprep.mubr.f32.mxu0 %v2587
    %2704 = vmatmul.mubr.f32.gmra.mrb[0].mxu0 %v2586
    %v2705 = vpop.f32.mrb[0].mxu0
    %v2706 = vadd.f32 %v2627, %v2705
    %v2707 = vpop.f32.mrb[0].mxu0
    %2708 = vmatprep.mubr.f32.mxu0 %v2589
    %2709 = vmatmul.mubr.f32.gmra.mrb[0].mxu0 %v2588
    %v2710 = vpop.f32.mrb[0].mxu0
    %v2711 = vadd.f32 %v2627, %v2710
    %v2712 = vpop.f32.mrb[0].mxu0
    %2713 = vdwg.mxu0
    %v2714 = vadd.f32 %v2445, %v2696
    %v2715 = vadd.f32 %v2446, %v2701
    %v2716 = vadd.f32 %v2447, %v2706
    %v2717 = vadd.f32 %v2448, %v2711
    %v2718 = vld [vmem:[%s16] sm:$0x1]
    %v2719 = vld [vmem:[%s17] sm:$0x1]
    %2720 = vadd.xlane.f32.xlu0 %v2714
    %v2721 = vpop.xlane.xlu0 %2720
    %2722 = vadd.xlane.f32.xlu0 %v2715
    %v2723 = vpop.xlane.xlu0 %2722
    %2724 = vadd.xlane.f32.xlu0 %v2716
    %v2725 = vpop.xlane.xlu0 %2724
    %2726 = vadd.xlane.f32.xlu0 %v2717
    %v2727 = vpop.xlane.xlu0 %2726
    %v2728 = vmul.f32 %v2721, %v2392
    %v2729 = vmul.f32 %v2723, %v2392
    %v2730 = vmul.f32 %v2725, %v2392
    %v2731 = vmul.f32 %v2727, %v2392
    %v2732 = vsub.f32 %v2714, %v2728
    %v2733 = vsub.f32 %v2715, %v2729
    %v2734 = vsub.f32 %v2716, %v2730
    %v2735 = vsub.f32 %v2717, %v2731
    %v2736 = vmul.f32 %v2732, %v2732
    %v2737 = vmul.f32 %v2733, %v2733
    %v2738 = vmul.f32 %v2734, %v2734
    %v2739 = vmul.f32 %v2735, %v2735
    %2740 = vadd.xlane.f32.xlu0 %v2736
    %v2741 = vpop.xlane.xlu0 %2740
    %2742 = vadd.xlane.f32.xlu0 %v2737
    %v2743 = vpop.xlane.xlu0 %2742
    %2744 = vadd.xlane.f32.xlu0 %v2738
    %v2745 = vpop.xlane.xlu0 %2744
    %2746 = vadd.xlane.f32.xlu0 %v2739
    %v2747 = vpop.xlane.xlu0 %2746
    %v2748 = vmul.f32 %v2741, %v2392
    %v2749 = vmul.f32 %v2743, %v2392
    %v2750 = vmul.f32 %v2745, %v2392
    %v2751 = vmul.f32 %v2747, %v2392
    %v2752 = vadd.f32 %v2748, 1e-05
    %v2753 = vadd.f32 %v2749, 1e-05
    %v2754 = vadd.f32 %v2750, 1e-05
    %v2755 = vadd.f32 %v2751, 1e-05
    %v2756 = vrsqrt.pop %v2752
    %v2757 = vrsqrt.pop %v2753
    %v2758 = vrsqrt.pop %v2754
    %v2759 = vrsqrt.pop %v2755
    %v2760 = vmul.f32 %v2732, %v2756
    %v2761 = vmul.f32 %v2733, %v2757
    %v2762 = vmul.f32 %v2734, %v2758
    %v2763 = vmul.f32 %v2735, %v2759
    %v2765 = vlaneseq
    %v2766 = vshrl.u32 %v2765, 7
    %v2767 = vsub.s32 0, %v2766
    %v2768 = vrot.slane %v2718, %v2767
    %v2770 = vmul.f32 %v2760, %v2768
    %v2771 = vmul.f32 %v2761, %v2768
    %v2772 = vmul.f32 %v2762, %v2768
    %v2773 = vmul.f32 %v2763, %v2768
    %v2775 = vlaneseq
    %v2776 = vshrl.u32 %v2775, 7
    %v2777 = vsub.s32 0, %v2776
    %v2778 = vrot.slane %v2719, %v2777
    %v2780 = vadd.f32 %v2770, %v2778
    %v2781 = vadd.f32 %v2771, %v2778
    %v2782 = vadd.f32 %v2772, %v2778
    %v2783 = vadd.f32 %v2773, %v2778
    %s2784 = scalar_lea.vmem [#allocation6], 384
    %v2785 = vld [vmem:[%s2784] sm:$0xff]
    %v2786 = vld [vmem:[%s2784 + $0x8] sm:$0xff]
    %v2787 = vld [vmem:[%s2784 + $0x10] sm:$0xff]
    %v2788 = vld [vmem:[%s2784 + $0x18] sm:$0xff]
    %v2789 = vld [vmem:[%s2784 + $0x20] sm:$0xff]
    %v2790 = vld [vmem:[%s2784 + $0x28] sm:$0xff]
    %v2791 = vld [vmem:[%s2784 + $0x30] sm:$0xff]
    %v2792 = vld [vmem:[%s2784 + $0x38] sm:$0xff]
    %v2793 = vld [vmem:[%s2784 + $0x40] sm:$0xff]
    %v2794 = vld [vmem:[%s2784 + $0x48] sm:$0xff]
    %v2795 = vld [vmem:[%s2784 + $0x50] sm:$0xff]
    %v2796 = vld [vmem:[%s2784 + $0x58] sm:$0xff]
    %v2797 = vld [vmem:[%s2784 + $0x60] sm:$0xff]
    %v2798 = vld [vmem:[%s2784 + $0x68] sm:$0xff]
    %v2799 = vld [vmem:[%s2784 + $0x70] sm:$0xff]
    %v2800 = vld [vmem:[%s2784 + $0x78] sm:$0xff]
    %v2801 = vld [vmem:[%s2784 + $0x80] sm:$0xff]
    %v2802 = vld [vmem:[%s2784 + $0x88] sm:$0xff]
    %v2803 = vld [vmem:[%s2784 + $0x90] sm:$0xff]
    %v2804 = vld [vmem:[%s2784 + $0x98] sm:$0xff]
    %v2805 = vld [vmem:[%s2784 + $0xa0] sm:$0xff]
    %v2806 = vld [vmem:[%s2784 + $0xa8] sm:$0xff]
    %v2807 = vld [vmem:[%s2784 + $0xb0] sm:$0xff]
    %v2808 = vld [vmem:[%s2784 + $0xb8] sm:$0xff]
    %v2809 = vld [vmem:[%s2784 + $0xc0] sm:$0xff]
    %v2810 = vld [vmem:[%s2784 + $0xc8] sm:$0xff]
    %v2811 = vld [vmem:[%s2784 + $0xd0] sm:$0xff]
    %v2812 = vld [vmem:[%s2784 + $0xd8] sm:$0xff]
    %v2813 = vld [vmem:[%s2784 + $0xe0] sm:$0xff]
    %v2814 = vld [vmem:[%s2784 + $0xe8] sm:$0xff]
    %v2815 = vld [vmem:[%s2784 + $0xf0] sm:$0xff]
    %v2816 = vld [vmem:[%s2784 + $0xf8] sm:$0xff]
    %v2817 = vld [vmem:[%s2784 + $0x100] sm:$0xff]
    %v2818 = vld [vmem:[%s2784 + $0x108] sm:$0xff]
    %v2819 = vld [vmem:[%s2784 + $0x110] sm:$0xff]
    %v2820 = vld [vmem:[%s2784 + $0x118] sm:$0xff]
    %v2821 = vld [vmem:[%s2784 + $0x120] sm:$0xff]
    %v2822 = vld [vmem:[%s2784 + $0x128] sm:$0xff]
    %v2823 = vld [vmem:[%s2784 + $0x130] sm:$0xff]
    %v2824 = vld [vmem:[%s2784 + $0x138] sm:$0xff]
    %v2825 = vld [vmem:[%s2784 + $0x140] sm:$0xff]
    %v2826 = vld [vmem:[%s2784 + $0x148] sm:$0xff]
    %v2827 = vld [vmem:[%s2784 + $0x150] sm:$0xff]
    %v2828 = vld [vmem:[%s2784 + $0x158] sm:$0xff]
    %v2829 = vld [vmem:[%s2784 + $0x160] sm:$0xff]
    %v2830 = vld [vmem:[%s2784 + $0x168] sm:$0xff]
    %v2831 = vld [vmem:[%s2784 + $0x170] sm:$0xff]
    %v2832 = vld [vmem:[%s2784 + $0x178] sm:$0xff]
    %s2833 = scalar_lea.vmem %s7, 3
    %v2834 = vld [vmem:[%s2833] sm:$0x7]
    %v2836 = vlaneseq
    %v2837 = vshrl.u32 %v2836, 7
    %v2838 = vsub.s32 0, %v2837
    %v2839 = vrot.slane %v2834, %v2838
    %v2840 = vlaneseq
    %v2841 = vshrl.u32 %v2840, 7
    %v2842 = vsub.s32 1, %v2841
    %v2843 = vrot.slane %v2834, %v2842
    %v2844 = vlaneseq
    %v2845 = vshrl.u32 %v2844, 7
    %v2846 = vsub.s32 2, %v2845
    %v2847 = vrot.slane %v2834, %v2846
    %2851 = vmatprep.subr.mxu0 %v2786
    %2852 = vmatpush1.msra.mxu0 %v2785
    %2853 = vmatprep.subr.mxu0 %v2789
    %2854 = vmatpush1.msra.mxu0 %v2788
    %2855 = vmatprep.subr.mxu0 %v2792
    %2856 = vmatpush1.msra.mxu0 %v2791
    %2857 = vmatprep.subr.mxu0 %v2795
    %2858 = vmatpush1.msra.mxu0 %v2794
    %2859 = vmatprep.subr.mxu0 %v2798
    %2860 = vmatpush1.msra.mxu0 %v2797
    %2861 = vmatprep.subr.mxu0 %v2801
    %2862 = vmatpush1.msra.mxu0 %v2800
    %2863 = vmatprep.subr.mxu0 %v2804
    %2864 = vmatpush1.msra.mxu0 %v2803
    %2865 = vmatprep.subr.mxu0 %v2807
    %2866 = vmatpush1.msra.mxu0 %v2806
    %2867 = vmatprep.subr.mxu0 %v2810
    %2868 = vmatpush1.msra.mxu0 %v2809
    %2869 = vmatprep.subr.mxu0 %v2813
    %2870 = vmatpush1.msra.mxu0 %v2812
    %2871 = vmatprep.subr.mxu0 %v2816
    %2872 = vmatpush1.msra.mxu0 %v2815
    %2873 = vmatprep.subr.mxu0 %v2819
    %2874 = vmatpush1.msra.mxu0 %v2818
    %2875 = vmatprep.subr.mxu0 %v2822
    %2876 = vmatpush1.msra.mxu0 %v2821
    %2877 = vmatprep.subr.mxu0 %v2825
    %2878 = vmatpush1.msra.mxu0 %v2824
    %2879 = vmatprep.subr.mxu0 %v2828
    %2880 = vmatpush1.msra.mxu0 %v2827
    %2881 = vmatprep.subr.mxu0 %v2831
    %2882 = vmatpush1.msra.mxu0 %v2830
    %2883 = vmatprep.subr.mxu0 0.0
    %2884 = vmatpush1.msra.mxu0 0.0
    %2885 = vmatprep.subr.mxu0 0.0
    %2886 = vmatpush1.msra.mxu0 0.0
    %2887 = vmatprep.subr.mxu0 0.0
    %2888 = vmatpush1.msra.mxu0 0.0
    %2889 = vmatprep.subr.mxu0 0.0
    %2890 = vmatpush1.msra.mxu0 0.0
    %2891 = vmatprep.subr.mxu0 0.0
    %2892 = vmatpush1.msra.mxu0 0.0
    %2893 = vmatprep.subr.mxu0 0.0
    %2894 = vmatpush1.msra.mxu0 0.0
    %2895 = vmatprep.subr.mxu0 0.0
    %2896 = vmatpush1.msra.mxu0 0.0
    %2897 = vmatprep.subr.mxu0 0.0
    %2898 = vmatpush1.msra.mxu0 0.0
    %2899 = vmatprep.subr.mxu0 0.0
    %2900 = vmatpush1.msra.mxu0 0.0
    %2901 = vmatprep.subr.mxu0 0.0
    %2902 = vmatpush1.msra.mxu0 0.0
    %2903 = vmatprep.subr.mxu0 0.0
    %2904 = vmatpush1.msra.mxu0 0.0
    %2905 = vmatprep.subr.mxu0 0.0
    %2906 = vmatpush1.msra.mxu0 0.0
    %2907 = vmatprep.subr.mxu0 0.0
    %2908 = vmatpush1.msra.mxu0 0.0
    %2909 = vmatprep.subr.mxu0 0.0
    %2910 = vmatpush1.msra.mxu0 0.0
    %2911 = vmatprep.subr.mxu0 0.0
    %2912 = vmatpush1.msra.mxu0 0.0
    %2913 = vmatprep.subr.mxu0 0.0
    %2914 = vmatpush1.msra.mxu0 0.0
    %2915 = vmatprep.mubr.f32.mxu0 0.0
    %2916 = vmatmul.mubr.f32.gmra.mrb[0].mxu0 %v2780
    %v2917 = vpop.f32.mrb[0].mxu0
    %v2918 = vadd.f32 %v2839, %v2917
    %v2919 = vpop.f32.mrb[0].mxu0
    %v2920 = vadd.f32 %v2843, %v2919
    %2921 = vmatprep.mubr.f32.mxu0 0.0
    %2922 = vmatmul.mubr.f32.gmra.mrb[0].mxu0 %v2781
    %v2923 = vpop.f32.mrb[0].mxu0
    %v2924 = vadd.f32 %v2839, %v2923
    %v2925 = vpop.f32.mrb[0].mxu0
    %v2926 = vadd.f32 %v2843, %v2925
    %2927 = vmatprep.mubr.f32.mxu0 0.0
    %2928 = vmatmul.mubr.f32.gmra.mrb[0].mxu0 %v2782
    %v2929 = vpop.f32.mrb[0].mxu0
    %v2930 = vadd.f32 %v2839, %v2929
    %v2931 = vpop.f32.mrb[0].mxu0
    %v2932 = vadd.f32 %v2843, %v2931
    %2933 = vmatprep.mubr.f32.mxu0 0.0
    %2934 = vmatmul.mubr.f32.gmra.mrb[0].mxu0 %v2783
    %v2935 = vpop.f32.mrb[0].mxu0
    %v2936 = vadd.f32 %v2839, %v2935
    %v2937 = vpop.f32.mrb[0].mxu0
    %v2938 = vadd.f32 %v2843, %v2937
    %2939 = vdwg.mxu0
    %2940 = vmatprep.subr.mxu0 0.0
    %2941 = vmatpush1.msra.mxu0 %v2787
    %2942 = vmatprep.subr.mxu0 0.0
    %2943 = vmatpush1.msra.mxu0 %v2790
    %2944 = vmatprep.subr.mxu0 0.0
    %2945 = vmatpush1.msra.mxu0 %v2793
    %2946 = vmatprep.subr.mxu0 0.0
    %2947 = vmatpush1.msra.mxu0 %v2796
    %2948 = vmatprep.subr.mxu0 0.0
    %2949 = vmatpush1.msra.mxu0 %v2799
    %2950 = vmatprep.subr.mxu0 0.0
    %2951 = vmatpush1.msra.mxu0 %v2802
    %2952 = vmatprep.subr.mxu0 0.0
    %2953 = vmatpush1.msra.mxu0 %v2805
    %2954 = vmatprep.subr.mxu0 0.0
    %2955 = vmatpush1.msra.mxu0 %v2808
    %2956 = vmatprep.subr.mxu0 0.0
    %2957 = vmatpush1.msra.mxu0 %v2811
    %2958 = vmatprep.subr.mxu0 0.0
    %2959 = vmatpush1.msra.mxu0 %v2814
    %2960 = vmatprep.subr.mxu0 0.0
    %2961 = vmatpush1.msra.mxu0 %v2817
    %2962 = vmatprep.subr.mxu0 0.0
    %2963 = vmatpush1.msra.mxu0 %v2820
    %2964 = vmatprep.subr.mxu0 0.0
    %2965 = vmatpush1.msra.mxu0 %v2823
    %2966 = vmatprep.subr.mxu0 0.0
    %2967 = vmatpush1.msra.mxu0 %v2826
    %2968 = vmatprep.subr.mxu0 0.0
    %2969 = vmatpush1.msra.mxu0 %v2829
    %2970 = vmatprep.subr.mxu0 0.0
    %2971 = vmatpush1.msra.mxu0 %v2832
    %2972 = vmatprep.subr.mxu0 0.0
    %2973 = vmatpush1.msra.mxu0 0.0
    %2974 = vmatprep.subr.mxu0 0.0
    %2975 = vmatpush1.msra.mxu0 0.0
    %2976 = vmatprep.subr.mxu0 0.0
    %2977 = vmatpush1.msra.mxu0 0.0
    %2978 = vmatprep.subr.mxu0 0.0
    %2979 = vmatpush1.msra.mxu0 0.0
    %2980 = vmatprep.subr.mxu0 0.0
    %2981 = vmatpush1.msra.mxu0 0.0
    %2982 = vmatprep.subr.mxu0 0.0
    %2983 = vmatpush1.msra.mxu0 0.0
    %2984 = vmatprep.subr.mxu0 0.0
    %2985 = vmatpush1.msra.mxu0 0.0
    %2986 = vmatprep.subr.mxu0 0.0
    %2987 = vmatpush1.msra.mxu0 0.0
    %2988 = vmatprep.subr.mxu0 0.0
    %2989 = vmatpush1.msra.mxu0 0.0
    %2990 = vmatprep.subr.mxu0 0.0
    %2991 = vmatpush1.msra.mxu0 0.0
    %2992 = vmatprep.subr.mxu0 0.0
    %2993 = vmatpush1.msra.mxu0 0.0
    %2994 = vmatprep.subr.mxu0 0.0
    %2995 = vmatpush1.msra.mxu0 0.0
    %2996 = vmatprep.subr.mxu0 0.0
    %2997 = vmatpush1.msra.mxu0 0.0
    %2998 = vmatprep.subr.mxu0 0.0
    %2999 = vmatpush1.msra.mxu0 0.0
    %3000 = vmatprep.subr.mxu0 0.0
    %3001 = vmatpush1.msra.mxu0 0.0
    %3002 = vmatprep.subr.mxu0 0.0
    %3003 = vmatpush1.msra.mxu0 0.0
    %3004 = vmatprep.mubr.f32.mxu0 0.0
    %3005 = vmatmul.mubr.f32.gmra.mrb[0].mxu0 %v2780
    %v3006 = vpop.f32.mrb[0].mxu0
    %v3007 = vadd.f32 %v2847, %v3006
    %v3008 = vpop.f32.mrb[0].mxu0
    %3009 = vmatprep.mubr.f32.mxu0 0.0
    %3010 = vmatmul.mubr.f32.gmra.mrb[0].mxu0 %v2781
    %v3011 = vpop.f32.mrb[0].mxu0
    %v3012 = vadd.f32 %v2847, %v3011
    %v3013 = vpop.f32.mrb[0].mxu0
    %3014 = vmatprep.mubr.f32.mxu0 0.0
    %3015 = vmatmul.mubr.f32.gmra.mrb[0].mxu0 %v2782
    %v3016 = vpop.f32.mrb[0].mxu0
    %v3017 = vadd.f32 %v2847, %v3016
    %v3018 = vpop.f32.mrb[0].mxu0
    %3019 = vmatprep.mubr.f32.mxu0 0.0
    %3020 = vmatmul.mubr.f32.gmra.mrb[0].mxu0 %v2783
    %v3021 = vpop.f32.mrb[0].mxu0
    %v3022 = vadd.f32 %v2847, %v3021
    %v3023 = vpop.f32.mrb[0].mxu0
    %3024 = vdwg.mxu0
    %v3026 = vsel %vm591, %v2918, 0
    %v3029 = vsel %vm591, %v2924, 0
    %v3032 = vsel %vm591, %v2920, 0
    %v3035 = vsel %vm591, %v2926, 0
    %3037 = vmatprep.subr.mxu0 0.0
    %3038 = vmatpush1.xpose.msra.mxu0 %v3032
    %3039 = vmatprep.subr.mxu0 0.0
    %3040 = vmatpush1.xpose.msra.mxu0 %v3035
    %3041 = vmatprep.subr.mxu0 0.0
    %3042 = vmatpush1.xpose.msra.mxu0 0.0
    %3043 = vmatprep.subr.mxu0 0.0
    %3044 = vmatpush1.xpose.msra.mxu0 0.0
    %3045 = vmatprep.subr.mxu0 0.0
    %3046 = vmatpush1.xpose.msra.mxu0 0.0
    %3047 = vmatprep.subr.mxu0 0.0
    %3048 = vmatpush1.xpose.msra.mxu0 0.0
    %3049 = vmatprep.subr.mxu0 0.0
    %3050 = vmatpush1.xpose.msra.mxu0 0.0
    %3051 = vmatprep.subr.mxu0 0.0
    %3052 = vmatpush1.xpose.msra.mxu0 0.0
    %3053 = vmatprep.subr.mxu0 0.0
    %3054 = vmatpush1.xpose.msra.mxu0 0.0
    %3055 = vmatprep.subr.mxu0 0.0
    %3056 = vmatpush1.xpose.msra.mxu0 0.0
    %3057 = vmatprep.subr.mxu0 0.0
    %3058 = vmatpush1.xpose.msra.mxu0 0.0
    %3059 = vmatprep.subr.mxu0 0.0
    %3060 = vmatpush1.xpose.msra.mxu0 0.0
    %3061 = vmatprep.subr.mxu0 0.0
    %3062 = vmatpush1.xpose.msra.mxu0 0.0
    %3063 = vmatprep.subr.mxu0 0.0
    %3064 = vmatpush1.xpose.msra.mxu0 0.0
    %3065 = vmatprep.subr.mxu0 0.0
    %3066 = vmatpush1.xpose.msra.mxu0 0.0
    %3067 = vmatprep.subr.mxu0 0.0
    %3068 = vmatpush1.xpose.msra.mxu0 0.0
    %3069 = vmatprep.subr.mxu0 0.0
    %3070 = vmatpush1.xpose.msra.mxu0 0.0
    %3071 = vmatprep.subr.mxu0 0.0
    %3072 = vmatpush1.xpose.msra.mxu0 0.0
    %3073 = vmatprep.subr.mxu0 0.0
    %3074 = vmatpush1.xpose.msra.mxu0 0.0
    %3075 = vmatprep.subr.mxu0 0.0
    %3076 = vmatpush1.xpose.msra.mxu0 0.0
    %3077 = vmatprep.subr.mxu0 0.0
    %3078 = vmatpush1.xpose.msra.mxu0 0.0
    %3079 = vmatprep.subr.mxu0 0.0
    %3080 = vmatpush1.xpose.msra.mxu0 0.0
    %3081 = vmatprep.subr.mxu0 0.0
    %3082 = vmatpush1.xpose.msra.mxu0 0.0
    %3083 = vmatprep.subr.mxu0 0.0
    %3084 = vmatpush1.xpose.msra.mxu0 0.0
    %3085 = vmatprep.subr.mxu0 0.0
    %3086 = vmatpush1.xpose.msra.mxu0 0.0
    %3087 = vmatprep.subr.mxu0 0.0
    %3088 = vmatpush1.xpose.msra.mxu0 0.0
    %3089 = vmatprep.subr.mxu0 0.0
    %3090 = vmatpush1.xpose.msra.mxu0 0.0
    %3091 = vmatprep.subr.mxu0 0.0
    %3092 = vmatpush1.xpose.msra.mxu0 0.0
    %3093 = vmatprep.subr.mxu0 0.0
    %3094 = vmatpush1.xpose.msra.mxu0 0.0
    %3095 = vmatprep.subr.mxu0 0.0
    %3096 = vmatpush1.xpose.msra.mxu0 0.0
    %3097 = vmatprep.subr.mxu0 0.0
    %3098 = vmatpush1.xpose.msra.mxu0 0.0
    %3099 = vmatprep.subr.mxu0 0.0
    %3100 = vmatpush1.xpose.msra.mxu0 0.0
    %3101 = vmatprep.mubr.f32.mxu0 0.0
    %3102 = vmatmul.mubr.f32.gmra.mrb[0].mxu0 %v3026
    %v3103 = vpop.f32.mrb[0].mxu0
    %v3104 = vadd.f32 0.0, %v3103
    %v3105 = vpop.f32.mrb[0].mxu0
    %3106 = vmatprep.mubr.f32.mxu0 0.0
    %3107 = vmatmul.mubr.f32.gmra.mrb[0].mxu0 %v3029
    %v3108 = vpop.f32.mrb[0].mxu0
    %v3109 = vadd.f32 0.0, %v3108
    %v3110 = vpop.f32.mrb[0].mxu0
    %3111 = vdwg.mxu0
    %v3113 = vsel %vm591, %v2930, 0
    %v3116 = vsel %vm591, %v2936, 0
    %v3119 = vsel %vm591, %v2932, 0
    %v3122 = vsel %vm591, %v2938, 0
    %3124 = vmatprep.subr.mxu0 0.0
    %3125 = vmatpush1.xpose.msra.mxu0 %v3119
    %3126 = vmatprep.subr.mxu0 0.0
    %3127 = vmatpush1.xpose.msra.mxu0 %v3122
    %3128 = vmatprep.subr.mxu0 0.0
    %3129 = vmatpush1.xpose.msra.mxu0 0.0
    %3130 = vmatprep.subr.mxu0 0.0
    %3131 = vmatpush1.xpose.msra.mxu0 0.0
    %3132 = vmatprep.subr.mxu0 0.0
    %3133 = vmatpush1.xpose.msra.mxu0 0.0
    %3134 = vmatprep.subr.mxu0 0.0
    %3135 = vmatpush1.xpose.msra.mxu0 0.0
    %3136 = vmatprep.subr.mxu0 0.0
    %3137 = vmatpush1.xpose.msra.mxu0 0.0
    %3138 = vmatprep.subr.mxu0 0.0
    %3139 = vmatpush1.xpose.msra.mxu0 0.0
    %3140 = vmatprep.subr.mxu0 0.0
    %3141 = vmatpush1.xpose.msra.mxu0 0.0
    %3142 = vmatprep.subr.mxu0 0.0
    %3143 = vmatpush1.xpose.msra.mxu0 0.0
    %3144 = vmatprep.subr.mxu0 0.0
    %3145 = vmatpush1.xpose.msra.mxu0 0.0
    %3146 = vmatprep.subr.mxu0 0.0
    %3147 = vmatpush1.xpose.msra.mxu0 0.0
    %3148 = vmatprep.subr.mxu0 0.0
    %3149 = vmatpush1.xpose.msra.mxu0 0.0
    %3150 = vmatprep.subr.mxu0 0.0
    %3151 = vmatpush1.xpose.msra.mxu0 0.0
    %3152 = vmatprep.subr.mxu0 0.0
    %3153 = vmatpush1.xpose.msra.mxu0 0.0
    %3154 = vmatprep.subr.mxu0 0.0
    %3155 = vmatpush1.xpose.msra.mxu0 0.0
    %3156 = vmatprep.subr.mxu0 0.0
    %3157 = vmatpush1.xpose.msra.mxu0 0.0
    %3158 = vmatprep.subr.mxu0 0.0
    %3159 = vmatpush1.xpose.msra.mxu0 0.0
    %3160 = vmatprep.subr.mxu0 0.0
    %3161 = vmatpush1.xpose.msra.mxu0 0.0
    %3162 = vmatprep.subr.mxu0 0.0
    %3163 = vmatpush1.xpose.msra.mxu0 0.0
    %3164 = vmatprep.subr.mxu0 0.0
    %3165 = vmatpush1.xpose.msra.mxu0 0.0
    %3166 = vmatprep.subr.mxu0 0.0
    %3167 = vmatpush1.xpose.msra.mxu0 0.0
    %3168 = vmatprep.subr.mxu0 0.0
    %3169 = vmatpush1.xpose.msra.mxu0 0.0
    %3170 = vmatprep.subr.mxu0 0.0
    %3171 = vmatpush1.xpose.msra.mxu0 0.0
    %3172 = vmatprep.subr.mxu0 0.0
    %3173 = vmatpush1.xpose.msra.mxu0 0.0
    %3174 = vmatprep.subr.mxu0 0.0
    %3175 = vmatpush1.xpose.msra.mxu0 0.0
    %3176 = vmatprep.subr.mxu0 0.0
    %3177 = vmatpush1.xpose.msra.mxu0 0.0
    %3178 = vmatprep.subr.mxu0 0.0
    %3179 = vmatpush1.xpose.msra.mxu0 0.0
    %3180 = vmatprep.subr.mxu0 0.0
    %3181 = vmatpush1.xpose.msra.mxu0 0.0
    %3182 = vmatprep.subr.mxu0 0.0
    %3183 = vmatpush1.xpose.msra.mxu0 0.0
    %3184 = vmatprep.subr.mxu0 0.0
    %3185 = vmatpush1.xpose.msra.mxu0 0.0
    %3186 = vmatprep.subr.mxu0 0.0
    %3187 = vmatpush1.xpose.msra.mxu0 0.0
    %3188 = vmatprep.mubr.f32.mxu0 0.0
    %3189 = vmatmul.mubr.f32.gmra.mrb[0].mxu0 %v3113
    %v3190 = vpop.f32.mrb[0].mxu0
    %v3191 = vadd.f32 0.0, %v3190
    %v3192 = vpop.f32.mrb[0].mxu0
    %3193 = vmatprep.mubr.f32.mxu0 0.0
    %3194 = vmatmul.mubr.f32.gmra.mrb[0].mxu0 %v3116
    %v3195 = vpop.f32.mrb[0].mxu0
    %v3196 = vadd.f32 0.0, %v3195
    %v3197 = vpop.f32.mrb[0].mxu0
    %3198 = vdwg.mxu0
    %v3199 = vmul.f32 %v3104, 0.17677669
    %v3200 = vmul.f32 %v3109, 0.17677669
    %v3201 = vmul.f32 %v3191, 0.17677669
    %v3202 = vmul.f32 %v3196, 0.17677669
    %v3203 = vadd.f32 %v3199, %v350
    %v3204 = vadd.f32 %v3200, %v351
    %v3205 = vadd.f32 %v3201, %v350
    %v3206 = vadd.f32 %v3202, %v351
    %v3207 = vsel %vm774, %v3203, -inf
    %3208 = vmax.xlane.f32.xlu0 %v3207
    %v3209 = vpop.xlane.xlu0 %3208
    %v3210 = vsel %vm774, %v3204, -inf
    %3211 = vmax.xlane.f32.xlu0 %v3210
    %v3212 = vpop.xlane.xlu0 %3211
    %v3213 = vsel %vm774, %v3205, -inf
    %3214 = vmax.xlane.f32.xlu0 %v3213
    %v3215 = vpop.xlane.xlu0 %3214
    %v3216 = vsel %vm774, %v3206, -inf
    %3217 = vmax.xlane.f32.xlu0 %v3216
    %v3218 = vpop.xlane.xlu0 %3217
    %v3219 = vsub.f32 %v3203, %v3209
    %v3220 = vsub.f32 %v3204, %v3212
    %v3221 = vsub.f32 %v3205, %v3215
    %v3222 = vsub.f32 %v3206, %v3218
    %v3223 = vmul.f32 %v3219, 1.442695
    %v3224 = vpow.pop %v3223
    %v3225 = vmul.f32 %v3220, 1.442695
    %v3226 = vpow.pop %v3225
    %v3227 = vmul.f32 %v3221, 1.442695
    %v3228 = vpow.pop %v3227
    %v3229 = vmul.f32 %v3222, 1.442695
    %v3230 = vpow.pop %v3229
    %v3231 = vsel %vm774, %v3224, 0.0
    %3232 = vadd.xlane.f32.xlu0 %v3231
    %v3233 = vpop.xlane.xlu0 %3232
    %v3234 = vsel %vm774, %v3226, 0.0
    %3235 = vadd.xlane.f32.xlu0 %v3234
    %v3236 = vpop.xlane.xlu0 %3235
    %v3237 = vsel %vm774, %v3228, 0.0
    %3238 = vadd.xlane.f32.xlu0 %v3237
    %v3239 = vpop.xlane.xlu0 %3238
    %v3240 = vsel %vm774, %v3230, 0.0
    %3241 = vadd.xlane.f32.xlu0 %v3240
    %v3242 = vpop.xlane.xlu0 %3241
    %v3243 = vrcp.pop %v3233
    %v3244 = vmul.f32 %v3224, %v3243
    %v3245 = vrcp.pop %v3236
    %v3246 = vmul.f32 %v3226, %v3245
    %v3247 = vrcp.pop %v3239
    %v3248 = vmul.f32 %v3228, %v3247
    %v3249 = vrcp.pop %v3242
    %v3250 = vmul.f32 %v3230, %v3249
    %v3252 = vsel %vm774, %v3244, 0
    %v3255 = vsel %vm774, %v3246, 0
    %3257 = vmatprep.subr.mxu0 0.0
    %3258 = vmatpush1.msra.mxu0 %v3007
    %3259 = vmatprep.subr.mxu0 0.0
    %3260 = vmatpush1.msra.mxu0 %v3012
    %3261 = vmatprep.subr.mxu0 0.0
    %3262 = vmatpush1.msra.mxu0 0.0
    %3263 = vmatprep.subr.mxu0 0.0
    %3264 = vmatpush1.msra.mxu0 0.0
    %3265 = vmatprep.subr.mxu0 0.0
    %3266 = vmatpush1.msra.mxu0 0.0
    %3267 = vmatprep.subr.mxu0 0.0
    %3268 = vmatpush1.msra.mxu0 0.0
    %3269 = vmatprep.subr.mxu0 0.0
    %3270 = vmatpush1.msra.mxu0 0.0
    %3271 = vmatprep.subr.mxu0 0.0
    %3272 = vmatpush1.msra.mxu0 0.0
    %3273 = vmatprep.subr.mxu0 0.0
    %3274 = vmatpush1.msra.mxu0 0.0
    %3275 = vmatprep.subr.mxu0 0.0
    %3276 = vmatpush1.msra.mxu0 0.0
    %3277 = vmatprep.subr.mxu0 0.0
    %3278 = vmatpush1.msra.mxu0 0.0
    %3279 = vmatprep.subr.mxu0 0.0
    %3280 = vmatpush1.msra.mxu0 0.0
    %3281 = vmatprep.subr.mxu0 0.0
    %3282 = vmatpush1.msra.mxu0 0.0
    %3283 = vmatprep.subr.mxu0 0.0
    %3284 = vmatpush1.msra.mxu0 0.0
    %3285 = vmatprep.subr.mxu0 0.0
    %3286 = vmatpush1.msra.mxu0 0.0
    %3287 = vmatprep.subr.mxu0 0.0
    %3288 = vmatpush1.msra.mxu0 0.0
    %3289 = vmatprep.subr.mxu0 0.0
    %3290 = vmatpush1.msra.mxu0 0.0
    %3291 = vmatprep.subr.mxu0 0.0
    %3292 = vmatpush1.msra.mxu0 0.0
    %3293 = vmatprep.subr.mxu0 0.0
    %3294 = vmatpush1.msra.mxu0 0.0
    %3295 = vmatprep.subr.mxu0 0.0
    %3296 = vmatpush1.msra.mxu0 0.0
    %3297 = vmatprep.subr.mxu0 0.0
    %3298 = vmatpush1.msra.mxu0 0.0
    %3299 = vmatprep.subr.mxu0 0.0
    %3300 = vmatpush1.msra.mxu0 0.0
    %3301 = vmatprep.subr.mxu0 0.0
    %3302 = vmatpush1.msra.mxu0 0.0
    %3303 = vmatprep.subr.mxu0 0.0
    %3304 = vmatpush1.msra.mxu0 0.0
    %3305 = vmatprep.subr.mxu0 0.0
    %3306 = vmatpush1.msra.mxu0 0.0
    %3307 = vmatprep.subr.mxu0 0.0
    %3308 = vmatpush1.msra.mxu0 0.0
    %3309 = vmatprep.subr.mxu0 0.0
    %3310 = vmatpush1.msra.mxu0 0.0
    %3311 = vmatprep.subr.mxu0 0.0
    %3312 = vmatpush1.msra.mxu0 0.0
    %3313 = vmatprep.subr.mxu0 0.0
    %3314 = vmatpush1.msra.mxu0 0.0
    %3315 = vmatprep.subr.mxu0 0.0
    %3316 = vmatpush1.msra.mxu0 0.0
    %3317 = vmatprep.subr.mxu0 0.0
    %3318 = vmatpush1.msra.mxu0 0.0
    %3319 = vmatprep.subr.mxu0 0.0
    %3320 = vmatpush1.msra.mxu0 0.0
    %3321 = vmatprep.mubr.f32.mxu0 0.0
    %3322 = vmatmul.mubr.f32.gmra.mrb[0].mxu0 %v3252
    %v3323 = vpop.f32.mrb[0].mxu0
    %v3324 = vadd.f32 0.0, %v3323
    %v3325 = vpop.f32.mrb[0].mxu0
    %3326 = vmatprep.mubr.f32.mxu0 0.0
    %3327 = vmatmul.mubr.f32.gmra.mrb[0].mxu0 %v3255
    %v3328 = vpop.f32.mrb[0].mxu0
    %v3329 = vadd.f32 0.0, %v3328
    %v3330 = vpop.f32.mrb[0].mxu0
    %3331 = vdwg.mxu0
    %v3333 = vsel %vm774, %v3248, 0
    %v3336 = vsel %vm774, %v3250, 0
    %3338 = vmatprep.subr.mxu0 0.0
    %3339 = vmatpush1.msra.mxu0 %v3017
    %3340 = vmatprep.subr.mxu0 0.0
    %3341 = vmatpush1.msra.mxu0 %v3022
    %3342 = vmatprep.subr.mxu0 0.0
    %3343 = vmatpush1.msra.mxu0 0.0
    %3344 = vmatprep.subr.mxu0 0.0
    %3345 = vmatpush1.msra.mxu0 0.0
    %3346 = vmatprep.subr.mxu0 0.0
    %3347 = vmatpush1.msra.mxu0 0.0
    %3348 = vmatprep.subr.mxu0 0.0
    %3349 = vmatpush1.msra.mxu0 0.0
    %3350 = vmatprep.subr.mxu0 0.0
    %3351 = vmatpush1.msra.mxu0 0.0
    %3352 = vmatprep.subr.mxu0 0.0
    %3353 = vmatpush1.msra.mxu0 0.0
    %3354 = vmatprep.subr.mxu0 0.0
    %3355 = vmatpush1.msra.mxu0 0.0
    %3356 = vmatprep.subr.mxu0 0.0
    %3357 = vmatpush1.msra.mxu0 0.0
    %3358 = vmatprep.subr.mxu0 0.0
    %3359 = vmatpush1.msra.mxu0 0.0
    %3360 = vmatprep.subr.mxu0 0.0
    %3361 = vmatpush1.msra.mxu0 0.0
    %3362 = vmatprep.subr.mxu0 0.0
    %3363 = vmatpush1.msra.mxu0 0.0
    %3364 = vmatprep.subr.mxu0 0.0
    %3365 = vmatpush1.msra.mxu0 0.0
    %3366 = vmatprep.subr.mxu0 0.0
    %3367 = vmatpush1.msra.mxu0 0.0
    %3368 = vmatprep.subr.mxu0 0.0
    %3369 = vmatpush1.msra.mxu0 0.0
    %3370 = vmatprep.subr.mxu0 0.0
    %3371 = vmatpush1.msra.mxu0 0.0
    %3372 = vmatprep.subr.mxu0 0.0
    %3373 = vmatpush1.msra.mxu0 0.0
    %3374 = vmatprep.subr.mxu0 0.0
    %3375 = vmatpush1.msra.mxu0 0.0
    %3376 = vmatprep.subr.mxu0 0.0
    %3377 = vmatpush1.msra.mxu0 0.0
    %3378 = vmatprep.subr.mxu0 0.0
    %3379 = vmatpush1.msra.mxu0 0.0
    %3380 = vmatprep.subr.mxu0 0.0
    %3381 = vmatpush1.msra.mxu0 0.0
    %3382 = vmatprep.subr.mxu0 0.0
    %3383 = vmatpush1.msra.mxu0 0.0
    %3384 = vmatprep.subr.mxu0 0.0
    %3385 = vmatpush1.msra.mxu0 0.0
    %3386 = vmatprep.subr.mxu0 0.0
    %3387 = vmatpush1.msra.mxu0 0.0
    %3388 = vmatprep.subr.mxu0 0.0
    %3389 = vmatpush1.msra.mxu0 0.0
    %3390 = vmatprep.subr.mxu0 0.0
    %3391 = vmatpush1.msra.mxu0 0.0
    %3392 = vmatprep.subr.mxu0 0.0
    %3393 = vmatpush1.msra.mxu0 0.0
    %3394 = vmatprep.subr.mxu0 0.0
    %3395 = vmatpush1.msra.mxu0 0.0
    %3396 = vmatprep.subr.mxu0 0.0
    %3397 = vmatpush1.msra.mxu0 0.0
    %3398 = vmatprep.subr.mxu0 0.0
    %3399 = vmatpush1.msra.mxu0 0.0
    %3400 = vmatprep.subr.mxu0 0.0
    %3401 = vmatpush1.msra.mxu0 0.0
    %3402 = vmatprep.mubr.f32.mxu0 0.0
    %3403 = vmatmul.mubr.f32.gmra.mrb[0].mxu0 %v3333
    %v3404 = vpop.f32.mrb[0].mxu0
    %v3405 = vadd.f32 0.0, %v3404
    %v3406 = vpop.f32.mrb[0].mxu0
    %3407 = vmatprep.mubr.f32.mxu0 0.0
    %3408 = vmatmul.mubr.f32.gmra.mrb[0].mxu0 %v3336
    %v3409 = vpop.f32.mrb[0].mxu0
    %v3410 = vadd.f32 0.0, %v3409
    %v3411 = vpop.f32.mrb[0].mxu0
    %3412 = vdwg.mxu0
    %3413 = vrot.lane.b32.xlu0 %v2918, 96
    %v3414 = vpop.permute.xlu0 %3413
    %3415 = vrot.lane.b32.xlu0 %v2924, 96
    %v3416 = vpop.permute.xlu0 %3415
    %3417 = vrot.lane.b32.xlu0 %v2920, 96
    %v3418 = vpop.permute.xlu0 %3417
    %3419 = vrot.lane.b32.xlu0 %v2926, 96
    %v3420 = vpop.permute.xlu0 %3419
    %v3421 = vsel %vm591, %v3414, 0
    %v3423 = vsel %vm591, %v3416, 0
    %v3425 = vsel %vm591, %v3418, 0
    %v3427 = vsel %vm591, %v3420, 0
    %3429 = vmatprep.subr.mxu0 0.0
    %3430 = vmatpush1.xpose.msra.mxu0 %v3425
    %3431 = vmatprep.subr.mxu0 0.0
    %3432 = vmatpush1.xpose.msra.mxu0 %v3427
    %3433 = vmatprep.subr.mxu0 0.0
    %3434 = vmatpush1.xpose.msra.mxu0 0.0
    %3435 = vmatprep.subr.mxu0 0.0
    %3436 = vmatpush1.xpose.msra.mxu0 0.0
    %3437 = vmatprep.subr.mxu0 0.0
    %3438 = vmatpush1.xpose.msra.mxu0 0.0
    %3439 = vmatprep.subr.mxu0 0.0
    %3440 = vmatpush1.xpose.msra.mxu0 0.0
    %3441 = vmatprep.subr.mxu0 0.0
    %3442 = vmatpush1.xpose.msra.mxu0 0.0
    %3443 = vmatprep.subr.mxu0 0.0
    %3444 = vmatpush1.xpose.msra.mxu0 0.0
    %3445 = vmatprep.subr.mxu0 0.0
    %3446 = vmatpush1.xpose.msra.mxu0 0.0
    %3447 = vmatprep.subr.mxu0 0.0
    %3448 = vmatpush1.xpose.msra.mxu0 0.0
    %3449 = vmatprep.subr.mxu0 0.0
    %3450 = vmatpush1.xpose.msra.mxu0 0.0
    %3451 = vmatprep.subr.mxu0 0.0
    %3452 = vmatpush1.xpose.msra.mxu0 0.0
    %3453 = vmatprep.subr.mxu0 0.0
    %3454 = vmatpush1.xpose.msra.mxu0 0.0
    %3455 = vmatprep.subr.mxu0 0.0
    %3456 = vmatpush1.xpose.msra.mxu0 0.0
    %3457 = vmatprep.subr.mxu0 0.0
    %3458 = vmatpush1.xpose.msra.mxu0 0.0
    %3459 = vmatprep.subr.mxu0 0.0
    %3460 = vmatpush1.xpose.msra.mxu0 0.0
    %3461 = vmatprep.subr.mxu0 0.0
    %3462 = vmatpush1.xpose.msra.mxu0 0.0
    %3463 = vmatprep.subr.mxu0 0.0
    %3464 = vmatpush1.xpose.msra.mxu0 0.0
    %3465 = vmatprep.subr.mxu0 0.0
    %3466 = vmatpush1.xpose.msra.mxu0 0.0
    %3467 = vmatprep.subr.mxu0 0.0
    %3468 = vmatpush1.xpose.msra.mxu0 0.0
    %3469 = vmatprep.subr.mxu0 0.0
    %3470 = vmatpush1.xpose.msra.mxu0 0.0
    %3471 = vmatprep.subr.mxu0 0.0
    %3472 = vmatpush1.xpose.msra.mxu0 0.0
    %3473 = vmatprep.subr.mxu0 0.0
    %3474 = vmatpush1.xpose.msra.mxu0 0.0
    %3475 = vmatprep.subr.mxu0 0.0
    %3476 = vmatpush1.xpose.msra.mxu0 0.0
    %3477 = vmatprep.subr.mxu0 0.0
    %3478 = vmatpush1.xpose.msra.mxu0 0.0
    %3479 = vmatprep.subr.mxu0 0.0
    %3480 = vmatpush1.xpose.msra.mxu0 0.0
    %3481 = vmatprep.subr.mxu0 0.0
    %3482 = vmatpush1.xpose.msra.mxu0 0.0
    %3483 = vmatprep.subr.mxu0 0.0
    %3484 = vmatpush1.xpose.msra.mxu0 0.0
    %3485 = vmatprep.subr.mxu0 0.0
    %3486 = vmatpush1.xpose.msra.mxu0 0.0
    %3487 = vmatprep.subr.mxu0 0.0
    %3488 = vmatpush1.xpose.msra.mxu0 0.0
    %3489 = vmatprep.subr.mxu0 0.0
    %3490 = vmatpush1.xpose.msra.mxu0 0.0
    %3491 = vmatprep.subr.mxu0 0.0
    %3492 = vmatpush1.xpose.msra.mxu0 0.0
    %3493 = vmatprep.mubr.f32.mxu0 0.0
    %3494 = vmatmul.mubr.f32.gmra.mrb[0].mxu0 %v3421
    %v3495 = vpop.f32.mrb[0].mxu0
    %v3496 = vadd.f32 0.0, %v3495
    %v3497 = vpop.f32.mrb[0].mxu0
    %3498 = vmatprep.mubr.f32.mxu0 0.0
    %3499 = vmatmul.mubr.f32.gmra.mrb[0].mxu0 %v3423
    %v3500 = vpop.f32.mrb[0].mxu0
    %v3501 = vadd.f32 0.0, %v3500
    %v3502 = vpop.f32.mrb[0].mxu0
    %3503 = vdwg.mxu0
    %3504 = vrot.lane.b32.xlu0 %v2930, 96
    %v3505 = vpop.permute.xlu0 %3504
    %3506 = vrot.lane.b32.xlu0 %v2936, 96
    %v3507 = vpop.permute.xlu0 %3506
    %3508 = vrot.lane.b32.xlu0 %v2932, 96
    %v3509 = vpop.permute.xlu0 %3508
    %3510 = vrot.lane.b32.xlu0 %v2938, 96
    %v3511 = vpop.permute.xlu0 %3510
    %v3512 = vsel %vm591, %v3505, 0
    %v3514 = vsel %vm591, %v3507, 0
    %v3516 = vsel %vm591, %v3509, 0
    %v3518 = vsel %vm591, %v3511, 0
    %3520 = vmatprep.subr.mxu0 0.0
    %3521 = vmatpush1.xpose.msra.mxu0 %v3516
    %3522 = vmatprep.subr.mxu0 0.0
    %3523 = vmatpush1.xpose.msra.mxu0 %v3518
    %3524 = vmatprep.subr.mxu0 0.0
    %3525 = vmatpush1.xpose.msra.mxu0 0.0
    %3526 = vmatprep.subr.mxu0 0.0
    %3527 = vmatpush1.xpose.msra.mxu0 0.0
    %3528 = vmatprep.subr.mxu0 0.0
    %3529 = vmatpush1.xpose.msra.mxu0 0.0
    %3530 = vmatprep.subr.mxu0 0.0
    %3531 = vmatpush1.xpose.msra.mxu0 0.0
    %3532 = vmatprep.subr.mxu0 0.0
    %3533 = vmatpush1.xpose.msra.mxu0 0.0
    %3534 = vmatprep.subr.mxu0 0.0
    %3535 = vmatpush1.xpose.msra.mxu0 0.0
    %3536 = vmatprep.subr.mxu0 0.0
    %3537 = vmatpush1.xpose.msra.mxu0 0.0
    %3538 = vmatprep.subr.mxu0 0.0
    %3539 = vmatpush1.xpose.msra.mxu0 0.0
    %3540 = vmatprep.subr.mxu0 0.0
    %3541 = vmatpush1.xpose.msra.mxu0 0.0
    %3542 = vmatprep.subr.mxu0 0.0
    %3543 = vmatpush1.xpose.msra.mxu0 0.0
    %3544 = vmatprep.subr.mxu0 0.0
    %3545 = vmatpush1.xpose.msra.mxu0 0.0
    %3546 = vmatprep.subr.mxu0 0.0
    %3547 = vmatpush1.xpose.msra.mxu0 0.0
    %3548 = vmatprep.subr.mxu0 0.0
    %3549 = vmatpush1.xpose.msra.mxu0 0.0
    %3550 = vmatprep.subr.mxu0 0.0
    %3551 = vmatpush1.xpose.msra.mxu0 0.0
    %3552 = vmatprep.subr.mxu0 0.0
    %3553 = vmatpush1.xpose.msra.mxu0 0.0
    %3554 = vmatprep.subr.mxu0 0.0
    %3555 = vmatpush1.xpose.msra.mxu0 0.0
    %3556 = vmatprep.subr.mxu0 0.0
    %3557 = vmatpush1.xpose.msra.mxu0 0.0
    %3558 = vmatprep.subr.mxu0 0.0
    %3559 = vmatpush1.xpose.msra.mxu0 0.0
    %3560 = vmatprep.subr.mxu0 0.0
    %3561 = vmatpush1.xpose.msra.mxu0 0.0
    %3562 = vmatprep.subr.mxu0 0.0
    %3563 = vmatpush1.xpose.msra.mxu0 0.0
    %3564 = vmatprep.subr.mxu0 0.0
    %3565 = vmatpush1.xpose.msra.mxu0 0.0
    %3566 = vmatprep.subr.mxu0 0.0
    %3567 = vmatpush1.xpose.msra.mxu0 0.0
    %3568 = vmatprep.subr.mxu0 0.0
    %3569 = vmatpush1.xpose.msra.mxu0 0.0
    %3570 = vmatprep.subr.mxu0 0.0
    %3571 = vmatpush1.xpose.msra.mxu0 0.0
    %3572 = vmatprep.subr.mxu0 0.0
    %3573 = vmatpush1.xpose.msra.mxu0 0.0
    %3574 = vmatprep.subr.mxu0 0.0
    %3575 = vmatpush1.xpose.msra.mxu0 0.0
    %3576 = vmatprep.subr.mxu0 0.0
    %3577 = vmatpush1.xpose.msra.mxu0 0.0
    %3578 = vmatprep.subr.mxu0 0.0
    %3579 = vmatpush1.xpose.msra.mxu0 0.0
    %3580 = vmatprep.subr.mxu0 0.0
    %3581 = vmatpush1.xpose.msra.mxu0 0.0
    %3582 = vmatprep.subr.mxu0 0.0
    %3583 = vmatpush1.xpose.msra.mxu0 0.0
    %3584 = vmatprep.mubr.f32.mxu0 0.0
    %3585 = vmatmul.mubr.f32.gmra.mrb[0].mxu0 %v3512
    %v3586 = vpop.f32.mrb[0].mxu0
    %v3587 = vadd.f32 0.0, %v3586
    %v3588 = vpop.f32.mrb[0].mxu0
    %3589 = vmatprep.mubr.f32.mxu0 0.0
    %3590 = vmatmul.mubr.f32.gmra.mrb[0].mxu0 %v3514
    %v3591 = vpop.f32.mrb[0].mxu0
    %v3592 = vadd.f32 0.0, %v3591
    %v3593 = vpop.f32.mrb[0].mxu0
    %3594 = vdwg.mxu0
    %v3595 = vmul.f32 %v3496, 0.17677669
    %v3596 = vmul.f32 %v3501, 0.17677669
    %v3597 = vmul.f32 %v3587, 0.17677669
    %v3598 = vmul.f32 %v3592, 0.17677669
    %v3599 = vadd.f32 %v3595, %v350
    %v3600 = vadd.f32 %v3596, %v351
    %v3601 = vadd.f32 %v3597, %v350
    %v3602 = vadd.f32 %v3598, %v351
    %v3603 = vsel %vm774, %v3599, -inf
    %3604 = vmax.xlane.f32.xlu0 %v3603
    %v3605 = vpop.xlane.xlu0 %3604
    %v3606 = vsel %vm774, %v3600, -inf
    %3607 = vmax.xlane.f32.xlu0 %v3606
    %v3608 = vpop.xlane.xlu0 %3607
    %v3609 = vsel %vm774, %v3601, -inf
    %3610 = vmax.xlane.f32.xlu0 %v3609
    %v3611 = vpop.xlane.xlu0 %3610
    %v3612 = vsel %vm774, %v3602, -inf
    %3613 = vmax.xlane.f32.xlu0 %v3612
    %v3614 = vpop.xlane.xlu0 %3613
    %v3615 = vsub.f32 %v3599, %v3605
    %v3616 = vsub.f32 %v3600, %v3608
    %v3617 = vsub.f32 %v3601, %v3611
    %v3618 = vsub.f32 %v3602, %v3614
    %v3619 = vmul.f32 %v3615, 1.442695
    %v3620 = vpow.pop %v3619
    %v3621 = vmul.f32 %v3616, 1.442695
    %v3622 = vpow.pop %v3621
    %v3623 = vmul.f32 %v3617, 1.442695
    %v3624 = vpow.pop %v3623
    %v3625 = vmul.f32 %v3618, 1.442695
    %v3626 = vpow.pop %v3625
    %v3627 = vsel %vm774, %v3620, 0.0
    %3628 = vadd.xlane.f32.xlu0 %v3627
    %v3629 = vpop.xlane.xlu0 %3628
    %v3630 = vsel %vm774, %v3622, 0.0
    %3631 = vadd.xlane.f32.xlu0 %v3630
    %v3632 = vpop.xlane.xlu0 %3631
    %v3633 = vsel %vm774, %v3624, 0.0
    %3634 = vadd.xlane.f32.xlu0 %v3633
    %v3635 = vpop.xlane.xlu0 %3634
    %v3636 = vsel %vm774, %v3626, 0.0
    %3637 = vadd.xlane.f32.xlu0 %v3636
    %v3638 = vpop.xlane.xlu0 %3637
    %v3639 = vrcp.pop %v3629
    %v3640 = vmul.f32 %v3620, %v3639
    %v3641 = vrcp.pop %v3632
    %v3642 = vmul.f32 %v3622, %v3641
    %v3643 = vrcp.pop %v3635
    %v3644 = vmul.f32 %v3624, %v3643
    %v3645 = vrcp.pop %v3638
    %v3646 = vmul.f32 %v3626, %v3645
    %3649 = vrot.lane.b32.xlu0 %v3007, 96
    %v3650 = vpop.permute.xlu0 %3649
    %3651 = vrot.lane.b32.xlu0 %v3012, 96
    %v3652 = vpop.permute.xlu0 %3651
    %v3656 = vsel %vm774, %v3640, 0
    %v3659 = vsel %vm774, %v3642, 0
    %3661 = vmatprep.subr.mxu0 0.0
    %3662 = vmatpush1.msra.mxu0 %v3650
    %3663 = vmatprep.subr.mxu0 0.0
    %3664 = vmatpush1.msra.mxu0 %v3652
    %3665 = vmatprep.subr.mxu0 0.0
    %3666 = vmatpush1.msra.mxu0 0.0
    %3667 = vmatprep.subr.mxu0 0.0
    %3668 = vmatpush1.msra.mxu0 0.0
    %3669 = vmatprep.subr.mxu0 0.0
    %3670 = vmatpush1.msra.mxu0 0.0
    %3671 = vmatprep.subr.mxu0 0.0
    %3672 = vmatpush1.msra.mxu0 0.0
    %3673 = vmatprep.subr.mxu0 0.0
    %3674 = vmatpush1.msra.mxu0 0.0
    %3675 = vmatprep.subr.mxu0 0.0
    %3676 = vmatpush1.msra.mxu0 0.0
    %3677 = vmatprep.subr.mxu0 0.0
    %3678 = vmatpush1.msra.mxu0 0.0
    %3679 = vmatprep.subr.mxu0 0.0
    %3680 = vmatpush1.msra.mxu0 0.0
    %3681 = vmatprep.subr.mxu0 0.0
    %3682 = vmatpush1.msra.mxu0 0.0
    %3683 = vmatprep.subr.mxu0 0.0
    %3684 = vmatpush1.msra.mxu0 0.0
    %3685 = vmatprep.subr.mxu0 0.0
    %3686 = vmatpush1.msra.mxu0 0.0
    %3687 = vmatprep.subr.mxu0 0.0
    %3688 = vmatpush1.msra.mxu0 0.0
    %3689 = vmatprep.subr.mxu0 0.0
    %3690 = vmatpush1.msra.mxu0 0.0
    %3691 = vmatprep.subr.mxu0 0.0
    %3692 = vmatpush1.msra.mxu0 0.0
    %3693 = vmatprep.subr.mxu0 0.0
    %3694 = vmatpush1.msra.mxu0 0.0
    %3695 = vmatprep.subr.mxu0 0.0
    %3696 = vmatpush1.msra.mxu0 0.0
    %3697 = vmatprep.subr.mxu0 0.0
    %3698 = vmatpush1.msra.mxu0 0.0
    %3699 = vmatprep.subr.mxu0 0.0
    %3700 = vmatpush1.msra.mxu0 0.0
    %3701 = vmatprep.subr.mxu0 0.0
    %3702 = vmatpush1.msra.mxu0 0.0
    %3703 = vmatprep.subr.mxu0 0.0
    %3704 = vmatpush1.msra.mxu0 0.0
    %3705 = vmatprep.subr.mxu0 0.0
    %3706 = vmatpush1.msra.mxu0 0.0
    %3707 = vmatprep.subr.mxu0 0.0
    %3708 = vmatpush1.msra.mxu0 0.0
    %3709 = vmatprep.subr.mxu0 0.0
    %3710 = vmatpush1.msra.mxu0 0.0
    %3711 = vmatprep.subr.mxu0 0.0
    %3712 = vmatpush1.msra.mxu0 0.0
    %3713 = vmatprep.subr.mxu0 0.0
    %3714 = vmatpush1.msra.mxu0 0.0
    %3715 = vmatprep.subr.mxu0 0.0
    %3716 = vmatpush1.msra.mxu0 0.0
    %3717 = vmatprep.subr.mxu0 0.0
    %3718 = vmatpush1.msra.mxu0 0.0
    %3719 = vmatprep.subr.mxu0 0.0
    %3720 = vmatpush1.msra.mxu0 0.0
    %3721 = vmatprep.subr.mxu0 0.0
    %3722 = vmatpush1.msra.mxu0 0.0
    %3723 = vmatprep.subr.mxu0 0.0
    %3724 = vmatpush1.msra.mxu0 0.0
    %3725 = vmatprep.mubr.f32.mxu0 0.0
    %3726 = vmatmul.mubr.f32.gmra.mrb[0].mxu0 %v3656
    %v3727 = vpop.f32.mrb[0].mxu0
    %v3728 = vadd.f32 0.0, %v3727
    %v3729 = vpop.f32.mrb[0].mxu0
    %3730 = vmatprep.mubr.f32.mxu0 0.0
    %3731 = vmatmul.mubr.f32.gmra.mrb[0].mxu0 %v3659
    %v3732 = vpop.f32.mrb[0].mxu0
    %v3733 = vadd.f32 0.0, %v3732
    %v3734 = vpop.f32.mrb[0].mxu0
    %3735 = vdwg.mxu0
    %3738 = vrot.lane.b32.xlu0 %v3017, 96
    %v3739 = vpop.permute.xlu0 %3738
    %3740 = vrot.lane.b32.xlu0 %v3022, 96
    %v3741 = vpop.permute.xlu0 %3740
    %v3745 = vsel %vm774, %v3644, 0
    %v3748 = vsel %vm774, %v3646, 0
    %3750 = vmatprep.subr.mxu0 0.0
    %3751 = vmatpush1.msra.mxu0 %v3739
    %3752 = vmatprep.subr.mxu0 0.0
    %3753 = vmatpush1.msra.mxu0 %v3741
    %3754 = vmatprep.subr.mxu0 0.0
    %3755 = vmatpush1.msra.mxu0 0.0
    %3756 = vmatprep.subr.mxu0 0.0
    %3757 = vmatpush1.msra.mxu0 0.0
    %3758 = vmatprep.subr.mxu0 0.0
    %3759 = vmatpush1.msra.mxu0 0.0
    %3760 = vmatprep.subr.mxu0 0.0
    %3761 = vmatpush1.msra.mxu0 0.0
    %3762 = vmatprep.subr.mxu0 0.0
    %3763 = vmatpush1.msra.mxu0 0.0
    %3764 = vmatprep.subr.mxu0 0.0
    %3765 = vmatpush1.msra.mxu0 0.0
    %3766 = vmatprep.subr.mxu0 0.0
    %3767 = vmatpush1.msra.mxu0 0.0
    %3768 = vmatprep.subr.mxu0 0.0
    %3769 = vmatpush1.msra.mxu0 0.0
    %3770 = vmatprep.subr.mxu0 0.0
    %3771 = vmatpush1.msra.mxu0 0.0
    %3772 = vmatprep.subr.mxu0 0.0
    %3773 = vmatpush1.msra.mxu0 0.0
    %3774 = vmatprep.subr.mxu0 0.0
    %3775 = vmatpush1.msra.mxu0 0.0
    %3776 = vmatprep.subr.mxu0 0.0
    %3777 = vmatpush1.msra.mxu0 0.0
    %3778 = vmatprep.subr.mxu0 0.0
    %3779 = vmatpush1.msra.mxu0 0.0
    %3780 = vmatprep.subr.mxu0 0.0
    %3781 = vmatpush1.msra.mxu0 0.0
    %3782 = vmatprep.subr.mxu0 0.0
    %3783 = vmatpush1.msra.mxu0 0.0
    %3784 = vmatprep.subr.mxu0 0.0
    %3785 = vmatpush1.msra.mxu0 0.0
    %3786 = vmatprep.subr.mxu0 0.0
    %3787 = vmatpush1.msra.mxu0 0.0
    %3788 = vmatprep.subr.mxu0 0.0
    %3789 = vmatpush1.msra.mxu0 0.0
    %3790 = vmatprep.subr.mxu0 0.0
    %3791 = vmatpush1.msra.mxu0 0.0
    %3792 = vmatprep.subr.mxu0 0.0
    %3793 = vmatpush1.msra.mxu0 0.0
    %3794 = vmatprep.subr.mxu0 0.0
    %3795 = vmatpush1.msra.mxu0 0.0
    %3796 = vmatprep.subr.mxu0 0.0
    %3797 = vmatpush1.msra.mxu0 0.0
    %3798 = vmatprep.subr.mxu0 0.0
    %3799 = vmatpush1.msra.mxu0 0.0
    %3800 = vmatprep.subr.mxu0 0.0
    %3801 = vmatpush1.msra.mxu0 0.0
    %3802 = vmatprep.subr.mxu0 0.0
    %3803 = vmatpush1.msra.mxu0 0.0
    %3804 = vmatprep.subr.mxu0 0.0
    %3805 = vmatpush1.msra.mxu0 0.0
    %3806 = vmatprep.subr.mxu0 0.0
    %3807 = vmatpush1.msra.mxu0 0.0
    %3808 = vmatprep.subr.mxu0 0.0
    %3809 = vmatpush1.msra.mxu0 0.0
    %3810 = vmatprep.subr.mxu0 0.0
    %3811 = vmatpush1.msra.mxu0 0.0
    %3812 = vmatprep.subr.mxu0 0.0
    %3813 = vmatpush1.msra.mxu0 0.0
    %3814 = vmatprep.mubr.f32.mxu0 0.0
    %3815 = vmatmul.mubr.f32.gmra.mrb[0].mxu0 %v3745
    %v3816 = vpop.f32.mrb[0].mxu0
    %v3817 = vadd.f32 0.0, %v3816
    %v3818 = vpop.f32.mrb[0].mxu0
    %3819 = vmatprep.mubr.f32.mxu0 0.0
    %3820 = vmatmul.mubr.f32.gmra.mrb[0].mxu0 %v3748
    %v3821 = vpop.f32.mrb[0].mxu0
    %v3822 = vadd.f32 0.0, %v3821
    %v3823 = vpop.f32.mrb[0].mxu0
    %3824 = vdwg.mxu0
    %3825 = vrot.lane.b32.xlu0 %v2918, 64
    %v3826 = vpop.permute.xlu0 %3825
    %3827 = vrot.lane.b32.xlu0 %v2924, 64
    %v3828 = vpop.permute.xlu0 %3827
    %3829 = vrot.lane.b32.xlu0 %v2920, 64
    %v3830 = vpop.permute.xlu0 %3829
    %3831 = vrot.lane.b32.xlu0 %v2926, 64
    %v3832 = vpop.permute.xlu0 %3831
    %v3833 = vsel %vm591, %v3826, 0
    %v3835 = vsel %vm591, %v3828, 0
    %v3837 = vsel %vm591, %v3830, 0
    %v3839 = vsel %vm591, %v3832, 0
    %3841 = vmatprep.subr.mxu0 0.0
    %3842 = vmatpush1.xpose.msra.mxu0 %v3837
    %3843 = vmatprep.subr.mxu0 0.0
    %3844 = vmatpush1.xpose.msra.mxu0 %v3839
    %3845 = vmatprep.subr.mxu0 0.0
    %3846 = vmatpush1.xpose.msra.mxu0 0.0
    %3847 = vmatprep.subr.mxu0 0.0
    %3848 = vmatpush1.xpose.msra.mxu0 0.0
    %3849 = vmatprep.subr.mxu0 0.0
    %3850 = vmatpush1.xpose.msra.mxu0 0.0
    %3851 = vmatprep.subr.mxu0 0.0
    %3852 = vmatpush1.xpose.msra.mxu0 0.0
    %3853 = vmatprep.subr.mxu0 0.0
    %3854 = vmatpush1.xpose.msra.mxu0 0.0
    %3855 = vmatprep.subr.mxu0 0.0
    %3856 = vmatpush1.xpose.msra.mxu0 0.0
    %3857 = vmatprep.subr.mxu0 0.0
    %3858 = vmatpush1.xpose.msra.mxu0 0.0
    %3859 = vmatprep.subr.mxu0 0.0
    %3860 = vmatpush1.xpose.msra.mxu0 0.0
    %3861 = vmatprep.subr.mxu0 0.0
    %3862 = vmatpush1.xpose.msra.mxu0 0.0
    %3863 = vmatprep.subr.mxu0 0.0
    %3864 = vmatpush1.xpose.msra.mxu0 0.0
    %3865 = vmatprep.subr.mxu0 0.0
    %3866 = vmatpush1.xpose.msra.mxu0 0.0
    %3867 = vmatprep.subr.mxu0 0.0
    %3868 = vmatpush1.xpose.msra.mxu0 0.0
    %3869 = vmatprep.subr.mxu0 0.0
    %3870 = vmatpush1.xpose.msra.mxu0 0.0
    %3871 = vmatprep.subr.mxu0 0.0
    %3872 = vmatpush1.xpose.msra.mxu0 0.0
    %3873 = vmatprep.subr.mxu0 0.0
    %3874 = vmatpush1.xpose.msra.mxu0 0.0
    %3875 = vmatprep.subr.mxu0 0.0
    %3876 = vmatpush1.xpose.msra.mxu0 0.0
    %3877 = vmatprep.subr.mxu0 0.0
    %3878 = vmatpush1.xpose.msra.mxu0 0.0
    %3879 = vmatprep.subr.mxu0 0.0
    %3880 = vmatpush1.xpose.msra.mxu0 0.0
    %3881 = vmatprep.subr.mxu0 0.0
    %3882 = vmatpush1.xpose.msra.mxu0 0.0
    %3883 = vmatprep.subr.mxu0 0.0
    %3884 = vmatpush1.xpose.msra.mxu0 0.0
    %3885 = vmatprep.subr.mxu0 0.0
    %3886 = vmatpush1.xpose.msra.mxu0 0.0
    %3887 = vmatprep.subr.mxu0 0.0
    %3888 = vmatpush1.xpose.msra.mxu0 0.0
    %3889 = vmatprep.subr.mxu0 0.0
    %3890 = vmatpush1.xpose.msra.mxu0 0.0
    %3891 = vmatprep.subr.mxu0 0.0
    %3892 = vmatpush1.xpose.msra.mxu0 0.0
    %3893 = vmatprep.subr.mxu0 0.0
    %3894 = vmatpush1.xpose.msra.mxu0 0.0
    %3895 = vmatprep.subr.mxu0 0.0
    %3896 = vmatpush1.xpose.msra.mxu0 0.0
    %3897 = vmatprep.subr.mxu0 0.0
    %3898 = vmatpush1.xpose.msra.mxu0 0.0
    %3899 = vmatprep.subr.mxu0 0.0
    %3900 = vmatpush1.xpose.msra.mxu0 0.0
    %3901 = vmatprep.subr.mxu0 0.0
    %3902 = vmatpush1.xpose.msra.mxu0 0.0
    %3903 = vmatprep.subr.mxu0 0.0
    %3904 = vmatpush1.xpose.msra.mxu0 0.0
    %3905 = vmatprep.mubr.f32.mxu0 0.0
    %3906 = vmatmul.mubr.f32.gmra.mrb[0].mxu0 %v3833
    %v3907 = vpop.f32.mrb[0].mxu0
    %v3908 = vadd.f32 0.0, %v3907
    %v3909 = vpop.f32.mrb[0].mxu0
    %3910 = vmatprep.mubr.f32.mxu0 0.0
    %3911 = vmatmul.mubr.f32.gmra.mrb[0].mxu0 %v3835
    %v3912 = vpop.f32.mrb[0].mxu0
    %v3913 = vadd.f32 0.0, %v3912
    %v3914 = vpop.f32.mrb[0].mxu0
    %3915 = vdwg.mxu0
    %3916 = vrot.lane.b32.xlu0 %v2930, 64
    %v3917 = vpop.permute.xlu0 %3916
    %3918 = vrot.lane.b32.xlu0 %v2936, 64
    %v3919 = vpop.permute.xlu0 %3918
    %3920 = vrot.lane.b32.xlu0 %v2932, 64
    %v3921 = vpop.permute.xlu0 %3920
    %3922 = vrot.lane.b32.xlu0 %v2938, 64
    %v3923 = vpop.permute.xlu0 %3922
    %v3924 = vsel %vm591, %v3917, 0
    %v3926 = vsel %vm591, %v3919, 0
    %v3928 = vsel %vm591, %v3921, 0
    %v3930 = vsel %vm591, %v3923, 0
    %3932 = vmatprep.subr.mxu0 0.0
    %3933 = vmatpush1.xpose.msra.mxu0 %v3928
    %3934 = vmatprep.subr.mxu0 0.0
    %3935 = vmatpush1.xpose.msra.mxu0 %v3930
    %3936 = vmatprep.subr.mxu0 0.0
    %3937 = vmatpush1.xpose.msra.mxu0 0.0
    %3938 = vmatprep.subr.mxu0 0.0
    %3939 = vmatpush1.xpose.msra.mxu0 0.0
    %3940 = vmatprep.subr.mxu0 0.0
    %3941 = vmatpush1.xpose.msra.mxu0 0.0
    %3942 = vmatprep.subr.mxu0 0.0
    %3943 = vmatpush1.xpose.msra.mxu0 0.0
    %3944 = vmatprep.subr.mxu0 0.0
    %3945 = vmatpush1.xpose.msra.mxu0 0.0
    %3946 = vmatprep.subr.mxu0 0.0
    %3947 = vmatpush1.xpose.msra.mxu0 0.0
    %3948 = vmatprep.subr.mxu0 0.0
    %3949 = vmatpush1.xpose.msra.mxu0 0.0
    %3950 = vmatprep.subr.mxu0 0.0
    %3951 = vmatpush1.xpose.msra.mxu0 0.0
    %3952 = vmatprep.subr.mxu0 0.0
    %3953 = vmatpush1.xpose.msra.mxu0 0.0
    %3954 = vmatprep.subr.mxu0 0.0
    %3955 = vmatpush1.xpose.msra.mxu0 0.0
    %3956 = vmatprep.subr.mxu0 0.0
    %3957 = vmatpush1.xpose.msra.mxu0 0.0
    %3958 = vmatprep.subr.mxu0 0.0
    %3959 = vmatpush1.xpose.msra.mxu0 0.0
    %3960 = vmatprep.subr.mxu0 0.0
    %3961 = vmatpush1.xpose.msra.mxu0 0.0
    %3962 = vmatprep.subr.mxu0 0.0
    %3963 = vmatpush1.xpose.msra.mxu0 0.0
    %3964 = vmatprep.subr.mxu0 0.0
    %3965 = vmatpush1.xpose.msra.mxu0 0.0
    %3966 = vmatprep.subr.mxu0 0.0
    %3967 = vmatpush1.xpose.msra.mxu0 0.0
    %3968 = vmatprep.subr.mxu0 0.0
    %3969 = vmatpush1.xpose.msra.mxu0 0.0
    %3970 = vmatprep.subr.mxu0 0.0
    %3971 = vmatpush1.xpose.msra.mxu0 0.0
    %3972 = vmatprep.subr.mxu0 0.0
    %3973 = vmatpush1.xpose.msra.mxu0 0.0
    %3974 = vmatprep.subr.mxu0 0.0
    %3975 = vmatpush1.xpose.msra.mxu0 0.0
    %3976 = vmatprep.subr.mxu0 0.0
    %3977 = vmatpush1.xpose.msra.mxu0 0.0
    %3978 = vmatprep.subr.mxu0 0.0
    %3979 = vmatpush1.xpose.msra.mxu0 0.0
    %3980 = vmatprep.subr.mxu0 0.0
    %3981 = vmatpush1.xpose.msra.mxu0 0.0
    %3982 = vmatprep.subr.mxu0 0.0
    %3983 = vmatpush1.xpose.msra.mxu0 0.0
    %3984 = vmatprep.subr.mxu0 0.0
    %3985 = vmatpush1.xpose.msra.mxu0 0.0
    %3986 = vmatprep.subr.mxu0 0.0
    %3987 = vmatpush1.xpose.msra.mxu0 0.0
    %3988 = vmatprep.subr.mxu0 0.0
    %3989 = vmatpush1.xpose.msra.mxu0 0.0
    %3990 = vmatprep.subr.mxu0 0.0
    %3991 = vmatpush1.xpose.msra.mxu0 0.0
    %3992 = vmatprep.subr.mxu0 0.0
    %3993 = vmatpush1.xpose.msra.mxu0 0.0
    %3994 = vmatprep.subr.mxu0 0.0
    %3995 = vmatpush1.xpose.msra.mxu0 0.0
    %3996 = vmatprep.mubr.f32.mxu0 0.0
    %3997 = vmatmul.mubr.f32.gmra.mrb[0].mxu0 %v3924
    %v3998 = vpop.f32.mrb[0].mxu0
    %v3999 = vadd.f32 0.0, %v3998
    %v4000 = vpop.f32.mrb[0].mxu0
    %4001 = vmatprep.mubr.f32.mxu0 0.0
    %4002 = vmatmul.mubr.f32.gmra.mrb[0].mxu0 %v3926
    %v4003 = vpop.f32.mrb[0].mxu0
    %v4004 = vadd.f32 0.0, %v4003
    %v4005 = vpop.f32.mrb[0].mxu0
    %4006 = vdwg.mxu0
    %v4007 = vmul.f32 %v3908, 0.17677669
    %v4008 = vmul.f32 %v3913, 0.17677669
    %v4009 = vmul.f32 %v3999, 0.17677669
    %v4010 = vmul.f32 %v4004, 0.17677669
    %v4011 = vadd.f32 %v4007, %v350
    %v4012 = vadd.f32 %v4008, %v351
    %v4013 = vadd.f32 %v4009, %v350
    %v4014 = vadd.f32 %v4010, %v351
    %v4015 = vsel %vm774, %v4011, -inf
    %4016 = vmax.xlane.f32.xlu0 %v4015
    %v4017 = vpop.xlane.xlu0 %4016
    %v4018 = vsel %vm774, %v4012, -inf
    %4019 = vmax.xlane.f32.xlu0 %v4018
    %v4020 = vpop.xlane.xlu0 %4019
    %v4021 = vsel %vm774, %v4013, -inf
    %4022 = vmax.xlane.f32.xlu0 %v4021
    %v4023 = vpop.xlane.xlu0 %4022
    %v4024 = vsel %vm774, %v4014, -inf
    %4025 = vmax.xlane.f32.xlu0 %v4024
    %v4026 = vpop.xlane.xlu0 %4025
    %v4027 = vsub.f32 %v4011, %v4017
    %v4028 = vsub.f32 %v4012, %v4020
    %v4029 = vsub.f32 %v4013, %v4023
    %v4030 = vsub.f32 %v4014, %v4026
    %v4031 = vmul.f32 %v4027, 1.442695
    %v4032 = vpow.pop %v4031
    %v4033 = vmul.f32 %v4028, 1.442695
    %v4034 = vpow.pop %v4033
    %v4035 = vmul.f32 %v4029, 1.442695
    %v4036 = vpow.pop %v4035
    %v4037 = vmul.f32 %v4030, 1.442695
    %v4038 = vpow.pop %v4037
    %v4039 = vsel %vm774, %v4032, 0.0
    %4040 = vadd.xlane.f32.xlu0 %v4039
    %v4041 = vpop.xlane.xlu0 %4040
    %v4042 = vsel %vm774, %v4034, 0.0
    %4043 = vadd.xlane.f32.xlu0 %v4042
    %v4044 = vpop.xlane.xlu0 %4043
    %v4045 = vsel %vm774, %v4036, 0.0
    %4046 = vadd.xlane.f32.xlu0 %v4045
    %v4047 = vpop.xlane.xlu0 %4046
    %v4048 = vsel %vm774, %v4038, 0.0
    %4049 = vadd.xlane.f32.xlu0 %v4048
    %v4050 = vpop.xlane.xlu0 %4049
    %v4051 = vrcp.pop %v4041
    %v4052 = vmul.f32 %v4032, %v4051
    %v4053 = vrcp.pop %v4044
    %v4054 = vmul.f32 %v4034, %v4053
    %v4055 = vrcp.pop %v4047
    %v4056 = vmul.f32 %v4036, %v4055
    %v4057 = vrcp.pop %v4050
    %v4058 = vmul.f32 %v4038, %v4057
    %4059 = vrot.lane.b32.xlu0 %v3007, 64
    %v4060 = vpop.permute.xlu0 %4059
    %4061 = vrot.lane.b32.xlu0 %v3012, 64
    %v4062 = vpop.permute.xlu0 %4061
    %v4066 = vsel %vm774, %v4052, 0
    %v4069 = vsel %vm774, %v4054, 0
    %4071 = vmatprep.subr.mxu0 0.0
    %4072 = vmatpush1.msra.mxu0 %v4060
    %4073 = vmatprep.subr.mxu0 0.0
    %4074 = vmatpush1.msra.mxu0 %v4062
    %4075 = vmatprep.subr.mxu0 0.0
    %4076 = vmatpush1.msra.mxu0 0.0
    %4077 = vmatprep.subr.mxu0 0.0
    %4078 = vmatpush1.msra.mxu0 0.0
    %4079 = vmatprep.subr.mxu0 0.0
    %4080 = vmatpush1.msra.mxu0 0.0
    %4081 = vmatprep.subr.mxu0 0.0
    %4082 = vmatpush1.msra.mxu0 0.0
    %4083 = vmatprep.subr.mxu0 0.0
    %4084 = vmatpush1.msra.mxu0 0.0
    %4085 = vmatprep.subr.mxu0 0.0
    %4086 = vmatpush1.msra.mxu0 0.0
    %4087 = vmatprep.subr.mxu0 0.0
    %4088 = vmatpush1.msra.mxu0 0.0
    %4089 = vmatprep.subr.mxu0 0.0
    %4090 = vmatpush1.msra.mxu0 0.0
    %4091 = vmatprep.subr.mxu0 0.0
    %4092 = vmatpush1.msra.mxu0 0.0
    %4093 = vmatprep.subr.mxu0 0.0
    %4094 = vmatpush1.msra.mxu0 0.0
    %4095 = vmatprep.subr.mxu0 0.0
    %4096 = vmatpush1.msra.mxu0 0.0
    %4097 = vmatprep.subr.mxu0 0.0
    %4098 = vmatpush1.msra.mxu0 0.0
    %4099 = vmatprep.subr.mxu0 0.0
    %4100 = vmatpush1.msra.mxu0 0.0
    %4101 = vmatprep.subr.mxu0 0.0
    %4102 = vmatpush1.msra.mxu0 0.0
    %4103 = vmatprep.subr.mxu0 0.0
    %4104 = vmatpush1.msra.mxu0 0.0
    %4105 = vmatprep.subr.mxu0 0.0
    %4106 = vmatpush1.msra.mxu0 0.0
    %4107 = vmatprep.subr.mxu0 0.0
    %4108 = vmatpush1.msra.mxu0 0.0
    %4109 = vmatprep.subr.mxu0 0.0
    %4110 = vmatpush1.msra.mxu0 0.0
    %4111 = vmatprep.subr.mxu0 0.0
    %4112 = vmatpush1.msra.mxu0 0.0
    %4113 = vmatprep.subr.mxu0 0.0
    %4114 = vmatpush1.msra.mxu0 0.0
    %4115 = vmatprep.subr.mxu0 0.0
    %4116 = vmatpush1.msra.mxu0 0.0
    %4117 = vmatprep.subr.mxu0 0.0
    %4118 = vmatpush1.msra.mxu0 0.0
    %4119 = vmatprep.subr.mxu0 0.0
    %4120 = vmatpush1.msra.mxu0 0.0
    %4121 = vmatprep.subr.mxu0 0.0
    %4122 = vmatpush1.msra.mxu0 0.0
    %4123 = vmatprep.subr.mxu0 0.0
    %4124 = vmatpush1.msra.mxu0 0.0
    %4125 = vmatprep.subr.mxu0 0.0
    %4126 = vmatpush1.msra.mxu0 0.0
    %4127 = vmatprep.subr.mxu0 0.0
    %4128 = vmatpush1.msra.mxu0 0.0
    %4129 = vmatprep.subr.mxu0 0.0
    %4130 = vmatpush1.msra.mxu0 0.0
    %4131 = vmatprep.subr.mxu0 0.0
    %4132 = vmatpush1.msra.mxu0 0.0
    %4133 = vmatprep.subr.mxu0 0.0
    %4134 = vmatpush1.msra.mxu0 0.0
    %4135 = vmatprep.mubr.f32.mxu0 0.0
    %4136 = vmatmul.mubr.f32.gmra.mrb[0].mxu0 %v4066
    %v4137 = vpop.f32.mrb[0].mxu0
    %v4138 = vadd.f32 0.0, %v4137
    %v4139 = vpop.f32.mrb[0].mxu0
    %4140 = vmatprep.mubr.f32.mxu0 0.0
    %4141 = vmatmul.mubr.f32.gmra.mrb[0].mxu0 %v4069
    %v4142 = vpop.f32.mrb[0].mxu0
    %v4143 = vadd.f32 0.0, %v4142
    %v4144 = vpop.f32.mrb[0].mxu0
    %4145 = vdwg.mxu0
    %4146 = vrot.lane.b32.xlu0 %v3017, 64
    %v4147 = vpop.permute.xlu0 %4146
    %4148 = vrot.lane.b32.xlu0 %v3022, 64
    %v4149 = vpop.permute.xlu0 %4148
    %v4153 = vsel %vm774, %v4056, 0
    %v4156 = vsel %vm774, %v4058, 0
    %4158 = vmatprep.subr.mxu0 0.0
    %4159 = vmatpush1.msra.mxu0 %v4147
    %4160 = vmatprep.subr.mxu0 0.0
    %4161 = vmatpush1.msra.mxu0 %v4149
    %4162 = vmatprep.subr.mxu0 0.0
    %4163 = vmatpush1.msra.mxu0 0.0
    %4164 = vmatprep.subr.mxu0 0.0
    %4165 = vmatpush1.msra.mxu0 0.0
    %4166 = vmatprep.subr.mxu0 0.0
    %4167 = vmatpush1.msra.mxu0 0.0
    %4168 = vmatprep.subr.mxu0 0.0
    %4169 = vmatpush1.msra.mxu0 0.0
    %4170 = vmatprep.subr.mxu0 0.0
    %4171 = vmatpush1.msra.mxu0 0.0
    %4172 = vmatprep.subr.mxu0 0.0
    %4173 = vmatpush1.msra.mxu0 0.0
    %4174 = vmatprep.subr.mxu0 0.0
    %4175 = vmatpush1.msra.mxu0 0.0
    %4176 = vmatprep.subr.mxu0 0.0
    %4177 = vmatpush1.msra.mxu0 0.0
    %4178 = vmatprep.subr.mxu0 0.0
    %4179 = vmatpush1.msra.mxu0 0.0
    %4180 = vmatprep.subr.mxu0 0.0
    %4181 = vmatpush1.msra.mxu0 0.0
    %4182 = vmatprep.subr.mxu0 0.0
    %4183 = vmatpush1.msra.mxu0 0.0
    %4184 = vmatprep.subr.mxu0 0.0
    %4185 = vmatpush1.msra.mxu0 0.0
    %4186 = vmatprep.subr.mxu0 0.0
    %4187 = vmatpush1.msra.mxu0 0.0
    %4188 = vmatprep.subr.mxu0 0.0
    %4189 = vmatpush1.msra.mxu0 0.0
    %4190 = vmatprep.subr.mxu0 0.0
    %4191 = vmatpush1.msra.mxu0 0.0
    %4192 = vmatprep.subr.mxu0 0.0
    %4193 = vmatpush1.msra.mxu0 0.0
    %4194 = vmatprep.subr.mxu0 0.0
    %4195 = vmatpush1.msra.mxu0 0.0
    %4196 = vmatprep.subr.mxu0 0.0
    %4197 = vmatpush1.msra.mxu0 0.0
    %4198 = vmatprep.subr.mxu0 0.0
    %4199 = vmatpush1.msra.mxu0 0.0
    %4200 = vmatprep.subr.mxu0 0.0
    %4201 = vmatpush1.msra.mxu0 0.0
    %4202 = vmatprep.subr.mxu0 0.0
    %4203 = vmatpush1.msra.mxu0 0.0
    %4204 = vmatprep.subr.mxu0 0.0
    %4205 = vmatpush1.msra.mxu0 0.0
    %4206 = vmatprep.subr.mxu0 0.0
    %4207 = vmatpush1.msra.mxu0 0.0
    %4208 = vmatprep.subr.mxu0 0.0
    %4209 = vmatpush1.msra.mxu0 0.0
    %4210 = vmatprep.subr.mxu0 0.0
    %4211 = vmatpush1.msra.mxu0 0.0
    %4212 = vmatprep.subr.mxu0 0.0
    %4213 = vmatpush1.msra.mxu0 0.0
    %4214 = vmatprep.subr.mxu0 0.0
    %4215 = vmatpush1.msra.mxu0 0.0
    %4216 = vmatprep.subr.mxu0 0.0
    %4217 = vmatpush1.msra.mxu0 0.0
    %4218 = vmatprep.subr.mxu0 0.0
    %4219 = vmatpush1.msra.mxu0 0.0
    %4220 = vmatprep.subr.mxu0 0.0
    %4221 = vmatpush1.msra.mxu0 0.0
    %4222 = vmatprep.mubr.f32.mxu0 0.0
    %4223 = vmatmul.mubr.f32.gmra.mrb[0].mxu0 %v4153
    %v4224 = vpop.f32.mrb[0].mxu0
    %v4225 = vadd.f32 0.0, %v4224
    %v4226 = vpop.f32.mrb[0].mxu0
    %4227 = vmatprep.mubr.f32.mxu0 0.0
    %4228 = vmatmul.mubr.f32.gmra.mrb[0].mxu0 %v4156
    %v4229 = vpop.f32.mrb[0].mxu0
    %v4230 = vadd.f32 0.0, %v4229
    %v4231 = vpop.f32.mrb[0].mxu0
    %4232 = vdwg.mxu0
    %4233 = vrot.lane.b32.xlu0 %v2918, 32
    %v4234 = vpop.permute.xlu0 %4233
    %4235 = vrot.lane.b32.xlu0 %v2924, 32
    %v4236 = vpop.permute.xlu0 %4235
    %4237 = vrot.lane.b32.xlu0 %v2920, 32
    %v4238 = vpop.permute.xlu0 %4237
    %4239 = vrot.lane.b32.xlu0 %v2926, 32
    %v4240 = vpop.permute.xlu0 %4239
    %v4241 = vsel %vm591, %v4234, 0
    %v4243 = vsel %vm591, %v4236, 0
    %v4245 = vsel %vm591, %v4238, 0
    %v4247 = vsel %vm591, %v4240, 0
    %4249 = vmatprep.subr.mxu0 0.0
    %4250 = vmatpush1.xpose.msra.mxu0 %v4245
    %4251 = vmatprep.subr.mxu0 0.0
    %4252 = vmatpush1.xpose.msra.mxu0 %v4247
    %4253 = vmatprep.subr.mxu0 0.0
    %4254 = vmatpush1.xpose.msra.mxu0 0.0
    %4255 = vmatprep.subr.mxu0 0.0
    %4256 = vmatpush1.xpose.msra.mxu0 0.0
    %4257 = vmatprep.subr.mxu0 0.0
    %4258 = vmatpush1.xpose.msra.mxu0 0.0
    %4259 = vmatprep.subr.mxu0 0.0
    %4260 = vmatpush1.xpose.msra.mxu0 0.0
    %4261 = vmatprep.subr.mxu0 0.0
    %4262 = vmatpush1.xpose.msra.mxu0 0.0
    %4263 = vmatprep.subr.mxu0 0.0
    %4264 = vmatpush1.xpose.msra.mxu0 0.0
    %4265 = vmatprep.subr.mxu0 0.0
    %4266 = vmatpush1.xpose.msra.mxu0 0.0
    %4267 = vmatprep.subr.mxu0 0.0
    %4268 = vmatpush1.xpose.msra.mxu0 0.0
    %4269 = vmatprep.subr.mxu0 0.0
    %4270 = vmatpush1.xpose.msra.mxu0 0.0
    %4271 = vmatprep.subr.mxu0 0.0
    %4272 = vmatpush1.xpose.msra.mxu0 0.0
    %4273 = vmatprep.subr.mxu0 0.0
    %4274 = vmatpush1.xpose.msra.mxu0 0.0
    %4275 = vmatprep.subr.mxu0 0.0
    %4276 = vmatpush1.xpose.msra.mxu0 0.0
    %4277 = vmatprep.subr.mxu0 0.0
    %4278 = vmatpush1.xpose.msra.mxu0 0.0
    %4279 = vmatprep.subr.mxu0 0.0
    %4280 = vmatpush1.xpose.msra.mxu0 0.0
    %4281 = vmatprep.subr.mxu0 0.0
    %4282 = vmatpush1.xpose.msra.mxu0 0.0
    %4283 = vmatprep.subr.mxu0 0.0
    %4284 = vmatpush1.xpose.msra.mxu0 0.0
    %4285 = vmatprep.subr.mxu0 0.0
    %4286 = vmatpush1.xpose.msra.mxu0 0.0
    %4287 = vmatprep.subr.mxu0 0.0
    %4288 = vmatpush1.xpose.msra.mxu0 0.0
    %4289 = vmatprep.subr.mxu0 0.0
    %4290 = vmatpush1.xpose.msra.mxu0 0.0
    %4291 = vmatprep.subr.mxu0 0.0
    %4292 = vmatpush1.xpose.msra.mxu0 0.0
    %4293 = vmatprep.subr.mxu0 0.0
    %4294 = vmatpush1.xpose.msra.mxu0 0.0
    %4295 = vmatprep.subr.mxu0 0.0
    %4296 = vmatpush1.xpose.msra.mxu0 0.0
    %4297 = vmatprep.subr.mxu0 0.0
    %4298 = vmatpush1.xpose.msra.mxu0 0.0
    %4299 = vmatprep.subr.mxu0 0.0
    %4300 = vmatpush1.xpose.msra.mxu0 0.0
    %4301 = vmatprep.subr.mxu0 0.0
    %4302 = vmatpush1.xpose.msra.mxu0 0.0
    %4303 = vmatprep.subr.mxu0 0.0
    %4304 = vmatpush1.xpose.msra.mxu0 0.0
    %4305 = vmatprep.subr.mxu0 0.0
    %4306 = vmatpush1.xpose.msra.mxu0 0.0
    %4307 = vmatprep.subr.mxu0 0.0
    %4308 = vmatpush1.xpose.msra.mxu0 0.0
    %4309 = vmatprep.subr.mxu0 0.0
    %4310 = vmatpush1.xpose.msra.mxu0 0.0
    %4311 = vmatprep.subr.mxu0 0.0
    %4312 = vmatpush1.xpose.msra.mxu0 0.0
    %4313 = vmatprep.mubr.f32.mxu0 0.0
    %4314 = vmatmul.mubr.f32.gmra.mrb[0].mxu0 %v4241
    %v4315 = vpop.f32.mrb[0].mxu0
    %v4316 = vadd.f32 0.0, %v4315
    %v4317 = vpop.f32.mrb[0].mxu0
    %4318 = vmatprep.mubr.f32.mxu0 0.0
    %4319 = vmatmul.mubr.f32.gmra.mrb[0].mxu0 %v4243
    %v4320 = vpop.f32.mrb[0].mxu0
    %v4321 = vadd.f32 0.0, %v4320
    %v4322 = vpop.f32.mrb[0].mxu0
    %4323 = vdwg.mxu0
    %4324 = vrot.lane.b32.xlu0 %v2930, 32
    %v4325 = vpop.permute.xlu0 %4324
    %4326 = vrot.lane.b32.xlu0 %v2936, 32
    %v4327 = vpop.permute.xlu0 %4326
    %4328 = vrot.lane.b32.xlu0 %v2932, 32
    %v4329 = vpop.permute.xlu0 %4328
    %4330 = vrot.lane.b32.xlu0 %v2938, 32
    %v4331 = vpop.permute.xlu0 %4330
    %v4332 = vsel %vm591, %v4325, 0
    %v4334 = vsel %vm591, %v4327, 0
    %v4336 = vsel %vm591, %v4329, 0
    %v4338 = vsel %vm591, %v4331, 0
    %4340 = vmatprep.subr.mxu0 0.0
    %4341 = vmatpush1.xpose.msra.mxu0 %v4336
    %4342 = vmatprep.subr.mxu0 0.0
    %4343 = vmatpush1.xpose.msra.mxu0 %v4338
    %4344 = vmatprep.subr.mxu0 0.0
    %4345 = vmatpush1.xpose.msra.mxu0 0.0
    %4346 = vmatprep.subr.mxu0 0.0
    %4347 = vmatpush1.xpose.msra.mxu0 0.0
    %4348 = vmatprep.subr.mxu0 0.0
    %4349 = vmatpush1.xpose.msra.mxu0 0.0
    %4350 = vmatprep.subr.mxu0 0.0
    %4351 = vmatpush1.xpose.msra.mxu0 0.0
    %4352 = vmatprep.subr.mxu0 0.0
    %4353 = vmatpush1.xpose.msra.mxu0 0.0
    %4354 = vmatprep.subr.mxu0 0.0
    %4355 = vmatpush1.xpose.msra.mxu0 0.0
    %4356 = vmatprep.subr.mxu0 0.0
    %4357 = vmatpush1.xpose.msra.mxu0 0.0
    %4358 = vmatprep.subr.mxu0 0.0
    %4359 = vmatpush1.xpose.msra.mxu0 0.0
    %4360 = vmatprep.subr.mxu0 0.0
    %4361 = vmatpush1.xpose.msra.mxu0 0.0
    %4362 = vmatprep.subr.mxu0 0.0
    %4363 = vmatpush1.xpose.msra.mxu0 0.0
    %4364 = vmatprep.subr.mxu0 0.0
    %4365 = vmatpush1.xpose.msra.mxu0 0.0
    %4366 = vmatprep.subr.mxu0 0.0
    %4367 = vmatpush1.xpose.msra.mxu0 0.0
    %4368 = vmatprep.subr.mxu0 0.0
    %4369 = vmatpush1.xpose.msra.mxu0 0.0
    %4370 = vmatprep.subr.mxu0 0.0
    %4371 = vmatpush1.xpose.msra.mxu0 0.0
    %4372 = vmatprep.subr.mxu0 0.0
    %4373 = vmatpush1.xpose.msra.mxu0 0.0
    %4374 = vmatprep.subr.mxu0 0.0
    %4375 = vmatpush1.xpose.msra.mxu0 0.0
    %4376 = vmatprep.subr.mxu0 0.0
    %4377 = vmatpush1.xpose.msra.mxu0 0.0
    %4378 = vmatprep.subr.mxu0 0.0
    %4379 = vmatpush1.xpose.msra.mxu0 0.0
    %4380 = vmatprep.subr.mxu0 0.0
    %4381 = vmatpush1.xpose.msra.mxu0 0.0
    %4382 = vmatprep.subr.mxu0 0.0
    %4383 = vmatpush1.xpose.msra.mxu0 0.0
    %4384 = vmatprep.subr.mxu0 0.0
    %4385 = vmatpush1.xpose.msra.mxu0 0.0
    %4386 = vmatprep.subr.mxu0 0.0
    %4387 = vmatpush1.xpose.msra.mxu0 0.0
    %4388 = vmatprep.subr.mxu0 0.0
    %4389 = vmatpush1.xpose.msra.mxu0 0.0
    %4390 = vmatprep.subr.mxu0 0.0
    %4391 = vmatpush1.xpose.msra.mxu0 0.0
    %4392 = vmatprep.subr.mxu0 0.0
    %4393 = vmatpush1.xpose.msra.mxu0 0.0
    %4394 = vmatprep.subr.mxu0 0.0
    %4395 = vmatpush1.xpose.msra.mxu0 0.0
    %4396 = vmatprep.subr.mxu0 0.0
    %4397 = vmatpush1.xpose.msra.mxu0 0.0
    %4398 = vmatprep.subr.mxu0 0.0
    %4399 = vmatpush1.xpose.msra.mxu0 0.0
    %4400 = vmatprep.subr.mxu0 0.0
    %4401 = vmatpush1.xpose.msra.mxu0 0.0
    %4402 = vmatprep.subr.mxu0 0.0
    %4403 = vmatpush1.xpose.msra.mxu0 0.0
    %4404 = vmatprep.mubr.f32.mxu0 0.0
    %4405 = vmatmul.mubr.f32.gmra.mrb[0].mxu0 %v4332
    %v4406 = vpop.f32.mrb[0].mxu0
    %v4407 = vadd.f32 0.0, %v4406
    %v4408 = vpop.f32.mrb[0].mxu0
    %4409 = vmatprep.mubr.f32.mxu0 0.0
    %4410 = vmatmul.mubr.f32.gmra.mrb[0].mxu0 %v4334
    %v4411 = vpop.f32.mrb[0].mxu0
    %v4412 = vadd.f32 0.0, %v4411
    %v4413 = vpop.f32.mrb[0].mxu0
    %4414 = vdwg.mxu0
    %v4415 = vmul.f32 %v4316, 0.17677669
    %v4416 = vmul.f32 %v4321, 0.17677669
    %v4417 = vmul.f32 %v4407, 0.17677669
    %v4418 = vmul.f32 %v4412, 0.17677669
    %v4419 = vadd.f32 %v4415, %v350
    %v4420 = vadd.f32 %v4416, %v351
    %v4421 = vadd.f32 %v4417, %v350
    %v4422 = vadd.f32 %v4418, %v351
    %v4423 = vsel %vm774, %v4419, -inf
    %4424 = vmax.xlane.f32.xlu0 %v4423
    %v4425 = vpop.xlane.xlu0 %4424
    %v4426 = vsel %vm774, %v4420, -inf
    %4427 = vmax.xlane.f32.xlu0 %v4426
    %v4428 = vpop.xlane.xlu0 %4427
    %v4429 = vsel %vm774, %v4421, -inf
    %4430 = vmax.xlane.f32.xlu0 %v4429
    %v4431 = vpop.xlane.xlu0 %4430
    %v4432 = vsel %vm774, %v4422, -inf
    %4433 = vmax.xlane.f32.xlu0 %v4432
    %v4434 = vpop.xlane.xlu0 %4433
    %v4435 = vsub.f32 %v4419, %v4425
    %v4436 = vsub.f32 %v4420, %v4428
    %v4437 = vsub.f32 %v4421, %v4431
    %v4438 = vsub.f32 %v4422, %v4434
    %v4439 = vmul.f32 %v4435, 1.442695
    %v4440 = vpow.pop %v4439
    %v4441 = vmul.f32 %v4436, 1.442695
    %v4442 = vpow.pop %v4441
    %v4443 = vmul.f32 %v4437, 1.442695
    %v4444 = vpow.pop %v4443
    %v4445 = vmul.f32 %v4438, 1.442695
    %v4446 = vpow.pop %v4445
    %v4447 = vsel %vm774, %v4440, 0.0
    %4448 = vadd.xlane.f32.xlu0 %v4447
    %v4449 = vpop.xlane.xlu0 %4448
    %v4450 = vsel %vm774, %v4442, 0.0
    %4451 = vadd.xlane.f32.xlu0 %v4450
    %v4452 = vpop.xlane.xlu0 %4451
    %v4453 = vsel %vm774, %v4444, 0.0
    %4454 = vadd.xlane.f32.xlu0 %v4453
    %v4455 = vpop.xlane.xlu0 %4454
    %v4456 = vsel %vm774, %v4446, 0.0
    %4457 = vadd.xlane.f32.xlu0 %v4456
    %v4458 = vpop.xlane.xlu0 %4457
    %v4459 = vrcp.pop %v4449
    %v4460 = vmul.f32 %v4440, %v4459
    %v4461 = vrcp.pop %v4452
    %v4462 = vmul.f32 %v4442, %v4461
    %v4463 = vrcp.pop %v4455
    %v4464 = vmul.f32 %v4444, %v4463
    %v4465 = vrcp.pop %v4458
    %v4466 = vmul.f32 %v4446, %v4465
    %4467 = vrot.lane.b32.xlu0 %v3007, 32
    %v4468 = vpop.permute.xlu0 %4467
    %4469 = vrot.lane.b32.xlu0 %v3012, 32
    %v4470 = vpop.permute.xlu0 %4469
    %v4474 = vsel %vm774, %v4460, 0
    %v4477 = vsel %vm774, %v4462, 0
    %4479 = vmatprep.subr.mxu0 0.0
    %4480 = vmatpush1.msra.mxu0 %v4468
    %4481 = vmatprep.subr.mxu0 0.0
    %4482 = vmatpush1.msra.mxu0 %v4470
    %4483 = vmatprep.subr.mxu0 0.0
    %4484 = vmatpush1.msra.mxu0 0.0
    %4485 = vmatprep.subr.mxu0 0.0
    %4486 = vmatpush1.msra.mxu0 0.0
    %4487 = vmatprep.subr.mxu0 0.0
    %4488 = vmatpush1.msra.mxu0 0.0
    %4489 = vmatprep.subr.mxu0 0.0
    %4490 = vmatpush1.msra.mxu0 0.0
    %4491 = vmatprep.subr.mxu0 0.0
    %4492 = vmatpush1.msra.mxu0 0.0
    %4493 = vmatprep.subr.mxu0 0.0
    %4494 = vmatpush1.msra.mxu0 0.0
    %4495 = vmatprep.subr.mxu0 0.0
    %4496 = vmatpush1.msra.mxu0 0.0
    %4497 = vmatprep.subr.mxu0 0.0
    %4498 = vmatpush1.msra.mxu0 0.0
    %4499 = vmatprep.subr.mxu0 0.0
    %4500 = vmatpush1.msra.mxu0 0.0
    %4501 = vmatprep.subr.mxu0 0.0
    %4502 = vmatpush1.msra.mxu0 0.0
    %4503 = vmatprep.subr.mxu0 0.0
    %4504 = vmatpush1.msra.mxu0 0.0
    %4505 = vmatprep.subr.mxu0 0.0
    %4506 = vmatpush1.msra.mxu0 0.0
    %4507 = vmatprep.subr.mxu0 0.0
    %4508 = vmatpush1.msra.mxu0 0.0
    %4509 = vmatprep.subr.mxu0 0.0
    %4510 = vmatpush1.msra.mxu0 0.0
    %4511 = vmatprep.subr.mxu0 0.0
    %4512 = vmatpush1.msra.mxu0 0.0
    %4513 = vmatprep.subr.mxu0 0.0
    %4514 = vmatpush1.msra.mxu0 0.0
    %4515 = vmatprep.subr.mxu0 0.0
    %4516 = vmatpush1.msra.mxu0 0.0
    %4517 = vmatprep.subr.mxu0 0.0
    %4518 = vmatpush1.msra.mxu0 0.0
    %4519 = vmatprep.subr.mxu0 0.0
    %4520 = vmatpush1.msra.mxu0 0.0
    %4521 = vmatprep.subr.mxu0 0.0
    %4522 = vmatpush1.msra.mxu0 0.0
    %4523 = vmatprep.subr.mxu0 0.0
    %4524 = vmatpush1.msra.mxu0 0.0
    %4525 = vmatprep.subr.mxu0 0.0
    %4526 = vmatpush1.msra.mxu0 0.0
    %4527 = vmatprep.subr.mxu0 0.0
    %4528 = vmatpush1.msra.mxu0 0.0
    %4529 = vmatprep.subr.mxu0 0.0
    %4530 = vmatpush1.msra.mxu0 0.0
    %4531 = vmatprep.subr.mxu0 0.0
    %4532 = vmatpush1.msra.mxu0 0.0
    %4533 = vmatprep.subr.mxu0 0.0
    %4534 = vmatpush1.msra.mxu0 0.0
    %4535 = vmatprep.subr.mxu0 0.0
    %4536 = vmatpush1.msra.mxu0 0.0
    %4537 = vmatprep.subr.mxu0 0.0
    %4538 = vmatpush1.msra.mxu0 0.0
    %4539 = vmatprep.subr.mxu0 0.0
    %4540 = vmatpush1.msra.mxu0 0.0
    %4541 = vmatprep.subr.mxu0 0.0
    %4542 = vmatpush1.msra.mxu0 0.0
    %4543 = vmatprep.mubr.f32.mxu0 0.0
    %4544 = vmatmul.mubr.f32.gmra.mrb[0].mxu0 %v4474
    %v4545 = vpop.f32.mrb[0].mxu0
    %v4546 = vadd.f32 0.0, %v4545
    %v4547 = vpop.f32.mrb[0].mxu0
    %4548 = vmatprep.mubr.f32.mxu0 0.0
    %4549 = vmatmul.mubr.f32.gmra.mrb[0].mxu0 %v4477
    %v4550 = vpop.f32.mrb[0].mxu0
    %v4551 = vadd.f32 0.0, %v4550
    %v4552 = vpop.f32.mrb[0].mxu0
    %4553 = vdwg.mxu0
    %4554 = vrot.lane.b32.xlu0 %v3017, 32
    %v4555 = vpop.permute.xlu0 %4554
    %4556 = vrot.lane.b32.xlu0 %v3022, 32
    %v4557 = vpop.permute.xlu0 %4556
    %v4561 = vsel %vm774, %v4464, 0
    %v4564 = vsel %vm774, %v4466, 0
    %4566 = vmatprep.subr.mxu0 0.0
    %4567 = vmatpush1.msra.mxu0 %v4555
    %4568 = vmatprep.subr.mxu0 0.0
    %4569 = vmatpush1.msra.mxu0 %v4557
    %4570 = vmatprep.subr.mxu0 0.0
    %4571 = vmatpush1.msra.mxu0 0.0
    %4572 = vmatprep.subr.mxu0 0.0
    %4573 = vmatpush1.msra.mxu0 0.0
    %4574 = vmatprep.subr.mxu0 0.0
    %4575 = vmatpush1.msra.mxu0 0.0
    %4576 = vmatprep.subr.mxu0 0.0
    %4577 = vmatpush1.msra.mxu0 0.0
    %4578 = vmatprep.subr.mxu0 0.0
    %4579 = vmatpush1.msra.mxu0 0.0
    %4580 = vmatprep.subr.mxu0 0.0
    %4581 = vmatpush1.msra.mxu0 0.0
    %4582 = vmatprep.subr.mxu0 0.0
    %4583 = vmatpush1.msra.mxu0 0.0
    %4584 = vmatprep.subr.mxu0 0.0
    %4585 = vmatpush1.msra.mxu0 0.0
    %4586 = vmatprep.subr.mxu0 0.0
    %4587 = vmatpush1.msra.mxu0 0.0
    %4588 = vmatprep.subr.mxu0 0.0
    %4589 = vmatpush1.msra.mxu0 0.0
    %4590 = vmatprep.subr.mxu0 0.0
    %4591 = vmatpush1.msra.mxu0 0.0
    %4592 = vmatprep.subr.mxu0 0.0
    %4593 = vmatpush1.msra.mxu0 0.0
    %4594 = vmatprep.subr.mxu0 0.0
    %4595 = vmatpush1.msra.mxu0 0.0
    %4596 = vmatprep.subr.mxu0 0.0
    %4597 = vmatpush1.msra.mxu0 0.0
    %4598 = vmatprep.subr.mxu0 0.0
    %4599 = vmatpush1.msra.mxu0 0.0
    %4600 = vmatprep.subr.mxu0 0.0
    %4601 = vmatpush1.msra.mxu0 0.0
    %4602 = vmatprep.subr.mxu0 0.0
    %4603 = vmatpush1.msra.mxu0 0.0
    %4604 = vmatprep.subr.mxu0 0.0
    %4605 = vmatpush1.msra.mxu0 0.0
    %4606 = vmatprep.subr.mxu0 0.0
    %4607 = vmatpush1.msra.mxu0 0.0
    %4608 = vmatprep.subr.mxu0 0.0
    %4609 = vmatpush1.msra.mxu0 0.0
    %4610 = vmatprep.subr.mxu0 0.0
    %4611 = vmatpush1.msra.mxu0 0.0
    %4612 = vmatprep.subr.mxu0 0.0
    %4613 = vmatpush1.msra.mxu0 0.0
    %4614 = vmatprep.subr.mxu0 0.0
    %4615 = vmatpush1.msra.mxu0 0.0
    %4616 = vmatprep.subr.mxu0 0.0
    %4617 = vmatpush1.msra.mxu0 0.0
    %4618 = vmatprep.subr.mxu0 0.0
    %4619 = vmatpush1.msra.mxu0 0.0
    %4620 = vmatprep.subr.mxu0 0.0
    %4621 = vmatpush1.msra.mxu0 0.0
    %4622 = vmatprep.subr.mxu0 0.0
    %4623 = vmatpush1.msra.mxu0 0.0
    %4624 = vmatprep.subr.mxu0 0.0
    %4625 = vmatpush1.msra.mxu0 0.0
    %4626 = vmatprep.subr.mxu0 0.0
    %4627 = vmatpush1.msra.mxu0 0.0
    %4628 = vmatprep.subr.mxu0 0.0
    %4629 = vmatpush1.msra.mxu0 0.0
    %4630 = vmatprep.mubr.f32.mxu0 0.0
    %4631 = vmatmul.mubr.f32.gmra.mrb[0].mxu0 %v4561
    %v4632 = vpop.f32.mrb[0].mxu0
    %v4633 = vadd.f32 0.0, %v4632
    %v4634 = vpop.f32.mrb[0].mxu0
    %4635 = vmatprep.mubr.f32.mxu0 0.0
    %4636 = vmatmul.mubr.f32.gmra.mrb[0].mxu0 %v4564
    %v4637 = vpop.f32.mrb[0].mxu0
    %v4638 = vadd.f32 0.0, %v4637
    %v4639 = vpop.f32.mrb[0].mxu0
    %4640 = vdwg.mxu0
    %4645 = vrot.lane.b32.xlu0 %v3728, 32
    %v4646 = vpop.permute.xlu0 %4645
    %4647 = vrot.lane.b32.xlu0 %v3733, 32
    %v4648 = vpop.permute.xlu0 %4647
    %4649 = vrot.lane.b32.xlu0 %v3817, 32
    %v4650 = vpop.permute.xlu0 %4649
    %4651 = vrot.lane.b32.xlu0 %v3822, 32
    %v4652 = vpop.permute.xlu0 %4651
    %4661 = vrot.lane.b32.xlu0 %v4138, 64
    %v4662 = vpop.permute.xlu0 %4661
    %4663 = vrot.lane.b32.xlu0 %v4143, 64
    %v4664 = vpop.permute.xlu0 %4663
    %4665 = vrot.lane.b32.xlu0 %v4225, 64
    %v4666 = vpop.permute.xlu0 %4665
    %4667 = vrot.lane.b32.xlu0 %v4230, 64
    %v4668 = vpop.permute.xlu0 %4667
    %4677 = vrot.lane.b32.xlu0 %v4546, 96
    %v4678 = vpop.permute.xlu0 %4677
    %4679 = vrot.lane.b32.xlu0 %v4551, 96
    %v4680 = vpop.permute.xlu0 %4679
    %4681 = vrot.lane.b32.xlu0 %v4633, 96
    %v4682 = vpop.permute.xlu0 %4681
    %4683 = vrot.lane.b32.xlu0 %v4638, 96
    %v4684 = vpop.permute.xlu0 %4683
    %v4689 = vsel %vm591, %v3324, %v4646
    %v4690 = vsel %vm591, %v3329, %v4648
    %v4691 = vsel %vm591, %v3405, %v4650
    %v4692 = vsel %vm591, %v3410, %v4652
    %v4693 = vsel %vm207, %v4689, %v4662
    %v4694 = vsel %vm207, %v4690, %v4664
    %v4695 = vsel %vm207, %v4691, %v4666
    %v4696 = vsel %vm207, %v4692, %v4668
    %v4697 = vsel %vm2265, %v4693, %v4678
    %v4698 = vsel %vm2265, %v4694, %v4680
    %v4699 = vsel %vm2265, %v4695, %v4682
    %v4700 = vsel %vm2265, %v4696, %v4684
    %s4701 = scalar_lea.vmem %s8, 128
    %v4702 = vld [vmem:[%s4701] sm:$0xff]
    %v4703 = vld [vmem:[%s4701 + $0x8] sm:$0xff]
    %v4704 = vld [vmem:[%s4701 + $0x10] sm:$0xff]
    %v4705 = vld [vmem:[%s4701 + $0x18] sm:$0xff]
    %v4706 = vld [vmem:[%s4701 + $0x20] sm:$0xff]
    %v4707 = vld [vmem:[%s4701 + $0x28] sm:$0xff]
    %v4708 = vld [vmem:[%s4701 + $0x30] sm:$0xff]
    %v4709 = vld [vmem:[%s4701 + $0x38] sm:$0xff]
    %v4710 = vld [vmem:[%s4701 + $0x40] sm:$0xff]
    %v4711 = vld [vmem:[%s4701 + $0x48] sm:$0xff]
    %v4712 = vld [vmem:[%s4701 + $0x50] sm:$0xff]
    %v4713 = vld [vmem:[%s4701 + $0x58] sm:$0xff]
    %v4714 = vld [vmem:[%s4701 + $0x60] sm:$0xff]
    %v4715 = vld [vmem:[%s4701 + $0x68] sm:$0xff]
    %v4716 = vld [vmem:[%s4701 + $0x70] sm:$0xff]
    %v4717 = vld [vmem:[%s4701 + $0x78] sm:$0xff]
    %s4718 = scalar_lea.vmem %s9, 1
    %v4719 = vld [vmem:[%s4718] sm:$0x1]
    %v4721 = vlaneseq
    %v4722 = vshrl.u32 %v4721, 7
    %v4723 = vsub.s32 0, %v4722
    %v4724 = vrot.slane %v4719, %v4723
    %4726 = vmatprep.subr.mxu0 0.0
    %4727 = vmatpush1.msra.mxu0 %v4702
    %4728 = vmatprep.subr.mxu0 0.0
    %4729 = vmatpush1.msra.mxu0 %v4703
    %4730 = vmatprep.subr.mxu0 0.0
    %4731 = vmatpush1.msra.mxu0 %v4704
    %4732 = vmatprep.subr.mxu0 0.0
    %4733 = vmatpush1.msra.mxu0 %v4705
    %4734 = vmatprep.subr.mxu0 0.0
    %4735 = vmatpush1.msra.mxu0 %v4706
    %4736 = vmatprep.subr.mxu0 0.0
    %4737 = vmatpush1.msra.mxu0 %v4707
    %4738 = vmatprep.subr.mxu0 0.0
    %4739 = vmatpush1.msra.mxu0 %v4708
    %4740 = vmatprep.subr.mxu0 0.0
    %4741 = vmatpush1.msra.mxu0 %v4709
    %4742 = vmatprep.subr.mxu0 0.0
    %4743 = vmatpush1.msra.mxu0 %v4710
    %4744 = vmatprep.subr.mxu0 0.0
    %4745 = vmatpush1.msra.mxu0 %v4711
    %4746 = vmatprep.subr.mxu0 0.0
    %4747 = vmatpush1.msra.mxu0 %v4712
    %4748 = vmatprep.subr.mxu0 0.0
    %4749 = vmatpush1.msra.mxu0 %v4713
    %4750 = vmatprep.subr.mxu0 0.0
    %4751 = vmatpush1.msra.mxu0 %v4714
    %4752 = vmatprep.subr.mxu0 0.0
    %4753 = vmatpush1.msra.mxu0 %v4715
    %4754 = vmatprep.subr.mxu0 0.0
    %4755 = vmatpush1.msra.mxu0 %v4716
    %4756 = vmatprep.subr.mxu0 0.0
    %4757 = vmatpush1.msra.mxu0 %v4717
    %4758 = vmatprep.subr.mxu0 0.0
    %4759 = vmatpush1.msra.mxu0 0.0
    %4760 = vmatprep.subr.mxu0 0.0
    %4761 = vmatpush1.msra.mxu0 0.0
    %4762 = vmatprep.subr.mxu0 0.0
    %4763 = vmatpush1.msra.mxu0 0.0
    %4764 = vmatprep.subr.mxu0 0.0
    %4765 = vmatpush1.msra.mxu0 0.0
    %4766 = vmatprep.subr.mxu0 0.0
    %4767 = vmatpush1.msra.mxu0 0.0
    %4768 = vmatprep.subr.mxu0 0.0
    %4769 = vmatpush1.msra.mxu0 0.0
    %4770 = vmatprep.subr.mxu0 0.0
    %4771 = vmatpush1.msra.mxu0 0.0
    %4772 = vmatprep.subr.mxu0 0.0
    %4773 = vmatpush1.msra.mxu0 0.0
    %4774 = vmatprep.subr.mxu0 0.0
    %4775 = vmatpush1.msra.mxu0 0.0
    %4776 = vmatprep.subr.mxu0 0.0
    %4777 = vmatpush1.msra.mxu0 0.0
    %4778 = vmatprep.subr.mxu0 0.0
    %4779 = vmatpush1.msra.mxu0 0.0
    %4780 = vmatprep.subr.mxu0 0.0
    %4781 = vmatpush1.msra.mxu0 0.0
    %4782 = vmatprep.subr.mxu0 0.0
    %4783 = vmatpush1.msra.mxu0 0.0
    %4784 = vmatprep.subr.mxu0 0.0
    %4785 = vmatpush1.msra.mxu0 0.0
    %4786 = vmatprep.subr.mxu0 0.0
    %4787 = vmatpush1.msra.mxu0 0.0
    %4788 = vmatprep.subr.mxu0 0.0
    %4789 = vmatpush1.msra.mxu0 0.0
    %4790 = vmatprep.mubr.f32.mxu0 0.0
    %4791 = vmatmul.mubr.f32.gmra.mrb[0].mxu0 %v4697
    %v4792 = vpop.f32.mrb[0].mxu0
    %v4793 = vadd.f32 %v4724, %v4792
    %v4794 = vpop.f32.mrb[0].mxu0
    %4795 = vmatprep.mubr.f32.mxu0 0.0
    %4796 = vmatmul.mubr.f32.gmra.mrb[0].mxu0 %v4698
    %v4797 = vpop.f32.mrb[0].mxu0
    %v4798 = vadd.f32 %v4724, %v4797
    %v4799 = vpop.f32.mrb[0].mxu0
    %4800 = vmatprep.mubr.f32.mxu0 0.0
    %4801 = vmatmul.mubr.f32.gmra.mrb[0].mxu0 %v4699
    %v4802 = vpop.f32.mrb[0].mxu0
    %v4803 = vadd.f32 %v4724, %v4802
    %v4804 = vpop.f32.mrb[0].mxu0
    %4805 = vmatprep.mubr.f32.mxu0 0.0
    %4806 = vmatmul.mubr.f32.gmra.mrb[0].mxu0 %v4700
    %v4807 = vpop.f32.mrb[0].mxu0
    %v4808 = vadd.f32 %v4724, %v4807
    %v4809 = vpop.f32.mrb[0].mxu0
    %4810 = vdwg.mxu0
    %v4811 = vadd.f32 %v2780, %v4793
    %v4812 = vadd.f32 %v2781, %v4798
    %v4813 = vadd.f32 %v2782, %v4803
    %v4814 = vadd.f32 %v2783, %v4808
    %s4815 = scalar_lea.vmem %s10, 1
    %v4816 = vld [vmem:[%s4815] sm:$0x1]
    %s4817 = scalar_lea.vmem %s11, 1
    %v4818 = vld [vmem:[%s4817] sm:$0x1]
    %4819 = vadd.xlane.f32.xlu0 %v4811
    %v4820 = vpop.xlane.xlu0 %4819
    %4821 = vadd.xlane.f32.xlu0 %v4812
    %v4822 = vpop.xlane.xlu0 %4821
    %4823 = vadd.xlane.f32.xlu0 %v4813
    %v4824 = vpop.xlane.xlu0 %4823
    %4825 = vadd.xlane.f32.xlu0 %v4814
    %v4826 = vpop.xlane.xlu0 %4825
    %v4827 = vmul.f32 %v4820, %v2392
    %v4828 = vmul.f32 %v4822, %v2392
    %v4829 = vmul.f32 %v4824, %v2392
    %v4830 = vmul.f32 %v4826, %v2392
    %v4831 = vsub.f32 %v4811, %v4827
    %v4832 = vsub.f32 %v4812, %v4828
    %v4833 = vsub.f32 %v4813, %v4829
    %v4834 = vsub.f32 %v4814, %v4830
    %v4835 = vmul.f32 %v4831, %v4831
    %v4836 = vmul.f32 %v4832, %v4832
    %v4837 = vmul.f32 %v4833, %v4833
    %v4838 = vmul.f32 %v4834, %v4834
    %4839 = vadd.xlane.f32.xlu0 %v4835
    %v4840 = vpop.xlane.xlu0 %4839
    %4841 = vadd.xlane.f32.xlu0 %v4836
    %v4842 = vpop.xlane.xlu0 %4841
    %4843 = vadd.xlane.f32.xlu0 %v4837
    %v4844 = vpop.xlane.xlu0 %4843
    %4845 = vadd.xlane.f32.xlu0 %v4838
    %v4846 = vpop.xlane.xlu0 %4845
    %v4847 = vmul.f32 %v4840, %v2392
    %v4848 = vmul.f32 %v4842, %v2392
    %v4849 = vmul.f32 %v4844, %v2392
    %v4850 = vmul.f32 %v4846, %v2392
    %v4851 = vadd.f32 %v4847, 1e-05
    %v4852 = vadd.f32 %v4848, 1e-05
    %v4853 = vadd.f32 %v4849, 1e-05
    %v4854 = vadd.f32 %v4850, 1e-05
    %v4855 = vrsqrt.pop %v4851
    %v4856 = vrsqrt.pop %v4852
    %v4857 = vrsqrt.pop %v4853
    %v4858 = vrsqrt.pop %v4854
    %v4859 = vmul.f32 %v4831, %v4855
    %v4860 = vmul.f32 %v4832, %v4856
    %v4861 = vmul.f32 %v4833, %v4857
    %v4862 = vmul.f32 %v4834, %v4858
    %v4864 = vlaneseq
    %v4865 = vshrl.u32 %v4864, 7
    %v4866 = vsub.s32 0, %v4865
    %v4867 = vrot.slane %v4816, %v4866
    %v4869 = vmul.f32 %v4859, %v4867
    %v4870 = vmul.f32 %v4860, %v4867
    %v4871 = vmul.f32 %v4861, %v4867
    %v4872 = vmul.f32 %v4862, %v4867
    %v4874 = vlaneseq
    %v4875 = vshrl.u32 %v4874, 7
    %v4876 = vsub.s32 0, %v4875
    %v4877 = vrot.slane %v4818, %v4876
    %v4879 = vadd.f32 %v4869, %v4877
    %v4880 = vadd.f32 %v4870, %v4877
    %v4881 = vadd.f32 %v4871, %v4877
    %v4882 = vadd.f32 %v4872, %v4877
    %s4883 = scalar_lea.vmem [#allocation8], 256
    %v4884 = vld [vmem:[%s4883] sm:$0xff]
    %v4885 = vld [vmem:[%s4883 + $0x8] sm:$0xff]
    %v4886 = vld [vmem:[%s4883 + $0x10] sm:$0xff]
    %v4887 = vld [vmem:[%s4883 + $0x18] sm:$0xff]
    %v4888 = vld [vmem:[%s4883 + $0x20] sm:$0xff]
    %v4889 = vld [vmem:[%s4883 + $0x28] sm:$0xff]
    %v4890 = vld [vmem:[%s4883 + $0x30] sm:$0xff]
    %v4891 = vld [vmem:[%s4883 + $0x38] sm:$0xff]
    %v4892 = vld [vmem:[%s4883 + $0x40] sm:$0xff]
    %v4893 = vld [vmem:[%s4883 + $0x48] sm:$0xff]
    %v4894 = vld [vmem:[%s4883 + $0x50] sm:$0xff]
    %v4895 = vld [vmem:[%s4883 + $0x58] sm:$0xff]
    %v4896 = vld [vmem:[%s4883 + $0x60] sm:$0xff]
    %v4897 = vld [vmem:[%s4883 + $0x68] sm:$0xff]
    %v4898 = vld [vmem:[%s4883 + $0x70] sm:$0xff]
    %v4899 = vld [vmem:[%s4883 + $0x78] sm:$0xff]
    %v4900 = vld [vmem:[%s4883 + $0x80] sm:$0xff]
    %v4901 = vld [vmem:[%s4883 + $0x88] sm:$0xff]
    %v4902 = vld [vmem:[%s4883 + $0x90] sm:$0xff]
    %v4903 = vld [vmem:[%s4883 + $0x98] sm:$0xff]
    %v4904 = vld [vmem:[%s4883 + $0xa0] sm:$0xff]
    %v4905 = vld [vmem:[%s4883 + $0xa8] sm:$0xff]
    %v4906 = vld [vmem:[%s4883 + $0xb0] sm:$0xff]
    %v4907 = vld [vmem:[%s4883 + $0xb8] sm:$0xff]
    %v4908 = vld [vmem:[%s4883 + $0xc0] sm:$0xff]
    %v4909 = vld [vmem:[%s4883 + $0xc8] sm:$0xff]
    %v4910 = vld [vmem:[%s4883 + $0xd0] sm:$0xff]
    %v4911 = vld [vmem:[%s4883 + $0xd8] sm:$0xff]
    %v4912 = vld [vmem:[%s4883 + $0xe0] sm:$0xff]
    %v4913 = vld [vmem:[%s4883 + $0xe8] sm:$0xff]
    %v4914 = vld [vmem:[%s4883 + $0xf0] sm:$0xff]
    %v4915 = vld [vmem:[%s4883 + $0xf8] sm:$0xff]
    %s4916 = scalar_lea.vmem %s13, 2
    %v4917 = vld [vmem:[%s4916] sm:$0x3]
    %v4919 = vlaneseq
    %v4920 = vshrl.u32 %v4919, 7
    %v4921 = vsub.s32 0, %v4920
    %v4922 = vrot.slane %v4917, %v4921
    %v4923 = vlaneseq
    %v4924 = vshrl.u32 %v4923, 7
    %v4925 = vsub.s32 1, %v4924
    %v4926 = vrot.slane %v4917, %v4925
    %4929 = vmatprep.subr.mxu0 %v4885
    %4930 = vmatpush1.msra.mxu0 %v4884
    %4931 = vmatprep.subr.mxu0 %v4887
    %4932 = vmatpush1.msra.mxu0 %v4886
    %4933 = vmatprep.subr.mxu0 %v4889
    %4934 = vmatpush1.msra.mxu0 %v4888
    %4935 = vmatprep.subr.mxu0 %v4891
    %4936 = vmatpush1.msra.mxu0 %v4890
    %4937 = vmatprep.subr.mxu0 %v4893
    %4938 = vmatpush1.msra.mxu0 %v4892
    %4939 = vmatprep.subr.mxu0 %v4895
    %4940 = vmatpush1.msra.mxu0 %v4894
    %4941 = vmatprep.subr.mxu0 %v4897
    %4942 = vmatpush1.msra.mxu0 %v4896
    %4943 = vmatprep.subr.mxu0 %v4899
    %4944 = vmatpush1.msra.mxu0 %v4898
    %4945 = vmatprep.subr.mxu0 %v4901
    %4946 = vmatpush1.msra.mxu0 %v4900
    %4947 = vmatprep.subr.mxu0 %v4903
    %4948 = vmatpush1.msra.mxu0 %v4902
    %4949 = vmatprep.subr.mxu0 %v4905
    %4950 = vmatpush1.msra.mxu0 %v4904
    %4951 = vmatprep.subr.mxu0 %v4907
    %4952 = vmatpush1.msra.mxu0 %v4906
    %4953 = vmatprep.subr.mxu0 %v4909
    %4954 = vmatpush1.msra.mxu0 %v4908
    %4955 = vmatprep.subr.mxu0 %v4911
    %4956 = vmatpush1.msra.mxu0 %v4910
    %4957 = vmatprep.subr.mxu0 %v4913
    %4958 = vmatpush1.msra.mxu0 %v4912
    %4959 = vmatprep.subr.mxu0 %v4915
    %4960 = vmatpush1.msra.mxu0 %v4914
    %4961 = vmatprep.subr.mxu0 0.0
    %4962 = vmatpush1.msra.mxu0 0.0
    %4963 = vmatprep.subr.mxu0 0.0
    %4964 = vmatpush1.msra.mxu0 0.0
    %4965 = vmatprep.subr.mxu0 0.0
    %4966 = vmatpush1.msra.mxu0 0.0
    %4967 = vmatprep.subr.mxu0 0.0
    %4968 = vmatpush1.msra.mxu0 0.0
    %4969 = vmatprep.subr.mxu0 0.0
    %4970 = vmatpush1.msra.mxu0 0.0
    %4971 = vmatprep.subr.mxu0 0.0
    %4972 = vmatpush1.msra.mxu0 0.0
    %4973 = vmatprep.subr.mxu0 0.0
    %4974 = vmatpush1.msra.mxu0 0.0
    %4975 = vmatprep.subr.mxu0 0.0
    %4976 = vmatpush1.msra.mxu0 0.0
    %4977 = vmatprep.subr.mxu0 0.0
    %4978 = vmatpush1.msra.mxu0 0.0
    %4979 = vmatprep.subr.mxu0 0.0
    %4980 = vmatpush1.msra.mxu0 0.0
    %4981 = vmatprep.subr.mxu0 0.0
    %4982 = vmatpush1.msra.mxu0 0.0
    %4983 = vmatprep.subr.mxu0 0.0
    %4984 = vmatpush1.msra.mxu0 0.0
    %4985 = vmatprep.subr.mxu0 0.0
    %4986 = vmatpush1.msra.mxu0 0.0
    %4987 = vmatprep.subr.mxu0 0.0
    %4988 = vmatpush1.msra.mxu0 0.0
    %4989 = vmatprep.subr.mxu0 0.0
    %4990 = vmatpush1.msra.mxu0 0.0
    %4991 = vmatprep.subr.mxu0 0.0
    %4992 = vmatpush1.msra.mxu0 0.0
    %4993 = vmatprep.mubr.f32.mxu0 0.0
    %4994 = vmatmul.mubr.f32.gmra.mrb[0].mxu0 %v4879
    %v4995 = vpop.f32.mrb[0].mxu0
    %v4996 = vadd.f32 %v4922, %v4995
    %v4997 = vpop.f32.mrb[0].mxu0
    %v4998 = vadd.f32 %v4926, %v4997
    %4999 = vmatprep.mubr.f32.mxu0 0.0
    %5000 = vmatmul.mubr.f32.gmra.mrb[0].mxu0 %v4880
    %v5001 = vpop.f32.mrb[0].mxu0
    %v5002 = vadd.f32 %v4922, %v5001
    %v5003 = vpop.f32.mrb[0].mxu0
    %v5004 = vadd.f32 %v4926, %v5003
    %5005 = vmatprep.mubr.f32.mxu0 0.0
    %5006 = vmatmul.mubr.f32.gmra.mrb[0].mxu0 %v4881
    %v5007 = vpop.f32.mrb[0].mxu0
    %v5008 = vadd.f32 %v4922, %v5007
    %v5009 = vpop.f32.mrb[0].mxu0
    %v5010 = vadd.f32 %v4926, %v5009
    %5011 = vmatprep.mubr.f32.mxu0 0.0
    %5012 = vmatmul.mubr.f32.gmra.mrb[0].mxu0 %v4882
    %v5013 = vpop.f32.mrb[0].mxu0
    %v5014 = vadd.f32 %v4922, %v5013
    %v5015 = vpop.f32.mrb[0].mxu0
    %v5016 = vadd.f32 %v4926, %v5015
    %5017 = vdwg.mxu0
    %v5018 = vmax.f32 %v4996, 0.0
    %v5019 = vmax.f32 %v4998, 0.0
    %v5020 = vmax.f32 %v5002, 0.0
    %v5021 = vmax.f32 %v5004, 0.0
    %v5022 = vmax.f32 %v5008, 0.0
    %v5023 = vmax.f32 %v5010, 0.0
    %v5024 = vmax.f32 %v5014, 0.0
    %v5025 = vmax.f32 %v5016, 0.0
    %s5026 = scalar_lea.vmem [#allocation9], 256
    %v5027 = vld [vmem:[%s5026] sm:$0xff]
    %v5028 = vld [vmem:[%s5026 + $0x8] sm:$0xff]
    %v5029 = vld [vmem:[%s5026 + $0x10] sm:$0xff]
    %v5030 = vld [vmem:[%s5026 + $0x18] sm:$0xff]
    %v5031 = vld [vmem:[%s5026 + $0x20] sm:$0xff]
    %v5032 = vld [vmem:[%s5026 + $0x28] sm:$0xff]
    %v5033 = vld [vmem:[%s5026 + $0x30] sm:$0xff]
    %v5034 = vld [vmem:[%s5026 + $0x38] sm:$0xff]
    %v5035 = vld [vmem:[%s5026 + $0x40] sm:$0xff]
    %v5036 = vld [vmem:[%s5026 + $0x48] sm:$0xff]
    %v5037 = vld [vmem:[%s5026 + $0x50] sm:$0xff]
    %v5038 = vld [vmem:[%s5026 + $0x58] sm:$0xff]
    %v5039 = vld [vmem:[%s5026 + $0x60] sm:$0xff]
    %v5040 = vld [vmem:[%s5026 + $0x68] sm:$0xff]
    %v5041 = vld [vmem:[%s5026 + $0x70] sm:$0xff]
    %v5042 = vld [vmem:[%s5026 + $0x78] sm:$0xff]
    %v5043 = vld [vmem:[%s5026 + $0x80] sm:$0xff]
    %v5044 = vld [vmem:[%s5026 + $0x88] sm:$0xff]
    %v5045 = vld [vmem:[%s5026 + $0x90] sm:$0xff]
    %v5046 = vld [vmem:[%s5026 + $0x98] sm:$0xff]
    %v5047 = vld [vmem:[%s5026 + $0xa0] sm:$0xff]
    %v5048 = vld [vmem:[%s5026 + $0xa8] sm:$0xff]
    %v5049 = vld [vmem:[%s5026 + $0xb0] sm:$0xff]
    %v5050 = vld [vmem:[%s5026 + $0xb8] sm:$0xff]
    %v5051 = vld [vmem:[%s5026 + $0xc0] sm:$0xff]
    %v5052 = vld [vmem:[%s5026 + $0xc8] sm:$0xff]
    %v5053 = vld [vmem:[%s5026 + $0xd0] sm:$0xff]
    %v5054 = vld [vmem:[%s5026 + $0xd8] sm:$0xff]
    %v5055 = vld [vmem:[%s5026 + $0xe0] sm:$0xff]
    %v5056 = vld [vmem:[%s5026 + $0xe8] sm:$0xff]
    %v5057 = vld [vmem:[%s5026 + $0xf0] sm:$0xff]
    %v5058 = vld [vmem:[%s5026 + $0xf8] sm:$0xff]
    %s5059 = scalar_lea.vmem %s15, 1
    %v5060 = vld [vmem:[%s5059] sm:$0x1]
    %v5062 = vlaneseq
    %v5063 = vshrl.u32 %v5062, 7
    %v5064 = vsub.s32 0, %v5063
    %v5065 = vrot.slane %v5060, %v5064
    %5067 = vmatprep.subr.mxu0 0.0
    %5068 = vmatpush1.msra.mxu0 %v5027
    %5069 = vmatprep.subr.mxu0 0.0
    %5070 = vmatpush1.msra.mxu0 %v5028
    %5071 = vmatprep.subr.mxu0 0.0
    %5072 = vmatpush1.msra.mxu0 %v5029
    %5073 = vmatprep.subr.mxu0 0.0
    %5074 = vmatpush1.msra.mxu0 %v5030
    %5075 = vmatprep.subr.mxu0 0.0
    %5076 = vmatpush1.msra.mxu0 %v5031
    %5077 = vmatprep.subr.mxu0 0.0
    %5078 = vmatpush1.msra.mxu0 %v5032
    %5079 = vmatprep.subr.mxu0 0.0
    %5080 = vmatpush1.msra.mxu0 %v5033
    %5081 = vmatprep.subr.mxu0 0.0
    %5082 = vmatpush1.msra.mxu0 %v5034
    %5083 = vmatprep.subr.mxu0 0.0
    %5084 = vmatpush1.msra.mxu0 %v5035
    %5085 = vmatprep.subr.mxu0 0.0
    %5086 = vmatpush1.msra.mxu0 %v5036
    %5087 = vmatprep.subr.mxu0 0.0
    %5088 = vmatpush1.msra.mxu0 %v5037
    %5089 = vmatprep.subr.mxu0 0.0
    %5090 = vmatpush1.msra.mxu0 %v5038
    %5091 = vmatprep.subr.mxu0 0.0
    %5092 = vmatpush1.msra.mxu0 %v5039
    %5093 = vmatprep.subr.mxu0 0.0
    %5094 = vmatpush1.msra.mxu0 %v5040
    %5095 = vmatprep.subr.mxu0 0.0
    %5096 = vmatpush1.msra.mxu0 %v5041
    %5097 = vmatprep.subr.mxu0 0.0
    %5098 = vmatpush1.msra.mxu0 %v5042
    %5099 = vmatprep.subr.mxu0 0.0
    %5100 = vmatpush1.msra.mxu0 %v5043
    %5101 = vmatprep.subr.mxu0 0.0
    %5102 = vmatpush1.msra.mxu0 %v5044
    %5103 = vmatprep.subr.mxu0 0.0
    %5104 = vmatpush1.msra.mxu0 %v5045
    %5105 = vmatprep.subr.mxu0 0.0
    %5106 = vmatpush1.msra.mxu0 %v5046
    %5107 = vmatprep.subr.mxu0 0.0
    %5108 = vmatpush1.msra.mxu0 %v5047
    %5109 = vmatprep.subr.mxu0 0.0
    %5110 = vmatpush1.msra.mxu0 %v5048
    %5111 = vmatprep.subr.mxu0 0.0
    %5112 = vmatpush1.msra.mxu0 %v5049
    %5113 = vmatprep.subr.mxu0 0.0
    %5114 = vmatpush1.msra.mxu0 %v5050
    %5115 = vmatprep.subr.mxu0 0.0
    %5116 = vmatpush1.msra.mxu0 %v5051
    %5117 = vmatprep.subr.mxu0 0.0
    %5118 = vmatpush1.msra.mxu0 %v5052
    %5119 = vmatprep.subr.mxu0 0.0
    %5120 = vmatpush1.msra.mxu0 %v5053
    %5121 = vmatprep.subr.mxu0 0.0
    %5122 = vmatpush1.msra.mxu0 %v5054
    %5123 = vmatprep.subr.mxu0 0.0
    %5124 = vmatpush1.msra.mxu0 %v5055
    %5125 = vmatprep.subr.mxu0 0.0
    %5126 = vmatpush1.msra.mxu0 %v5056
    %5127 = vmatprep.subr.mxu0 0.0
    %5128 = vmatpush1.msra.mxu0 %v5057
    %5129 = vmatprep.subr.mxu0 0.0
    %5130 = vmatpush1.msra.mxu0 %v5058
    %5131 = vmatprep.mubr.f32.mxu0 %v5019
    %5132 = vmatmul.mubr.f32.gmra.mrb[0].mxu0 %v5018
    %v5133 = vpop.f32.mrb[0].mxu0
    %v5134 = vadd.f32 %v5065, %v5133
    %v5135 = vpop.f32.mrb[0].mxu0
    %5136 = vmatprep.mubr.f32.mxu0 %v5021
    %5137 = vmatmul.mubr.f32.gmra.mrb[0].mxu0 %v5020
    %v5138 = vpop.f32.mrb[0].mxu0
    %v5139 = vadd.f32 %v5065, %v5138
    %v5140 = vpop.f32.mrb[0].mxu0
    %5141 = vmatprep.mubr.f32.mxu0 %v5023
    %5142 = vmatmul.mubr.f32.gmra.mrb[0].mxu0 %v5022
    %v5143 = vpop.f32.mrb[0].mxu0
    %v5144 = vadd.f32 %v5065, %v5143
    %v5145 = vpop.f32.mrb[0].mxu0
    %5146 = vmatprep.mubr.f32.mxu0 %v5025
    %5147 = vmatmul.mubr.f32.gmra.mrb[0].mxu0 %v5024
    %v5148 = vpop.f32.mrb[0].mxu0
    %v5149 = vadd.f32 %v5065, %v5148
    %v5150 = vpop.f32.mrb[0].mxu0
    %5151 = vdwg.mxu0
    %v5152 = vadd.f32 %v4879, %v5134
    %v5153 = vadd.f32 %v4880, %v5139
    %v5154 = vadd.f32 %v4881, %v5144
    %v5155 = vadd.f32 %v4882, %v5149
    %s5156 = scalar_lea.vmem %s16, 1
    %v5157 = vld [vmem:[%s5156] sm:$0x1]
    %s5158 = scalar_lea.vmem %s17, 1
    %v5159 = vld [vmem:[%s5158] sm:$0x1]
    %5160 = vadd.xlane.f32.xlu0 %v5152
    %v5161 = vpop.xlane.xlu0 %5160
    %5162 = vadd.xlane.f32.xlu0 %v5153
    %v5163 = vpop.xlane.xlu0 %5162
    %5164 = vadd.xlane.f32.xlu0 %v5154
    %v5165 = vpop.xlane.xlu0 %5164
    %5166 = vadd.xlane.f32.xlu0 %v5155
    %v5167 = vpop.xlane.xlu0 %5166
    %v5168 = vmul.f32 %v5161, %v2392
    %v5169 = vmul.f32 %v5163, %v2392
    %v5170 = vmul.f32 %v5165, %v2392
    %v5171 = vmul.f32 %v5167, %v2392
    %v5172 = vsub.f32 %v5152, %v5168
    %v5173 = vsub.f32 %v5153, %v5169
    %v5174 = vsub.f32 %v5154, %v5170
    %v5175 = vsub.f32 %v5155, %v5171
    %v5176 = vmul.f32 %v5172, %v5172
    %v5177 = vmul.f32 %v5173, %v5173
    %v5178 = vmul.f32 %v5174, %v5174
    %v5179 = vmul.f32 %v5175, %v5175
    %5180 = vadd.xlane.f32.xlu0 %v5176
    %v5181 = vpop.xlane.xlu0 %5180
    %5182 = vadd.xlane.f32.xlu0 %v5177
    %v5183 = vpop.xlane.xlu0 %5182
    %5184 = vadd.xlane.f32.xlu0 %v5178
    %v5185 = vpop.xlane.xlu0 %5184
    %5186 = vadd.xlane.f32.xlu0 %v5179
    %v5187 = vpop.xlane.xlu0 %5186
    %v5188 = vmul.f32 %v5181, %v2392
    %v5189 = vmul.f32 %v5183, %v2392
    %v5190 = vmul.f32 %v5185, %v2392
    %v5191 = vmul.f32 %v5187, %v2392
    %v5192 = vadd.f32 %v5188, 1e-05
    %v5193 = vadd.f32 %v5189, 1e-05
    %v5194 = vadd.f32 %v5190, 1e-05
    %v5195 = vadd.f32 %v5191, 1e-05
    %v5196 = vrsqrt.pop %v5192
    %v5197 = vrsqrt.pop %v5193
    %v5198 = vrsqrt.pop %v5194
    %v5199 = vrsqrt.pop %v5195
    %v5200 = vmul.f32 %v5172, %v5196
    %v5201 = vmul.f32 %v5173, %v5197
    %v5202 = vmul.f32 %v5174, %v5198
    %v5203 = vmul.f32 %v5175, %v5199
    %v5205 = vlaneseq
    %v5206 = vshrl.u32 %v5205, 7
    %v5207 = vsub.s32 0, %v5206
    %v5208 = vrot.slane %v5157, %v5207
    %v5210 = vmul.f32 %v5200, %v5208
    %v5211 = vmul.f32 %v5201, %v5208
    %v5212 = vmul.f32 %v5202, %v5208
    %v5213 = vmul.f32 %v5203, %v5208
    %v5215 = vlaneseq
    %v5216 = vshrl.u32 %v5215, 7
    %v5217 = vsub.s32 0, %v5216
    %v5218 = vrot.slane %v5159, %v5217
    %v5220 = vadd.f32 %v5210, %v5218
    %v5221 = vadd.f32 %v5211, %v5218
    %v5222 = vadd.f32 %v5212, %v5218
    %v5223 = vadd.f32 %v5213, %v5218
    %v5224 = vld [vmem:[%s18] sm:$0xff]
    %v5225 = vld [vmem:[%s18 + $0x8] sm:$0xff]
    %v5226 = vld [vmem:[%s18 + $0x10] sm:$0xff]
    %v5227 = vld [vmem:[%s18 + $0x18] sm:$0xff]
    %v5228 = vld [vmem:[%s18 + $0x20] sm:$0xff]
    %v5229 = vld [vmem:[%s18 + $0x28] sm:$0xff]
    %v5230 = vld [vmem:[%s18 + $0x30] sm:$0xff]
    %v5231 = vld [vmem:[%s18 + $0x38] sm:$0xff]
    %v5232 = vld [vmem:[%s18 + $0x40] sm:$0xff]
    %v5233 = vld [vmem:[%s18 + $0x48] sm:$0xff]
    %v5234 = vld [vmem:[%s18 + $0x50] sm:$0xff]
    %v5235 = vld [vmem:[%s18 + $0x58] sm:$0xff]
    %v5236 = vld [vmem:[%s18 + $0x60] sm:$0xff]
    %v5237 = vld [vmem:[%s18 + $0x68] sm:$0xff]
    %v5238 = vld [vmem:[%s18 + $0x70] sm:$0xff]
    %v5239 = vld [vmem:[%s18 + $0x78] sm:$0xff]
    %v5240 = vld [vmem:[%s19] sm:$0x1]
    %v5242 = vlaneseq
    %v5243 = vshrl.u32 %v5242, 7
    %v5244 = vsub.s32 0, %v5243
    %v5245 = vrot.slane %v5240, %v5244
    %5247 = vmatprep.subr.mxu0 0.0
    %5248 = vmatpush1.msra.mxu0 %v5224
    %5249 = vmatprep.subr.mxu0 0.0
    %5250 = vmatpush1.msra.mxu0 %v5225
    %5251 = vmatprep.subr.mxu0 0.0
    %5252 = vmatpush1.msra.mxu0 %v5226
    %5253 = vmatprep.subr.mxu0 0.0
    %5254 = vmatpush1.msra.mxu0 %v5227
    %5255 = vmatprep.subr.mxu0 0.0
    %5256 = vmatpush1.msra.mxu0 %v5228
    %5257 = vmatprep.subr.mxu0 0.0
    %5258 = vmatpush1.msra.mxu0 %v5229
    %5259 = vmatprep.subr.mxu0 0.0
    %5260 = vmatpush1.msra.mxu0 %v5230
    %5261 = vmatprep.subr.mxu0 0.0
    %5262 = vmatpush1.msra.mxu0 %v5231
    %5263 = vmatprep.subr.mxu0 0.0
    %5264 = vmatpush1.msra.mxu0 %v5232
    %5265 = vmatprep.subr.mxu0 0.0
    %5266 = vmatpush1.msra.mxu0 %v5233
    %5267 = vmatprep.subr.mxu0 0.0
    %5268 = vmatpush1.msra.mxu0 %v5234
    %5269 = vmatprep.subr.mxu0 0.0
    %5270 = vmatpush1.msra.mxu0 %v5235
    %5271 = vmatprep.subr.mxu0 0.0
    %5272 = vmatpush1.msra.mxu0 %v5236
    %5273 = vmatprep.subr.mxu0 0.0
    %5274 = vmatpush1.msra.mxu0 %v5237
    %5275 = vmatprep.subr.mxu0 0.0
    %5276 = vmatpush1.msra.mxu0 %v5238
    %5277 = vmatprep.subr.mxu0 0.0
    %5278 = vmatpush1.msra.mxu0 %v5239
    %5279 = vmatprep.subr.mxu0 0.0
    %5280 = vmatpush1.msra.mxu0 0.0
    %5281 = vmatprep.subr.mxu0 0.0
    %5282 = vmatpush1.msra.mxu0 0.0
    %5283 = vmatprep.subr.mxu0 0.0
    %5284 = vmatpush1.msra.mxu0 0.0
    %5285 = vmatprep.subr.mxu0 0.0
    %5286 = vmatpush1.msra.mxu0 0.0
    %5287 = vmatprep.subr.mxu0 0.0
    %5288 = vmatpush1.msra.mxu0 0.0
    %5289 = vmatprep.subr.mxu0 0.0
    %5290 = vmatpush1.msra.mxu0 0.0
    %5291 = vmatprep.subr.mxu0 0.0
    %5292 = vmatpush1.msra.mxu0 0.0
    %5293 = vmatprep.subr.mxu0 0.0
    %5294 = vmatpush1.msra.mxu0 0.0
    %5295 = vmatprep.subr.mxu0 0.0
    %5296 = vmatpush1.msra.mxu0 0.0
    %5297 = vmatprep.subr.mxu0 0.0
    %5298 = vmatpush1.msra.mxu0 0.0
    %5299 = vmatprep.subr.mxu0 0.0
    %5300 = vmatpush1.msra.mxu0 0.0
    %5301 = vmatprep.subr.mxu0 0.0
    %5302 = vmatpush1.msra.mxu0 0.0
    %5303 = vmatprep.subr.mxu0 0.0
    %5304 = vmatpush1.msra.mxu0 0.0
    %5305 = vmatprep.subr.mxu0 0.0
    %5306 = vmatpush1.msra.mxu0 0.0
    %5307 = vmatprep.subr.mxu0 0.0
    %5308 = vmatpush1.msra.mxu0 0.0
    %5309 = vmatprep.subr.mxu0 0.0
    %5310 = vmatpush1.msra.mxu0 0.0
    %5311 = vmatprep.mubr.f32.mxu0 0.0
    %5312 = vmatmul.mubr.f32.gmra.mrb[0].mxu0 %v5220
    %v5313 = vpop.f32.mrb[0].mxu0
    %v5314 = vadd.f32 %v5245, %v5313
    %v5315 = vpop.f32.mrb[0].mxu0
    %5316 = vmatprep.mubr.f32.mxu0 0.0
    %5317 = vmatmul.mubr.f32.gmra.mrb[0].mxu0 %v5221
    %v5318 = vpop.f32.mrb[0].mxu0
    %v5319 = vadd.f32 %v5245, %v5318
    %v5320 = vpop.f32.mrb[0].mxu0
    %5321 = vmatprep.mubr.f32.mxu0 0.0
    %5322 = vmatmul.mubr.f32.gmra.mrb[0].mxu0 %v5222
    %v5323 = vpop.f32.mrb[0].mxu0
    %v5324 = vadd.f32 %v5245, %v5323
    %v5325 = vpop.f32.mrb[0].mxu0
    %5326 = vmatprep.mubr.f32.mxu0 0.0
    %5327 = vmatmul.mubr.f32.gmra.mrb[0].mxu0 %v5223
    %v5328 = vpop.f32.mrb[0].mxu0
    %v5329 = vadd.f32 %v5245, %v5328
    %v5330 = vpop.f32.mrb[0].mxu0
    %5331 = vdwg.mxu0
    %v5332 = vmax.f32 %v5314, 0.0
    %v5333 = vmax.f32 %v5319, 0.0
    %v5334 = vmax.f32 %v5324, 0.0
    %v5335 = vmax.f32 %v5329, 0.0
    %v5336 = vld [vmem:[%s20] sm:$0x1]
    %v5338 = vlaneseq
    %v5339 = vshrl.u32 %v5338, 7
    %v5340 = vsub.s32 0, %v5339
    %v5341 = vrot.slane %v5336, %v5340
    %v5343 = vmul.f32 %v5332, %v5341
    %v5344 = vmul.f32 %v5333, %v5341
    %v5345 = vmul.f32 %v5334, %v5341
    %v5346 = vmul.f32 %v5335, %v5341
    %v5347 = vsel %vm207, %v5343, 0.0
    %5348 = vadd.xlane.f32.xlu0 %v5347
    %v5349 = vpop.xlane.xlu0 %5348
    %v5350 = vsel %vm207, %v5344, 0.0
    %5351 = vadd.xlane.f32.xlu0 %v5350
    %v5352 = vpop.xlane.xlu0 %5351
    %v5353 = vsel %vm207, %v5345, 0.0
    %5354 = vadd.xlane.f32.xlu0 %v5353
    %v5355 = vpop.xlane.xlu0 %5354
    %v5356 = vsel %vm207, %v5346, 0.0
    %5357 = vadd.xlane.f32.xlu0 %v5356
    %v5358 = vpop.xlane.xlu0 %5357
    %v5359 = vld [vmem:[#allocation2] sm:$0x1]
    %v5361 = vlaneseq
    %v5362 = vshrl.u32 %v5361, 7
    %v5363 = vsub.s32 0, %v5362
    %v5364 = vrot.slane %v5359, %v5363
    %5365 = vset.pattern.permute.xlu0 0
    %5366 = vperm.xlu0 %5365, %v5364
    %v5367 = vpop.permute.xlu0 %5366
    %v5369 = vadd.f32 %v5349, %v5367
    %v5370 = vadd.f32 %v5352, %v5367
    %v5371 = vadd.f32 %v5355, %v5367
    %v5372 = vadd.f32 %v5358, %v5367
    %v5373 = vld [vmem:[%s22] sm:$0xff]
    %v5374 = vld [vmem:[%s22 + $0x8] sm:$0xff]
    %v5375 = vld [vmem:[%s23] sm:$0x1]
    %v5377 = vlaneseq
    %v5378 = vshrl.u32 %v5377, 7
    %v5379 = vsub.s32 0, %v5378
    %v5380 = vrot.slane %v5375, %v5379
    %v5386 = vlaneseq
    %v5387 = vshrl.u32 %v5386, 7
    %v5388 = vsub.s32 %v347, %v5387
    %v5389 = vrot.slane %v5369, %v5388
    %v5390 = vadd.s32 %v347, 4294967288
    %v5391 = vlaneseq
    %v5392 = vshrl.u32 %v5391, 7
    %v5393 = vsub.s32 %v5390, %v5392
    %v5394 = vrot.slane %v5370, %v5393
    %vm5395 = vcmask 130112
    %v5396 = vsel %vm5395, %v5394, %v5389
    %v5397 = vlaneseq
    %v5398 = vshrl.u32 %v5397, 7
    %v5399 = vsub.s32 %v347, %v5398
    %v5400 = vrot.slane %v5371, %v5399
    %v5401 = vlaneseq
    %v5402 = vshrl.u32 %v5401, 7
    %v5403 = vsub.s32 %v5390, %v5402
    %v5404 = vrot.slane %v5372, %v5403
    %v5405 = vsel %vm5395, %v5404, %v5400
    %vm5406 = vcmask 1041409
    %v5407 = vsel %vm5406, %v5405, %v5396
    %v5408 = vsel %vm774, %v5407, 0
    %5410 = vmatprep.subr.mxu0 0.0
    %5411 = vmatpush1.msra.mxu0 %v5373
    %5412 = vmatprep.subr.mxu0 0.0
    %5413 = vmatpush1.msra.mxu0 %v5374
    %5414 = vmatprep.subr.mxu0 0.0
    %5415 = vmatpush1.msra.mxu0 0.0
    %5416 = vmatprep.subr.mxu0 0.0
    %5417 = vmatpush1.msra.mxu0 0.0
    %5418 = vmatprep.subr.mxu0 0.0
    %5419 = vmatpush1.msra.mxu0 0.0
    %5420 = vmatprep.subr.mxu0 0.0
    %5421 = vmatpush1.msra.mxu0 0.0
    %5422 = vmatprep.subr.mxu0 0.0
    %5423 = vmatpush1.msra.mxu0 0.0
    %5424 = vmatprep.subr.mxu0 0.0
    %5425 = vmatpush1.msra.mxu0 0.0
    %5426 = vmatprep.subr.mxu0 0.0
    %5427 = vmatpush1.msra.mxu0 0.0
    %5428 = vmatprep.subr.mxu0 0.0
    %5429 = vmatpush1.msra.mxu0 0.0
    %5430 = vmatprep.subr.mxu0 0.0
    %5431 = vmatpush1.msra.mxu0 0.0
    %5432 = vmatprep.subr.mxu0 0.0
    %5433 = vmatpush1.msra.mxu0 0.0
    %5434 = vmatprep.subr.mxu0 0.0
    %5435 = vmatpush1.msra.mxu0 0.0
    %5436 = vmatprep.subr.mxu0 0.0
    %5437 = vmatpush1.msra.mxu0 0.0
    %5438 = vmatprep.subr.mxu0 0.0
    %5439 = vmatpush1.msra.mxu0 0.0
    %5440 = vmatprep.subr.mxu0 0.0
    %5441 = vmatpush1.msra.mxu0 0.0
    %5442 = vmatprep.subr.mxu0 0.0
    %5443 = vmatpush1.msra.mxu0 0.0
    %5444 = vmatprep.subr.mxu0 0.0
    %5445 = vmatpush1.msra.mxu0 0.0
    %5446 = vmatprep.subr.mxu0 0.0
    %5447 = vmatpush1.msra.mxu0 0.0
    %5448 = vmatprep.subr.mxu0 0.0
    %5449 = vmatpush1.msra.mxu0 0.0
    %5450 = vmatprep.subr.mxu0 0.0
    %5451 = vmatpush1.msra.mxu0 0.0
    %5452 = vmatprep.subr.mxu0 0.0
    %5453 = vmatpush1.msra.mxu0 0.0
    %5454 = vmatprep.subr.mxu0 0.0
    %5455 = vmatpush1.msra.mxu0 0.0
    %5456 = vmatprep.subr.mxu0 0.0
    %5457 = vmatpush1.msra.mxu0 0.0
    %5458 = vmatprep.subr.mxu0 0.0
    %5459 = vmatpush1.msra.mxu0 0.0
    %5460 = vmatprep.subr.mxu0 0.0
    %5461 = vmatpush1.msra.mxu0 0.0
    %5462 = vmatprep.subr.mxu0 0.0
    %5463 = vmatpush1.msra.mxu0 0.0
    %5464 = vmatprep.subr.mxu0 0.0
    %5465 = vmatpush1.msra.mxu0 0.0
    %5466 = vmatprep.subr.mxu0 0.0
    %5467 = vmatpush1.msra.mxu0 0.0
    %5468 = vmatprep.subr.mxu0 0.0
    %5469 = vmatpush1.msra.mxu0 0.0
    %5470 = vmatprep.subr.mxu0 0.0
    %5471 = vmatpush1.msra.mxu0 0.0
    %5472 = vmatprep.subr.mxu0 0.0
    %5473 = vmatpush1.msra.mxu0 0.0
    %5474 = vmatprep.mubr.f32.mxu0 0.0
    %5475 = vmatmul.mubr.f32.gmra.mrb[0].mxu0 %v5408
    %v5476 = vpop.f32.mrb[0].mxu0
    %v5477 = vadd.f32 %v5380, %v5476
    %v5478 = vpop.f32.mrb[0].mxu0
    %5479 = vdwg.mxu0
    %v5480 = vmax.f32 %v5477, 0.0
    %v5481 = vld [vmem:[%s24] sm:$0xff]
    %v5482 = vld [vmem:[#allocation3] sm:$0x1]
    %v5484 = vlaneseq
    %v5485 = vshrl.u32 %v5484, 7
    %v5486 = vsub.s32 0, %v5485
    %v5487 = vrot.slane %v5482, %v5486
    %vm5489 = vcmask 64512
    %v5491 = vsel %vm5489, %v5480, 0
    %5493 = vmatprep.subr.mxu0 0.0
    %5494 = vmatpush1.msra.mxu0 %v5481
    %5495 = vmatprep.subr.mxu0 0.0
    %5496 = vmatpush1.msra.mxu0 0.0
    %5497 = vmatprep.subr.mxu0 0.0
    %5498 = vmatpush1.msra.mxu0 0.0
    %5499 = vmatprep.subr.mxu0 0.0
    %5500 = vmatpush1.msra.mxu0 0.0
    %5501 = vmatprep.subr.mxu0 0.0
    %5502 = vmatpush1.msra.mxu0 0.0
    %5503 = vmatprep.subr.mxu0 0.0
    %5504 = vmatpush1.msra.mxu0 0.0
    %5505 = vmatprep.subr.mxu0 0.0
    %5506 = vmatpush1.msra.mxu0 0.0
    %5507 = vmatprep.subr.mxu0 0.0
    %5508 = vmatpush1.msra.mxu0 0.0
    %5509 = vmatprep.subr.mxu0 0.0
    %5510 = vmatpush1.msra.mxu0 0.0
    %5511 = vmatprep.subr.mxu0 0.0
    %5512 = vmatpush1.msra.mxu0 0.0
    %5513 = vmatprep.subr.mxu0 0.0
    %5514 = vmatpush1.msra.mxu0 0.0
    %5515 = vmatprep.subr.mxu0 0.0
    %5516 = vmatpush1.msra.mxu0 0.0
    %5517 = vmatprep.subr.mxu0 0.0
    %5518 = vmatpush1.msra.mxu0 0.0
    %5519 = vmatprep.subr.mxu0 0.0
    %5520 = vmatpush1.msra.mxu0 0.0
    %5521 = vmatprep.subr.mxu0 0.0
    %5522 = vmatpush1.msra.mxu0 0.0
    %5523 = vmatprep.subr.mxu0 0.0
    %5524 = vmatpush1.msra.mxu0 0.0
    %5525 = vmatprep.subr.mxu0 0.0
    %5526 = vmatpush1.msra.mxu0 0.0
    %5527 = vmatprep.subr.mxu0 0.0
    %5528 = vmatpush1.msra.mxu0 0.0
    %5529 = vmatprep.subr.mxu0 0.0
    %5530 = vmatpush1.msra.mxu0 0.0
    %5531 = vmatprep.subr.mxu0 0.0
    %5532 = vmatpush1.msra.mxu0 0.0
    %5533 = vmatprep.subr.mxu0 0.0
    %5534 = vmatpush1.msra.mxu0 0.0
    %5535 = vmatprep.subr.mxu0 0.0
    %5536 = vmatpush1.msra.mxu0 0.0
    %5537 = vmatprep.subr.mxu0 0.0
    %5538 = vmatpush1.msra.mxu0 0.0
    %5539 = vmatprep.subr.mxu0 0.0
    %5540 = vmatpush1.msra.mxu0 0.0
    %5541 = vmatprep.subr.mxu0 0.0
    %5542 = vmatpush1.msra.mxu0 0.0
    %5543 = vmatprep.subr.mxu0 0.0
    %5544 = vmatpush1.msra.mxu0 0.0
    %5545 = vmatprep.subr.mxu0 0.0
    %5546 = vmatpush1.msra.mxu0 0.0
    %5547 = vmatprep.subr.mxu0 0.0
    %5548 = vmatpush1.msra.mxu0 0.0
    %5549 = vmatprep.subr.mxu0 0.0
    %5550 = vmatpush1.msra.mxu0 0.0
    %5551 = vmatprep.subr.mxu0 0.0
    %5552 = vmatpush1.msra.mxu0 0.0
    %5553 = vmatprep.subr.mxu0 0.0
    %5554 = vmatpush1.msra.mxu0 0.0
    %5555 = vmatprep.subr.mxu0 0.0
    %5556 = vmatpush1.msra.mxu0 0.0
    %5557 = vmatprep.mubr.f32.mxu0 0.0
    %5558 = vmatmul.mubr.f32.gmra.mrb[0].mxu0 %v5491
    %v5559 = vpop.f32.mrb[0].mxu0
    %v5560 = vadd.f32 %v5487, %v5559
    %v5561 = vpop.f32.mrb[0].mxu0
    %5562 = vdwg.mxu0
    %vm5563 = vcmask 1024
    %5564 = vst.msk [vmem:[%s26] sm:$0x3] %vm5563, %v5560
    // Predicated region
    $region122: #{transformer_forward.1} parent=1 // pred_check
      _
    $region123: #{transformer_forward.1} parent=1 // pred_check_branch
      %5566 = sbr.rel (0) target = $region125
    $region124: #{transformer_forward.1} parent=1 // pred_region
      _
    $region125: #{transformer_forward.1} parent=1 // pred_fallthru
      _
    // Predicated region
    $region126: #{transformer_forward.1} parent=1 // pred_check
      _
    $region127: #{transformer_forward.1} parent=1 // pred_check_branch
      %5568 = sbr.rel (0) target = $region129
    $region128: #{transformer_forward.1} parent=1 // pred_region
      _
    $region129: #{transformer_forward.1} parent=1 // pred_fallthru
      _
    %5569 = vsyncpa [#allocation5], 1
    %5570 = vsyncpa [#allocation7], 1
    %5571 = vsyncpa [#allocation10], 1

</llo_original>
